<compile_context>
chip_gen: v6e
topology: v6e:2x2x1
jax: 0.10.0
libtpu: 0.0.40
codegen_flags: <defaults>
</compile_context>

<pallas_src>
import functools

import jax
import jax.numpy as jnp
from jax import lax
from jax.experimental import pallas as pl
from jax.experimental.pallas import tpu as pltpu


_LANE = 128


def _round_up(x, m=_LANE):
    return ((x + m - 1) // m) * m


def _segment_layout(hidden_size, memory_bank_size):
    """Lane layout of the fused projection:
    [ rnn_pre | content | read_prob | write_prob | read_gate | write_gate ],
    each segment padded to a 128-lane boundary (so every slice is vreg-aligned)."""
    widths = [hidden_size, hidden_size, memory_bank_size, memory_bank_size, 1, 1]
    offsets, total = [], 0
    for w in widths:
        offsets.append(total)
        total += _round_up(w)
    return offsets, widths, total


def memory_ram_kernel(hf_ref, Wx_ref, Wh_ref, b_ref, Wrh_ref, out_ref, xproj_ref,
                      *, hidden_size, memory_bank_size, unroll):
    n_img = hf_ref.shape[0]
    H, M = hidden_size, memory_bank_size
    Hp = _round_up(H)  # hidden state / memory / output are carried lane-padded
    (o_h, o_c, o_rp, o_wp, o_rg, o_wg), _, _ = _segment_layout(H, M)

    # --- Hoist ALL x-dependent projections (and every bias) out of the serial
    #     recurrence: one batched MXU matmul over the whole sequence. ---
    xproj_ref[...] = (
        jnp.dot(hf_ref[...], Wx_ref[...], preferred_element_type=jnp.float32)
        + b_ref[...]
    )

    # (M, M) identity, hoisted out of the loop: converts the write distribution
    # row -> column with one mul + lane reduce (no in-loop transpose).
    rows = lax.broadcasted_iota(jnp.int32, (M, M), 0)
    cols = lax.broadcasted_iota(jnp.int32, (M, M), 1)
    eye_m = (rows == cols).astype(jnp.float32)

    def softmax_row(logits):  # softmax over the lane (last) axis
        mx = jnp.max(logits, axis=-1, keepdims=True)
        e = jnp.exp(logits - mx)
        return e * pl.reciprocal(jnp.sum(e, axis=-1, keepdims=True), approx=True)

    def body(t, carry):
        h_t, mem = carry                           # (1, Hp), (M, Hp); pad lanes == 0

        # All h-dependent projections in ONE MXU dot; x parts precomputed.
        proj = xproj_ref[pl.ds(t, 1), :] + jnp.dot(
            h_t, Wh_ref[...], preferred_element_type=jnp.float32)  # (1, P)

        pre_h = proj[:, o_h:o_h + Hp]       # x@Wxh + h@Whh + bh   (pad lanes = 0)
        pre_c = proj[:, o_c:o_c + Hp]       # hidden_to_content pre-activation
        rp_lg = proj[:, o_rp:o_rp + M]      # read_prob logits
        wp_lg = proj[:, o_wp:o_wp + M]      # write_prob logits
        rg_lg = proj[:, o_rg:o_rg + 1]      # read_gate logit
        wg_lg = proj[:, o_wg:o_wg + 1]      # write_gate logit

        # --- read: fold the gate into the (1, M) distribution before the dot ---
        ar = jax.nn.sigmoid(rg_lg) * softmax_row(rp_lg)                    # (1, M)
        r = jnp.dot(ar, mem, preferred_element_type=jnp.float32)           # (1, Hp)

        # --- RNN cell: h' = relu(x@Wxh + r@Wrh + h@Whh + bh) ---
        h_new = jnp.maximum(
            pre_h + jnp.dot(r, Wrh_ref[...], preferred_element_type=jnp.float32),
            0.0)                                                           # (1, Hp)

        # --- content + gated memory write ---
        c_t = jnp.maximum(pre_c, 0.0)                                      # (1, Hp)
        aw = softmax_row(wp_lg)                                            # (1, M)
        gw = jax.nn.sigmoid(wg_lg)                                         # (1, 1)
        aw_col = jnp.sum(aw * eye_m, axis=1, keepdims=True)                # (M, 1)
        # mem + aw*(gw*c - mem)  ==  gw*aw*c + (1 - aw)*mem   (reference form)
        mem_new = mem + aw_col * (gw * c_t - mem)                          # (M, Hp)

        out_ref[pl.ds(t, 1), :] = h_new            # lane-dense (Hp) unmasked store
        return (h_new, mem_new)

    h0 = jnp.zeros((1, Hp), jnp.float32)
    mem0 = jnp.zeros((M, Hp), jnp.float32)
    lax.fori_loop(0, n_img, body, (h0, mem0), unroll=unroll)


def _fuse_params(params, input_size):
    """Pack PyTorch-style parameters into the fused / lane-padded matrices used
    by the kernel.  The reference uses x_h_t = cat([x_t, h_t]), so each Linear
    weight W (out, I+H) splits into an x part W[:, :I] and an h part W[:, I:].
    h-dependent matrices are padded to Hp rows/cols so the in-kernel state can
    be carried lane-dense (pad rows/cols are zero)."""
    I = input_size
    H = params["Wxh"].shape[1]
    M = params["Wrp"].shape[0]
    Hp = _round_up(H)

    def split(W):
        return W[:, :I].T, W[:, I:].T          # (I, out), (H, out)

    Wcx, Wch = split(params["Wc"])
    Wrpx, Wrph = split(params["Wrp"])
    Wwpx, Wwph = split(params["Wwp"])
    Wrgx, Wrgh = split(params["Wrg"])
    Wwgx, Wwgh = split(params["Wwg"])

    offsets, widths, total = _segment_layout(H, M)
    segments = [
        (params["Wxh"], params["Whh"], params["bh"]),
        (Wcx, Wch, params["bc"]),
        (Wrpx, Wrph, params["brp"]),
        (Wwpx, Wwph, params["bwp"]),
        (Wrgx, Wrgh, params["brg"]),
        (Wwgx, Wwgh, params["bwg"]),
    ]
    Wx = jnp.zeros((I, total), jnp.float32)
    Wh = jnp.zeros((Hp, total), jnp.float32)
    b = jnp.zeros((1, total), jnp.float32)
    for (xw, hw, bias), off, w in zip(segments, offsets, widths):
        Wx = Wx.at[:, off:off + w].set(xw.astype(jnp.float32))
        Wh = Wh.at[:H, off:off + w].set(hw.astype(jnp.float32))
        b = b.at[:, off:off + w].set(bias.astype(jnp.float32)[None, :])
    Wrh = jnp.zeros((Hp, Hp), jnp.float32).at[:H, :H].set(
        params["Wrh"].astype(jnp.float32))
    return Wx, Wh, b, Wrh, H, M, Hp, total


def memory_ram_forward(hidden_frames, params):
    nImg, input_size = hidden_frames.shape
    Wx, Wh, b, Wrh, H, M, Hp, total = _fuse_params(params, input_size)

    # Fully unroll short sequences; partial unroll otherwise so the VLIW
    # scheduler can overlap adjacent steps of the serial recurrence.
    if nImg <= 32:
        unroll = True
    elif nImg % 8 == 0:
        unroll = 8
    else:
        unroll = 1

    kernel = functools.partial(
        memory_ram_kernel, hidden_size=H, memory_bank_size=M, unroll=unroll)
    vmem = pl.BlockSpec(memory_space=pltpu.MemorySpace.VMEM)
    out = pl.pallas_call(
        kernel,
        out_shape=jax.ShapeDtypeStruct((nImg, Hp), jnp.float32),
        in_specs=[vmem] * 5,
        out_specs=vmem,
        scratch_shapes=[pltpu.VMEM((nImg, total), jnp.float32)],
        # TODO(synk): for very long sequences (esp. v7x's 64 MiB VMEM) switch
        # hidden_frames/out to a time-chunked grid with BlockSpecs and keep the
        # (h, mem) carry in scratch across an "arbitrary" grid axis.
    )(hidden_frames.astype(jnp.float32), Wx, Wh, b, Wrh)
    return out[:, :H]


def memory_ram_reference(hidden_frames, params):
    """Pure-JAX transcription of MemoryRamModule.forward (validation only)."""
    H = params["Wxh"].shape[1]
    M = params["Wrp"].shape[0]
    lin = lambda W, bias, xh: xh @ W.T + bias[None, :]
    h = jnp.zeros((1, H), jnp.float32)
    mem = jnp.zeros((M, H), jnp.float32)
    outs = []
    for t in range(hidden_frames.shape[0]):
        x = hidden_frames[t:t + 1, :]
        xh = jnp.concatenate([x, h], axis=1)
        ar = jax.nn.softmax(lin(params["Wrp"], params["brp"], xh), axis=1)
        go = jax.nn.sigmoid(lin(params["Wrg"], params["brg"], xh))
        r = go * (ar @ mem)
        h_new = jax.nn.relu(x @ params["Wxh"] + r @ params["Wrh"]
                            + h @ params["Whh"] + params["bh"][None, :])
        c = jax.nn.relu(lin(params["Wc"], params["bc"], xh))
        aw = jax.nn.softmax(lin(params["Wwp"], params["bwp"], xh), axis=1).reshape(M, 1)
        gw = jax.nn.sigmoid(lin(params["Wwg"], params["bwg"], xh))
        mem = gw * aw * c + (1.0 - aw) * mem
        h = h_new
        outs.append(h)
    return jnp.concatenate(outs, axis=0)


def init_params(key, input_size, hidden_size, memory_bank_size):
    I, H, M = input_size, hidden_size, memory_bank_size
    ks = jax.random.split(key, 11)
    n = lambda k, shape, s=0.01: (s * jax.random.normal(k, shape)).astype(jnp.float32)
    return dict(
        # RNN cell params (the module inits these N(0, 0.01); bh = 0)
        Wxh=n(ks[0], (I, H)), Wrh=n(ks[1], (H, H)), Whh=n(ks[2], (H, H)),
        bh=jnp.zeros((H,), jnp.float32),
        # PyTorch-style Linear(H + I -> out) weights: (out, I + H), input order [x, h]
        Wc=n(ks[3], (H, I + H)), bc=n(ks[4], (H,)),
        Wrp=n(ks[5], (M, I + H)), brp=n(ks[6], (M,)),
        Wwp=n(ks[7], (M, I + H)), bwp=n(ks[8], (M,)),
        Wrg=n(ks[9], (1, I + H)), brg=jnp.zeros((1,), jnp.float32),
        Wwg=n(ks[10], (1, I + H)), bwg=jnp.zeros((1,), jnp.float32),
    )


if __name__ == "__main__":
    input_size, hidden_size, memory_bank_size, nImg = 64, 32, 16, 8

    key = jax.random.PRNGKey(0)
    kp, kx = jax.random.split(key)
    params = init_params(kp, input_size, hidden_size, memory_bank_size)
    hidden_frames = jax.random.normal(kx, (nImg, input_size), dtype=jnp.float32)

    hiddens = memory_ram_forward(hidden_frames, params)
    jax.block_until_ready(hiddens)
    assert hiddens.shape == (nImg, hidden_size)
    assert bool(jnp.all(jnp.isfinite(hiddens)))

    # Numerical check vs a pure-JAX transcription of the PyTorch forward.
    # (approx EUP reciprocal in the in-kernel softmax -> allow small slack)
    ref = memory_ram_reference(hidden_frames, params)
    max_err = float(jnp.max(jnp.abs(hiddens - ref)))
    assert max_err < 1e-3, f"mismatch vs reference: max abs err {max_err}"

    print("KERNEL_OK")
</pallas_src>

<mosaic_0001>
module attributes {stable_mosaic.version = 11 : i64} {
  func.func @memory_ram_kernel(%arg0: memref<8x64xf32, #tpu.memory_space<vmem>>, %arg1: memref<64x768xf32, #tpu.memory_space<vmem>>, %arg2: memref<128x768xf32, #tpu.memory_space<vmem>>, %arg3: memref<1x768xf32, #tpu.memory_space<vmem>>, %arg4: memref<128x128xf32, #tpu.memory_space<vmem>>, %arg5: memref<8x128xf32, #tpu.memory_space<vmem>>, %arg6: memref<8x768xf32, #tpu.memory_space<vmem>>) attributes {dimension_semantics = [], scalar_prefetch = 0 : i64, scratch_operands = 1 : i64, tpu.core_type = #tpu.core_type<tc>} {
    %c0 = arith.constant 0 : index
    %c0_0 = arith.constant 0 : index
    %0 = vector.load %arg0[%c0, %c0_0] : memref<8x64xf32, #tpu.memory_space<vmem>>, vector<8x64xf32>
    %c0_1 = arith.constant 0 : index
    %c0_2 = arith.constant 0 : index
    %1 = vector.load %arg1[%c0_1, %c0_2] : memref<64x768xf32, #tpu.memory_space<vmem>>, vector<64x768xf32>
    %cst = arith.constant dense<0.000000e+00> : vector<8x768xf32>
    %2 = tpu.matmul %0, %1, %cst {dimension_numbers = #tpu.dot_dimension_numbers<[1], [0], [0], [1], [0, 0, 1, 1], [], []>} : vector<8x64xf32>, vector<64x768xf32>, vector<8x768xf32> -> vector<8x768xf32>
    %c0_3 = arith.constant 0 : index
    %c0_4 = arith.constant 0 : index
    %3 = vector.load %arg3[%c0_3, %c0_4] : memref<1x768xf32, #tpu.memory_space<vmem>>, vector<1x768xf32>
    %4 = vector.broadcast %3 : vector<1x768xf32> to vector<8x768xf32>
    %5 = arith.addf %2, %4 : vector<8x768xf32>
    %c0_5 = arith.constant 0 : index
    %c0_6 = arith.constant 0 : index
    %6 = vector.load %arg6[%c0_5, %c0_6] : memref<8x768xf32, #tpu.memory_space<vmem>>, vector<8x768xf32>
    tpu.vector_store %arg6[%c0_5, %c0_6], %5 {strides = array<i32>} : memref<8x768xf32, #tpu.memory_space<vmem>>, vector<8x768xf32>,
    %7 = tpu.iota {dimensions = array<i32: 0>} : vector<16x16xi32>
    %8 = tpu.iota {dimensions = array<i32: 1>} : vector<16x16xi32>
    %9 = arith.cmpi eq, %7, %8 : vector<16x16xi32>
    %10 = arith.extui %9 : vector<16x16xi1> to vector<16x16xi32>
    %11 = arith.sitofp %10 : vector<16x16xi32> to vector<16x16xf32>
    %cst_7 = arith.constant 0.000000e+00 : f32
    %12 = vector.broadcast %cst_7 : f32 to vector<1x128xf32>
    %cst_8 = arith.constant 0.000000e+00 : f32
    %13 = vector.broadcast %cst_8 : f32 to vector<16x128xf32>
    %c0_i32 = arith.constant 0 : i32
    %14 = arith.index_cast %c0_i32 : i32 to index
    %c0_9 = arith.constant 0 : index
    %15 = vector.load %arg6[%14, %c0_9] : memref<8x768xf32, #tpu.memory_space<vmem>>, vector<1x768xf32>
    %c0_10 = arith.constant 0 : index
    %c0_11 = arith.constant 0 : index
    %16 = vector.load %arg2[%c0_10, %c0_11] : memref<128x768xf32, #tpu.memory_space<vmem>>, vector<128x768xf32>
    %cst_12 = arith.constant dense<0.000000e+00> : vector<1x768xf32>
    %17 = tpu.matmul %12, %16, %cst_12 {dimension_numbers = #tpu.dot_dimension_numbers<[1], [0], [0], [1], [0, 0, 1, 1], [], []>} : vector<1x128xf32>, vector<128x768xf32>, vector<1x768xf32> -> vector<1x768xf32>
    %18 = arith.addf %15, %17 : vector<1x768xf32>
    %19 = vector.extract_strided_slice %18 {offsets = [0, 0], sizes = [1, 128], strides = [1, 1]} : vector<1x768xf32> to vector<1x128xf32>
    %20 = vector.extract_strided_slice %18 {offsets = [0, 128], sizes = [1, 128], strides = [1, 1]} : vector<1x768xf32> to vector<1x128xf32>
    %21 = vector.extract_strided_slice %18 {offsets = [0, 256], sizes = [1, 16], strides = [1, 1]} : vector<1x768xf32> to vector<1x16xf32>
    %22 = vector.extract_strided_slice %18 {offsets = [0, 384], sizes = [1, 16], strides = [1, 1]} : vector<1x768xf32> to vector<1x16xf32>
    %23 = vector.extract_strided_slice %18 {offsets = [0, 512], sizes = [1, 1], strides = [1, 1]} : vector<1x768xf32> to vector<1x1xf32>
    %24 = vector.extract_strided_slice %18 {offsets = [0, 640], sizes = [1, 1], strides = [1, 1]} : vector<1x768xf32> to vector<1x1xf32>
    %25 = arith.negf %23 : vector<1x1xf32>
    %26 = math.exp %25 : vector<1x1xf32>
    %cst_13 = arith.constant 1.000000e+00 : f32
    %27 = vector.broadcast %cst_13 : f32 to vector<1x1xf32>
    %28 = arith.addf %27, %26 : vector<1x1xf32>
    %29 = arith.divf %27, %28 : vector<1x1xf32>
    %cst_14 = arith.constant dense<0xFF800000> : vector<1xf32>
    %30 = vector.multi_reduction <maximumf>, %21, %cst_14 [1] : vector<1x16xf32> to vector<1xf32>
    %31 = vector.shape_cast %30 : vector<1xf32> to vector<1x1xf32>
    %32 = vector.broadcast %31 : vector<1x1xf32> to vector<1x16xf32>
    %33 = arith.subf %21, %32 : vector<1x16xf32>
    %34 = math.exp %33 : vector<1x16xf32>
    %cst_15 = arith.constant dense<0.000000e+00> : vector<1xf32>
    %35 = vector.multi_reduction <add>, %34, %cst_15 [1] : vector<1x16xf32> to vector<1xf32>
    %36 = vector.shape_cast %35 : vector<1xf32> to vector<1x1xf32>
    %37 = tpu.reciprocal %36 {approx = true} : vector<1x1xf32> -> vector<1x1xf32>
    %38 = vector.broadcast %37 : vector<1x1xf32> to vector<1x16xf32>
    %39 = arith.mulf %34, %38 : vector<1x16xf32>
    %40 = vector.broadcast %29 : vector<1x1xf32> to vector<1x16xf32>
    %41 = arith.mulf %40, %39 : vector<1x16xf32>
    %cst_16 = arith.constant dense<0.000000e+00> : vector<1x128xf32>
    %42 = tpu.matmul %41, %13, %cst_16 {dimension_numbers = #tpu.dot_dimension_numbers<[1], [0], [0], [1], [0, 0, 1, 1], [], []>} : vector<1x16xf32>, vector<16x128xf32>, vector<1x128xf32> -> vector<1x128xf32>
    %c0_17 = arith.constant 0 : index
    %c0_18 = arith.constant 0 : index
    %43 = vector.load %arg4[%c0_17, %c0_18] : memref<128x128xf32, #tpu.memory_space<vmem>>, vector<128x128xf32>
    %cst_19 = arith.constant dense<0.000000e+00> : vector<1x128xf32>
    %44 = tpu.matmul %42, %43, %cst_19 {dimension_numbers = #tpu.dot_dimension_numbers<[1], [0], [0], [1], [0, 0, 1, 1], [], []>} : vector<1x128xf32>, vector<128x128xf32>, vector<1x128xf32> -> vector<1x128xf32>
    %45 = arith.addf %19, %44 : vector<1x128xf32>
    %cst_20 = arith.constant 0.000000e+00 : f32
    %46 = vector.broadcast %cst_20 : f32 to vector<1x128xf32>
    %47 = arith.maximumf %45, %46 : vector<1x128xf32>
    %cst_21 = arith.constant 0.000000e+00 : f32
    %48 = vector.broadcast %cst_21 : f32 to vector<1x128xf32>
    %49 = arith.maximumf %20, %48 : vector<1x128xf32>
    %cst_22 = arith.constant dense<0xFF800000> : vector<1xf32>
    %50 = vector.multi_reduction <maximumf>, %22, %cst_22 [1] : vector<1x16xf32> to vector<1xf32>
    %51 = vector.shape_cast %50 : vector<1xf32> to vector<1x1xf32>
    %52 = vector.broadcast %51 : vector<1x1xf32> to vector<1x16xf32>
    %53 = arith.subf %22, %52 : vector<1x16xf32>
    %54 = math.exp %53 : vector<1x16xf32>
    %cst_23 = arith.constant dense<0.000000e+00> : vector<1xf32>
    %55 = vector.multi_reduction <add>, %54, %cst_23 [1] : vector<1x16xf32> to vector<1xf32>
    %56 = vector.shape_cast %55 : vector<1xf32> to vector<1x1xf32>
    %57 = tpu.reciprocal %56 {approx = true} : vector<1x1xf32> -> vector<1x1xf32>
    %58 = vector.broadcast %57 : vector<1x1xf32> to vector<1x16xf32>
    %59 = arith.mulf %54, %58 : vector<1x16xf32>
    %60 = arith.negf %24 : vector<1x1xf32>
    %61 = math.exp %60 : vector<1x1xf32>
    %cst_24 = arith.constant 1.000000e+00 : f32
    %62 = vector.broadcast %cst_24 : f32 to vector<1x1xf32>
    %63 = arith.addf %62, %61 : vector<1x1xf32>
    %64 = arith.divf %62, %63 : vector<1x1xf32>
    %65 = vector.broadcast %59 : vector<1x16xf32> to vector<16x16xf32>
    %66 = arith.mulf %65, %11 : vector<16x16xf32>
    %cst_25 = arith.constant dense<0.000000e+00> : vector<16xf32>
    %67 = vector.multi_reduction <add>, %66, %cst_25 [1] : vector<16x16xf32> to vector<16xf32>
    %68 = vector.shape_cast %67 : vector<16xf32> to vector<16x1xf32>
    %69 = vector.broadcast %64 : vector<1x1xf32> to vector<1x128xf32>
    %70 = arith.mulf %69, %49 : vector<1x128xf32>
    %71 = vector.broadcast %70 : vector<1x128xf32> to vector<16x128xf32>
    %72 = arith.subf %71, %13 : vector<16x128xf32>
    %73 = vector.broadcast %68 : vector<16x1xf32> to vector<16x128xf32>
    %74 = arith.mulf %73, %72 : vector<16x128xf32>
    %75 = arith.addf %13, %74 : vector<16x128xf32>
    %76 = arith.index_cast %c0_i32 : i32 to index
    %c0_26 = arith.constant 0 : index
    %77 = vector.load %arg5[%76, %c0_26] : memref<8x128xf32, #tpu.memory_space<vmem>>, vector<1x128xf32>
    tpu.vector_store %arg5[%76, %c0_26], %47 {strides = array<i32>} : memref<8x128xf32, #tpu.memory_space<vmem>>, vector<1x128xf32>,
    %c1_i32 = arith.constant 1 : i32
    %78 = arith.index_cast %c1_i32 : i32 to index
    %c0_27 = arith.constant 0 : index
    %79 = vector.load %arg6[%78, %c0_27] : memref<8x768xf32, #tpu.memory_space<vmem>>, vector<1x768xf32>
    %c0_28 = arith.constant 0 : index
    %c0_29 = arith.constant 0 : index
    %80 = vector.load %arg2[%c0_28, %c0_29] : memref<128x768xf32, #tpu.memory_space<vmem>>, vector<128x768xf32>
    %cst_30 = arith.constant dense<0.000000e+00> : vector<1x768xf32>
    %81 = tpu.matmul %47, %80, %cst_30 {dimension_numbers = #tpu.dot_dimension_numbers<[1], [0], [0], [1], [0, 0, 1, 1], [], []>} : vector<1x128xf32>, vector<128x768xf32>, vector<1x768xf32> -> vector<1x768xf32>
    %82 = arith.addf %79, %81 : vector<1x768xf32>
    %83 = vector.extract_strided_slice %82 {offsets = [0, 0], sizes = [1, 128], strides = [1, 1]} : vector<1x768xf32> to vector<1x128xf32>
    %84 = vector.extract_strided_slice %82 {offsets = [0, 128], sizes = [1, 128], strides = [1, 1]} : vector<1x768xf32> to vector<1x128xf32>
    %85 = vector.extract_strided_slice %82 {offsets = [0, 256], sizes = [1, 16], strides = [1, 1]} : vector<1x768xf32> to vector<1x16xf32>
    %86 = vector.extract_strided_slice %82 {offsets = [0, 384], sizes = [1, 16], strides = [1, 1]} : vector<1x768xf32> to vector<1x16xf32>
    %87 = vector.extract_strided_slice %82 {offsets = [0, 512], sizes = [1, 1], strides = [1, 1]} : vector<1x768xf32> to vector<1x1xf32>
    %88 = vector.extract_strided_slice %82 {offsets = [0, 640], sizes = [1, 1], strides = [1, 1]} : vector<1x768xf32> to vector<1x1xf32>
    %89 = arith.negf %87 : vector<1x1xf32>
    %90 = math.exp %89 : vector<1x1xf32>
    %cst_31 = arith.constant 1.000000e+00 : f32
    %91 = vector.broadcast %cst_31 : f32 to vector<1x1xf32>
    %92 = arith.addf %91, %90 : vector<1x1xf32>
    %93 = arith.divf %91, %92 : vector<1x1xf32>
    %cst_32 = arith.constant dense<0xFF800000> : vector<1xf32>
    %94 = vector.multi_reduction <maximumf>, %85, %cst_32 [1] : vector<1x16xf32> to vector<1xf32>
    %95 = vector.shape_cast %94 : vector<1xf32> to vector<1x1xf32>
    %96 = vector.broadcast %95 : vector<1x1xf32> to vector<1x16xf32>
    %97 = arith.subf %85, %96 : vector<1x16xf32>
    %98 = math.exp %97 : vector<1x16xf32>
    %cst_33 = arith.constant dense<0.000000e+00> : vector<1xf32>
    %99 = vector.multi_reduction <add>, %98, %cst_33 [1] : vector<1x16xf32> to vector<1xf32>
    %100 = vector.shape_cast %99 : vector<1xf32> to vector<1x1xf32>
    %101 = tpu.reciprocal %100 {approx = true} : vector<1x1xf32> -> vector<1x1xf32>
    %102 = vector.broadcast %101 : vector<1x1xf32> to vector<1x16xf32>
    %103 = arith.mulf %98, %102 : vector<1x16xf32>
    %104 = vector.broadcast %93 : vector<1x1xf32> to vector<1x16xf32>
    %105 = arith.mulf %104, %103 : vector<1x16xf32>
    %cst_34 = arith.constant dense<0.000000e+00> : vector<1x128xf32>
    %106 = tpu.matmul %105, %75, %cst_34 {dimension_numbers = #tpu.dot_dimension_numbers<[1], [0], [0], [1], [0, 0, 1, 1], [], []>} : vector<1x16xf32>, vector<16x128xf32>, vector<1x128xf32> -> vector<1x128xf32>
    %c0_35 = arith.constant 0 : index
    %c0_36 = arith.constant 0 : index
    %107 = vector.load %arg4[%c0_35, %c0_36] : memref<128x128xf32, #tpu.memory_space<vmem>>, vector<128x128xf32>
    %cst_37 = arith.constant dense<0.000000e+00> : vector<1x128xf32>
    %108 = tpu.matmul %106, %107, %cst_37 {dimension_numbers = #tpu.dot_dimension_numbers<[1], [0], [0], [1], [0, 0, 1, 1], [], []>} : vector<1x128xf32>, vector<128x128xf32>, vector<1x128xf32> -> vector<1x128xf32>
    %109 = arith.addf %83, %108 : vector<1x128xf32>
    %cst_38 = arith.constant 0.000000e+00 : f32
    %110 = vector.broadcast %cst_38 : f32 to vector<1x128xf32>
    %111 = arith.maximumf %109, %110 : vector<1x128xf32>
    %cst_39 = arith.constant 0.000000e+00 : f32
    %112 = vector.broadcast %cst_39 : f32 to vector<1x128xf32>
    %113 = arith.maximumf %84, %112 : vector<1x128xf32>
    %cst_40 = arith.constant dense<0xFF800000> : vector<1xf32>
    %114 = vector.multi_reduction <maximumf>, %86, %cst_40 [1] : vector<1x16xf32> to vector<1xf32>
    %115 = vector.shape_cast %114 : vector<1xf32> to vector<1x1xf32>
    %116 = vector.broadcast %115 : vector<1x1xf32> to vector<1x16xf32>
    %117 = arith.subf %86, %116 : vector<1x16xf32>
    %118 = math.exp %117 : vector<1x16xf32>
    %cst_41 = arith.constant dense<0.000000e+00> : vector<1xf32>
    %119 = vector.multi_reduction <add>, %118, %cst_41 [1] : vector<1x16xf32> to vector<1xf32>
    %120 = vector.shape_cast %119 : vector<1xf32> to vector<1x1xf32>
    %121 = tpu.reciprocal %120 {approx = true} : vector<1x1xf32> -> vector<1x1xf32>
    %122 = vector.broadcast %121 : vector<1x1xf32> to vector<1x16xf32>
    %123 = arith.mulf %118, %122 : vector<1x16xf32>
    %124 = arith.negf %88 : vector<1x1xf32>
    %125 = math.exp %124 : vector<1x1xf32>
    %cst_42 = arith.constant 1.000000e+00 : f32
    %126 = vector.broadcast %cst_42 : f32 to vector<1x1xf32>
    %127 = arith.addf %126, %125 : vector<1x1xf32>
    %128 = arith.divf %126, %127 : vector<1x1xf32>
    %129 = vector.broadcast %123 : vector<1x16xf32> to vector<16x16xf32>
    %130 = arith.mulf %129, %11 : vector<16x16xf32>
    %cst_43 = arith.constant dense<0.000000e+00> : vector<16xf32>
    %131 = vector.multi_reduction <add>, %130, %cst_43 [1] : vector<16x16xf32> to vector<16xf32>
    %132 = vector.shape_cast %131 : vector<16xf32> to vector<16x1xf32>
    %133 = vector.broadcast %128 : vector<1x1xf32> to vector<1x128xf32>
    %134 = arith.mulf %133, %113 : vector<1x128xf32>
    %135 = vector.broadcast %134 : vector<1x128xf32> to vector<16x128xf32>
    %136 = arith.subf %135, %75 : vector<16x128xf32>
    %137 = vector.broadcast %132 : vector<16x1xf32> to vector<16x128xf32>
    %138 = arith.mulf %137, %136 : vector<16x128xf32>
    %139 = arith.addf %75, %138 : vector<16x128xf32>
    %140 = arith.index_cast %c1_i32 : i32 to index
    %c0_44 = arith.constant 0 : index
    %141 = vector.load %arg5[%140, %c0_44] : memref<8x128xf32, #tpu.memory_space<vmem>>, vector<1x128xf32>
    tpu.vector_store %arg5[%140, %c0_44], %111 {strides = array<i32>} : memref<8x128xf32, #tpu.memory_space<vmem>>, vector<1x128xf32>,
    %c2_i32 = arith.constant 2 : i32
    %142 = arith.index_cast %c2_i32 : i32 to index
    %c0_45 = arith.constant 0 : index
    %143 = vector.load %arg6[%142, %c0_45] : memref<8x768xf32, #tpu.memory_space<vmem>>, vector<1x768xf32>
    %c0_46 = arith.constant 0 : index
    %c0_47 = arith.constant 0 : index
    %144 = vector.load %arg2[%c0_46, %c0_47] : memref<128x768xf32, #tpu.memory_space<vmem>>, vector<128x768xf32>
    %cst_48 = arith.constant dense<0.000000e+00> : vector<1x768xf32>
    %145 = tpu.matmul %111, %144, %cst_48 {dimension_numbers = #tpu.dot_dimension_numbers<[1], [0], [0], [1], [0, 0, 1, 1], [], []>} : vector<1x128xf32>, vector<128x768xf32>, vector<1x768xf32> -> vector<1x768xf32>
    %146 = arith.addf %143, %145 : vector<1x768xf32>
    %147 = vector.extract_strided_slice %146 {offsets = [0, 0], sizes = [1, 128], strides = [1, 1]} : vector<1x768xf32> to vector<1x128xf32>
    %148 = vector.extract_strided_slice %146 {offsets = [0, 128], sizes = [1, 128], strides = [1, 1]} : vector<1x768xf32> to vector<1x128xf32>
    %149 = vector.extract_strided_slice %146 {offsets = [0, 256], sizes = [1, 16], strides = [1, 1]} : vector<1x768xf32> to vector<1x16xf32>
    %150 = vector.extract_strided_slice %146 {offsets = [0, 384], sizes = [1, 16], strides = [1, 1]} : vector<1x768xf32> to vector<1x16xf32>
    %151 = vector.extract_strided_slice %146 {offsets = [0, 512], sizes = [1, 1], strides = [1, 1]} : vector<1x768xf32> to vector<1x1xf32>
    %152 = vector.extract_strided_slice %146 {offsets = [0, 640], sizes = [1, 1], strides = [1, 1]} : vector<1x768xf32> to vector<1x1xf32>
    %153 = arith.negf %151 : vector<1x1xf32>
    %154 = math.exp %153 : vector<1x1xf32>
    %cst_49 = arith.constant 1.000000e+00 : f32
    %155 = vector.broadcast %cst_49 : f32 to vector<1x1xf32>
    %156 = arith.addf %155, %154 : vector<1x1xf32>
    %157 = arith.divf %155, %156 : vector<1x1xf32>
    %cst_50 = arith.constant dense<0xFF800000> : vector<1xf32>
    %158 = vector.multi_reduction <maximumf>, %149, %cst_50 [1] : vector<1x16xf32> to vector<1xf32>
    %159 = vector.shape_cast %158 : vector<1xf32> to vector<1x1xf32>
    %160 = vector.broadcast %159 : vector<1x1xf32> to vector<1x16xf32>
    %161 = arith.subf %149, %160 : vector<1x16xf32>
    %162 = math.exp %161 : vector<1x16xf32>
    %cst_51 = arith.constant dense<0.000000e+00> : vector<1xf32>
    %163 = vector.multi_reduction <add>, %162, %cst_51 [1] : vector<1x16xf32> to vector<1xf32>
    %164 = vector.shape_cast %163 : vector<1xf32> to vector<1x1xf32>
    %165 = tpu.reciprocal %164 {approx = true} : vector<1x1xf32> -> vector<1x1xf32>
    %166 = vector.broadcast %165 : vector<1x1xf32> to vector<1x16xf32>
    %167 = arith.mulf %162, %166 : vector<1x16xf32>
    %168 = vector.broadcast %157 : vector<1x1xf32> to vector<1x16xf32>
    %169 = arith.mulf %168, %167 : vector<1x16xf32>
    %cst_52 = arith.constant dense<0.000000e+00> : vector<1x128xf32>
    %170 = tpu.matmul %169, %139, %cst_52 {dimension_numbers = #tpu.dot_dimension_numbers<[1], [0], [0], [1], [0, 0, 1, 1], [], []>} : vector<1x16xf32>, vector<16x128xf32>, vector<1x128xf32> -> vector<1x128xf32>
    %c0_53 = arith.constant 0 : index
    %c0_54 = arith.constant 0 : index
    %171 = vector.load %arg4[%c0_53, %c0_54] : memref<128x128xf32, #tpu.memory_space<vmem>>, vector<128x128xf32>
    %cst_55 = arith.constant dense<0.000000e+00> : vector<1x128xf32>
    %172 = tpu.matmul %170, %171, %cst_55 {dimension_numbers = #tpu.dot_dimension_numbers<[1], [0], [0], [1], [0, 0, 1, 1], [], []>} : vector<1x128xf32>, vector<128x128xf32>, vector<1x128xf32> -> vector<1x128xf32>
    %173 = arith.addf %147, %172 : vector<1x128xf32>
    %cst_56 = arith.constant 0.000000e+00 : f32
    %174 = vector.broadcast %cst_56 : f32 to vector<1x128xf32>
    %175 = arith.maximumf %173, %174 : vector<1x128xf32>
    %cst_57 = arith.constant 0.000000e+00 : f32
    %176 = vector.broadcast %cst_57 : f32 to vector<1x128xf32>
    %177 = arith.maximumf %148, %176 : vector<1x128xf32>
    %cst_58 = arith.constant dense<0xFF800000> : vector<1xf32>
    %178 = vector.multi_reduction <maximumf>, %150, %cst_58 [1] : vector<1x16xf32> to vector<1xf32>
    %179 = vector.shape_cast %178 : vector<1xf32> to vector<1x1xf32>
    %180 = vector.broadcast %179 : vector<1x1xf32> to vector<1x16xf32>
    %181 = arith.subf %150, %180 : vector<1x16xf32>
    %182 = math.exp %181 : vector<1x16xf32>
    %cst_59 = arith.constant dense<0.000000e+00> : vector<1xf32>
    %183 = vector.multi_reduction <add>, %182, %cst_59 [1] : vector<1x16xf32> to vector<1xf32>
    %184 = vector.shape_cast %183 : vector<1xf32> to vector<1x1xf32>
    %185 = tpu.reciprocal %184 {approx = true} : vector<1x1xf32> -> vector<1x1xf32>
    %186 = vector.broadcast %185 : vector<1x1xf32> to vector<1x16xf32>
    %187 = arith.mulf %182, %186 : vector<1x16xf32>
    %188 = arith.negf %152 : vector<1x1xf32>
    %189 = math.exp %188 : vector<1x1xf32>
    %cst_60 = arith.constant 1.000000e+00 : f32
    %190 = vector.broadcast %cst_60 : f32 to vector<1x1xf32>
    %191 = arith.addf %190, %189 : vector<1x1xf32>
    %192 = arith.divf %190, %191 : vector<1x1xf32>
    %193 = vector.broadcast %187 : vector<1x16xf32> to vector<16x16xf32>
    %194 = arith.mulf %193, %11 : vector<16x16xf32>
    %cst_61 = arith.constant dense<0.000000e+00> : vector<16xf32>
    %195 = vector.multi_reduction <add>, %194, %cst_61 [1] : vector<16x16xf32> to vector<16xf32>
    %196 = vector.shape_cast %195 : vector<16xf32> to vector<16x1xf32>
    %197 = vector.broadcast %192 : vector<1x1xf32> to vector<1x128xf32>
    %198 = arith.mulf %197, %177 : vector<1x128xf32>
    %199 = vector.broadcast %198 : vector<1x128xf32> to vector<16x128xf32>
    %200 = arith.subf %199, %139 : vector<16x128xf32>
    %201 = vector.broadcast %196 : vector<16x1xf32> to vector<16x128xf32>
    %202 = arith.mulf %201, %200 : vector<16x128xf32>
    %203 = arith.addf %139, %202 : vector<16x128xf32>
    %204 = arith.index_cast %c2_i32 : i32 to index
    %c0_62 = arith.constant 0 : index
    %205 = vector.load %arg5[%204, %c0_62] : memref<8x128xf32, #tpu.memory_space<vmem>>, vector<1x128xf32>
    tpu.vector_store %arg5[%204, %c0_62], %175 {strides = array<i32>} : memref<8x128xf32, #tpu.memory_space<vmem>>, vector<1x128xf32>,
    %c3_i32 = arith.constant 3 : i32
    %206 = arith.index_cast %c3_i32 : i32 to index
    %c0_63 = arith.constant 0 : index
    %207 = vector.load %arg6[%206, %c0_63] : memref<8x768xf32, #tpu.memory_space<vmem>>, vector<1x768xf32>
    %c0_64 = arith.constant 0 : index
    %c0_65 = arith.constant 0 : index
    %208 = vector.load %arg2[%c0_64, %c0_65] : memref<128x768xf32, #tpu.memory_space<vmem>>, vector<128x768xf32>
    %cst_66 = arith.constant dense<0.000000e+00> : vector<1x768xf32>
    %209 = tpu.matmul %175, %208, %cst_66 {dimension_numbers = #tpu.dot_dimension_numbers<[1], [0], [0], [1], [0, 0, 1, 1], [], []>} : vector<1x128xf32>, vector<128x768xf32>, vector<1x768xf32> -> vector<1x768xf32>
    %210 = arith.addf %207, %209 : vector<1x768xf32>
    %211 = vector.extract_strided_slice %210 {offsets = [0, 0], sizes = [1, 128], strides = [1, 1]} : vector<1x768xf32> to vector<1x128xf32>
    %212 = vector.extract_strided_slice %210 {offsets = [0, 128], sizes = [1, 128], strides = [1, 1]} : vector<1x768xf32> to vector<1x128xf32>
    %213 = vector.extract_strided_slice %210 {offsets = [0, 256], sizes = [1, 16], strides = [1, 1]} : vector<1x768xf32> to vector<1x16xf32>
    %214 = vector.extract_strided_slice %210 {offsets = [0, 384], sizes = [1, 16], strides = [1, 1]} : vector<1x768xf32> to vector<1x16xf32>
    %215 = vector.extract_strided_slice %210 {offsets = [0, 512], sizes = [1, 1], strides = [1, 1]} : vector<1x768xf32> to vector<1x1xf32>
    %216 = vector.extract_strided_slice %210 {offsets = [0, 640], sizes = [1, 1], strides = [1, 1]} : vector<1x768xf32> to vector<1x1xf32>
    %217 = arith.negf %215 : vector<1x1xf32>
    %218 = math.exp %217 : vector<1x1xf32>
    %cst_67 = arith.constant 1.000000e+00 : f32
    %219 = vector.broadcast %cst_67 : f32 to vector<1x1xf32>
    %220 = arith.addf %219, %218 : vector<1x1xf32>
    %221 = arith.divf %219, %220 : vector<1x1xf32>
    %cst_68 = arith.constant dense<0xFF800000> : vector<1xf32>
    %222 = vector.multi_reduction <maximumf>, %213, %cst_68 [1] : vector<1x16xf32> to vector<1xf32>
    %223 = vector.shape_cast %222 : vector<1xf32> to vector<1x1xf32>
    %224 = vector.broadcast %223 : vector<1x1xf32> to vector<1x16xf32>
    %225 = arith.subf %213, %224 : vector<1x16xf32>
    %226 = math.exp %225 : vector<1x16xf32>
    %cst_69 = arith.constant dense<0.000000e+00> : vector<1xf32>
    %227 = vector.multi_reduction <add>, %226, %cst_69 [1] : vector<1x16xf32> to vector<1xf32>
    %228 = vector.shape_cast %227 : vector<1xf32> to vector<1x1xf32>
    %229 = tpu.reciprocal %228 {approx = true} : vector<1x1xf32> -> vector<1x1xf32>
    %230 = vector.broadcast %229 : vector<1x1xf32> to vector<1x16xf32>
    %231 = arith.mulf %226, %230 : vector<1x16xf32>
    %232 = vector.broadcast %221 : vector<1x1xf32> to vector<1x16xf32>
    %233 = arith.mulf %232, %231 : vector<1x16xf32>
    %cst_70 = arith.constant dense<0.000000e+00> : vector<1x128xf32>
    %234 = tpu.matmul %233, %203, %cst_70 {dimension_numbers = #tpu.dot_dimension_numbers<[1], [0], [0], [1], [0, 0, 1, 1], [], []>} : vector<1x16xf32>, vector<16x128xf32>, vector<1x128xf32> -> vector<1x128xf32>
    %c0_71 = arith.constant 0 : index
    %c0_72 = arith.constant 0 : index
    %235 = vector.load %arg4[%c0_71, %c0_72] : memref<128x128xf32, #tpu.memory_space<vmem>>, vector<128x128xf32>
    %cst_73 = arith.constant dense<0.000000e+00> : vector<1x128xf32>
    %236 = tpu.matmul %234, %235, %cst_73 {dimension_numbers = #tpu.dot_dimension_numbers<[1], [0], [0], [1], [0, 0, 1, 1], [], []>} : vector<1x128xf32>, vector<128x128xf32>, vector<1x128xf32> -> vector<1x128xf32>
    %237 = arith.addf %211, %236 : vector<1x128xf32>
    %cst_74 = arith.constant 0.000000e+00 : f32
    %238 = vector.broadcast %cst_74 : f32 to vector<1x128xf32>
    %239 = arith.maximumf %237, %238 : vector<1x128xf32>
    %cst_75 = arith.constant 0.000000e+00 : f32
    %240 = vector.broadcast %cst_75 : f32 to vector<1x128xf32>
    %241 = arith.maximumf %212, %240 : vector<1x128xf32>
    %cst_76 = arith.constant dense<0xFF800000> : vector<1xf32>
    %242 = vector.multi_reduction <maximumf>, %214, %cst_76 [1] : vector<1x16xf32> to vector<1xf32>
    %243 = vector.shape_cast %242 : vector<1xf32> to vector<1x1xf32>
    %244 = vector.broadcast %243 : vector<1x1xf32> to vector<1x16xf32>
    %245 = arith.subf %214, %244 : vector<1x16xf32>
    %246 = math.exp %245 : vector<1x16xf32>
    %cst_77 = arith.constant dense<0.000000e+00> : vector<1xf32>
    %247 = vector.multi_reduction <add>, %246, %cst_77 [1] : vector<1x16xf32> to vector<1xf32>
    %248 = vector.shape_cast %247 : vector<1xf32> to vector<1x1xf32>
    %249 = tpu.reciprocal %248 {approx = true} : vector<1x1xf32> -> vector<1x1xf32>
    %250 = vector.broadcast %249 : vector<1x1xf32> to vector<1x16xf32>
    %251 = arith.mulf %246, %250 : vector<1x16xf32>
    %252 = arith.negf %216 : vector<1x1xf32>
    %253 = math.exp %252 : vector<1x1xf32>
    %cst_78 = arith.constant 1.000000e+00 : f32
    %254 = vector.broadcast %cst_78 : f32 to vector<1x1xf32>
    %255 = arith.addf %254, %253 : vector<1x1xf32>
    %256 = arith.divf %254, %255 : vector<1x1xf32>
    %257 = vector.broadcast %251 : vector<1x16xf32> to vector<16x16xf32>
    %258 = arith.mulf %257, %11 : vector<16x16xf32>
    %cst_79 = arith.constant dense<0.000000e+00> : vector<16xf32>
    %259 = vector.multi_reduction <add>, %258, %cst_79 [1] : vector<16x16xf32> to vector<16xf32>
    %260 = vector.shape_cast %259 : vector<16xf32> to vector<16x1xf32>
    %261 = vector.broadcast %256 : vector<1x1xf32> to vector<1x128xf32>
    %262 = arith.mulf %261, %241 : vector<1x128xf32>
    %263 = vector.broadcast %262 : vector<1x128xf32> to vector<16x128xf32>
    %264 = arith.subf %263, %203 : vector<16x128xf32>
    %265 = vector.broadcast %260 : vector<16x1xf32> to vector<16x128xf32>
    %266 = arith.mulf %265, %264 : vector<16x128xf32>
    %267 = arith.addf %203, %266 : vector<16x128xf32>
    %268 = arith.index_cast %c3_i32 : i32 to index
    %c0_80 = arith.constant 0 : index
    %269 = vector.load %arg5[%268, %c0_80] : memref<8x128xf32, #tpu.memory_space<vmem>>, vector<1x128xf32>
    tpu.vector_store %arg5[%268, %c0_80], %239 {strides = array<i32>} : memref<8x128xf32, #tpu.memory_space<vmem>>, vector<1x128xf32>,
    %c4_i32 = arith.constant 4 : i32
    %270 = arith.index_cast %c4_i32 : i32 to index
    %c0_81 = arith.constant 0 : index
    %271 = vector.load %arg6[%270, %c0_81] : memref<8x768xf32, #tpu.memory_space<vmem>>, vector<1x768xf32>
    %c0_82 = arith.constant 0 : index
    %c0_83 = arith.constant 0 : index
    %272 = vector.load %arg2[%c0_82, %c0_83] : memref<128x768xf32, #tpu.memory_space<vmem>>, vector<128x768xf32>
    %cst_84 = arith.constant dense<0.000000e+00> : vector<1x768xf32>
    %273 = tpu.matmul %239, %272, %cst_84 {dimension_numbers = #tpu.dot_dimension_numbers<[1], [0], [0], [1], [0, 0, 1, 1], [], []>} : vector<1x128xf32>, vector<128x768xf32>, vector<1x768xf32> -> vector<1x768xf32>
    %274 = arith.addf %271, %273 : vector<1x768xf32>
    %275 = vector.extract_strided_slice %274 {offsets = [0, 0], sizes = [1, 128], strides = [1, 1]} : vector<1x768xf32> to vector<1x128xf32>
    %276 = vector.extract_strided_slice %274 {offsets = [0, 128], sizes = [1, 128], strides = [1, 1]} : vector<1x768xf32> to vector<1x128xf32>
    %277 = vector.extract_strided_slice %274 {offsets = [0, 256], sizes = [1, 16], strides = [1, 1]} : vector<1x768xf32> to vector<1x16xf32>
    %278 = vector.extract_strided_slice %274 {offsets = [0, 384], sizes = [1, 16], strides = [1, 1]} : vector<1x768xf32> to vector<1x16xf32>
    %279 = vector.extract_strided_slice %274 {offsets = [0, 512], sizes = [1, 1], strides = [1, 1]} : vector<1x768xf32> to vector<1x1xf32>
    %280 = vector.extract_strided_slice %274 {offsets = [0, 640], sizes = [1, 1], strides = [1, 1]} : vector<1x768xf32> to vector<1x1xf32>
    %281 = arith.negf %279 : vector<1x1xf32>
    %282 = math.exp %281 : vector<1x1xf32>
    %cst_85 = arith.constant 1.000000e+00 : f32
    %283 = vector.broadcast %cst_85 : f32 to vector<1x1xf32>
    %284 = arith.addf %283, %282 : vector<1x1xf32>
    %285 = arith.divf %283, %284 : vector<1x1xf32>
    %cst_86 = arith.constant dense<0xFF800000> : vector<1xf32>
    %286 = vector.multi_reduction <maximumf>, %277, %cst_86 [1] : vector<1x16xf32> to vector<1xf32>
    %287 = vector.shape_cast %286 : vector<1xf32> to vector<1x1xf32>
    %288 = vector.broadcast %287 : vector<1x1xf32> to vector<1x16xf32>
    %289 = arith.subf %277, %288 : vector<1x16xf32>
    %290 = math.exp %289 : vector<1x16xf32>
    %cst_87 = arith.constant dense<0.000000e+00> : vector<1xf32>
    %291 = vector.multi_reduction <add>, %290, %cst_87 [1] : vector<1x16xf32> to vector<1xf32>
    %292 = vector.shape_cast %291 : vector<1xf32> to vector<1x1xf32>
    %293 = tpu.reciprocal %292 {approx = true} : vector<1x1xf32> -> vector<1x1xf32>
    %294 = vector.broadcast %293 : vector<1x1xf32> to vector<1x16xf32>
    %295 = arith.mulf %290, %294 : vector<1x16xf32>
    %296 = vector.broadcast %285 : vector<1x1xf32> to vector<1x16xf32>
    %297 = arith.mulf %296, %295 : vector<1x16xf32>
    %cst_88 = arith.constant dense<0.000000e+00> : vector<1x128xf32>
    %298 = tpu.matmul %297, %267, %cst_88 {dimension_numbers = #tpu.dot_dimension_numbers<[1], [0], [0], [1], [0, 0, 1, 1], [], []>} : vector<1x16xf32>, vector<16x128xf32>, vector<1x128xf32> -> vector<1x128xf32>
    %c0_89 = arith.constant 0 : index
    %c0_90 = arith.constant 0 : index
    %299 = vector.load %arg4[%c0_89, %c0_90] : memref<128x128xf32, #tpu.memory_space<vmem>>, vector<128x128xf32>
    %cst_91 = arith.constant dense<0.000000e+00> : vector<1x128xf32>
    %300 = tpu.matmul %298, %299, %cst_91 {dimension_numbers = #tpu.dot_dimension_numbers<[1], [0], [0], [1], [0, 0, 1, 1], [], []>} : vector<1x128xf32>, vector<128x128xf32>, vector<1x128xf32> -> vector<1x128xf32>
    %301 = arith.addf %275, %300 : vector<1x128xf32>
    %cst_92 = arith.constant 0.000000e+00 : f32
    %302 = vector.broadcast %cst_92 : f32 to vector<1x128xf32>
    %303 = arith.maximumf %301, %302 : vector<1x128xf32>
    %cst_93 = arith.constant 0.000000e+00 : f32
    %304 = vector.broadcast %cst_93 : f32 to vector<1x128xf32>
    %305 = arith.maximumf %276, %304 : vector<1x128xf32>
    %cst_94 = arith.constant dense<0xFF800000> : vector<1xf32>
    %306 = vector.multi_reduction <maximumf>, %278, %cst_94 [1] : vector<1x16xf32> to vector<1xf32>
    %307 = vector.shape_cast %306 : vector<1xf32> to vector<1x1xf32>
    %308 = vector.broadcast %307 : vector<1x1xf32> to vector<1x16xf32>
    %309 = arith.subf %278, %308 : vector<1x16xf32>
    %310 = math.exp %309 : vector<1x16xf32>
    %cst_95 = arith.constant dense<0.000000e+00> : vector<1xf32>
    %311 = vector.multi_reduction <add>, %310, %cst_95 [1] : vector<1x16xf32> to vector<1xf32>
    %312 = vector.shape_cast %311 : vector<1xf32> to vector<1x1xf32>
    %313 = tpu.reciprocal %312 {approx = true} : vector<1x1xf32> -> vector<1x1xf32>
    %314 = vector.broadcast %313 : vector<1x1xf32> to vector<1x16xf32>
    %315 = arith.mulf %310, %314 : vector<1x16xf32>
    %316 = arith.negf %280 : vector<1x1xf32>
    %317 = math.exp %316 : vector<1x1xf32>
    %cst_96 = arith.constant 1.000000e+00 : f32
    %318 = vector.broadcast %cst_96 : f32 to vector<1x1xf32>
    %319 = arith.addf %318, %317 : vector<1x1xf32>
    %320 = arith.divf %318, %319 : vector<1x1xf32>
    %321 = vector.broadcast %315 : vector<1x16xf32> to vector<16x16xf32>
    %322 = arith.mulf %321, %11 : vector<16x16xf32>
    %cst_97 = arith.constant dense<0.000000e+00> : vector<16xf32>
    %323 = vector.multi_reduction <add>, %322, %cst_97 [1] : vector<16x16xf32> to vector<16xf32>
    %324 = vector.shape_cast %323 : vector<16xf32> to vector<16x1xf32>
    %325 = vector.broadcast %320 : vector<1x1xf32> to vector<1x128xf32>
    %326 = arith.mulf %325, %305 : vector<1x128xf32>
    %327 = vector.broadcast %326 : vector<1x128xf32> to vector<16x128xf32>
    %328 = arith.subf %327, %267 : vector<16x128xf32>
    %329 = vector.broadcast %324 : vector<16x1xf32> to vector<16x128xf32>
    %330 = arith.mulf %329, %328 : vector<16x128xf32>
    %331 = arith.addf %267, %330 : vector<16x128xf32>
    %332 = arith.index_cast %c4_i32 : i32 to index
    %c0_98 = arith.constant 0 : index
    %333 = vector.load %arg5[%332, %c0_98] : memref<8x128xf32, #tpu.memory_space<vmem>>, vector<1x128xf32>
    tpu.vector_store %arg5[%332, %c0_98], %303 {strides = array<i32>} : memref<8x128xf32, #tpu.memory_space<vmem>>, vector<1x128xf32>,
    %c5_i32 = arith.constant 5 : i32
    %334 = arith.index_cast %c5_i32 : i32 to index
    %c0_99 = arith.constant 0 : index
    %335 = vector.load %arg6[%334, %c0_99] : memref<8x768xf32, #tpu.memory_space<vmem>>, vector<1x768xf32>
    %c0_100 = arith.constant 0 : index
    %c0_101 = arith.constant 0 : index
    %336 = vector.load %arg2[%c0_100, %c0_101] : memref<128x768xf32, #tpu.memory_space<vmem>>, vector<128x768xf32>
    %cst_102 = arith.constant dense<0.000000e+00> : vector<1x768xf32>
    %337 = tpu.matmul %303, %336, %cst_102 {dimension_numbers = #tpu.dot_dimension_numbers<[1], [0], [0], [1], [0, 0, 1, 1], [], []>} : vector<1x128xf32>, vector<128x768xf32>, vector<1x768xf32> -> vector<1x768xf32>
    %338 = arith.addf %335, %337 : vector<1x768xf32>
    %339 = vector.extract_strided_slice %338 {offsets = [0, 0], sizes = [1, 128], strides = [1, 1]} : vector<1x768xf32> to vector<1x128xf32>
    %340 = vector.extract_strided_slice %338 {offsets = [0, 128], sizes = [1, 128], strides = [1, 1]} : vector<1x768xf32> to vector<1x128xf32>
    %341 = vector.extract_strided_slice %338 {offsets = [0, 256], sizes = [1, 16], strides = [1, 1]} : vector<1x768xf32> to vector<1x16xf32>
    %342 = vector.extract_strided_slice %338 {offsets = [0, 384], sizes = [1, 16], strides = [1, 1]} : vector<1x768xf32> to vector<1x16xf32>
    %343 = vector.extract_strided_slice %338 {offsets = [0, 512], sizes = [1, 1], strides = [1, 1]} : vector<1x768xf32> to vector<1x1xf32>
    %344 = vector.extract_strided_slice %338 {offsets = [0, 640], sizes = [1, 1], strides = [1, 1]} : vector<1x768xf32> to vector<1x1xf32>
    %345 = arith.negf %343 : vector<1x1xf32>
    %346 = math.exp %345 : vector<1x1xf32>
    %cst_103 = arith.constant 1.000000e+00 : f32
    %347 = vector.broadcast %cst_103 : f32 to vector<1x1xf32>
    %348 = arith.addf %347, %346 : vector<1x1xf32>
    %349 = arith.divf %347, %348 : vector<1x1xf32>
    %cst_104 = arith.constant dense<0xFF800000> : vector<1xf32>
    %350 = vector.multi_reduction <maximumf>, %341, %cst_104 [1] : vector<1x16xf32> to vector<1xf32>
    %351 = vector.shape_cast %350 : vector<1xf32> to vector<1x1xf32>
    %352 = vector.broadcast %351 : vector<1x1xf32> to vector<1x16xf32>
    %353 = arith.subf %341, %352 : vector<1x16xf32>
    %354 = math.exp %353 : vector<1x16xf32>
    %cst_105 = arith.constant dense<0.000000e+00> : vector<1xf32>
    %355 = vector.multi_reduction <add>, %354, %cst_105 [1] : vector<1x16xf32> to vector<1xf32>
    %356 = vector.shape_cast %355 : vector<1xf32> to vector<1x1xf32>
    %357 = tpu.reciprocal %356 {approx = true} : vector<1x1xf32> -> vector<1x1xf32>
    %358 = vector.broadcast %357 : vector<1x1xf32> to vector<1x16xf32>
    %359 = arith.mulf %354, %358 : vector<1x16xf32>
    %360 = vector.broadcast %349 : vector<1x1xf32> to vector<1x16xf32>
    %361 = arith.mulf %360, %359 : vector<1x16xf32>
    %cst_106 = arith.constant dense<0.000000e+00> : vector<1x128xf32>
    %362 = tpu.matmul %361, %331, %cst_106 {dimension_numbers = #tpu.dot_dimension_numbers<[1], [0], [0], [1], [0, 0, 1, 1], [], []>} : vector<1x16xf32>, vector<16x128xf32>, vector<1x128xf32> -> vector<1x128xf32>
    %c0_107 = arith.constant 0 : index
    %c0_108 = arith.constant 0 : index
    %363 = vector.load %arg4[%c0_107, %c0_108] : memref<128x128xf32, #tpu.memory_space<vmem>>, vector<128x128xf32>
    %cst_109 = arith.constant dense<0.000000e+00> : vector<1x128xf32>
    %364 = tpu.matmul %362, %363, %cst_109 {dimension_numbers = #tpu.dot_dimension_numbers<[1], [0], [0], [1], [0, 0, 1, 1], [], []>} : vector<1x128xf32>, vector<128x128xf32>, vector<1x128xf32> -> vector<1x128xf32>
    %365 = arith.addf %339, %364 : vector<1x128xf32>
    %cst_110 = arith.constant 0.000000e+00 : f32
    %366 = vector.broadcast %cst_110 : f32 to vector<1x128xf32>
    %367 = arith.maximumf %365, %366 : vector<1x128xf32>
    %cst_111 = arith.constant 0.000000e+00 : f32
    %368 = vector.broadcast %cst_111 : f32 to vector<1x128xf32>
    %369 = arith.maximumf %340, %368 : vector<1x128xf32>
    %cst_112 = arith.constant dense<0xFF800000> : vector<1xf32>
    %370 = vector.multi_reduction <maximumf>, %342, %cst_112 [1] : vector<1x16xf32> to vector<1xf32>
    %371 = vector.shape_cast %370 : vector<1xf32> to vector<1x1xf32>
    %372 = vector.broadcast %371 : vector<1x1xf32> to vector<1x16xf32>
    %373 = arith.subf %342, %372 : vector<1x16xf32>
    %374 = math.exp %373 : vector<1x16xf32>
    %cst_113 = arith.constant dense<0.000000e+00> : vector<1xf32>
    %375 = vector.multi_reduction <add>, %374, %cst_113 [1] : vector<1x16xf32> to vector<1xf32>
    %376 = vector.shape_cast %375 : vector<1xf32> to vector<1x1xf32>
    %377 = tpu.reciprocal %376 {approx = true} : vector<1x1xf32> -> vector<1x1xf32>
    %378 = vector.broadcast %377 : vector<1x1xf32> to vector<1x16xf32>
    %379 = arith.mulf %374, %378 : vector<1x16xf32>
    %380 = arith.negf %344 : vector<1x1xf32>
    %381 = math.exp %380 : vector<1x1xf32>
    %cst_114 = arith.constant 1.000000e+00 : f32
    %382 = vector.broadcast %cst_114 : f32 to vector<1x1xf32>
    %383 = arith.addf %382, %381 : vector<1x1xf32>
    %384 = arith.divf %382, %383 : vector<1x1xf32>
    %385 = vector.broadcast %379 : vector<1x16xf32> to vector<16x16xf32>
    %386 = arith.mulf %385, %11 : vector<16x16xf32>
    %cst_115 = arith.constant dense<0.000000e+00> : vector<16xf32>
    %387 = vector.multi_reduction <add>, %386, %cst_115 [1] : vector<16x16xf32> to vector<16xf32>
    %388 = vector.shape_cast %387 : vector<16xf32> to vector<16x1xf32>
    %389 = vector.broadcast %384 : vector<1x1xf32> to vector<1x128xf32>
    %390 = arith.mulf %389, %369 : vector<1x128xf32>
    %391 = vector.broadcast %390 : vector<1x128xf32> to vector<16x128xf32>
    %392 = arith.subf %391, %331 : vector<16x128xf32>
    %393 = vector.broadcast %388 : vector<16x1xf32> to vector<16x128xf32>
    %394 = arith.mulf %393, %392 : vector<16x128xf32>
    %395 = arith.addf %331, %394 : vector<16x128xf32>
    %396 = arith.index_cast %c5_i32 : i32 to index
    %c0_116 = arith.constant 0 : index
    %397 = vector.load %arg5[%396, %c0_116] : memref<8x128xf32, #tpu.memory_space<vmem>>, vector<1x128xf32>
    tpu.vector_store %arg5[%396, %c0_116], %367 {strides = array<i32>} : memref<8x128xf32, #tpu.memory_space<vmem>>, vector<1x128xf32>,
    %c6_i32 = arith.constant 6 : i32
    %398 = arith.index_cast %c6_i32 : i32 to index
    %c0_117 = arith.constant 0 : index
    %399 = vector.load %arg6[%398, %c0_117] : memref<8x768xf32, #tpu.memory_space<vmem>>, vector<1x768xf32>
    %c0_118 = arith.constant 0 : index
    %c0_119 = arith.constant 0 : index
    %400 = vector.load %arg2[%c0_118, %c0_119] : memref<128x768xf32, #tpu.memory_space<vmem>>, vector<128x768xf32>
    %cst_120 = arith.constant dense<0.000000e+00> : vector<1x768xf32>
    %401 = tpu.matmul %367, %400, %cst_120 {dimension_numbers = #tpu.dot_dimension_numbers<[1], [0], [0], [1], [0, 0, 1, 1], [], []>} : vector<1x128xf32>, vector<128x768xf32>, vector<1x768xf32> -> vector<1x768xf32>
    %402 = arith.addf %399, %401 : vector<1x768xf32>
    %403 = vector.extract_strided_slice %402 {offsets = [0, 0], sizes = [1, 128], strides = [1, 1]} : vector<1x768xf32> to vector<1x128xf32>
    %404 = vector.extract_strided_slice %402 {offsets = [0, 128], sizes = [1, 128], strides = [1, 1]} : vector<1x768xf32> to vector<1x128xf32>
    %405 = vector.extract_strided_slice %402 {offsets = [0, 256], sizes = [1, 16], strides = [1, 1]} : vector<1x768xf32> to vector<1x16xf32>
    %406 = vector.extract_strided_slice %402 {offsets = [0, 384], sizes = [1, 16], strides = [1, 1]} : vector<1x768xf32> to vector<1x16xf32>
    %407 = vector.extract_strided_slice %402 {offsets = [0, 512], sizes = [1, 1], strides = [1, 1]} : vector<1x768xf32> to vector<1x1xf32>
    %408 = vector.extract_strided_slice %402 {offsets = [0, 640], sizes = [1, 1], strides = [1, 1]} : vector<1x768xf32> to vector<1x1xf32>
    %409 = arith.negf %407 : vector<1x1xf32>
    %410 = math.exp %409 : vector<1x1xf32>
    %cst_121 = arith.constant 1.000000e+00 : f32
    %411 = vector.broadcast %cst_121 : f32 to vector<1x1xf32>
    %412 = arith.addf %411, %410 : vector<1x1xf32>
    %413 = arith.divf %411, %412 : vector<1x1xf32>
    %cst_122 = arith.constant dense<0xFF800000> : vector<1xf32>
    %414 = vector.multi_reduction <maximumf>, %405, %cst_122 [1] : vector<1x16xf32> to vector<1xf32>
    %415 = vector.shape_cast %414 : vector<1xf32> to vector<1x1xf32>
    %416 = vector.broadcast %415 : vector<1x1xf32> to vector<1x16xf32>
    %417 = arith.subf %405, %416 : vector<1x16xf32>
    %418 = math.exp %417 : vector<1x16xf32>
    %cst_123 = arith.constant dense<0.000000e+00> : vector<1xf32>
    %419 = vector.multi_reduction <add>, %418, %cst_123 [1] : vector<1x16xf32> to vector<1xf32>
    %420 = vector.shape_cast %419 : vector<1xf32> to vector<1x1xf32>
    %421 = tpu.reciprocal %420 {approx = true} : vector<1x1xf32> -> vector<1x1xf32>
    %422 = vector.broadcast %421 : vector<1x1xf32> to vector<1x16xf32>
    %423 = arith.mulf %418, %422 : vector<1x16xf32>
    %424 = vector.broadcast %413 : vector<1x1xf32> to vector<1x16xf32>
    %425 = arith.mulf %424, %423 : vector<1x16xf32>
    %cst_124 = arith.constant dense<0.000000e+00> : vector<1x128xf32>
    %426 = tpu.matmul %425, %395, %cst_124 {dimension_numbers = #tpu.dot_dimension_numbers<[1], [0], [0], [1], [0, 0, 1, 1], [], []>} : vector<1x16xf32>, vector<16x128xf32>, vector<1x128xf32> -> vector<1x128xf32>
    %c0_125 = arith.constant 0 : index
    %c0_126 = arith.constant 0 : index
    %427 = vector.load %arg4[%c0_125, %c0_126] : memref<128x128xf32, #tpu.memory_space<vmem>>, vector<128x128xf32>
    %cst_127 = arith.constant dense<0.000000e+00> : vector<1x128xf32>
    %428 = tpu.matmul %426, %427, %cst_127 {dimension_numbers = #tpu.dot_dimension_numbers<[1], [0], [0], [1], [0, 0, 1, 1], [], []>} : vector<1x128xf32>, vector<128x128xf32>, vector<1x128xf32> -> vector<1x128xf32>
    %429 = arith.addf %403, %428 : vector<1x128xf32>
    %cst_128 = arith.constant 0.000000e+00 : f32
    %430 = vector.broadcast %cst_128 : f32 to vector<1x128xf32>
    %431 = arith.maximumf %429, %430 : vector<1x128xf32>
    %cst_129 = arith.constant 0.000000e+00 : f32
    %432 = vector.broadcast %cst_129 : f32 to vector<1x128xf32>
    %433 = arith.maximumf %404, %432 : vector<1x128xf32>
    %cst_130 = arith.constant dense<0xFF800000> : vector<1xf32>
    %434 = vector.multi_reduction <maximumf>, %406, %cst_130 [1] : vector<1x16xf32> to vector<1xf32>
    %435 = vector.shape_cast %434 : vector<1xf32> to vector<1x1xf32>
    %436 = vector.broadcast %435 : vector<1x1xf32> to vector<1x16xf32>
    %437 = arith.subf %406, %436 : vector<1x16xf32>
    %438 = math.exp %437 : vector<1x16xf32>
    %cst_131 = arith.constant dense<0.000000e+00> : vector<1xf32>
    %439 = vector.multi_reduction <add>, %438, %cst_131 [1] : vector<1x16xf32> to vector<1xf32>
    %440 = vector.shape_cast %439 : vector<1xf32> to vector<1x1xf32>
    %441 = tpu.reciprocal %440 {approx = true} : vector<1x1xf32> -> vector<1x1xf32>
    %442 = vector.broadcast %441 : vector<1x1xf32> to vector<1x16xf32>
    %443 = arith.mulf %438, %442 : vector<1x16xf32>
    %444 = arith.negf %408 : vector<1x1xf32>
    %445 = math.exp %444 : vector<1x1xf32>
    %cst_132 = arith.constant 1.000000e+00 : f32
    %446 = vector.broadcast %cst_132 : f32 to vector<1x1xf32>
    %447 = arith.addf %446, %445 : vector<1x1xf32>
    %448 = arith.divf %446, %447 : vector<1x1xf32>
    %449 = vector.broadcast %443 : vector<1x16xf32> to vector<16x16xf32>
    %450 = arith.mulf %449, %11 : vector<16x16xf32>
    %cst_133 = arith.constant dense<0.000000e+00> : vector<16xf32>
    %451 = vector.multi_reduction <add>, %450, %cst_133 [1] : vector<16x16xf32> to vector<16xf32>
    %452 = vector.shape_cast %451 : vector<16xf32> to vector<16x1xf32>
    %453 = vector.broadcast %448 : vector<1x1xf32> to vector<1x128xf32>
    %454 = arith.mulf %453, %433 : vector<1x128xf32>
    %455 = vector.broadcast %454 : vector<1x128xf32> to vector<16x128xf32>
    %456 = arith.subf %455, %395 : vector<16x128xf32>
    %457 = vector.broadcast %452 : vector<16x1xf32> to vector<16x128xf32>
    %458 = arith.mulf %457, %456 : vector<16x128xf32>
    %459 = arith.addf %395, %458 : vector<16x128xf32>
    %460 = arith.index_cast %c6_i32 : i32 to index
    %c0_134 = arith.constant 0 : index
    %461 = vector.load %arg5[%460, %c0_134] : memref<8x128xf32, #tpu.memory_space<vmem>>, vector<1x128xf32>
    tpu.vector_store %arg5[%460, %c0_134], %431 {strides = array<i32>} : memref<8x128xf32, #tpu.memory_space<vmem>>, vector<1x128xf32>,
    %c7_i32 = arith.constant 7 : i32
    %462 = arith.index_cast %c7_i32 : i32 to index
    %c0_135 = arith.constant 0 : index
    %463 = vector.load %arg6[%462, %c0_135] : memref<8x768xf32, #tpu.memory_space<vmem>>, vector<1x768xf32>
    %c0_136 = arith.constant 0 : index
    %c0_137 = arith.constant 0 : index
    %464 = vector.load %arg2[%c0_136, %c0_137] : memref<128x768xf32, #tpu.memory_space<vmem>>, vector<128x768xf32>
    %cst_138 = arith.constant dense<0.000000e+00> : vector<1x768xf32>
    %465 = tpu.matmul %431, %464, %cst_138 {dimension_numbers = #tpu.dot_dimension_numbers<[1], [0], [0], [1], [0, 0, 1, 1], [], []>} : vector<1x128xf32>, vector<128x768xf32>, vector<1x768xf32> -> vector<1x768xf32>
    %466 = arith.addf %463, %465 : vector<1x768xf32>
    %467 = vector.extract_strided_slice %466 {offsets = [0, 0], sizes = [1, 128], strides = [1, 1]} : vector<1x768xf32> to vector<1x128xf32>
    %468 = vector.extract_strided_slice %466 {offsets = [0, 128], sizes = [1, 128], strides = [1, 1]} : vector<1x768xf32> to vector<1x128xf32>
    %469 = vector.extract_strided_slice %466 {offsets = [0, 256], sizes = [1, 16], strides = [1, 1]} : vector<1x768xf32> to vector<1x16xf32>
    %470 = vector.extract_strided_slice %466 {offsets = [0, 384], sizes = [1, 16], strides = [1, 1]} : vector<1x768xf32> to vector<1x16xf32>
    %471 = vector.extract_strided_slice %466 {offsets = [0, 512], sizes = [1, 1], strides = [1, 1]} : vector<1x768xf32> to vector<1x1xf32>
    %472 = vector.extract_strided_slice %466 {offsets = [0, 640], sizes = [1, 1], strides = [1, 1]} : vector<1x768xf32> to vector<1x1xf32>
    %473 = arith.negf %471 : vector<1x1xf32>
    %474 = math.exp %473 : vector<1x1xf32>
    %cst_139 = arith.constant 1.000000e+00 : f32
    %475 = vector.broadcast %cst_139 : f32 to vector<1x1xf32>
    %476 = arith.addf %475, %474 : vector<1x1xf32>
    %477 = arith.divf %475, %476 : vector<1x1xf32>
    %cst_140 = arith.constant dense<0xFF800000> : vector<1xf32>
    %478 = vector.multi_reduction <maximumf>, %469, %cst_140 [1] : vector<1x16xf32> to vector<1xf32>
    %479 = vector.shape_cast %478 : vector<1xf32> to vector<1x1xf32>
    %480 = vector.broadcast %479 : vector<1x1xf32> to vector<1x16xf32>
    %481 = arith.subf %469, %480 : vector<1x16xf32>
    %482 = math.exp %481 : vector<1x16xf32>
    %cst_141 = arith.constant dense<0.000000e+00> : vector<1xf32>
    %483 = vector.multi_reduction <add>, %482, %cst_141 [1] : vector<1x16xf32> to vector<1xf32>
    %484 = vector.shape_cast %483 : vector<1xf32> to vector<1x1xf32>
    %485 = tpu.reciprocal %484 {approx = true} : vector<1x1xf32> -> vector<1x1xf32>
    %486 = vector.broadcast %485 : vector<1x1xf32> to vector<1x16xf32>
    %487 = arith.mulf %482, %486 : vector<1x16xf32>
    %488 = vector.broadcast %477 : vector<1x1xf32> to vector<1x16xf32>
    %489 = arith.mulf %488, %487 : vector<1x16xf32>
    %cst_142 = arith.constant dense<0.000000e+00> : vector<1x128xf32>
    %490 = tpu.matmul %489, %459, %cst_142 {dimension_numbers = #tpu.dot_dimension_numbers<[1], [0], [0], [1], [0, 0, 1, 1], [], []>} : vector<1x16xf32>, vector<16x128xf32>, vector<1x128xf32> -> vector<1x128xf32>
    %c0_143 = arith.constant 0 : index
    %c0_144 = arith.constant 0 : index
    %491 = vector.load %arg4[%c0_143, %c0_144] : memref<128x128xf32, #tpu.memory_space<vmem>>, vector<128x128xf32>
    %cst_145 = arith.constant dense<0.000000e+00> : vector<1x128xf32>
    %492 = tpu.matmul %490, %491, %cst_145 {dimension_numbers = #tpu.dot_dimension_numbers<[1], [0], [0], [1], [0, 0, 1, 1], [], []>} : vector<1x128xf32>, vector<128x128xf32>, vector<1x128xf32> -> vector<1x128xf32>
    %493 = arith.addf %467, %492 : vector<1x128xf32>
    %cst_146 = arith.constant 0.000000e+00 : f32
    %494 = vector.broadcast %cst_146 : f32 to vector<1x128xf32>
    %495 = arith.maximumf %493, %494 : vector<1x128xf32>
    %cst_147 = arith.constant 0.000000e+00 : f32
    %496 = vector.broadcast %cst_147 : f32 to vector<1x128xf32>
    %497 = arith.maximumf %468, %496 : vector<1x128xf32>
    %cst_148 = arith.constant dense<0xFF800000> : vector<1xf32>
    %498 = vector.multi_reduction <maximumf>, %470, %cst_148 [1] : vector<1x16xf32> to vector<1xf32>
    %499 = vector.shape_cast %498 : vector<1xf32> to vector<1x1xf32>
    %500 = vector.broadcast %499 : vector<1x1xf32> to vector<1x16xf32>
    %501 = arith.subf %470, %500 : vector<1x16xf32>
    %502 = math.exp %501 : vector<1x16xf32>
    %cst_149 = arith.constant dense<0.000000e+00> : vector<1xf32>
    %503 = vector.multi_reduction <add>, %502, %cst_149 [1] : vector<1x16xf32> to vector<1xf32>
    %504 = vector.shape_cast %503 : vector<1xf32> to vector<1x1xf32>
    %505 = tpu.reciprocal %504 {approx = true} : vector<1x1xf32> -> vector<1x1xf32>
    %506 = vector.broadcast %505 : vector<1x1xf32> to vector<1x16xf32>
    %507 = arith.mulf %502, %506 : vector<1x16xf32>
    %508 = arith.negf %472 : vector<1x1xf32>
    %509 = math.exp %508 : vector<1x1xf32>
    %cst_150 = arith.constant 1.000000e+00 : f32
    %510 = vector.broadcast %cst_150 : f32 to vector<1x1xf32>
    %511 = arith.addf %510, %509 : vector<1x1xf32>
    %512 = arith.divf %510, %511 : vector<1x1xf32>
    %513 = vector.broadcast %507 : vector<1x16xf32> to vector<16x16xf32>
    %514 = arith.mulf %513, %11 : vector<16x16xf32>
    %cst_151 = arith.constant dense<0.000000e+00> : vector<16xf32>
    %515 = vector.multi_reduction <add>, %514, %cst_151 [1] : vector<16x16xf32> to vector<16xf32>
    %516 = vector.shape_cast %515 : vector<16xf32> to vector<16x1xf32>
    %517 = vector.broadcast %512 : vector<1x1xf32> to vector<1x128xf32>
    %518 = arith.mulf %517, %497 : vector<1x128xf32>
    %519 = vector.broadcast %518 : vector<1x128xf32> to vector<16x128xf32>
    %520 = arith.subf %519, %459 : vector<16x128xf32>
    %521 = vector.broadcast %516 : vector<16x1xf32> to vector<16x128xf32>
    %522 = arith.mulf %521, %520 : vector<16x128xf32>
    %523 = arith.addf %459, %522 : vector<16x128xf32>
    %524 = arith.index_cast %c7_i32 : i32 to index
    %c0_152 = arith.constant 0 : index
    %525 = vector.load %arg5[%524, %c0_152] : memref<8x128xf32, #tpu.memory_space<vmem>>, vector<1x128xf32>
    tpu.vector_store %arg5[%524, %c0_152], %495 {strides = array<i32>} : memref<8x128xf32, #tpu.memory_space<vmem>>, vector<1x128xf32>,
    %c8_i32 = arith.constant 8 : i32
    return
  }
}

</mosaic_0001>

<llo_original>
// kernel: tpu_custom_call.1
$region0: #{tpu_custom_call.1}
  #allocation0 [shape = 'u32[]', space=smem, size = 0x4, offset = 0x4, fixed_abs, tag = 'smem constant byte address 0x4 - core index']
  #allocation1 [shape = 'u32[144,128]{1,0:T(1,128)}', space=vmem, size = 0x12000, scoped, tag = 'internal scratch']
  #allocation2 [shape = 'f32[8,768]{1,0:T(8,128)}', space=vmem, size = 0x6000, scoped, tag = 'scratch operand']
  %s0 = inlined_call_operand.hbm [shape: f32[8,64], index: 0, kind: input, shape index: {}]
  %s1 = inlined_call_operand.hbm [shape: f32[64,768], index: 1, kind: input, shape index: {}]
  %s2 = inlined_call_operand.hbm [shape: f32[128,768], index: 2, kind: input, shape index: {}]
  %s3 = inlined_call_operand.hbm [shape: f32[1,768], index: 3, kind: input, shape index: {}]
  %s4 = inlined_call_operand.hbm [shape: f32[128,128], index: 4, kind: input, shape index: {}]
  %s5 = inlined_call_operand.hbm [shape: f32[8,128], index: 5, kind: output, shape index: {}]
  %s6 = sld [smem:[#allocation0]]
  $region50: #{tpu_custom_call.1} parent=0
    _
  %s8 = ssub.s32 1, %s6
  %s9 = scalar_select 0, %s8, %s6
  $region1: #{tpu_custom_call.1} parent=0
    #allocation3 [shape = 'u8[4096]{0}', space=vmem, size = 0x1000, scoped, tag = 'input window, operand 0, single buffered']
    #allocation4 [shape = 's32[1]{0}', space=sflag, size = 0x4, scoped, tag = 'scoped memory for tpu_custom_call.1']
    #allocation5 [shape = 's32[1]{0}', space=sflag, size = 0x4, scoped, tag = 'scoped memory for tpu_custom_call.1']
    #allocation6 [shape = 'u8[196608]{0}', space=vmem, size = 0x30000, scoped, tag = 'input window, operand 1, single buffered']
    #allocation7 [shape = 's32[1]{0}', space=sflag, size = 0x4, scoped, tag = 'scoped memory for tpu_custom_call.1']
    #allocation8 [shape = 'u8[393216]{0}', space=vmem, size = 0x60000, scoped, tag = 'input window, operand 2, single buffered']
    #allocation9 [shape = 'u8[3072]{0}', space=vmem, size = 0xc00, scoped, tag = 'input window, operand 3, single buffered']
    #allocation10 [shape = 's32[1]{0}', space=sflag, size = 0x4, scoped, tag = 'scoped memory for tpu_custom_call.1']
    #allocation11 [shape = 'u8[65536]{0}', space=vmem, size = 0x10000, scoped, tag = 'input window, operand 4, single buffered']
    #allocation12 [shape = 'u8[4096]{0}', space=vmem, size = 0x1000, scoped, tag = 'output window, operand 0, single buffered']
    %10 = vsyncpa [#allocation4], 0
    %11 = vsyncpa [#allocation7], 0
    %12 = vsyncpa [#allocation10], 0
    %13 = vsyncpa [#allocation5], 0
    // Predicated region
    $region2: #{tpu_custom_call.1} parent=1 // pred_check
      _
    $region3: #{tpu_custom_call.1} parent=1 // pred_check_branch
      %15 = sbr.rel (0) target = $region5
    $region4: #{tpu_custom_call.1} parent=1 // pred_region
      %s17 = ssub.s32 128, 128
      %18 = vsyncadd [#allocation4], %s17
      %s20 = sshll.u32 [#allocation3], 4
      %s21 = int_to_ptr.vmem [resolvable:$true] %s20
      %23 = dma.hbm_to_vmem [thread:$0]  %s0, 128, %s21, [#allocation4]
    $region5: #{tpu_custom_call.1} parent=1 // pred_fallthru
      _
    // Predicated region
    $region6: #{tpu_custom_call.1} parent=1 // pred_check
      _
    $region7: #{tpu_custom_call.1} parent=1 // pred_check_branch
      %25 = sbr.rel (0) target = $region9
    $region8: #{tpu_custom_call.1} parent=1 // pred_region
      %s27 = ssub.s32 6144, 6144
      %28 = vsyncadd [#allocation7], %s27
      %s29 = sshll.u32 [#allocation6], 4
      %s30 = int_to_ptr.vmem [resolvable:$true] %s29
      %35 = dma.hbm_to_vmem [thread:$0]  %s1, 6144, %s30, [#allocation7], 768, 768, 48
    $region9: #{tpu_custom_call.1} parent=1 // pred_fallthru
      _
    // Predicated region
    $region10: #{tpu_custom_call.1} parent=1 // pred_check
      _
    $region11: #{tpu_custom_call.1} parent=1 // pred_check_branch
      %37 = sbr.rel (0) target = $region13
    $region12: #{tpu_custom_call.1} parent=1 // pred_region
      %s39 = ssub.s32 12288, 12288
      %40 = vsyncadd [#allocation7], %s39
      %s41 = sshll.u32 [#allocation8], 4
      %s42 = int_to_ptr.vmem [resolvable:$true] %s41
      %47 = dma.hbm_to_vmem [thread:$0]  %s2, 12288, %s42, [#allocation7], 768, 768, 48
    $region13: #{tpu_custom_call.1} parent=1 // pred_fallthru
      _
    // Predicated region
    $region14: #{tpu_custom_call.1} parent=1 // pred_check
      _
    $region15: #{tpu_custom_call.1} parent=1 // pred_check_branch
      %49 = sbr.rel (0) target = $region17
    $region16: #{tpu_custom_call.1} parent=1 // pred_region
      %s51 = ssub.s32 96, 96
      %52 = vsyncadd [#allocation10], %s51
      %s54 = sshll.u32 [#allocation9], 4
      %s55 = int_to_ptr.vmem [resolvable:$true] %s54
      %57 = dma.hbm_to_vmem [thread:$0]  %s3, 96, %s55, [#allocation10]
    $region17: #{tpu_custom_call.1} parent=1 // pred_fallthru
      _
    // Predicated region
    $region18: #{tpu_custom_call.1} parent=1 // pred_check
      _
    $region19: #{tpu_custom_call.1} parent=1 // pred_check_branch
      %59 = sbr.rel (0) target = $region21
    $region20: #{tpu_custom_call.1} parent=1 // pred_region
      %s61 = ssub.s32 2048, 2048
      %62 = vsyncadd [#allocation10], %s61
      %s63 = sshll.u32 [#allocation11], 4
      %s64 = int_to_ptr.vmem [resolvable:$true] %s63
      %69 = dma.hbm_to_vmem [thread:$0]  %s4, 2048, %s64, [#allocation10], 128, 128, 8
    $region21: #{tpu_custom_call.1} parent=1 // pred_fallthru
      _
    // Predicated region
    $region22: #{tpu_custom_call.1} parent=1 // pred_check
      _
    $region23: #{tpu_custom_call.1} parent=1 // pred_check_branch
      %71 = sbr.rel (0) target = $region25
    $region24: #{tpu_custom_call.1} parent=1 // pred_region
      %72 = dma.done [#allocation4], 128
    $region25: #{tpu_custom_call.1} parent=1 // pred_fallthru
      _
    // Predicated region
    $region26: #{tpu_custom_call.1} parent=1 // pred_check
      _
    $region27: #{tpu_custom_call.1} parent=1 // pred_check_branch
      %74 = sbr.rel (0) target = $region29
    $region28: #{tpu_custom_call.1} parent=1 // pred_region
      %75 = dma.done [#allocation7], 6144
    $region29: #{tpu_custom_call.1} parent=1 // pred_fallthru
      _
    // Predicated region
    $region30: #{tpu_custom_call.1} parent=1 // pred_check
      _
    $region31: #{tpu_custom_call.1} parent=1 // pred_check_branch
      %77 = sbr.rel (0) target = $region33
    $region32: #{tpu_custom_call.1} parent=1 // pred_region
      %78 = dma.done [#allocation7], 12288
    $region33: #{tpu_custom_call.1} parent=1 // pred_fallthru
      _
    // Predicated region
    $region34: #{tpu_custom_call.1} parent=1 // pred_check
      _
    $region35: #{tpu_custom_call.1} parent=1 // pred_check_branch
      %80 = sbr.rel (0) target = $region37
    $region36: #{tpu_custom_call.1} parent=1 // pred_region
      %81 = dma.done [#allocation10], 96
    $region37: #{tpu_custom_call.1} parent=1 // pred_fallthru
      _
    // Predicated region
    $region38: #{tpu_custom_call.1} parent=1 // pred_check
      _
    $region39: #{tpu_custom_call.1} parent=1 // pred_check_branch
      %83 = sbr.rel (0) target = $region41
    $region40: #{tpu_custom_call.1} parent=1 // pred_region
      %84 = dma.done [#allocation10], 2048
    $region41: #{tpu_custom_call.1} parent=1 // pred_fallthru
      _
    %v85 = vld [vmem:[#allocation3] sm:$0xff]
    %v86 = vld [vmem:[#allocation6] sm:$0xff]
    %v87 = vld [vmem:[#allocation6 + $0x8] sm:$0xff]
    %v88 = vld [vmem:[#allocation6 + $0x10] sm:$0xff]
    %v89 = vld [vmem:[#allocation6 + $0x18] sm:$0xff]
    %v90 = vld [vmem:[#allocation6 + $0x20] sm:$0xff]
    %v91 = vld [vmem:[#allocation6 + $0x28] sm:$0xff]
    %v92 = vld [vmem:[#allocation6 + $0x30] sm:$0xff]
    %v93 = vld [vmem:[#allocation6 + $0x38] sm:$0xff]
    %v94 = vld [vmem:[#allocation6 + $0x40] sm:$0xff]
    %v95 = vld [vmem:[#allocation6 + $0x48] sm:$0xff]
    %v96 = vld [vmem:[#allocation6 + $0x50] sm:$0xff]
    %v97 = vld [vmem:[#allocation6 + $0x58] sm:$0xff]
    %v98 = vld [vmem:[#allocation6 + $0x60] sm:$0xff]
    %v99 = vld [vmem:[#allocation6 + $0x68] sm:$0xff]
    %v100 = vld [vmem:[#allocation6 + $0x70] sm:$0xff]
    %v101 = vld [vmem:[#allocation6 + $0x78] sm:$0xff]
    %v102 = vld [vmem:[#allocation6 + $0x80] sm:$0xff]
    %v103 = vld [vmem:[#allocation6 + $0x88] sm:$0xff]
    %v104 = vld [vmem:[#allocation6 + $0x90] sm:$0xff]
    %v105 = vld [vmem:[#allocation6 + $0x98] sm:$0xff]
    %v106 = vld [vmem:[#allocation6 + $0xa0] sm:$0xff]
    %v107 = vld [vmem:[#allocation6 + $0xa8] sm:$0xff]
    %v108 = vld [vmem:[#allocation6 + $0xb0] sm:$0xff]
    %v109 = vld [vmem:[#allocation6 + $0xb8] sm:$0xff]
    %v110 = vld [vmem:[#allocation6 + $0xc0] sm:$0xff]
    %v111 = vld [vmem:[#allocation6 + $0xc8] sm:$0xff]
    %v112 = vld [vmem:[#allocation6 + $0xd0] sm:$0xff]
    %v113 = vld [vmem:[#allocation6 + $0xd8] sm:$0xff]
    %v114 = vld [vmem:[#allocation6 + $0xe0] sm:$0xff]
    %v115 = vld [vmem:[#allocation6 + $0xe8] sm:$0xff]
    %v116 = vld [vmem:[#allocation6 + $0xf0] sm:$0xff]
    %v117 = vld [vmem:[#allocation6 + $0xf8] sm:$0xff]
    %v118 = vld [vmem:[#allocation6 + $0x100] sm:$0xff]
    %v119 = vld [vmem:[#allocation6 + $0x108] sm:$0xff]
    %v120 = vld [vmem:[#allocation6 + $0x110] sm:$0xff]
    %v121 = vld [vmem:[#allocation6 + $0x118] sm:$0xff]
    %v122 = vld [vmem:[#allocation6 + $0x120] sm:$0xff]
    %v123 = vld [vmem:[#allocation6 + $0x128] sm:$0xff]
    %v124 = vld [vmem:[#allocation6 + $0x130] sm:$0xff]
    %v125 = vld [vmem:[#allocation6 + $0x138] sm:$0xff]
    %v126 = vld [vmem:[#allocation6 + $0x140] sm:$0xff]
    %v127 = vld [vmem:[#allocation6 + $0x148] sm:$0xff]
    %v128 = vld [vmem:[#allocation6 + $0x150] sm:$0xff]
    %v129 = vld [vmem:[#allocation6 + $0x158] sm:$0xff]
    %v130 = vld [vmem:[#allocation6 + $0x160] sm:$0xff]
    %v131 = vld [vmem:[#allocation6 + $0x168] sm:$0xff]
    %v132 = vld [vmem:[#allocation6 + $0x170] sm:$0xff]
    %v133 = vld [vmem:[#allocation6 + $0x178] sm:$0xff]
    %v134 = vld [vmem:[#allocation9] sm:$0x3f]
    %v136 = vlaneseq
    %v137 = vshrl.u32 %v136, 7
    %v138 = vsub.s32 0, %v137
    %v139 = vrot.slane %v134, %v138
    %v140 = vlaneseq
    %v141 = vshrl.u32 %v140, 7
    %v142 = vsub.s32 1, %v141
    %v143 = vrot.slane %v134, %v142
    %v144 = vlaneseq
    %v145 = vshrl.u32 %v144, 7
    %v146 = vsub.s32 2, %v145
    %v147 = vrot.slane %v134, %v146
    %v148 = vlaneseq
    %v149 = vshrl.u32 %v148, 7
    %v150 = vsub.s32 3, %v149
    %v151 = vrot.slane %v134, %v150
    %v152 = vlaneseq
    %v153 = vshrl.u32 %v152, 7
    %v154 = vsub.s32 4, %v153
    %v155 = vrot.slane %v134, %v154
    %v156 = vlaneseq
    %v157 = vshrl.u32 %v156, 7
    %v158 = vsub.s32 5, %v157
    %v159 = vrot.slane %v134, %v158
    %vm166 = vcmask 523264
    %v168 = vsel %vm166, %v85, 0
    %170 = vmatprep.subr.mxu0 0.0
    %171 = vmatpush1.msra.mxu0 0.0
    %172 = vmatprep.subr.mxu0 0.0
    %173 = vmatpush1.msra.mxu0 0.0
    %174 = vmatprep.subr.mxu0 0.0
    %175 = vmatpush1.msra.mxu0 0.0
    %176 = vmatprep.subr.mxu0 0.0
    %177 = vmatpush1.msra.mxu0 0.0
    %178 = vmatprep.subr.mxu0 0.0
    %179 = vmatpush1.msra.mxu0 0.0
    %180 = vmatprep.subr.mxu0 0.0
    %181 = vmatpush1.msra.mxu0 0.0
    %182 = vmatprep.subr.mxu0 0.0
    %183 = vmatpush1.msra.mxu0 0.0
    %184 = vmatprep.subr.mxu0 0.0
    %185 = vmatpush1.msra.mxu0 0.0
    %186 = vmatprep.subr.mxu0 %v129
    %187 = vmatpush1.msra.mxu0 %v128
    %188 = vmatprep.subr.mxu0 %v123
    %189 = vmatpush1.msra.mxu0 %v122
    %190 = vmatprep.subr.mxu0 %v117
    %191 = vmatpush1.msra.mxu0 %v116
    %192 = vmatprep.subr.mxu0 %v111
    %193 = vmatpush1.msra.mxu0 %v110
    %194 = vmatprep.subr.mxu0 %v105
    %195 = vmatpush1.msra.mxu0 %v104
    %196 = vmatprep.subr.mxu0 %v99
    %197 = vmatpush1.msra.mxu0 %v98
    %198 = vmatprep.subr.mxu0 %v93
    %199 = vmatpush1.msra.mxu0 %v92
    %200 = vmatprep.subr.mxu0 %v87
    %201 = vmatpush1.msra.mxu0 %v86
    %202 = vmatprep.subr.mxu0 0.0
    %203 = vmatpush2.msra.mxu0 0.0
    %204 = vmatprep.subr.mxu0 0.0
    %205 = vmatpush2.msra.mxu0 0.0
    %206 = vmatprep.subr.mxu0 0.0
    %207 = vmatpush2.msra.mxu0 0.0
    %208 = vmatprep.subr.mxu0 0.0
    %209 = vmatpush2.msra.mxu0 0.0
    %210 = vmatprep.subr.mxu0 0.0
    %211 = vmatpush2.msra.mxu0 0.0
    %212 = vmatprep.subr.mxu0 0.0
    %213 = vmatpush2.msra.mxu0 0.0
    %214 = vmatprep.subr.mxu0 0.0
    %215 = vmatpush2.msra.mxu0 0.0
    %216 = vmatprep.subr.mxu0 0.0
    %217 = vmatpush2.msra.mxu0 0.0
    %218 = vmatprep.subr.mxu0 0.0
    %219 = vmatpush2.msra.mxu0 0.0
    %220 = vmatprep.subr.mxu0 0.0
    %221 = vmatpush2.msra.mxu0 0.0
    %222 = vmatprep.subr.mxu0 0.0
    %223 = vmatpush2.msra.mxu0 0.0
    %224 = vmatprep.subr.mxu0 0.0
    %225 = vmatpush2.msra.mxu0 0.0
    %226 = vmatprep.subr.mxu0 0.0
    %227 = vmatpush2.msra.mxu0 0.0
    %228 = vmatprep.subr.mxu0 0.0
    %229 = vmatpush2.msra.mxu0 0.0
    %230 = vmatprep.subr.mxu0 0.0
    %231 = vmatpush2.msra.mxu0 0.0
    %232 = vmatprep.subr.mxu0 0.0
    %233 = vmatpush2.msra.mxu0 0.0
    %234 = vmatprep.mubr.f32.mxu0 0.0
    %235 = vmatmul.mubr.f32.gmra.mxu0 %v168
    %v236 = vpop.f32.mrf.mxu0
    %v237 = vadd.f32 %v139, %v236
    %v238 = vpop.f32.mrf.mxu0
    %v239 = vadd.f32 %v143, %v238
    %240 = vdwg.mxu0
    %241 = vmatprep.subr.mxu0 0.0
    %242 = vmatpush1.msra.mxu0 0.0
    %243 = vmatprep.subr.mxu0 0.0
    %244 = vmatpush1.msra.mxu0 0.0
    %245 = vmatprep.subr.mxu0 0.0
    %246 = vmatpush1.msra.mxu0 0.0
    %247 = vmatprep.subr.mxu0 0.0
    %248 = vmatpush1.msra.mxu0 0.0
    %249 = vmatprep.subr.mxu0 0.0
    %250 = vmatpush1.msra.mxu0 0.0
    %251 = vmatprep.subr.mxu0 0.0
    %252 = vmatpush1.msra.mxu0 0.0
    %253 = vmatprep.subr.mxu0 0.0
    %254 = vmatpush1.msra.mxu0 0.0
    %255 = vmatprep.subr.mxu0 0.0
    %256 = vmatpush1.msra.mxu0 0.0
    %257 = vmatprep.subr.mxu0 %v131
    %258 = vmatpush1.msra.mxu0 %v130
    %259 = vmatprep.subr.mxu0 %v125
    %260 = vmatpush1.msra.mxu0 %v124
    %261 = vmatprep.subr.mxu0 %v119
    %262 = vmatpush1.msra.mxu0 %v118
    %263 = vmatprep.subr.mxu0 %v113
    %264 = vmatpush1.msra.mxu0 %v112
    %265 = vmatprep.subr.mxu0 %v107
    %266 = vmatpush1.msra.mxu0 %v106
    %267 = vmatprep.subr.mxu0 %v101
    %268 = vmatpush1.msra.mxu0 %v100
    %269 = vmatprep.subr.mxu0 %v95
    %270 = vmatpush1.msra.mxu0 %v94
    %271 = vmatprep.subr.mxu0 %v89
    %272 = vmatpush1.msra.mxu0 %v88
    %273 = vmatprep.subr.mxu0 0.0
    %274 = vmatpush2.msra.mxu0 0.0
    %275 = vmatprep.subr.mxu0 0.0
    %276 = vmatpush2.msra.mxu0 0.0
    %277 = vmatprep.subr.mxu0 0.0
    %278 = vmatpush2.msra.mxu0 0.0
    %279 = vmatprep.subr.mxu0 0.0
    %280 = vmatpush2.msra.mxu0 0.0
    %281 = vmatprep.subr.mxu0 0.0
    %282 = vmatpush2.msra.mxu0 0.0
    %283 = vmatprep.subr.mxu0 0.0
    %284 = vmatpush2.msra.mxu0 0.0
    %285 = vmatprep.subr.mxu0 0.0
    %286 = vmatpush2.msra.mxu0 0.0
    %287 = vmatprep.subr.mxu0 0.0
    %288 = vmatpush2.msra.mxu0 0.0
    %289 = vmatprep.subr.mxu0 0.0
    %290 = vmatpush2.msra.mxu0 0.0
    %291 = vmatprep.subr.mxu0 0.0
    %292 = vmatpush2.msra.mxu0 0.0
    %293 = vmatprep.subr.mxu0 0.0
    %294 = vmatpush2.msra.mxu0 0.0
    %295 = vmatprep.subr.mxu0 0.0
    %296 = vmatpush2.msra.mxu0 0.0
    %297 = vmatprep.subr.mxu0 0.0
    %298 = vmatpush2.msra.mxu0 0.0
    %299 = vmatprep.subr.mxu0 0.0
    %300 = vmatpush2.msra.mxu0 0.0
    %301 = vmatprep.subr.mxu0 0.0
    %302 = vmatpush2.msra.mxu0 0.0
    %303 = vmatprep.subr.mxu0 0.0
    %304 = vmatpush2.msra.mxu0 0.0
    %305 = vmatprep.mubr.f32.mxu0 0.0
    %306 = vmatmul.mubr.f32.gmra.mxu0 %v168
    %v307 = vpop.f32.mrf.mxu0
    %v308 = vadd.f32 %v147, %v307
    %v309 = vpop.f32.mrf.mxu0
    %v310 = vadd.f32 %v151, %v309
    %311 = vdwg.mxu0
    %312 = vmatprep.subr.mxu0 0.0
    %313 = vmatpush1.msra.mxu0 0.0
    %314 = vmatprep.subr.mxu0 0.0
    %315 = vmatpush1.msra.mxu0 0.0
    %316 = vmatprep.subr.mxu0 0.0
    %317 = vmatpush1.msra.mxu0 0.0
    %318 = vmatprep.subr.mxu0 0.0
    %319 = vmatpush1.msra.mxu0 0.0
    %320 = vmatprep.subr.mxu0 0.0
    %321 = vmatpush1.msra.mxu0 0.0
    %322 = vmatprep.subr.mxu0 0.0
    %323 = vmatpush1.msra.mxu0 0.0
    %324 = vmatprep.subr.mxu0 0.0
    %325 = vmatpush1.msra.mxu0 0.0
    %326 = vmatprep.subr.mxu0 0.0
    %327 = vmatpush1.msra.mxu0 0.0
    %328 = vmatprep.subr.mxu0 %v133
    %329 = vmatpush1.msra.mxu0 %v132
    %330 = vmatprep.subr.mxu0 %v127
    %331 = vmatpush1.msra.mxu0 %v126
    %332 = vmatprep.subr.mxu0 %v121
    %333 = vmatpush1.msra.mxu0 %v120
    %334 = vmatprep.subr.mxu0 %v115
    %335 = vmatpush1.msra.mxu0 %v114
    %336 = vmatprep.subr.mxu0 %v109
    %337 = vmatpush1.msra.mxu0 %v108
    %338 = vmatprep.subr.mxu0 %v103
    %339 = vmatpush1.msra.mxu0 %v102
    %340 = vmatprep.subr.mxu0 %v97
    %341 = vmatpush1.msra.mxu0 %v96
    %342 = vmatprep.subr.mxu0 %v91
    %343 = vmatpush1.msra.mxu0 %v90
    %344 = vmatprep.subr.mxu0 0.0
    %345 = vmatpush2.msra.mxu0 0.0
    %346 = vmatprep.subr.mxu0 0.0
    %347 = vmatpush2.msra.mxu0 0.0
    %348 = vmatprep.subr.mxu0 0.0
    %349 = vmatpush2.msra.mxu0 0.0
    %350 = vmatprep.subr.mxu0 0.0
    %351 = vmatpush2.msra.mxu0 0.0
    %352 = vmatprep.subr.mxu0 0.0
    %353 = vmatpush2.msra.mxu0 0.0
    %354 = vmatprep.subr.mxu0 0.0
    %355 = vmatpush2.msra.mxu0 0.0
    %356 = vmatprep.subr.mxu0 0.0
    %357 = vmatpush2.msra.mxu0 0.0
    %358 = vmatprep.subr.mxu0 0.0
    %359 = vmatpush2.msra.mxu0 0.0
    %360 = vmatprep.subr.mxu0 0.0
    %361 = vmatpush2.msra.mxu0 0.0
    %362 = vmatprep.subr.mxu0 0.0
    %363 = vmatpush2.msra.mxu0 0.0
    %364 = vmatprep.subr.mxu0 0.0
    %365 = vmatpush2.msra.mxu0 0.0
    %366 = vmatprep.subr.mxu0 0.0
    %367 = vmatpush2.msra.mxu0 0.0
    %368 = vmatprep.subr.mxu0 0.0
    %369 = vmatpush2.msra.mxu0 0.0
    %370 = vmatprep.subr.mxu0 0.0
    %371 = vmatpush2.msra.mxu0 0.0
    %372 = vmatprep.subr.mxu0 0.0
    %373 = vmatpush2.msra.mxu0 0.0
    %374 = vmatprep.subr.mxu0 0.0
    %375 = vmatpush2.msra.mxu0 0.0
    %376 = vmatprep.mubr.f32.mxu0 0.0
    %377 = vmatmul.mubr.f32.gmra.mxu0 %v168
    %v378 = vpop.f32.mrf.mxu0
    %v379 = vadd.f32 %v155, %v378
    %v380 = vpop.f32.mrf.mxu0
    %v381 = vadd.f32 %v159, %v380
    %382 = vdwg.mxu0
    %383 = vst [vmem:[#allocation2] sm:$0xff] %v237
    %384 = vst [vmem:[#allocation2 + $0x8] sm:$0xff] %v239
    %385 = vst [vmem:[#allocation2 + $0x10] sm:$0xff] %v308
    %386 = vst [vmem:[#allocation2 + $0x18] sm:$0xff] %v310
    %387 = vst [vmem:[#allocation2 + $0x20] sm:$0xff] %v379
    %388 = vst [vmem:[#allocation2 + $0x28] sm:$0xff] %v381
    %v389 = vlaneseq
    %v390 = vshrl.u32 %v389, 7
    %v391 = vadd.s32 %v390, 8
    %v392 = vlaneseq
    %v393 = vand.u32 %v392, 127
    %vm394 = vcmp.eq.s32.totalorder %v390, %v393
    %vm395 = vcmp.eq.s32.totalorder %v391, %v393
    %v396 = vsel %vm394, 1, 0
    %v397 = vsel %vm395, 1, 0
    %v398 = vcvt.s32.f32 %v396
    %v399 = vcvt.s32.f32 %v397
    %v400 = vld [vmem:[#allocation2] ss:$8 sm:$0xf]
    %v401 = vld [vmem:[#allocation2] ss:$8 sm:$0x30]
    %v402 = vor.u32 %v400, %v401
    %v403 = vld [vmem:[#allocation8] sm:$0xff]
    %v404 = vld [vmem:[#allocation8 + $0x8] sm:$0xff]
    %v405 = vld [vmem:[#allocation8 + $0x10] sm:$0xff]
    %v406 = vld [vmem:[#allocation8 + $0x18] sm:$0xff]
    %v407 = vld [vmem:[#allocation8 + $0x20] sm:$0xff]
    %v408 = vld [vmem:[#allocation8 + $0x28] sm:$0xff]
    %v409 = vld [vmem:[#allocation8 + $0x30] sm:$0xff]
    %v410 = vld [vmem:[#allocation8 + $0x38] sm:$0xff]
    %v411 = vld [vmem:[#allocation8 + $0x40] sm:$0xff]
    %v412 = vld [vmem:[#allocation8 + $0x48] sm:$0xff]
    %v413 = vld [vmem:[#allocation8 + $0x50] sm:$0xff]
    %v414 = vld [vmem:[#allocation8 + $0x58] sm:$0xff]
    %v415 = vld [vmem:[#allocation8 + $0x60] sm:$0xff]
    %v416 = vld [vmem:[#allocation8 + $0x68] sm:$0xff]
    %v417 = vld [vmem:[#allocation8 + $0x70] sm:$0xff]
    %v418 = vld [vmem:[#allocation8 + $0x78] sm:$0xff]
    %v419 = vld [vmem:[#allocation8 + $0x80] sm:$0xff]
    %v420 = vld [vmem:[#allocation8 + $0x88] sm:$0xff]
    %v421 = vld [vmem:[#allocation8 + $0x90] sm:$0xff]
    %v422 = vld [vmem:[#allocation8 + $0x98] sm:$0xff]
    %v423 = vld [vmem:[#allocation8 + $0xa0] sm:$0xff]
    %v424 = vld [vmem:[#allocation8 + $0xa8] sm:$0xff]
    %v425 = vld [vmem:[#allocation8 + $0xb0] sm:$0xff]
    %v426 = vld [vmem:[#allocation8 + $0xb8] sm:$0xff]
    %v427 = vld [vmem:[#allocation8 + $0xc0] sm:$0xff]
    %v428 = vld [vmem:[#allocation8 + $0xc8] sm:$0xff]
    %v429 = vld [vmem:[#allocation8 + $0xd0] sm:$0xff]
    %v430 = vld [vmem:[#allocation8 + $0xd8] sm:$0xff]
    %v431 = vld [vmem:[#allocation8 + $0xe0] sm:$0xff]
    %v432 = vld [vmem:[#allocation8 + $0xe8] sm:$0xff]
    %v433 = vld [vmem:[#allocation8 + $0xf0] sm:$0xff]
    %v434 = vld [vmem:[#allocation8 + $0xf8] sm:$0xff]
    %v435 = vld [vmem:[#allocation8 + $0x100] sm:$0xff]
    %v436 = vld [vmem:[#allocation8 + $0x108] sm:$0xff]
    %v437 = vld [vmem:[#allocation8 + $0x110] sm:$0xff]
    %v438 = vld [vmem:[#allocation8 + $0x118] sm:$0xff]
    %v439 = vld [vmem:[#allocation8 + $0x120] sm:$0xff]
    %v440 = vld [vmem:[#allocation8 + $0x128] sm:$0xff]
    %v441 = vld [vmem:[#allocation8 + $0x130] sm:$0xff]
    %v442 = vld [vmem:[#allocation8 + $0x138] sm:$0xff]
    %v443 = vld [vmem:[#allocation8 + $0x140] sm:$0xff]
    %v444 = vld [vmem:[#allocation8 + $0x148] sm:$0xff]
    %v445 = vld [vmem:[#allocation8 + $0x150] sm:$0xff]
    %v446 = vld [vmem:[#allocation8 + $0x158] sm:$0xff]
    %v447 = vld [vmem:[#allocation8 + $0x160] sm:$0xff]
    %v448 = vld [vmem:[#allocation8 + $0x168] sm:$0xff]
    %v449 = vld [vmem:[#allocation8 + $0x170] sm:$0xff]
    %v450 = vld [vmem:[#allocation8 + $0x178] sm:$0xff]
    %v451 = vld [vmem:[#allocation8 + $0x180] sm:$0xff]
    %v452 = vld [vmem:[#allocation8 + $0x188] sm:$0xff]
    %v453 = vld [vmem:[#allocation8 + $0x190] sm:$0xff]
    %v454 = vld [vmem:[#allocation8 + $0x198] sm:$0xff]
    %v455 = vld [vmem:[#allocation8 + $0x1a0] sm:$0xff]
    %v456 = vld [vmem:[#allocation8 + $0x1a8] sm:$0xff]
    %v457 = vld [vmem:[#allocation8 + $0x1b0] sm:$0xff]
    %v458 = vld [vmem:[#allocation8 + $0x1b8] sm:$0xff]
    %v459 = vld [vmem:[#allocation8 + $0x1c0] sm:$0xff]
    %v460 = vld [vmem:[#allocation8 + $0x1c8] sm:$0xff]
    %v461 = vld [vmem:[#allocation8 + $0x1d0] sm:$0xff]
    %v462 = vld [vmem:[#allocation8 + $0x1d8] sm:$0xff]
    %v463 = vld [vmem:[#allocation8 + $0x1e0] sm:$0xff]
    %v464 = vld [vmem:[#allocation8 + $0x1e8] sm:$0xff]
    %v465 = vld [vmem:[#allocation8 + $0x1f0] sm:$0xff]
    %v466 = vld [vmem:[#allocation8 + $0x1f8] sm:$0xff]
    %v467 = vld [vmem:[#allocation8 + $0x200] sm:$0xff]
    %v468 = vld [vmem:[#allocation8 + $0x208] sm:$0xff]
    %v469 = vld [vmem:[#allocation8 + $0x210] sm:$0xff]
    %v470 = vld [vmem:[#allocation8 + $0x218] sm:$0xff]
    %v471 = vld [vmem:[#allocation8 + $0x220] sm:$0xff]
    %v472 = vld [vmem:[#allocation8 + $0x228] sm:$0xff]
    %v473 = vld [vmem:[#allocation8 + $0x230] sm:$0xff]
    %v474 = vld [vmem:[#allocation8 + $0x238] sm:$0xff]
    %v475 = vld [vmem:[#allocation8 + $0x240] sm:$0xff]
    %v476 = vld [vmem:[#allocation8 + $0x248] sm:$0xff]
    %v477 = vld [vmem:[#allocation8 + $0x250] sm:$0xff]
    %v478 = vld [vmem:[#allocation8 + $0x258] sm:$0xff]
    %v479 = vld [vmem:[#allocation8 + $0x260] sm:$0xff]
    %v480 = vld [vmem:[#allocation8 + $0x268] sm:$0xff]
    %v481 = vld [vmem:[#allocation8 + $0x270] sm:$0xff]
    %v482 = vld [vmem:[#allocation8 + $0x278] sm:$0xff]
    %v483 = vld [vmem:[#allocation8 + $0x280] sm:$0xff]
    %v484 = vld [vmem:[#allocation8 + $0x288] sm:$0xff]
    %v485 = vld [vmem:[#allocation8 + $0x290] sm:$0xff]
    %v486 = vld [vmem:[#allocation8 + $0x298] sm:$0xff]
    %v487 = vld [vmem:[#allocation8 + $0x2a0] sm:$0xff]
    %v488 = vld [vmem:[#allocation8 + $0x2a8] sm:$0xff]
    %v489 = vld [vmem:[#allocation8 + $0x2b0] sm:$0xff]
    %v490 = vld [vmem:[#allocation8 + $0x2b8] sm:$0xff]
    %v491 = vld [vmem:[#allocation8 + $0x2c0] sm:$0xff]
    %v492 = vld [vmem:[#allocation8 + $0x2c8] sm:$0xff]
    %v493 = vld [vmem:[#allocation8 + $0x2d0] sm:$0xff]
    %v494 = vld [vmem:[#allocation8 + $0x2d8] sm:$0xff]
    %v495 = vld [vmem:[#allocation8 + $0x2e0] sm:$0xff]
    %v496 = vld [vmem:[#allocation8 + $0x2e8] sm:$0xff]
    %v497 = vld [vmem:[#allocation8 + $0x2f0] sm:$0xff]
    %v498 = vld [vmem:[#allocation8 + $0x2f8] sm:$0xff]
    %499 = vmatprep.subr.mxu0 %v494
    %500 = vmatpush1.msra.mxu0 %v493
    %501 = vmatprep.subr.mxu0 %v488
    %502 = vmatpush1.msra.mxu0 %v487
    %503 = vmatprep.subr.mxu0 %v482
    %504 = vmatpush1.msra.mxu0 %v481
    %505 = vmatprep.subr.mxu0 %v476
    %506 = vmatpush1.msra.mxu0 %v475
    %507 = vmatprep.subr.mxu0 %v470
    %508 = vmatpush1.msra.mxu0 %v469
    %509 = vmatprep.subr.mxu0 %v464
    %510 = vmatpush1.msra.mxu0 %v463
    %511 = vmatprep.subr.mxu0 %v458
    %512 = vmatpush1.msra.mxu0 %v457
    %513 = vmatprep.subr.mxu0 %v452
    %514 = vmatpush1.msra.mxu0 %v451
    %515 = vmatprep.subr.mxu0 %v446
    %516 = vmatpush1.msra.mxu0 %v445
    %517 = vmatprep.subr.mxu0 %v440
    %518 = vmatpush1.msra.mxu0 %v439
    %519 = vmatprep.subr.mxu0 %v434
    %520 = vmatpush1.msra.mxu0 %v433
    %521 = vmatprep.subr.mxu0 %v428
    %522 = vmatpush1.msra.mxu0 %v427
    %523 = vmatprep.subr.mxu0 %v422
    %524 = vmatpush1.msra.mxu0 %v421
    %525 = vmatprep.subr.mxu0 %v416
    %526 = vmatpush1.msra.mxu0 %v415
    %527 = vmatprep.subr.mxu0 %v410
    %528 = vmatpush1.msra.mxu0 %v409
    %529 = vmatprep.subr.mxu0 %v404
    %530 = vmatpush1.msra.mxu0 %v403
    %531 = vmatprep.subr.mxu0 0.0
    %532 = vmatpush2.msra.mxu0 0.0
    %533 = vmatprep.subr.mxu0 0.0
    %534 = vmatpush2.msra.mxu0 0.0
    %535 = vmatprep.subr.mxu0 0.0
    %536 = vmatpush2.msra.mxu0 0.0
    %537 = vmatprep.subr.mxu0 0.0
    %538 = vmatpush2.msra.mxu0 0.0
    %539 = vmatprep.subr.mxu0 0.0
    %540 = vmatpush2.msra.mxu0 0.0
    %541 = vmatprep.subr.mxu0 0.0
    %542 = vmatpush2.msra.mxu0 0.0
    %543 = vmatprep.subr.mxu0 0.0
    %544 = vmatpush2.msra.mxu0 0.0
    %545 = vmatprep.subr.mxu0 0.0
    %546 = vmatpush2.msra.mxu0 0.0
    %547 = vmatprep.subr.mxu0 0.0
    %548 = vmatpush2.msra.mxu0 0.0
    %549 = vmatprep.subr.mxu0 0.0
    %550 = vmatpush2.msra.mxu0 0.0
    %551 = vmatprep.subr.mxu0 0.0
    %552 = vmatpush2.msra.mxu0 0.0
    %553 = vmatprep.subr.mxu0 0.0
    %554 = vmatpush2.msra.mxu0 0.0
    %555 = vmatprep.subr.mxu0 0.0
    %556 = vmatpush2.msra.mxu0 0.0
    %557 = vmatprep.subr.mxu0 0.0
    %558 = vmatpush2.msra.mxu0 0.0
    %559 = vmatprep.subr.mxu0 0.0
    %560 = vmatpush2.msra.mxu0 0.0
    %561 = vmatprep.subr.mxu0 0.0
    %562 = vmatpush2.msra.mxu0 0.0
    %563 = vmatprep.mubr.f32.mxu0 0.0
    %564 = vmatmul.mubr.f32.gmra.mxu0 0.0
    %v565 = vpop.f32.mrf.mxu0
    %v566 = vadd.f32 0.0, %v565
    %v567 = vpop.f32.mrf.mxu0
    %v568 = vadd.f32 0.0, %v567
    %569 = vdwg.mxu0
    %570 = vmatprep.subr.mxu0 %v496
    %571 = vmatpush1.msra.mxu0 %v495
    %572 = vmatprep.subr.mxu0 %v490
    %573 = vmatpush1.msra.mxu0 %v489
    %574 = vmatprep.subr.mxu0 %v484
    %575 = vmatpush1.msra.mxu0 %v483
    %576 = vmatprep.subr.mxu0 %v478
    %577 = vmatpush1.msra.mxu0 %v477
    %578 = vmatprep.subr.mxu0 %v472
    %579 = vmatpush1.msra.mxu0 %v471
    %580 = vmatprep.subr.mxu0 %v466
    %581 = vmatpush1.msra.mxu0 %v465
    %582 = vmatprep.subr.mxu0 %v460
    %583 = vmatpush1.msra.mxu0 %v459
    %584 = vmatprep.subr.mxu0 %v454
    %585 = vmatpush1.msra.mxu0 %v453
    %586 = vmatprep.subr.mxu0 %v448
    %587 = vmatpush1.msra.mxu0 %v447
    %588 = vmatprep.subr.mxu0 %v442
    %589 = vmatpush1.msra.mxu0 %v441
    %590 = vmatprep.subr.mxu0 %v436
    %591 = vmatpush1.msra.mxu0 %v435
    %592 = vmatprep.subr.mxu0 %v430
    %593 = vmatpush1.msra.mxu0 %v429
    %594 = vmatprep.subr.mxu0 %v424
    %595 = vmatpush1.msra.mxu0 %v423
    %596 = vmatprep.subr.mxu0 %v418
    %597 = vmatpush1.msra.mxu0 %v417
    %598 = vmatprep.subr.mxu0 %v412
    %599 = vmatpush1.msra.mxu0 %v411
    %600 = vmatprep.subr.mxu0 %v406
    %601 = vmatpush1.msra.mxu0 %v405
    %602 = vmatprep.subr.mxu0 0.0
    %603 = vmatpush2.msra.mxu0 0.0
    %604 = vmatprep.subr.mxu0 0.0
    %605 = vmatpush2.msra.mxu0 0.0
    %606 = vmatprep.subr.mxu0 0.0
    %607 = vmatpush2.msra.mxu0 0.0
    %608 = vmatprep.subr.mxu0 0.0
    %609 = vmatpush2.msra.mxu0 0.0
    %610 = vmatprep.subr.mxu0 0.0
    %611 = vmatpush2.msra.mxu0 0.0
    %612 = vmatprep.subr.mxu0 0.0
    %613 = vmatpush2.msra.mxu0 0.0
    %614 = vmatprep.subr.mxu0 0.0
    %615 = vmatpush2.msra.mxu0 0.0
    %616 = vmatprep.subr.mxu0 0.0
    %617 = vmatpush2.msra.mxu0 0.0
    %618 = vmatprep.subr.mxu0 0.0
    %619 = vmatpush2.msra.mxu0 0.0
    %620 = vmatprep.subr.mxu0 0.0
    %621 = vmatpush2.msra.mxu0 0.0
    %622 = vmatprep.subr.mxu0 0.0
    %623 = vmatpush2.msra.mxu0 0.0
    %624 = vmatprep.subr.mxu0 0.0
    %625 = vmatpush2.msra.mxu0 0.0
    %626 = vmatprep.subr.mxu0 0.0
    %627 = vmatpush2.msra.mxu0 0.0
    %628 = vmatprep.subr.mxu0 0.0
    %629 = vmatpush2.msra.mxu0 0.0
    %630 = vmatprep.subr.mxu0 0.0
    %631 = vmatpush2.msra.mxu0 0.0
    %632 = vmatprep.subr.mxu0 0.0
    %633 = vmatpush2.msra.mxu0 0.0
    %634 = vmatprep.mubr.f32.mxu0 0.0
    %635 = vmatmul.mubr.f32.gmra.mxu0 0.0
    %v636 = vpop.f32.mrf.mxu0
    %v637 = vadd.f32 0.0, %v636
    %v638 = vpop.f32.mrf.mxu0
    %v639 = vadd.f32 0.0, %v638
    %640 = vdwg.mxu0
    %641 = vmatprep.subr.mxu0 %v498
    %642 = vmatpush1.msra.mxu0 %v497
    %643 = vmatprep.subr.mxu0 %v492
    %644 = vmatpush1.msra.mxu0 %v491
    %645 = vmatprep.subr.mxu0 %v486
    %646 = vmatpush1.msra.mxu0 %v485
    %647 = vmatprep.subr.mxu0 %v480
    %648 = vmatpush1.msra.mxu0 %v479
    %649 = vmatprep.subr.mxu0 %v474
    %650 = vmatpush1.msra.mxu0 %v473
    %651 = vmatprep.subr.mxu0 %v468
    %652 = vmatpush1.msra.mxu0 %v467
    %653 = vmatprep.subr.mxu0 %v462
    %654 = vmatpush1.msra.mxu0 %v461
    %655 = vmatprep.subr.mxu0 %v456
    %656 = vmatpush1.msra.mxu0 %v455
    %657 = vmatprep.subr.mxu0 %v450
    %658 = vmatpush1.msra.mxu0 %v449
    %659 = vmatprep.subr.mxu0 %v444
    %660 = vmatpush1.msra.mxu0 %v443
    %661 = vmatprep.subr.mxu0 %v438
    %662 = vmatpush1.msra.mxu0 %v437
    %663 = vmatprep.subr.mxu0 %v432
    %664 = vmatpush1.msra.mxu0 %v431
    %665 = vmatprep.subr.mxu0 %v426
    %666 = vmatpush1.msra.mxu0 %v425
    %667 = vmatprep.subr.mxu0 %v420
    %668 = vmatpush1.msra.mxu0 %v419
    %669 = vmatprep.subr.mxu0 %v414
    %670 = vmatpush1.msra.mxu0 %v413
    %671 = vmatprep.subr.mxu0 %v408
    %672 = vmatpush1.msra.mxu0 %v407
    %673 = vmatprep.subr.mxu0 0.0
    %674 = vmatpush2.msra.mxu0 0.0
    %675 = vmatprep.subr.mxu0 0.0
    %676 = vmatpush2.msra.mxu0 0.0
    %677 = vmatprep.subr.mxu0 0.0
    %678 = vmatpush2.msra.mxu0 0.0
    %679 = vmatprep.subr.mxu0 0.0
    %680 = vmatpush2.msra.mxu0 0.0
    %681 = vmatprep.subr.mxu0 0.0
    %682 = vmatpush2.msra.mxu0 0.0
    %683 = vmatprep.subr.mxu0 0.0
    %684 = vmatpush2.msra.mxu0 0.0
    %685 = vmatprep.subr.mxu0 0.0
    %686 = vmatpush2.msra.mxu0 0.0
    %687 = vmatprep.subr.mxu0 0.0
    %688 = vmatpush2.msra.mxu0 0.0
    %689 = vmatprep.subr.mxu0 0.0
    %690 = vmatpush2.msra.mxu0 0.0
    %691 = vmatprep.subr.mxu0 0.0
    %692 = vmatpush2.msra.mxu0 0.0
    %693 = vmatprep.subr.mxu0 0.0
    %694 = vmatpush2.msra.mxu0 0.0
    %695 = vmatprep.subr.mxu0 0.0
    %696 = vmatpush2.msra.mxu0 0.0
    %697 = vmatprep.subr.mxu0 0.0
    %698 = vmatpush2.msra.mxu0 0.0
    %699 = vmatprep.subr.mxu0 0.0
    %700 = vmatpush2.msra.mxu0 0.0
    %701 = vmatprep.subr.mxu0 0.0
    %702 = vmatpush2.msra.mxu0 0.0
    %703 = vmatprep.subr.mxu0 0.0
    %704 = vmatpush2.msra.mxu0 0.0
    %705 = vmatprep.mubr.f32.mxu0 0.0
    %706 = vmatmul.mubr.f32.gmra.mxu0 0.0
    %v707 = vpop.f32.mrf.mxu0
    %v708 = vadd.f32 0.0, %v707
    %v709 = vpop.f32.mrf.mxu0
    %v710 = vadd.f32 0.0, %v709
    %711 = vdwg.mxu0
    %v718 = vcombine.low %v566, %v568
    %v719 = vcombine.low %v637, %v639
    %v720 = vcombine.low %v708, %v710
    %v722 = vunpack.c.l.s4 1966171168
    %v723 = vunpack.c.0.s8 %v722
    %v724 = vlaneseq
    %v725 = vshrl.u32 %v724, 7
    %v726 = vsub.s32 %v723, %v725
    %v727 = vrot.slane %v718, %v726
    %v729 = vunpack.c.l.s4 1966171168
    %v730 = vunpack.c.0.s8 %v729
    %v731 = vlaneseq
    %v732 = vshrl.u32 %v731, 7
    %v733 = vsub.s32 %v730, %v732
    %v734 = vrot.slane %v719, %v733
    %v736 = vunpack.c.l.s4 1966171168
    %v737 = vunpack.c.0.s8 %v736
    %v738 = vlaneseq
    %v739 = vshrl.u32 %v738, 7
    %v740 = vsub.s32 %v737, %v739
    %v741 = vrot.slane %v720, %v740
    %v742 = vcombine.low %v727, %v734
    %v744 = vunpack.c.l.s4 1966171168
    %v745 = vunpack.c.0.s8 %v744
    %v746 = vlaneseq
    %v747 = vshrl.u32 %v746, 7
    %v748 = vsub.s32 %v745, %v747
    %v749 = vrot.slane %v742, %v748
    %v751 = vunpack.c.l.s4 1966171168
    %v752 = vunpack.c.0.s8 %v751
    %v753 = vlaneseq
    %v754 = vshrl.u32 %v753, 7
    %v755 = vsub.s32 %v752, %v754
    %v756 = vrot.slane %v741, %v755
    %v757 = vcombine.low %v749, %v756
    %v759 = vadd.f32 %v402, %v757
    %v761 = vrot.slane %v759, 4
    %v763 = vxor.u32 %v761, 2147483648
    %v764 = vmul.f32 %v763, 1.442695
    %v765 = vpow.pop %v764
    %v766 = vadd.f32 %v765, 1.0
    %v767 = vrcp.pop %v766
    %v768 = vmul.f32 1.0, %v767
    %v769 = vlaneseq
    %v770 = vshrl.u32 %v769, 7
    %v771 = vsub.s32 2, %v770
    %v772 = vrot.slane %v759, %v771
    %vm774 = vcmask 122880
    %v775 = vsel %vm774, %v772, -inf
    %776 = vmax.xlane.f32.xlu0 %v775
    %v777 = vpop.xlane.xlu0 %776
    %v778 = vrot.slane %v759, 2
    %v780 = vsub.f32 %v778, %v777
    %v781 = vmul.f32 %v780, 1.442695
    %v782 = vpow.pop %v781
    %v783 = vsel %vm774, %v782, 0.0
    %784 = vadd.xlane.f32.xlu0 %v783
    %v785 = vpop.xlane.xlu0 %784
    %v786 = vrcp.pop %v785
    %v787 = vmul.f32 %v782, %v786
    %789 = vset.pattern.permute.xlu0 0
    %790 = vperm.xlu0 %789, %v768
    %v791 = vpop.permute.xlu0 %790
    %v793 = vlaneseq
    %v794 = vshrl.u32 %v793, 7
    %v795 = vsub.s32 0, %v794
    %v796 = vrot.slane %v791, %v795
    %v797 = vmul.f32 %v796, %v787
    %vm798 = vcmask 130048
    %v800 = vsel %vm798, %v797, 0
    %802 = vmatprep.subr.mxu0 0.0
    %803 = vmatpush1.msra.mxu0 0.0
    %804 = vmatprep.subr.mxu0 0.0
    %805 = vmatpush1.msra.mxu0 0.0
    %806 = vmatprep.subr.mxu0 0.0
    %807 = vmatpush1.msra.mxu0 0.0
    %808 = vmatprep.subr.mxu0 0.0
    %809 = vmatpush1.msra.mxu0 0.0
    %810 = vmatprep.subr.mxu0 0.0
    %811 = vmatpush1.msra.mxu0 0.0
    %812 = vmatprep.subr.mxu0 0.0
    %813 = vmatpush1.msra.mxu0 0.0
    %814 = vmatprep.subr.mxu0 0.0
    %815 = vmatpush1.msra.mxu0 0.0
    %816 = vmatprep.subr.mxu0 0.0
    %817 = vmatpush1.msra.mxu0 0.0
    %818 = vmatprep.subr.mxu0 0.0
    %819 = vmatpush1.msra.mxu0 0.0
    %820 = vmatprep.subr.mxu0 0.0
    %821 = vmatpush1.msra.mxu0 0.0
    %822 = vmatprep.subr.mxu0 0.0
    %823 = vmatpush1.msra.mxu0 0.0
    %824 = vmatprep.subr.mxu0 0.0
    %825 = vmatpush1.msra.mxu0 0.0
    %826 = vmatprep.subr.mxu0 0.0
    %827 = vmatpush1.msra.mxu0 0.0
    %828 = vmatprep.subr.mxu0 0.0
    %829 = vmatpush1.msra.mxu0 0.0
    %830 = vmatprep.subr.mxu0 0.0
    %831 = vmatpush1.msra.mxu0 0.0
    %832 = vmatprep.subr.mxu0 0.0
    %833 = vmatpush1.msra.mxu0 0.0
    %834 = vmatprep.subr.mxu0 0.0
    %835 = vmatpush2.msra.mxu0 0.0
    %836 = vmatprep.subr.mxu0 0.0
    %837 = vmatpush2.msra.mxu0 0.0
    %838 = vmatprep.subr.mxu0 0.0
    %839 = vmatpush2.msra.mxu0 0.0
    %840 = vmatprep.subr.mxu0 0.0
    %841 = vmatpush2.msra.mxu0 0.0
    %842 = vmatprep.subr.mxu0 0.0
    %843 = vmatpush2.msra.mxu0 0.0
    %844 = vmatprep.subr.mxu0 0.0
    %845 = vmatpush2.msra.mxu0 0.0
    %846 = vmatprep.subr.mxu0 0.0
    %847 = vmatpush2.msra.mxu0 0.0
    %848 = vmatprep.subr.mxu0 0.0
    %849 = vmatpush2.msra.mxu0 0.0
    %850 = vmatprep.subr.mxu0 0.0
    %851 = vmatpush2.msra.mxu0 0.0
    %852 = vmatprep.subr.mxu0 0.0
    %853 = vmatpush2.msra.mxu0 0.0
    %854 = vmatprep.subr.mxu0 0.0
    %855 = vmatpush2.msra.mxu0 0.0
    %856 = vmatprep.subr.mxu0 0.0
    %857 = vmatpush2.msra.mxu0 0.0
    %858 = vmatprep.subr.mxu0 0.0
    %859 = vmatpush2.msra.mxu0 0.0
    %860 = vmatprep.subr.mxu0 0.0
    %861 = vmatpush2.msra.mxu0 0.0
    %862 = vmatprep.subr.mxu0 0.0
    %863 = vmatpush2.msra.mxu0 0.0
    %864 = vmatprep.subr.mxu0 0.0
    %865 = vmatpush2.msra.mxu0 0.0
    %866 = vmatprep.mubr.f32.mxu0 0.0
    %867 = vmatmul.mubr.f32.gmra.mxu0 %v800
    %v868 = vpop.f32.mrf.mxu0
    %v869 = vadd.f32 0.0, %v868
    %v870 = vpop.f32.mrf.mxu0
    %871 = vdwg.mxu0
    %v872 = vld [vmem:[#allocation11] sm:$0xff]
    %v873 = vld [vmem:[#allocation11 + $0x8] sm:$0xff]
    %v874 = vld [vmem:[#allocation11 + $0x10] sm:$0xff]
    %v875 = vld [vmem:[#allocation11 + $0x18] sm:$0xff]
    %v876 = vld [vmem:[#allocation11 + $0x20] sm:$0xff]
    %v877 = vld [vmem:[#allocation11 + $0x28] sm:$0xff]
    %v878 = vld [vmem:[#allocation11 + $0x30] sm:$0xff]
    %v879 = vld [vmem:[#allocation11 + $0x38] sm:$0xff]
    %v880 = vld [vmem:[#allocation11 + $0x40] sm:$0xff]
    %v881 = vld [vmem:[#allocation11 + $0x48] sm:$0xff]
    %v882 = vld [vmem:[#allocation11 + $0x50] sm:$0xff]
    %v883 = vld [vmem:[#allocation11 + $0x58] sm:$0xff]
    %v884 = vld [vmem:[#allocation11 + $0x60] sm:$0xff]
    %v885 = vld [vmem:[#allocation11 + $0x68] sm:$0xff]
    %v886 = vld [vmem:[#allocation11 + $0x70] sm:$0xff]
    %v887 = vld [vmem:[#allocation11 + $0x78] sm:$0xff]
    %888 = vmatprep.subr.mxu0 0.0
    %889 = vmatpush1.msra.mxu0 %v887
    %890 = vmatprep.subr.mxu0 0.0
    %891 = vmatpush1.msra.mxu0 %v886
    %892 = vmatprep.subr.mxu0 0.0
    %893 = vmatpush1.msra.mxu0 %v885
    %894 = vmatprep.subr.mxu0 0.0
    %895 = vmatpush1.msra.mxu0 %v884
    %896 = vmatprep.subr.mxu0 0.0
    %897 = vmatpush1.msra.mxu0 %v883
    %898 = vmatprep.subr.mxu0 0.0
    %899 = vmatpush1.msra.mxu0 %v882
    %900 = vmatprep.subr.mxu0 0.0
    %901 = vmatpush1.msra.mxu0 %v881
    %902 = vmatprep.subr.mxu0 0.0
    %903 = vmatpush1.msra.mxu0 %v880
    %904 = vmatprep.subr.mxu0 0.0
    %905 = vmatpush1.msra.mxu0 %v879
    %906 = vmatprep.subr.mxu0 0.0
    %907 = vmatpush1.msra.mxu0 %v878
    %908 = vmatprep.subr.mxu0 0.0
    %909 = vmatpush1.msra.mxu0 %v877
    %910 = vmatprep.subr.mxu0 0.0
    %911 = vmatpush1.msra.mxu0 %v876
    %912 = vmatprep.subr.mxu0 0.0
    %913 = vmatpush1.msra.mxu0 %v875
    %914 = vmatprep.subr.mxu0 0.0
    %915 = vmatpush1.msra.mxu0 %v874
    %916 = vmatprep.subr.mxu0 0.0
    %917 = vmatpush1.msra.mxu0 %v873
    %918 = vmatprep.subr.mxu0 0.0
    %919 = vmatpush1.msra.mxu0 %v872
    %920 = vmatprep.subr.mxu0 0.0
    %921 = vmatpush2.msra.mxu0 0.0
    %922 = vmatprep.subr.mxu0 0.0
    %923 = vmatpush2.msra.mxu0 0.0
    %924 = vmatprep.subr.mxu0 0.0
    %925 = vmatpush2.msra.mxu0 0.0
    %926 = vmatprep.subr.mxu0 0.0
    %927 = vmatpush2.msra.mxu0 0.0
    %928 = vmatprep.subr.mxu0 0.0
    %929 = vmatpush2.msra.mxu0 0.0
    %930 = vmatprep.subr.mxu0 0.0
    %931 = vmatpush2.msra.mxu0 0.0
    %932 = vmatprep.subr.mxu0 0.0
    %933 = vmatpush2.msra.mxu0 0.0
    %934 = vmatprep.subr.mxu0 0.0
    %935 = vmatpush2.msra.mxu0 0.0
    %936 = vmatprep.subr.mxu0 0.0
    %937 = vmatpush2.msra.mxu0 0.0
    %938 = vmatprep.subr.mxu0 0.0
    %939 = vmatpush2.msra.mxu0 0.0
    %940 = vmatprep.subr.mxu0 0.0
    %941 = vmatpush2.msra.mxu0 0.0
    %942 = vmatprep.subr.mxu0 0.0
    %943 = vmatpush2.msra.mxu0 0.0
    %944 = vmatprep.subr.mxu0 0.0
    %945 = vmatpush2.msra.mxu0 0.0
    %946 = vmatprep.subr.mxu0 0.0
    %947 = vmatpush2.msra.mxu0 0.0
    %948 = vmatprep.subr.mxu0 0.0
    %949 = vmatpush2.msra.mxu0 0.0
    %950 = vmatprep.subr.mxu0 0.0
    %951 = vmatpush2.msra.mxu0 0.0
    %952 = vmatprep.mubr.f32.mxu0 0.0
    %953 = vmatmul.mubr.f32.gmra.mxu0 %v869
    %v954 = vpop.f32.mrf.mxu0
    %v955 = vadd.f32 0.0, %v954
    %v956 = vpop.f32.mrf.mxu0
    %957 = vdwg.mxu0
    %v958 = vadd.f32 %v759, %v955
    %v959 = vmax.f32 %v958, 0.0
    %v960 = vrot.slane %v759, 1
    %v962 = vmax.f32 %v960, 0.0
    %v963 = vlaneseq
    %v964 = vshrl.u32 %v963, 7
    %v965 = vsub.s32 3, %v964
    %v966 = vrot.slane %v759, %v965
    %v968 = vsel %vm774, %v966, -inf
    %969 = vmax.xlane.f32.xlu0 %v968
    %v970 = vpop.xlane.xlu0 %969
    %v971 = vrot.slane %v759, 3
    %v973 = vsub.f32 %v971, %v970
    %v974 = vmul.f32 %v973, 1.442695
    %v975 = vpow.pop %v974
    %v976 = vsel %vm774, %v975, 0.0
    %977 = vadd.xlane.f32.xlu0 %v976
    %v978 = vpop.xlane.xlu0 %977
    %v979 = vrcp.pop %v978
    %v980 = vmul.f32 %v975, %v979
    %v981 = vrot.slane %v759, 5
    %v983 = vxor.u32 %v981, 2147483648
    %v984 = vmul.f32 %v983, 1.442695
    %v985 = vpow.pop %v984
    %v986 = vadd.f32 %v985, 1.0
    %v987 = vrcp.pop %v986
    %v988 = vmul.f32 1.0, %v987
    %v990 = vlaneseq
    %v991 = vshrl.u32 %v990, 7
    %v992 = vsub.s32 0, %v991
    %v993 = vrot.slane %v980, %v992
    %v995 = vmul.f32 %v993, %v398
    %v996 = vmul.f32 %v993, %v399
    %v997 = vsel %vm798, %v995, 0.0
    %998 = vadd.xlane.f32.xlu0 %v997
    %v999 = vpop.xlane.xlu0 %998
    %v1000 = vsel %vm798, %v996, 0.0
    %1001 = vadd.xlane.f32.xlu0 %v1000
    %v1002 = vpop.xlane.xlu0 %1001
    %1004 = vset.pattern.permute.xlu0 0
    %1005 = vperm.xlu0 %1004, %v988
    %v1006 = vpop.permute.xlu0 %1005
    %v1008 = vlaneseq
    %v1009 = vshrl.u32 %v1008, 7
    %v1010 = vsub.s32 0, %v1009
    %v1011 = vrot.slane %v1006, %v1010
    %v1012 = vmul.f32 %v1011, %v962
    %v1014 = vlaneseq
    %v1015 = vshrl.u32 %v1014, 7
    %v1016 = vsub.s32 0, %v1015
    %v1017 = vrot.slane %v1012, %v1016
    %v1019 = vmul.f32 %v999, %v1017
    %v1020 = vmul.f32 %v1002, %v1017
    %v1021 = vadd.f32 %v1019, 0.0
    %v1022 = vadd.f32 %v1020, 0.0
    %1023 = vst [vmem:[#allocation12] sm:$0x1] %v959
    %s1024 = scalar_lea.vmem [#allocation2], 1
    %v1025 = vld [vmem:[%s1024] ss:$8 sm:$0xf]
    %v1026 = vld [vmem:[%s1024] ss:$8 sm:$0x30]
    %v1027 = vor.u32 %v1025, %v1026
    %v1028 = vld [vmem:[#allocation8] sm:$0xff]
    %v1029 = vld [vmem:[#allocation8 + $0x8] sm:$0xff]
    %v1030 = vld [vmem:[#allocation8 + $0x10] sm:$0xff]
    %v1031 = vld [vmem:[#allocation8 + $0x18] sm:$0xff]
    %v1032 = vld [vmem:[#allocation8 + $0x20] sm:$0xff]
    %v1033 = vld [vmem:[#allocation8 + $0x28] sm:$0xff]
    %v1034 = vld [vmem:[#allocation8 + $0x30] sm:$0xff]
    %v1035 = vld [vmem:[#allocation8 + $0x38] sm:$0xff]
    %v1036 = vld [vmem:[#allocation8 + $0x40] sm:$0xff]
    %v1037 = vld [vmem:[#allocation8 + $0x48] sm:$0xff]
    %v1038 = vld [vmem:[#allocation8 + $0x50] sm:$0xff]
    %v1039 = vld [vmem:[#allocation8 + $0x58] sm:$0xff]
    %v1040 = vld [vmem:[#allocation8 + $0x60] sm:$0xff]
    %v1041 = vld [vmem:[#allocation8 + $0x68] sm:$0xff]
    %v1042 = vld [vmem:[#allocation8 + $0x70] sm:$0xff]
    %v1043 = vld [vmem:[#allocation8 + $0x78] sm:$0xff]
    %v1044 = vld [vmem:[#allocation8 + $0x80] sm:$0xff]
    %v1045 = vld [vmem:[#allocation8 + $0x88] sm:$0xff]
    %v1046 = vld [vmem:[#allocation8 + $0x90] sm:$0xff]
    %v1047 = vld [vmem:[#allocation8 + $0x98] sm:$0xff]
    %v1048 = vld [vmem:[#allocation8 + $0xa0] sm:$0xff]
    %v1049 = vld [vmem:[#allocation8 + $0xa8] sm:$0xff]
    %v1050 = vld [vmem:[#allocation8 + $0xb0] sm:$0xff]
    %v1051 = vld [vmem:[#allocation8 + $0xb8] sm:$0xff]
    %v1052 = vld [vmem:[#allocation8 + $0xc0] sm:$0xff]
    %v1053 = vld [vmem:[#allocation8 + $0xc8] sm:$0xff]
    %v1054 = vld [vmem:[#allocation8 + $0xd0] sm:$0xff]
    %v1055 = vld [vmem:[#allocation8 + $0xd8] sm:$0xff]
    %v1056 = vld [vmem:[#allocation8 + $0xe0] sm:$0xff]
    %v1057 = vld [vmem:[#allocation8 + $0xe8] sm:$0xff]
    %v1058 = vld [vmem:[#allocation8 + $0xf0] sm:$0xff]
    %v1059 = vld [vmem:[#allocation8 + $0xf8] sm:$0xff]
    %v1060 = vld [vmem:[#allocation8 + $0x100] sm:$0xff]
    %v1061 = vld [vmem:[#allocation8 + $0x108] sm:$0xff]
    %v1062 = vld [vmem:[#allocation8 + $0x110] sm:$0xff]
    %v1063 = vld [vmem:[#allocation8 + $0x118] sm:$0xff]
    %v1064 = vld [vmem:[#allocation8 + $0x120] sm:$0xff]
    %v1065 = vld [vmem:[#allocation8 + $0x128] sm:$0xff]
    %v1066 = vld [vmem:[#allocation8 + $0x130] sm:$0xff]
    %v1067 = vld [vmem:[#allocation8 + $0x138] sm:$0xff]
    %v1068 = vld [vmem:[#allocation8 + $0x140] sm:$0xff]
    %v1069 = vld [vmem:[#allocation8 + $0x148] sm:$0xff]
    %v1070 = vld [vmem:[#allocation8 + $0x150] sm:$0xff]
    %v1071 = vld [vmem:[#allocation8 + $0x158] sm:$0xff]
    %v1072 = vld [vmem:[#allocation8 + $0x160] sm:$0xff]
    %v1073 = vld [vmem:[#allocation8 + $0x168] sm:$0xff]
    %v1074 = vld [vmem:[#allocation8 + $0x170] sm:$0xff]
    %v1075 = vld [vmem:[#allocation8 + $0x178] sm:$0xff]
    %v1076 = vld [vmem:[#allocation8 + $0x180] sm:$0xff]
    %v1077 = vld [vmem:[#allocation8 + $0x188] sm:$0xff]
    %v1078 = vld [vmem:[#allocation8 + $0x190] sm:$0xff]
    %v1079 = vld [vmem:[#allocation8 + $0x198] sm:$0xff]
    %v1080 = vld [vmem:[#allocation8 + $0x1a0] sm:$0xff]
    %v1081 = vld [vmem:[#allocation8 + $0x1a8] sm:$0xff]
    %v1082 = vld [vmem:[#allocation8 + $0x1b0] sm:$0xff]
    %v1083 = vld [vmem:[#allocation8 + $0x1b8] sm:$0xff]
    %v1084 = vld [vmem:[#allocation8 + $0x1c0] sm:$0xff]
    %v1085 = vld [vmem:[#allocation8 + $0x1c8] sm:$0xff]
    %v1086 = vld [vmem:[#allocation8 + $0x1d0] sm:$0xff]
    %v1087 = vld [vmem:[#allocation8 + $0x1d8] sm:$0xff]
    %v1088 = vld [vmem:[#allocation8 + $0x1e0] sm:$0xff]
    %v1089 = vld [vmem:[#allocation8 + $0x1e8] sm:$0xff]
    %v1090 = vld [vmem:[#allocation8 + $0x1f0] sm:$0xff]
    %v1091 = vld [vmem:[#allocation8 + $0x1f8] sm:$0xff]
    %v1092 = vld [vmem:[#allocation8 + $0x200] sm:$0xff]
    %v1093 = vld [vmem:[#allocation8 + $0x208] sm:$0xff]
    %v1094 = vld [vmem:[#allocation8 + $0x210] sm:$0xff]
    %v1095 = vld [vmem:[#allocation8 + $0x218] sm:$0xff]
    %v1096 = vld [vmem:[#allocation8 + $0x220] sm:$0xff]
    %v1097 = vld [vmem:[#allocation8 + $0x228] sm:$0xff]
    %v1098 = vld [vmem:[#allocation8 + $0x230] sm:$0xff]
    %v1099 = vld [vmem:[#allocation8 + $0x238] sm:$0xff]
    %v1100 = vld [vmem:[#allocation8 + $0x240] sm:$0xff]
    %v1101 = vld [vmem:[#allocation8 + $0x248] sm:$0xff]
    %v1102 = vld [vmem:[#allocation8 + $0x250] sm:$0xff]
    %v1103 = vld [vmem:[#allocation8 + $0x258] sm:$0xff]
    %v1104 = vld [vmem:[#allocation8 + $0x260] sm:$0xff]
    %v1105 = vld [vmem:[#allocation8 + $0x268] sm:$0xff]
    %v1106 = vld [vmem:[#allocation8 + $0x270] sm:$0xff]
    %v1107 = vld [vmem:[#allocation8 + $0x278] sm:$0xff]
    %v1108 = vld [vmem:[#allocation8 + $0x280] sm:$0xff]
    %v1109 = vld [vmem:[#allocation8 + $0x288] sm:$0xff]
    %v1110 = vld [vmem:[#allocation8 + $0x290] sm:$0xff]
    %v1111 = vld [vmem:[#allocation8 + $0x298] sm:$0xff]
    %v1112 = vld [vmem:[#allocation8 + $0x2a0] sm:$0xff]
    %v1113 = vld [vmem:[#allocation8 + $0x2a8] sm:$0xff]
    %v1114 = vld [vmem:[#allocation8 + $0x2b0] sm:$0xff]
    %v1115 = vld [vmem:[#allocation8 + $0x2b8] sm:$0xff]
    %v1116 = vld [vmem:[#allocation8 + $0x2c0] sm:$0xff]
    %v1117 = vld [vmem:[#allocation8 + $0x2c8] sm:$0xff]
    %v1118 = vld [vmem:[#allocation8 + $0x2d0] sm:$0xff]
    %v1119 = vld [vmem:[#allocation8 + $0x2d8] sm:$0xff]
    %v1120 = vld [vmem:[#allocation8 + $0x2e0] sm:$0xff]
    %v1121 = vld [vmem:[#allocation8 + $0x2e8] sm:$0xff]
    %v1122 = vld [vmem:[#allocation8 + $0x2f0] sm:$0xff]
    %v1123 = vld [vmem:[#allocation8 + $0x2f8] sm:$0xff]
    %1124 = vmatprep.subr.mxu0 %v1119
    %1125 = vmatpush1.msra.mxu0 %v1118
    %1126 = vmatprep.subr.mxu0 %v1113
    %1127 = vmatpush1.msra.mxu0 %v1112
    %1128 = vmatprep.subr.mxu0 %v1107
    %1129 = vmatpush1.msra.mxu0 %v1106
    %1130 = vmatprep.subr.mxu0 %v1101
    %1131 = vmatpush1.msra.mxu0 %v1100
    %1132 = vmatprep.subr.mxu0 %v1095
    %1133 = vmatpush1.msra.mxu0 %v1094
    %1134 = vmatprep.subr.mxu0 %v1089
    %1135 = vmatpush1.msra.mxu0 %v1088
    %1136 = vmatprep.subr.mxu0 %v1083
    %1137 = vmatpush1.msra.mxu0 %v1082
    %1138 = vmatprep.subr.mxu0 %v1077
    %1139 = vmatpush1.msra.mxu0 %v1076
    %1140 = vmatprep.subr.mxu0 %v1071
    %1141 = vmatpush1.msra.mxu0 %v1070
    %1142 = vmatprep.subr.mxu0 %v1065
    %1143 = vmatpush1.msra.mxu0 %v1064
    %1144 = vmatprep.subr.mxu0 %v1059
    %1145 = vmatpush1.msra.mxu0 %v1058
    %1146 = vmatprep.subr.mxu0 %v1053
    %1147 = vmatpush1.msra.mxu0 %v1052
    %1148 = vmatprep.subr.mxu0 %v1047
    %1149 = vmatpush1.msra.mxu0 %v1046
    %1150 = vmatprep.subr.mxu0 %v1041
    %1151 = vmatpush1.msra.mxu0 %v1040
    %1152 = vmatprep.subr.mxu0 %v1035
    %1153 = vmatpush1.msra.mxu0 %v1034
    %1154 = vmatprep.subr.mxu0 %v1029
    %1155 = vmatpush1.msra.mxu0 %v1028
    %1156 = vmatprep.subr.mxu0 0.0
    %1157 = vmatpush2.msra.mxu0 0.0
    %1158 = vmatprep.subr.mxu0 0.0
    %1159 = vmatpush2.msra.mxu0 0.0
    %1160 = vmatprep.subr.mxu0 0.0
    %1161 = vmatpush2.msra.mxu0 0.0
    %1162 = vmatprep.subr.mxu0 0.0
    %1163 = vmatpush2.msra.mxu0 0.0
    %1164 = vmatprep.subr.mxu0 0.0
    %1165 = vmatpush2.msra.mxu0 0.0
    %1166 = vmatprep.subr.mxu0 0.0
    %1167 = vmatpush2.msra.mxu0 0.0
    %1168 = vmatprep.subr.mxu0 0.0
    %1169 = vmatpush2.msra.mxu0 0.0
    %1170 = vmatprep.subr.mxu0 0.0
    %1171 = vmatpush2.msra.mxu0 0.0
    %1172 = vmatprep.subr.mxu0 0.0
    %1173 = vmatpush2.msra.mxu0 0.0
    %1174 = vmatprep.subr.mxu0 0.0
    %1175 = vmatpush2.msra.mxu0 0.0
    %1176 = vmatprep.subr.mxu0 0.0
    %1177 = vmatpush2.msra.mxu0 0.0
    %1178 = vmatprep.subr.mxu0 0.0
    %1179 = vmatpush2.msra.mxu0 0.0
    %1180 = vmatprep.subr.mxu0 0.0
    %1181 = vmatpush2.msra.mxu0 0.0
    %1182 = vmatprep.subr.mxu0 0.0
    %1183 = vmatpush2.msra.mxu0 0.0
    %1184 = vmatprep.subr.mxu0 0.0
    %1185 = vmatpush2.msra.mxu0 0.0
    %1186 = vmatprep.subr.mxu0 0.0
    %1187 = vmatpush2.msra.mxu0 0.0
    %1188 = vmatprep.mubr.f32.mxu0 0.0
    %1189 = vmatmul.mubr.f32.gmra.mxu0 %v959
    %v1190 = vpop.f32.mrf.mxu0
    %v1191 = vadd.f32 0.0, %v1190
    %v1192 = vpop.f32.mrf.mxu0
    %v1193 = vadd.f32 0.0, %v1192
    %1194 = vdwg.mxu0
    %1195 = vmatprep.subr.mxu0 %v1121
    %1196 = vmatpush1.msra.mxu0 %v1120
    %1197 = vmatprep.subr.mxu0 %v1115
    %1198 = vmatpush1.msra.mxu0 %v1114
    %1199 = vmatprep.subr.mxu0 %v1109
    %1200 = vmatpush1.msra.mxu0 %v1108
    %1201 = vmatprep.subr.mxu0 %v1103
    %1202 = vmatpush1.msra.mxu0 %v1102
    %1203 = vmatprep.subr.mxu0 %v1097
    %1204 = vmatpush1.msra.mxu0 %v1096
    %1205 = vmatprep.subr.mxu0 %v1091
    %1206 = vmatpush1.msra.mxu0 %v1090
    %1207 = vmatprep.subr.mxu0 %v1085
    %1208 = vmatpush1.msra.mxu0 %v1084
    %1209 = vmatprep.subr.mxu0 %v1079
    %1210 = vmatpush1.msra.mxu0 %v1078
    %1211 = vmatprep.subr.mxu0 %v1073
    %1212 = vmatpush1.msra.mxu0 %v1072
    %1213 = vmatprep.subr.mxu0 %v1067
    %1214 = vmatpush1.msra.mxu0 %v1066
    %1215 = vmatprep.subr.mxu0 %v1061
    %1216 = vmatpush1.msra.mxu0 %v1060
    %1217 = vmatprep.subr.mxu0 %v1055
    %1218 = vmatpush1.msra.mxu0 %v1054
    %1219 = vmatprep.subr.mxu0 %v1049
    %1220 = vmatpush1.msra.mxu0 %v1048
    %1221 = vmatprep.subr.mxu0 %v1043
    %1222 = vmatpush1.msra.mxu0 %v1042
    %1223 = vmatprep.subr.mxu0 %v1037
    %1224 = vmatpush1.msra.mxu0 %v1036
    %1225 = vmatprep.subr.mxu0 %v1031
    %1226 = vmatpush1.msra.mxu0 %v1030
    %1227 = vmatprep.subr.mxu0 0.0
    %1228 = vmatpush2.msra.mxu0 0.0
    %1229 = vmatprep.subr.mxu0 0.0
    %1230 = vmatpush2.msra.mxu0 0.0
    %1231 = vmatprep.subr.mxu0 0.0
    %1232 = vmatpush2.msra.mxu0 0.0
    %1233 = vmatprep.subr.mxu0 0.0
    %1234 = vmatpush2.msra.mxu0 0.0
    %1235 = vmatprep.subr.mxu0 0.0
    %1236 = vmatpush2.msra.mxu0 0.0
    %1237 = vmatprep.subr.mxu0 0.0
    %1238 = vmatpush2.msra.mxu0 0.0
    %1239 = vmatprep.subr.mxu0 0.0
    %1240 = vmatpush2.msra.mxu0 0.0
    %1241 = vmatprep.subr.mxu0 0.0
    %1242 = vmatpush2.msra.mxu0 0.0
    %1243 = vmatprep.subr.mxu0 0.0
    %1244 = vmatpush2.msra.mxu0 0.0
    %1245 = vmatprep.subr.mxu0 0.0
    %1246 = vmatpush2.msra.mxu0 0.0
    %1247 = vmatprep.subr.mxu0 0.0
    %1248 = vmatpush2.msra.mxu0 0.0
    %1249 = vmatprep.subr.mxu0 0.0
    %1250 = vmatpush2.msra.mxu0 0.0
    %1251 = vmatprep.subr.mxu0 0.0
    %1252 = vmatpush2.msra.mxu0 0.0
    %1253 = vmatprep.subr.mxu0 0.0
    %1254 = vmatpush2.msra.mxu0 0.0
    %1255 = vmatprep.subr.mxu0 0.0
    %1256 = vmatpush2.msra.mxu0 0.0
    %1257 = vmatprep.subr.mxu0 0.0
    %1258 = vmatpush2.msra.mxu0 0.0
    %1259 = vmatprep.mubr.f32.mxu0 0.0
    %1260 = vmatmul.mubr.f32.gmra.mxu0 %v959
    %v1261 = vpop.f32.mrf.mxu0
    %v1262 = vadd.f32 0.0, %v1261
    %v1263 = vpop.f32.mrf.mxu0
    %v1264 = vadd.f32 0.0, %v1263
    %1265 = vdwg.mxu0
    %1266 = vmatprep.subr.mxu0 %v1123
    %1267 = vmatpush1.msra.mxu0 %v1122
    %1268 = vmatprep.subr.mxu0 %v1117
    %1269 = vmatpush1.msra.mxu0 %v1116
    %1270 = vmatprep.subr.mxu0 %v1111
    %1271 = vmatpush1.msra.mxu0 %v1110
    %1272 = vmatprep.subr.mxu0 %v1105
    %1273 = vmatpush1.msra.mxu0 %v1104
    %1274 = vmatprep.subr.mxu0 %v1099
    %1275 = vmatpush1.msra.mxu0 %v1098
    %1276 = vmatprep.subr.mxu0 %v1093
    %1277 = vmatpush1.msra.mxu0 %v1092
    %1278 = vmatprep.subr.mxu0 %v1087
    %1279 = vmatpush1.msra.mxu0 %v1086
    %1280 = vmatprep.subr.mxu0 %v1081
    %1281 = vmatpush1.msra.mxu0 %v1080
    %1282 = vmatprep.subr.mxu0 %v1075
    %1283 = vmatpush1.msra.mxu0 %v1074
    %1284 = vmatprep.subr.mxu0 %v1069
    %1285 = vmatpush1.msra.mxu0 %v1068
    %1286 = vmatprep.subr.mxu0 %v1063
    %1287 = vmatpush1.msra.mxu0 %v1062
    %1288 = vmatprep.subr.mxu0 %v1057
    %1289 = vmatpush1.msra.mxu0 %v1056
    %1290 = vmatprep.subr.mxu0 %v1051
    %1291 = vmatpush1.msra.mxu0 %v1050
    %1292 = vmatprep.subr.mxu0 %v1045
    %1293 = vmatpush1.msra.mxu0 %v1044
    %1294 = vmatprep.subr.mxu0 %v1039
    %1295 = vmatpush1.msra.mxu0 %v1038
    %1296 = vmatprep.subr.mxu0 %v1033
    %1297 = vmatpush1.msra.mxu0 %v1032
    %1298 = vmatprep.subr.mxu0 0.0
    %1299 = vmatpush2.msra.mxu0 0.0
    %1300 = vmatprep.subr.mxu0 0.0
    %1301 = vmatpush2.msra.mxu0 0.0
    %1302 = vmatprep.subr.mxu0 0.0
    %1303 = vmatpush2.msra.mxu0 0.0
    %1304 = vmatprep.subr.mxu0 0.0
    %1305 = vmatpush2.msra.mxu0 0.0
    %1306 = vmatprep.subr.mxu0 0.0
    %1307 = vmatpush2.msra.mxu0 0.0
    %1308 = vmatprep.subr.mxu0 0.0
    %1309 = vmatpush2.msra.mxu0 0.0
    %1310 = vmatprep.subr.mxu0 0.0
    %1311 = vmatpush2.msra.mxu0 0.0
    %1312 = vmatprep.subr.mxu0 0.0
    %1313 = vmatpush2.msra.mxu0 0.0
    %1314 = vmatprep.subr.mxu0 0.0
    %1315 = vmatpush2.msra.mxu0 0.0
    %1316 = vmatprep.subr.mxu0 0.0
    %1317 = vmatpush2.msra.mxu0 0.0
    %1318 = vmatprep.subr.mxu0 0.0
    %1319 = vmatpush2.msra.mxu0 0.0
    %1320 = vmatprep.subr.mxu0 0.0
    %1321 = vmatpush2.msra.mxu0 0.0
    %1322 = vmatprep.subr.mxu0 0.0
    %1323 = vmatpush2.msra.mxu0 0.0
    %1324 = vmatprep.subr.mxu0 0.0
    %1325 = vmatpush2.msra.mxu0 0.0
    %1326 = vmatprep.subr.mxu0 0.0
    %1327 = vmatpush2.msra.mxu0 0.0
    %1328 = vmatprep.subr.mxu0 0.0
    %1329 = vmatpush2.msra.mxu0 0.0
    %1330 = vmatprep.mubr.f32.mxu0 0.0
    %1331 = vmatmul.mubr.f32.gmra.mxu0 %v959
    %v1332 = vpop.f32.mrf.mxu0
    %v1333 = vadd.f32 0.0, %v1332
    %v1334 = vpop.f32.mrf.mxu0
    %v1335 = vadd.f32 0.0, %v1334
    %1336 = vdwg.mxu0
    %v1343 = vcombine.low %v1191, %v1193
    %v1344 = vcombine.low %v1262, %v1264
    %v1345 = vcombine.low %v1333, %v1335
    %v1347 = vunpack.c.l.s4 1966171168
    %v1348 = vunpack.c.0.s8 %v1347
    %v1349 = vlaneseq
    %v1350 = vshrl.u32 %v1349, 7
    %v1351 = vsub.s32 %v1348, %v1350
    %v1352 = vrot.slane %v1343, %v1351
    %v1354 = vunpack.c.l.s4 1966171168
    %v1355 = vunpack.c.0.s8 %v1354
    %v1356 = vlaneseq
    %v1357 = vshrl.u32 %v1356, 7
    %v1358 = vsub.s32 %v1355, %v1357
    %v1359 = vrot.slane %v1344, %v1358
    %v1361 = vunpack.c.l.s4 1966171168
    %v1362 = vunpack.c.0.s8 %v1361
    %v1363 = vlaneseq
    %v1364 = vshrl.u32 %v1363, 7
    %v1365 = vsub.s32 %v1362, %v1364
    %v1366 = vrot.slane %v1345, %v1365
    %v1367 = vcombine.low %v1352, %v1359
    %v1369 = vunpack.c.l.s4 1966171168
    %v1370 = vunpack.c.0.s8 %v1369
    %v1371 = vlaneseq
    %v1372 = vshrl.u32 %v1371, 7
    %v1373 = vsub.s32 %v1370, %v1372
    %v1374 = vrot.slane %v1367, %v1373
    %v1376 = vunpack.c.l.s4 1966171168
    %v1377 = vunpack.c.0.s8 %v1376
    %v1378 = vlaneseq
    %v1379 = vshrl.u32 %v1378, 7
    %v1380 = vsub.s32 %v1377, %v1379
    %v1381 = vrot.slane %v1366, %v1380
    %v1382 = vcombine.low %v1374, %v1381
    %v1384 = vadd.f32 %v1027, %v1382
    %v1386 = vrot.slane %v1384, 4
    %v1388 = vxor.u32 %v1386, 2147483648
    %v1389 = vmul.f32 %v1388, 1.442695
    %v1390 = vpow.pop %v1389
    %v1391 = vadd.f32 %v1390, 1.0
    %v1392 = vrcp.pop %v1391
    %v1393 = vmul.f32 1.0, %v1392
    %v1394 = vlaneseq
    %v1395 = vshrl.u32 %v1394, 7
    %v1396 = vsub.s32 2, %v1395
    %v1397 = vrot.slane %v1384, %v1396
    %v1399 = vsel %vm774, %v1397, -inf
    %1400 = vmax.xlane.f32.xlu0 %v1399
    %v1401 = vpop.xlane.xlu0 %1400
    %v1402 = vrot.slane %v1384, 2
    %v1404 = vsub.f32 %v1402, %v1401
    %v1405 = vmul.f32 %v1404, 1.442695
    %v1406 = vpow.pop %v1405
    %v1407 = vsel %vm774, %v1406, 0.0
    %1408 = vadd.xlane.f32.xlu0 %v1407
    %v1409 = vpop.xlane.xlu0 %1408
    %v1410 = vrcp.pop %v1409
    %v1411 = vmul.f32 %v1406, %v1410
    %1413 = vset.pattern.permute.xlu0 0
    %1414 = vperm.xlu0 %1413, %v1393
    %v1415 = vpop.permute.xlu0 %1414
    %v1417 = vlaneseq
    %v1418 = vshrl.u32 %v1417, 7
    %v1419 = vsub.s32 0, %v1418
    %v1420 = vrot.slane %v1415, %v1419
    %v1421 = vmul.f32 %v1420, %v1411
    %v1423 = vsel %vm798, %v1421, 0
    %1425 = vmatprep.subr.mxu0 0.0
    %1426 = vmatpush1.msra.mxu0 0.0
    %1427 = vmatprep.subr.mxu0 0.0
    %1428 = vmatpush1.msra.mxu0 0.0
    %1429 = vmatprep.subr.mxu0 0.0
    %1430 = vmatpush1.msra.mxu0 0.0
    %1431 = vmatprep.subr.mxu0 0.0
    %1432 = vmatpush1.msra.mxu0 0.0
    %1433 = vmatprep.subr.mxu0 0.0
    %1434 = vmatpush1.msra.mxu0 0.0
    %1435 = vmatprep.subr.mxu0 0.0
    %1436 = vmatpush1.msra.mxu0 0.0
    %1437 = vmatprep.subr.mxu0 0.0
    %1438 = vmatpush1.msra.mxu0 0.0
    %1439 = vmatprep.subr.mxu0 0.0
    %1440 = vmatpush1.msra.mxu0 0.0
    %1441 = vmatprep.subr.mxu0 0.0
    %1442 = vmatpush1.msra.mxu0 0.0
    %1443 = vmatprep.subr.mxu0 0.0
    %1444 = vmatpush1.msra.mxu0 0.0
    %1445 = vmatprep.subr.mxu0 0.0
    %1446 = vmatpush1.msra.mxu0 0.0
    %1447 = vmatprep.subr.mxu0 0.0
    %1448 = vmatpush1.msra.mxu0 0.0
    %1449 = vmatprep.subr.mxu0 0.0
    %1450 = vmatpush1.msra.mxu0 0.0
    %1451 = vmatprep.subr.mxu0 0.0
    %1452 = vmatpush1.msra.mxu0 0.0
    %1453 = vmatprep.subr.mxu0 0.0
    %1454 = vmatpush1.msra.mxu0 %v1022
    %1455 = vmatprep.subr.mxu0 0.0
    %1456 = vmatpush1.msra.mxu0 %v1021
    %1457 = vmatprep.subr.mxu0 0.0
    %1458 = vmatpush2.msra.mxu0 0.0
    %1459 = vmatprep.subr.mxu0 0.0
    %1460 = vmatpush2.msra.mxu0 0.0
    %1461 = vmatprep.subr.mxu0 0.0
    %1462 = vmatpush2.msra.mxu0 0.0
    %1463 = vmatprep.subr.mxu0 0.0
    %1464 = vmatpush2.msra.mxu0 0.0
    %1465 = vmatprep.subr.mxu0 0.0
    %1466 = vmatpush2.msra.mxu0 0.0
    %1467 = vmatprep.subr.mxu0 0.0
    %1468 = vmatpush2.msra.mxu0 0.0
    %1469 = vmatprep.subr.mxu0 0.0
    %1470 = vmatpush2.msra.mxu0 0.0
    %1471 = vmatprep.subr.mxu0 0.0
    %1472 = vmatpush2.msra.mxu0 0.0
    %1473 = vmatprep.subr.mxu0 0.0
    %1474 = vmatpush2.msra.mxu0 0.0
    %1475 = vmatprep.subr.mxu0 0.0
    %1476 = vmatpush2.msra.mxu0 0.0
    %1477 = vmatprep.subr.mxu0 0.0
    %1478 = vmatpush2.msra.mxu0 0.0
    %1479 = vmatprep.subr.mxu0 0.0
    %1480 = vmatpush2.msra.mxu0 0.0
    %1481 = vmatprep.subr.mxu0 0.0
    %1482 = vmatpush2.msra.mxu0 0.0
    %1483 = vmatprep.subr.mxu0 0.0
    %1484 = vmatpush2.msra.mxu0 0.0
    %1485 = vmatprep.subr.mxu0 0.0
    %1486 = vmatpush2.msra.mxu0 0.0
    %1487 = vmatprep.subr.mxu0 0.0
    %1488 = vmatpush2.msra.mxu0 0.0
    %1489 = vmatprep.mubr.f32.mxu0 0.0
    %1490 = vmatmul.mubr.f32.gmra.mxu0 %v1423
    %v1491 = vpop.f32.mrf.mxu0
    %v1492 = vadd.f32 0.0, %v1491
    %v1493 = vpop.f32.mrf.mxu0
    %1494 = vdwg.mxu0
    %v1495 = vld [vmem:[#allocation11] sm:$0xff]
    %v1496 = vld [vmem:[#allocation11 + $0x8] sm:$0xff]
    %v1497 = vld [vmem:[#allocation11 + $0x10] sm:$0xff]
    %v1498 = vld [vmem:[#allocation11 + $0x18] sm:$0xff]
    %v1499 = vld [vmem:[#allocation11 + $0x20] sm:$0xff]
    %v1500 = vld [vmem:[#allocation11 + $0x28] sm:$0xff]
    %v1501 = vld [vmem:[#allocation11 + $0x30] sm:$0xff]
    %v1502 = vld [vmem:[#allocation11 + $0x38] sm:$0xff]
    %v1503 = vld [vmem:[#allocation11 + $0x40] sm:$0xff]
    %v1504 = vld [vmem:[#allocation11 + $0x48] sm:$0xff]
    %v1505 = vld [vmem:[#allocation11 + $0x50] sm:$0xff]
    %v1506 = vld [vmem:[#allocation11 + $0x58] sm:$0xff]
    %v1507 = vld [vmem:[#allocation11 + $0x60] sm:$0xff]
    %v1508 = vld [vmem:[#allocation11 + $0x68] sm:$0xff]
    %v1509 = vld [vmem:[#allocation11 + $0x70] sm:$0xff]
    %v1510 = vld [vmem:[#allocation11 + $0x78] sm:$0xff]
    %1511 = vmatprep.subr.mxu0 0.0
    %1512 = vmatpush1.msra.mxu0 %v1510
    %1513 = vmatprep.subr.mxu0 0.0
    %1514 = vmatpush1.msra.mxu0 %v1509
    %1515 = vmatprep.subr.mxu0 0.0
    %1516 = vmatpush1.msra.mxu0 %v1508
    %1517 = vmatprep.subr.mxu0 0.0
    %1518 = vmatpush1.msra.mxu0 %v1507
    %1519 = vmatprep.subr.mxu0 0.0
    %1520 = vmatpush1.msra.mxu0 %v1506
    %1521 = vmatprep.subr.mxu0 0.0
    %1522 = vmatpush1.msra.mxu0 %v1505
    %1523 = vmatprep.subr.mxu0 0.0
    %1524 = vmatpush1.msra.mxu0 %v1504
    %1525 = vmatprep.subr.mxu0 0.0
    %1526 = vmatpush1.msra.mxu0 %v1503
    %1527 = vmatprep.subr.mxu0 0.0
    %1528 = vmatpush1.msra.mxu0 %v1502
    %1529 = vmatprep.subr.mxu0 0.0
    %1530 = vmatpush1.msra.mxu0 %v1501
    %1531 = vmatprep.subr.mxu0 0.0
    %1532 = vmatpush1.msra.mxu0 %v1500
    %1533 = vmatprep.subr.mxu0 0.0
    %1534 = vmatpush1.msra.mxu0 %v1499
    %1535 = vmatprep.subr.mxu0 0.0
    %1536 = vmatpush1.msra.mxu0 %v1498
    %1537 = vmatprep.subr.mxu0 0.0
    %1538 = vmatpush1.msra.mxu0 %v1497
    %1539 = vmatprep.subr.mxu0 0.0
    %1540 = vmatpush1.msra.mxu0 %v1496
    %1541 = vmatprep.subr.mxu0 0.0
    %1542 = vmatpush1.msra.mxu0 %v1495
    %1543 = vmatprep.subr.mxu0 0.0
    %1544 = vmatpush2.msra.mxu0 0.0
    %1545 = vmatprep.subr.mxu0 0.0
    %1546 = vmatpush2.msra.mxu0 0.0
    %1547 = vmatprep.subr.mxu0 0.0
    %1548 = vmatpush2.msra.mxu0 0.0
    %1549 = vmatprep.subr.mxu0 0.0
    %1550 = vmatpush2.msra.mxu0 0.0
    %1551 = vmatprep.subr.mxu0 0.0
    %1552 = vmatpush2.msra.mxu0 0.0
    %1553 = vmatprep.subr.mxu0 0.0
    %1554 = vmatpush2.msra.mxu0 0.0
    %1555 = vmatprep.subr.mxu0 0.0
    %1556 = vmatpush2.msra.mxu0 0.0
    %1557 = vmatprep.subr.mxu0 0.0
    %1558 = vmatpush2.msra.mxu0 0.0
    %1559 = vmatprep.subr.mxu0 0.0
    %1560 = vmatpush2.msra.mxu0 0.0
    %1561 = vmatprep.subr.mxu0 0.0
    %1562 = vmatpush2.msra.mxu0 0.0
    %1563 = vmatprep.subr.mxu0 0.0
    %1564 = vmatpush2.msra.mxu0 0.0
    %1565 = vmatprep.subr.mxu0 0.0
    %1566 = vmatpush2.msra.mxu0 0.0
    %1567 = vmatprep.subr.mxu0 0.0
    %1568 = vmatpush2.msra.mxu0 0.0
    %1569 = vmatprep.subr.mxu0 0.0
    %1570 = vmatpush2.msra.mxu0 0.0
    %1571 = vmatprep.subr.mxu0 0.0
    %1572 = vmatpush2.msra.mxu0 0.0
    %1573 = vmatprep.subr.mxu0 0.0
    %1574 = vmatpush2.msra.mxu0 0.0
    %1575 = vmatprep.mubr.f32.mxu0 0.0
    %1576 = vmatmul.mubr.f32.gmra.mxu0 %v1492
    %v1577 = vpop.f32.mrf.mxu0
    %v1578 = vadd.f32 0.0, %v1577
    %v1579 = vpop.f32.mrf.mxu0
    %1580 = vdwg.mxu0
    %v1581 = vadd.f32 %v1384, %v1578
    %v1582 = vmax.f32 %v1581, 0.0
    %v1583 = vrot.slane %v1384, 1
    %v1585 = vmax.f32 %v1583, 0.0
    %v1586 = vlaneseq
    %v1587 = vshrl.u32 %v1586, 7
    %v1588 = vsub.s32 3, %v1587
    %v1589 = vrot.slane %v1384, %v1588
    %v1591 = vsel %vm774, %v1589, -inf
    %1592 = vmax.xlane.f32.xlu0 %v1591
    %v1593 = vpop.xlane.xlu0 %1592
    %v1594 = vrot.slane %v1384, 3
    %v1596 = vsub.f32 %v1594, %v1593
    %v1597 = vmul.f32 %v1596, 1.442695
    %v1598 = vpow.pop %v1597
    %v1599 = vsel %vm774, %v1598, 0.0
    %1600 = vadd.xlane.f32.xlu0 %v1599
    %v1601 = vpop.xlane.xlu0 %1600
    %v1602 = vrcp.pop %v1601
    %v1603 = vmul.f32 %v1598, %v1602
    %v1604 = vrot.slane %v1384, 5
    %v1606 = vxor.u32 %v1604, 2147483648
    %v1607 = vmul.f32 %v1606, 1.442695
    %v1608 = vpow.pop %v1607
    %v1609 = vadd.f32 %v1608, 1.0
    %v1610 = vrcp.pop %v1609
    %v1611 = vmul.f32 1.0, %v1610
    %v1613 = vlaneseq
    %v1614 = vshrl.u32 %v1613, 7
    %v1615 = vsub.s32 0, %v1614
    %v1616 = vrot.slane %v1603, %v1615
    %v1618 = vmul.f32 %v1616, %v398
    %v1619 = vmul.f32 %v1616, %v399
    %v1620 = vsel %vm798, %v1618, 0.0
    %1621 = vadd.xlane.f32.xlu0 %v1620
    %v1622 = vpop.xlane.xlu0 %1621
    %v1623 = vsel %vm798, %v1619, 0.0
    %1624 = vadd.xlane.f32.xlu0 %v1623
    %v1625 = vpop.xlane.xlu0 %1624
    %1627 = vset.pattern.permute.xlu0 0
    %1628 = vperm.xlu0 %1627, %v1611
    %v1629 = vpop.permute.xlu0 %1628
    %v1631 = vlaneseq
    %v1632 = vshrl.u32 %v1631, 7
    %v1633 = vsub.s32 0, %v1632
    %v1634 = vrot.slane %v1629, %v1633
    %v1635 = vmul.f32 %v1634, %v1585
    %v1637 = vlaneseq
    %v1638 = vshrl.u32 %v1637, 7
    %v1639 = vsub.s32 0, %v1638
    %v1640 = vrot.slane %v1635, %v1639
    %v1642 = vsub.f32 %v1640, %v1021
    %v1643 = vsub.f32 %v1640, %v1022
    %v1644 = vmul.f32 %v1622, %v1642
    %v1645 = vmul.f32 %v1625, %v1643
    %v1646 = vadd.f32 %v1021, %v1644
    %v1647 = vadd.f32 %v1022, %v1645
    %1648 = vst [vmem:[#allocation12 + $0x1] sm:$0x1] %v1582
    %s1649 = scalar_lea.vmem [#allocation2], 2
    %v1650 = vld [vmem:[%s1649] ss:$8 sm:$0xf]
    %v1651 = vld [vmem:[%s1649] ss:$8 sm:$0x30]
    %v1652 = vor.u32 %v1650, %v1651
    %v1653 = vld [vmem:[#allocation8] sm:$0xff]
    %v1654 = vld [vmem:[#allocation8 + $0x8] sm:$0xff]
    %v1655 = vld [vmem:[#allocation8 + $0x10] sm:$0xff]
    %v1656 = vld [vmem:[#allocation8 + $0x18] sm:$0xff]
    %v1657 = vld [vmem:[#allocation8 + $0x20] sm:$0xff]
    %v1658 = vld [vmem:[#allocation8 + $0x28] sm:$0xff]
    %v1659 = vld [vmem:[#allocation8 + $0x30] sm:$0xff]
    %v1660 = vld [vmem:[#allocation8 + $0x38] sm:$0xff]
    %v1661 = vld [vmem:[#allocation8 + $0x40] sm:$0xff]
    %v1662 = vld [vmem:[#allocation8 + $0x48] sm:$0xff]
    %v1663 = vld [vmem:[#allocation8 + $0x50] sm:$0xff]
    %v1664 = vld [vmem:[#allocation8 + $0x58] sm:$0xff]
    %v1665 = vld [vmem:[#allocation8 + $0x60] sm:$0xff]
    %v1666 = vld [vmem:[#allocation8 + $0x68] sm:$0xff]
    %v1667 = vld [vmem:[#allocation8 + $0x70] sm:$0xff]
    %v1668 = vld [vmem:[#allocation8 + $0x78] sm:$0xff]
    %v1669 = vld [vmem:[#allocation8 + $0x80] sm:$0xff]
    %v1670 = vld [vmem:[#allocation8 + $0x88] sm:$0xff]
    %v1671 = vld [vmem:[#allocation8 + $0x90] sm:$0xff]
    %v1672 = vld [vmem:[#allocation8 + $0x98] sm:$0xff]
    %v1673 = vld [vmem:[#allocation8 + $0xa0] sm:$0xff]
    %v1674 = vld [vmem:[#allocation8 + $0xa8] sm:$0xff]
    %v1675 = vld [vmem:[#allocation8 + $0xb0] sm:$0xff]
    %v1676 = vld [vmem:[#allocation8 + $0xb8] sm:$0xff]
    %v1677 = vld [vmem:[#allocation8 + $0xc0] sm:$0xff]
    %v1678 = vld [vmem:[#allocation8 + $0xc8] sm:$0xff]
    %v1679 = vld [vmem:[#allocation8 + $0xd0] sm:$0xff]
    %v1680 = vld [vmem:[#allocation8 + $0xd8] sm:$0xff]
    %v1681 = vld [vmem:[#allocation8 + $0xe0] sm:$0xff]
    %v1682 = vld [vmem:[#allocation8 + $0xe8] sm:$0xff]
    %v1683 = vld [vmem:[#allocation8 + $0xf0] sm:$0xff]
    %v1684 = vld [vmem:[#allocation8 + $0xf8] sm:$0xff]
    %v1685 = vld [vmem:[#allocation8 + $0x100] sm:$0xff]
    %v1686 = vld [vmem:[#allocation8 + $0x108] sm:$0xff]
    %v1687 = vld [vmem:[#allocation8 + $0x110] sm:$0xff]
    %v1688 = vld [vmem:[#allocation8 + $0x118] sm:$0xff]
    %v1689 = vld [vmem:[#allocation8 + $0x120] sm:$0xff]
    %v1690 = vld [vmem:[#allocation8 + $0x128] sm:$0xff]
    %v1691 = vld [vmem:[#allocation8 + $0x130] sm:$0xff]
    %v1692 = vld [vmem:[#allocation8 + $0x138] sm:$0xff]
    %v1693 = vld [vmem:[#allocation8 + $0x140] sm:$0xff]
    %v1694 = vld [vmem:[#allocation8 + $0x148] sm:$0xff]
    %v1695 = vld [vmem:[#allocation8 + $0x150] sm:$0xff]
    %v1696 = vld [vmem:[#allocation8 + $0x158] sm:$0xff]
    %v1697 = vld [vmem:[#allocation8 + $0x160] sm:$0xff]
    %v1698 = vld [vmem:[#allocation8 + $0x168] sm:$0xff]
    %v1699 = vld [vmem:[#allocation8 + $0x170] sm:$0xff]
    %v1700 = vld [vmem:[#allocation8 + $0x178] sm:$0xff]
    %v1701 = vld [vmem:[#allocation8 + $0x180] sm:$0xff]
    %v1702 = vld [vmem:[#allocation8 + $0x188] sm:$0xff]
    %v1703 = vld [vmem:[#allocation8 + $0x190] sm:$0xff]
    %v1704 = vld [vmem:[#allocation8 + $0x198] sm:$0xff]
    %v1705 = vld [vmem:[#allocation8 + $0x1a0] sm:$0xff]
    %v1706 = vld [vmem:[#allocation8 + $0x1a8] sm:$0xff]
    %v1707 = vld [vmem:[#allocation8 + $0x1b0] sm:$0xff]
    %v1708 = vld [vmem:[#allocation8 + $0x1b8] sm:$0xff]
    %v1709 = vld [vmem:[#allocation8 + $0x1c0] sm:$0xff]
    %v1710 = vld [vmem:[#allocation8 + $0x1c8] sm:$0xff]
    %v1711 = vld [vmem:[#allocation8 + $0x1d0] sm:$0xff]
    %v1712 = vld [vmem:[#allocation8 + $0x1d8] sm:$0xff]
    %v1713 = vld [vmem:[#allocation8 + $0x1e0] sm:$0xff]
    %v1714 = vld [vmem:[#allocation8 + $0x1e8] sm:$0xff]
    %v1715 = vld [vmem:[#allocation8 + $0x1f0] sm:$0xff]
    %v1716 = vld [vmem:[#allocation8 + $0x1f8] sm:$0xff]
    %v1717 = vld [vmem:[#allocation8 + $0x200] sm:$0xff]
    %v1718 = vld [vmem:[#allocation8 + $0x208] sm:$0xff]
    %v1719 = vld [vmem:[#allocation8 + $0x210] sm:$0xff]
    %v1720 = vld [vmem:[#allocation8 + $0x218] sm:$0xff]
    %v1721 = vld [vmem:[#allocation8 + $0x220] sm:$0xff]
    %v1722 = vld [vmem:[#allocation8 + $0x228] sm:$0xff]
    %v1723 = vld [vmem:[#allocation8 + $0x230] sm:$0xff]
    %v1724 = vld [vmem:[#allocation8 + $0x238] sm:$0xff]
    %v1725 = vld [vmem:[#allocation8 + $0x240] sm:$0xff]
    %v1726 = vld [vmem:[#allocation8 + $0x248] sm:$0xff]
    %v1727 = vld [vmem:[#allocation8 + $0x250] sm:$0xff]
    %v1728 = vld [vmem:[#allocation8 + $0x258] sm:$0xff]
    %v1729 = vld [vmem:[#allocation8 + $0x260] sm:$0xff]
    %v1730 = vld [vmem:[#allocation8 + $0x268] sm:$0xff]
    %v1731 = vld [vmem:[#allocation8 + $0x270] sm:$0xff]
    %v1732 = vld [vmem:[#allocation8 + $0x278] sm:$0xff]
    %v1733 = vld [vmem:[#allocation8 + $0x280] sm:$0xff]
    %v1734 = vld [vmem:[#allocation8 + $0x288] sm:$0xff]
    %v1735 = vld [vmem:[#allocation8 + $0x290] sm:$0xff]
    %v1736 = vld [vmem:[#allocation8 + $0x298] sm:$0xff]
    %v1737 = vld [vmem:[#allocation8 + $0x2a0] sm:$0xff]
    %v1738 = vld [vmem:[#allocation8 + $0x2a8] sm:$0xff]
    %v1739 = vld [vmem:[#allocation8 + $0x2b0] sm:$0xff]
    %v1740 = vld [vmem:[#allocation8 + $0x2b8] sm:$0xff]
    %v1741 = vld [vmem:[#allocation8 + $0x2c0] sm:$0xff]
    %v1742 = vld [vmem:[#allocation8 + $0x2c8] sm:$0xff]
    %v1743 = vld [vmem:[#allocation8 + $0x2d0] sm:$0xff]
    %v1744 = vld [vmem:[#allocation8 + $0x2d8] sm:$0xff]
    %v1745 = vld [vmem:[#allocation8 + $0x2e0] sm:$0xff]
    %v1746 = vld [vmem:[#allocation8 + $0x2e8] sm:$0xff]
    %v1747 = vld [vmem:[#allocation8 + $0x2f0] sm:$0xff]
    %v1748 = vld [vmem:[#allocation8 + $0x2f8] sm:$0xff]
    %1749 = vmatprep.subr.mxu0 %v1744
    %1750 = vmatpush1.msra.mxu0 %v1743
    %1751 = vmatprep.subr.mxu0 %v1738
    %1752 = vmatpush1.msra.mxu0 %v1737
    %1753 = vmatprep.subr.mxu0 %v1732
    %1754 = vmatpush1.msra.mxu0 %v1731
    %1755 = vmatprep.subr.mxu0 %v1726
    %1756 = vmatpush1.msra.mxu0 %v1725
    %1757 = vmatprep.subr.mxu0 %v1720
    %1758 = vmatpush1.msra.mxu0 %v1719
    %1759 = vmatprep.subr.mxu0 %v1714
    %1760 = vmatpush1.msra.mxu0 %v1713
    %1761 = vmatprep.subr.mxu0 %v1708
    %1762 = vmatpush1.msra.mxu0 %v1707
    %1763 = vmatprep.subr.mxu0 %v1702
    %1764 = vmatpush1.msra.mxu0 %v1701
    %1765 = vmatprep.subr.mxu0 %v1696
    %1766 = vmatpush1.msra.mxu0 %v1695
    %1767 = vmatprep.subr.mxu0 %v1690
    %1768 = vmatpush1.msra.mxu0 %v1689
    %1769 = vmatprep.subr.mxu0 %v1684
    %1770 = vmatpush1.msra.mxu0 %v1683
    %1771 = vmatprep.subr.mxu0 %v1678
    %1772 = vmatpush1.msra.mxu0 %v1677
    %1773 = vmatprep.subr.mxu0 %v1672
    %1774 = vmatpush1.msra.mxu0 %v1671
    %1775 = vmatprep.subr.mxu0 %v1666
    %1776 = vmatpush1.msra.mxu0 %v1665
    %1777 = vmatprep.subr.mxu0 %v1660
    %1778 = vmatpush1.msra.mxu0 %v1659
    %1779 = vmatprep.subr.mxu0 %v1654
    %1780 = vmatpush1.msra.mxu0 %v1653
    %1781 = vmatprep.subr.mxu0 0.0
    %1782 = vmatpush2.msra.mxu0 0.0
    %1783 = vmatprep.subr.mxu0 0.0
    %1784 = vmatpush2.msra.mxu0 0.0
    %1785 = vmatprep.subr.mxu0 0.0
    %1786 = vmatpush2.msra.mxu0 0.0
    %1787 = vmatprep.subr.mxu0 0.0
    %1788 = vmatpush2.msra.mxu0 0.0
    %1789 = vmatprep.subr.mxu0 0.0
    %1790 = vmatpush2.msra.mxu0 0.0
    %1791 = vmatprep.subr.mxu0 0.0
    %1792 = vmatpush2.msra.mxu0 0.0
    %1793 = vmatprep.subr.mxu0 0.0
    %1794 = vmatpush2.msra.mxu0 0.0
    %1795 = vmatprep.subr.mxu0 0.0
    %1796 = vmatpush2.msra.mxu0 0.0
    %1797 = vmatprep.subr.mxu0 0.0
    %1798 = vmatpush2.msra.mxu0 0.0
    %1799 = vmatprep.subr.mxu0 0.0
    %1800 = vmatpush2.msra.mxu0 0.0
    %1801 = vmatprep.subr.mxu0 0.0
    %1802 = vmatpush2.msra.mxu0 0.0
    %1803 = vmatprep.subr.mxu0 0.0
    %1804 = vmatpush2.msra.mxu0 0.0
    %1805 = vmatprep.subr.mxu0 0.0
    %1806 = vmatpush2.msra.mxu0 0.0
    %1807 = vmatprep.subr.mxu0 0.0
    %1808 = vmatpush2.msra.mxu0 0.0
    %1809 = vmatprep.subr.mxu0 0.0
    %1810 = vmatpush2.msra.mxu0 0.0
    %1811 = vmatprep.subr.mxu0 0.0
    %1812 = vmatpush2.msra.mxu0 0.0
    %1813 = vmatprep.mubr.f32.mxu0 0.0
    %1814 = vmatmul.mubr.f32.gmra.mxu0 %v1582
    %v1815 = vpop.f32.mrf.mxu0
    %v1816 = vadd.f32 0.0, %v1815
    %v1817 = vpop.f32.mrf.mxu0
    %v1818 = vadd.f32 0.0, %v1817
    %1819 = vdwg.mxu0
    %1820 = vmatprep.subr.mxu0 %v1746
    %1821 = vmatpush1.msra.mxu0 %v1745
    %1822 = vmatprep.subr.mxu0 %v1740
    %1823 = vmatpush1.msra.mxu0 %v1739
    %1824 = vmatprep.subr.mxu0 %v1734
    %1825 = vmatpush1.msra.mxu0 %v1733
    %1826 = vmatprep.subr.mxu0 %v1728
    %1827 = vmatpush1.msra.mxu0 %v1727
    %1828 = vmatprep.subr.mxu0 %v1722
    %1829 = vmatpush1.msra.mxu0 %v1721
    %1830 = vmatprep.subr.mxu0 %v1716
    %1831 = vmatpush1.msra.mxu0 %v1715
    %1832 = vmatprep.subr.mxu0 %v1710
    %1833 = vmatpush1.msra.mxu0 %v1709
    %1834 = vmatprep.subr.mxu0 %v1704
    %1835 = vmatpush1.msra.mxu0 %v1703
    %1836 = vmatprep.subr.mxu0 %v1698
    %1837 = vmatpush1.msra.mxu0 %v1697
    %1838 = vmatprep.subr.mxu0 %v1692
    %1839 = vmatpush1.msra.mxu0 %v1691
    %1840 = vmatprep.subr.mxu0 %v1686
    %1841 = vmatpush1.msra.mxu0 %v1685
    %1842 = vmatprep.subr.mxu0 %v1680
    %1843 = vmatpush1.msra.mxu0 %v1679
    %1844 = vmatprep.subr.mxu0 %v1674
    %1845 = vmatpush1.msra.mxu0 %v1673
    %1846 = vmatprep.subr.mxu0 %v1668
    %1847 = vmatpush1.msra.mxu0 %v1667
    %1848 = vmatprep.subr.mxu0 %v1662
    %1849 = vmatpush1.msra.mxu0 %v1661
    %1850 = vmatprep.subr.mxu0 %v1656
    %1851 = vmatpush1.msra.mxu0 %v1655
    %1852 = vmatprep.subr.mxu0 0.0
    %1853 = vmatpush2.msra.mxu0 0.0
    %1854 = vmatprep.subr.mxu0 0.0
    %1855 = vmatpush2.msra.mxu0 0.0
    %1856 = vmatprep.subr.mxu0 0.0
    %1857 = vmatpush2.msra.mxu0 0.0
    %1858 = vmatprep.subr.mxu0 0.0
    %1859 = vmatpush2.msra.mxu0 0.0
    %1860 = vmatprep.subr.mxu0 0.0
    %1861 = vmatpush2.msra.mxu0 0.0
    %1862 = vmatprep.subr.mxu0 0.0
    %1863 = vmatpush2.msra.mxu0 0.0
    %1864 = vmatprep.subr.mxu0 0.0
    %1865 = vmatpush2.msra.mxu0 0.0
    %1866 = vmatprep.subr.mxu0 0.0
    %1867 = vmatpush2.msra.mxu0 0.0
    %1868 = vmatprep.subr.mxu0 0.0
    %1869 = vmatpush2.msra.mxu0 0.0
    %1870 = vmatprep.subr.mxu0 0.0
    %1871 = vmatpush2.msra.mxu0 0.0
    %1872 = vmatprep.subr.mxu0 0.0
    %1873 = vmatpush2.msra.mxu0 0.0
    %1874 = vmatprep.subr.mxu0 0.0
    %1875 = vmatpush2.msra.mxu0 0.0
    %1876 = vmatprep.subr.mxu0 0.0
    %1877 = vmatpush2.msra.mxu0 0.0
    %1878 = vmatprep.subr.mxu0 0.0
    %1879 = vmatpush2.msra.mxu0 0.0
    %1880 = vmatprep.subr.mxu0 0.0
    %1881 = vmatpush2.msra.mxu0 0.0
    %1882 = vmatprep.subr.mxu0 0.0
    %1883 = vmatpush2.msra.mxu0 0.0
    %1884 = vmatprep.mubr.f32.mxu0 0.0
    %1885 = vmatmul.mubr.f32.gmra.mxu0 %v1582
    %v1886 = vpop.f32.mrf.mxu0
    %v1887 = vadd.f32 0.0, %v1886
    %v1888 = vpop.f32.mrf.mxu0
    %v1889 = vadd.f32 0.0, %v1888
    %1890 = vdwg.mxu0
    %1891 = vmatprep.subr.mxu0 %v1748
    %1892 = vmatpush1.msra.mxu0 %v1747
    %1893 = vmatprep.subr.mxu0 %v1742
    %1894 = vmatpush1.msra.mxu0 %v1741
    %1895 = vmatprep.subr.mxu0 %v1736
    %1896 = vmatpush1.msra.mxu0 %v1735
    %1897 = vmatprep.subr.mxu0 %v1730
    %1898 = vmatpush1.msra.mxu0 %v1729
    %1899 = vmatprep.subr.mxu0 %v1724
    %1900 = vmatpush1.msra.mxu0 %v1723
    %1901 = vmatprep.subr.mxu0 %v1718
    %1902 = vmatpush1.msra.mxu0 %v1717
    %1903 = vmatprep.subr.mxu0 %v1712
    %1904 = vmatpush1.msra.mxu0 %v1711
    %1905 = vmatprep.subr.mxu0 %v1706
    %1906 = vmatpush1.msra.mxu0 %v1705
    %1907 = vmatprep.subr.mxu0 %v1700
    %1908 = vmatpush1.msra.mxu0 %v1699
    %1909 = vmatprep.subr.mxu0 %v1694
    %1910 = vmatpush1.msra.mxu0 %v1693
    %1911 = vmatprep.subr.mxu0 %v1688
    %1912 = vmatpush1.msra.mxu0 %v1687
    %1913 = vmatprep.subr.mxu0 %v1682
    %1914 = vmatpush1.msra.mxu0 %v1681
    %1915 = vmatprep.subr.mxu0 %v1676
    %1916 = vmatpush1.msra.mxu0 %v1675
    %1917 = vmatprep.subr.mxu0 %v1670
    %1918 = vmatpush1.msra.mxu0 %v1669
    %1919 = vmatprep.subr.mxu0 %v1664
    %1920 = vmatpush1.msra.mxu0 %v1663
    %1921 = vmatprep.subr.mxu0 %v1658
    %1922 = vmatpush1.msra.mxu0 %v1657
    %1923 = vmatprep.subr.mxu0 0.0
    %1924 = vmatpush2.msra.mxu0 0.0
    %1925 = vmatprep.subr.mxu0 0.0
    %1926 = vmatpush2.msra.mxu0 0.0
    %1927 = vmatprep.subr.mxu0 0.0
    %1928 = vmatpush2.msra.mxu0 0.0
    %1929 = vmatprep.subr.mxu0 0.0
    %1930 = vmatpush2.msra.mxu0 0.0
    %1931 = vmatprep.subr.mxu0 0.0
    %1932 = vmatpush2.msra.mxu0 0.0
    %1933 = vmatprep.subr.mxu0 0.0
    %1934 = vmatpush2.msra.mxu0 0.0
    %1935 = vmatprep.subr.mxu0 0.0
    %1936 = vmatpush2.msra.mxu0 0.0
    %1937 = vmatprep.subr.mxu0 0.0
    %1938 = vmatpush2.msra.mxu0 0.0
    %1939 = vmatprep.subr.mxu0 0.0
    %1940 = vmatpush2.msra.mxu0 0.0
    %1941 = vmatprep.subr.mxu0 0.0
    %1942 = vmatpush2.msra.mxu0 0.0
    %1943 = vmatprep.subr.mxu0 0.0
    %1944 = vmatpush2.msra.mxu0 0.0
    %1945 = vmatprep.subr.mxu0 0.0
    %1946 = vmatpush2.msra.mxu0 0.0
    %1947 = vmatprep.subr.mxu0 0.0
    %1948 = vmatpush2.msra.mxu0 0.0
    %1949 = vmatprep.subr.mxu0 0.0
    %1950 = vmatpush2.msra.mxu0 0.0
    %1951 = vmatprep.subr.mxu0 0.0
    %1952 = vmatpush2.msra.mxu0 0.0
    %1953 = vmatprep.subr.mxu0 0.0
    %1954 = vmatpush2.msra.mxu0 0.0
    %1955 = vmatprep.mubr.f32.mxu0 0.0
    %1956 = vmatmul.mubr.f32.gmra.mxu0 %v1582
    %v1957 = vpop.f32.mrf.mxu0
    %v1958 = vadd.f32 0.0, %v1957
    %v1959 = vpop.f32.mrf.mxu0
    %v1960 = vadd.f32 0.0, %v1959
    %1961 = vdwg.mxu0
    %v1968 = vcombine.low %v1816, %v1818
    %v1969 = vcombine.low %v1887, %v1889
    %v1970 = vcombine.low %v1958, %v1960
    %v1972 = vunpack.c.l.s4 1966171168
    %v1973 = vunpack.c.0.s8 %v1972
    %v1974 = vlaneseq
    %v1975 = vshrl.u32 %v1974, 7
    %v1976 = vsub.s32 %v1973, %v1975
    %v1977 = vrot.slane %v1968, %v1976
    %v1979 = vunpack.c.l.s4 1966171168
    %v1980 = vunpack.c.0.s8 %v1979
    %v1981 = vlaneseq
    %v1982 = vshrl.u32 %v1981, 7
    %v1983 = vsub.s32 %v1980, %v1982
    %v1984 = vrot.slane %v1969, %v1983
    %v1986 = vunpack.c.l.s4 1966171168
    %v1987 = vunpack.c.0.s8 %v1986
    %v1988 = vlaneseq
    %v1989 = vshrl.u32 %v1988, 7
    %v1990 = vsub.s32 %v1987, %v1989
    %v1991 = vrot.slane %v1970, %v1990
    %v1992 = vcombine.low %v1977, %v1984
    %v1994 = vunpack.c.l.s4 1966171168
    %v1995 = vunpack.c.0.s8 %v1994
    %v1996 = vlaneseq
    %v1997 = vshrl.u32 %v1996, 7
    %v1998 = vsub.s32 %v1995, %v1997
    %v1999 = vrot.slane %v1992, %v1998
    %v2001 = vunpack.c.l.s4 1966171168
    %v2002 = vunpack.c.0.s8 %v2001
    %v2003 = vlaneseq
    %v2004 = vshrl.u32 %v2003, 7
    %v2005 = vsub.s32 %v2002, %v2004
    %v2006 = vrot.slane %v1991, %v2005
    %v2007 = vcombine.low %v1999, %v2006
    %v2009 = vadd.f32 %v1652, %v2007
    %v2011 = vrot.slane %v2009, 4
    %v2013 = vxor.u32 %v2011, 2147483648
    %v2014 = vmul.f32 %v2013, 1.442695
    %v2015 = vpow.pop %v2014
    %v2016 = vadd.f32 %v2015, 1.0
    %v2017 = vrcp.pop %v2016
    %v2018 = vmul.f32 1.0, %v2017
    %v2019 = vlaneseq
    %v2020 = vshrl.u32 %v2019, 7
    %v2021 = vsub.s32 2, %v2020
    %v2022 = vrot.slane %v2009, %v2021
    %v2024 = vsel %vm774, %v2022, -inf
    %2025 = vmax.xlane.f32.xlu0 %v2024
    %v2026 = vpop.xlane.xlu0 %2025
    %v2027 = vrot.slane %v2009, 2
    %v2029 = vsub.f32 %v2027, %v2026
    %v2030 = vmul.f32 %v2029, 1.442695
    %v2031 = vpow.pop %v2030
    %v2032 = vsel %vm774, %v2031, 0.0
    %2033 = vadd.xlane.f32.xlu0 %v2032
    %v2034 = vpop.xlane.xlu0 %2033
    %v2035 = vrcp.pop %v2034
    %v2036 = vmul.f32 %v2031, %v2035
    %2038 = vset.pattern.permute.xlu0 0
    %2039 = vperm.xlu0 %2038, %v2018
    %v2040 = vpop.permute.xlu0 %2039
    %v2042 = vlaneseq
    %v2043 = vshrl.u32 %v2042, 7
    %v2044 = vsub.s32 0, %v2043
    %v2045 = vrot.slane %v2040, %v2044
    %v2046 = vmul.f32 %v2045, %v2036
    %v2048 = vsel %vm798, %v2046, 0
    %2050 = vmatprep.subr.mxu0 0.0
    %2051 = vmatpush1.msra.mxu0 0.0
    %2052 = vmatprep.subr.mxu0 0.0
    %2053 = vmatpush1.msra.mxu0 0.0
    %2054 = vmatprep.subr.mxu0 0.0
    %2055 = vmatpush1.msra.mxu0 0.0
    %2056 = vmatprep.subr.mxu0 0.0
    %2057 = vmatpush1.msra.mxu0 0.0
    %2058 = vmatprep.subr.mxu0 0.0
    %2059 = vmatpush1.msra.mxu0 0.0
    %2060 = vmatprep.subr.mxu0 0.0
    %2061 = vmatpush1.msra.mxu0 0.0
    %2062 = vmatprep.subr.mxu0 0.0
    %2063 = vmatpush1.msra.mxu0 0.0
    %2064 = vmatprep.subr.mxu0 0.0
    %2065 = vmatpush1.msra.mxu0 0.0
    %2066 = vmatprep.subr.mxu0 0.0
    %2067 = vmatpush1.msra.mxu0 0.0
    %2068 = vmatprep.subr.mxu0 0.0
    %2069 = vmatpush1.msra.mxu0 0.0
    %2070 = vmatprep.subr.mxu0 0.0
    %2071 = vmatpush1.msra.mxu0 0.0
    %2072 = vmatprep.subr.mxu0 0.0
    %2073 = vmatpush1.msra.mxu0 0.0
    %2074 = vmatprep.subr.mxu0 0.0
    %2075 = vmatpush1.msra.mxu0 0.0
    %2076 = vmatprep.subr.mxu0 0.0
    %2077 = vmatpush1.msra.mxu0 0.0
    %2078 = vmatprep.subr.mxu0 0.0
    %2079 = vmatpush1.msra.mxu0 %v1647
    %2080 = vmatprep.subr.mxu0 0.0
    %2081 = vmatpush1.msra.mxu0 %v1646
    %2082 = vmatprep.subr.mxu0 0.0
    %2083 = vmatpush2.msra.mxu0 0.0
    %2084 = vmatprep.subr.mxu0 0.0
    %2085 = vmatpush2.msra.mxu0 0.0
    %2086 = vmatprep.subr.mxu0 0.0
    %2087 = vmatpush2.msra.mxu0 0.0
    %2088 = vmatprep.subr.mxu0 0.0
    %2089 = vmatpush2.msra.mxu0 0.0
    %2090 = vmatprep.subr.mxu0 0.0
    %2091 = vmatpush2.msra.mxu0 0.0
    %2092 = vmatprep.subr.mxu0 0.0
    %2093 = vmatpush2.msra.mxu0 0.0
    %2094 = vmatprep.subr.mxu0 0.0
    %2095 = vmatpush2.msra.mxu0 0.0
    %2096 = vmatprep.subr.mxu0 0.0
    %2097 = vmatpush2.msra.mxu0 0.0
    %2098 = vmatprep.subr.mxu0 0.0
    %2099 = vmatpush2.msra.mxu0 0.0
    %2100 = vmatprep.subr.mxu0 0.0
    %2101 = vmatpush2.msra.mxu0 0.0
    %2102 = vmatprep.subr.mxu0 0.0
    %2103 = vmatpush2.msra.mxu0 0.0
    %2104 = vmatprep.subr.mxu0 0.0
    %2105 = vmatpush2.msra.mxu0 0.0
    %2106 = vmatprep.subr.mxu0 0.0
    %2107 = vmatpush2.msra.mxu0 0.0
    %2108 = vmatprep.subr.mxu0 0.0
    %2109 = vmatpush2.msra.mxu0 0.0
    %2110 = vmatprep.subr.mxu0 0.0
    %2111 = vmatpush2.msra.mxu0 0.0
    %2112 = vmatprep.subr.mxu0 0.0
    %2113 = vmatpush2.msra.mxu0 0.0
    %2114 = vmatprep.mubr.f32.mxu0 0.0
    %2115 = vmatmul.mubr.f32.gmra.mxu0 %v2048
    %v2116 = vpop.f32.mrf.mxu0
    %v2117 = vadd.f32 0.0, %v2116
    %v2118 = vpop.f32.mrf.mxu0
    %2119 = vdwg.mxu0
    %v2120 = vld [vmem:[#allocation11] sm:$0xff]
    %v2121 = vld [vmem:[#allocation11 + $0x8] sm:$0xff]
    %v2122 = vld [vmem:[#allocation11 + $0x10] sm:$0xff]
    %v2123 = vld [vmem:[#allocation11 + $0x18] sm:$0xff]
    %v2124 = vld [vmem:[#allocation11 + $0x20] sm:$0xff]
    %v2125 = vld [vmem:[#allocation11 + $0x28] sm:$0xff]
    %v2126 = vld [vmem:[#allocation11 + $0x30] sm:$0xff]
    %v2127 = vld [vmem:[#allocation11 + $0x38] sm:$0xff]
    %v2128 = vld [vmem:[#allocation11 + $0x40] sm:$0xff]
    %v2129 = vld [vmem:[#allocation11 + $0x48] sm:$0xff]
    %v2130 = vld [vmem:[#allocation11 + $0x50] sm:$0xff]
    %v2131 = vld [vmem:[#allocation11 + $0x58] sm:$0xff]
    %v2132 = vld [vmem:[#allocation11 + $0x60] sm:$0xff]
    %v2133 = vld [vmem:[#allocation11 + $0x68] sm:$0xff]
    %v2134 = vld [vmem:[#allocation11 + $0x70] sm:$0xff]
    %v2135 = vld [vmem:[#allocation11 + $0x78] sm:$0xff]
    %2136 = vmatprep.subr.mxu0 0.0
    %2137 = vmatpush1.msra.mxu0 %v2135
    %2138 = vmatprep.subr.mxu0 0.0
    %2139 = vmatpush1.msra.mxu0 %v2134
    %2140 = vmatprep.subr.mxu0 0.0
    %2141 = vmatpush1.msra.mxu0 %v2133
    %2142 = vmatprep.subr.mxu0 0.0
    %2143 = vmatpush1.msra.mxu0 %v2132
    %2144 = vmatprep.subr.mxu0 0.0
    %2145 = vmatpush1.msra.mxu0 %v2131
    %2146 = vmatprep.subr.mxu0 0.0
    %2147 = vmatpush1.msra.mxu0 %v2130
    %2148 = vmatprep.subr.mxu0 0.0
    %2149 = vmatpush1.msra.mxu0 %v2129
    %2150 = vmatprep.subr.mxu0 0.0
    %2151 = vmatpush1.msra.mxu0 %v2128
    %2152 = vmatprep.subr.mxu0 0.0
    %2153 = vmatpush1.msra.mxu0 %v2127
    %2154 = vmatprep.subr.mxu0 0.0
    %2155 = vmatpush1.msra.mxu0 %v2126
    %2156 = vmatprep.subr.mxu0 0.0
    %2157 = vmatpush1.msra.mxu0 %v2125
    %2158 = vmatprep.subr.mxu0 0.0
    %2159 = vmatpush1.msra.mxu0 %v2124
    %2160 = vmatprep.subr.mxu0 0.0
    %2161 = vmatpush1.msra.mxu0 %v2123
    %2162 = vmatprep.subr.mxu0 0.0
    %2163 = vmatpush1.msra.mxu0 %v2122
    %2164 = vmatprep.subr.mxu0 0.0
    %2165 = vmatpush1.msra.mxu0 %v2121
    %2166 = vmatprep.subr.mxu0 0.0
    %2167 = vmatpush1.msra.mxu0 %v2120
    %2168 = vmatprep.subr.mxu0 0.0
    %2169 = vmatpush2.msra.mxu0 0.0
    %2170 = vmatprep.subr.mxu0 0.0
    %2171 = vmatpush2.msra.mxu0 0.0
    %2172 = vmatprep.subr.mxu0 0.0
    %2173 = vmatpush2.msra.mxu0 0.0
    %2174 = vmatprep.subr.mxu0 0.0
    %2175 = vmatpush2.msra.mxu0 0.0
    %2176 = vmatprep.subr.mxu0 0.0
    %2177 = vmatpush2.msra.mxu0 0.0
    %2178 = vmatprep.subr.mxu0 0.0
    %2179 = vmatpush2.msra.mxu0 0.0
    %2180 = vmatprep.subr.mxu0 0.0
    %2181 = vmatpush2.msra.mxu0 0.0
    %2182 = vmatprep.subr.mxu0 0.0
    %2183 = vmatpush2.msra.mxu0 0.0
    %2184 = vmatprep.subr.mxu0 0.0
    %2185 = vmatpush2.msra.mxu0 0.0
    %2186 = vmatprep.subr.mxu0 0.0
    %2187 = vmatpush2.msra.mxu0 0.0
    %2188 = vmatprep.subr.mxu0 0.0
    %2189 = vmatpush2.msra.mxu0 0.0
    %2190 = vmatprep.subr.mxu0 0.0
    %2191 = vmatpush2.msra.mxu0 0.0
    %2192 = vmatprep.subr.mxu0 0.0
    %2193 = vmatpush2.msra.mxu0 0.0
    %2194 = vmatprep.subr.mxu0 0.0
    %2195 = vmatpush2.msra.mxu0 0.0
    %2196 = vmatprep.subr.mxu0 0.0
    %2197 = vmatpush2.msra.mxu0 0.0
    %2198 = vmatprep.subr.mxu0 0.0
    %2199 = vmatpush2.msra.mxu0 0.0
    %2200 = vmatprep.mubr.f32.mxu0 0.0
    %2201 = vmatmul.mubr.f32.gmra.mxu0 %v2117
    %v2202 = vpop.f32.mrf.mxu0
    %v2203 = vadd.f32 0.0, %v2202
    %v2204 = vpop.f32.mrf.mxu0
    %2205 = vdwg.mxu0
    %v2206 = vadd.f32 %v2009, %v2203
    %v2207 = vmax.f32 %v2206, 0.0
    %v2208 = vrot.slane %v2009, 1
    %v2210 = vmax.f32 %v2208, 0.0
    %v2211 = vlaneseq
    %v2212 = vshrl.u32 %v2211, 7
    %v2213 = vsub.s32 3, %v2212
    %v2214 = vrot.slane %v2009, %v2213
    %v2216 = vsel %vm774, %v2214, -inf
    %2217 = vmax.xlane.f32.xlu0 %v2216
    %v2218 = vpop.xlane.xlu0 %2217
    %v2219 = vrot.slane %v2009, 3
    %v2221 = vsub.f32 %v2219, %v2218
    %v2222 = vmul.f32 %v2221, 1.442695
    %v2223 = vpow.pop %v2222
    %v2224 = vsel %vm774, %v2223, 0.0
    %2225 = vadd.xlane.f32.xlu0 %v2224
    %v2226 = vpop.xlane.xlu0 %2225
    %v2227 = vrcp.pop %v2226
    %v2228 = vmul.f32 %v2223, %v2227
    %v2229 = vrot.slane %v2009, 5
    %v2231 = vxor.u32 %v2229, 2147483648
    %v2232 = vmul.f32 %v2231, 1.442695
    %v2233 = vpow.pop %v2232
    %v2234 = vadd.f32 %v2233, 1.0
    %v2235 = vrcp.pop %v2234
    %v2236 = vmul.f32 1.0, %v2235
    %v2238 = vlaneseq
    %v2239 = vshrl.u32 %v2238, 7
    %v2240 = vsub.s32 0, %v2239
    %v2241 = vrot.slane %v2228, %v2240
    %v2243 = vmul.f32 %v2241, %v398
    %v2244 = vmul.f32 %v2241, %v399
    %v2245 = vsel %vm798, %v2243, 0.0
    %2246 = vadd.xlane.f32.xlu0 %v2245
    %v2247 = vpop.xlane.xlu0 %2246
    %v2248 = vsel %vm798, %v2244, 0.0
    %2249 = vadd.xlane.f32.xlu0 %v2248
    %v2250 = vpop.xlane.xlu0 %2249
    %2252 = vset.pattern.permute.xlu0 0
    %2253 = vperm.xlu0 %2252, %v2236
    %v2254 = vpop.permute.xlu0 %2253
    %v2256 = vlaneseq
    %v2257 = vshrl.u32 %v2256, 7
    %v2258 = vsub.s32 0, %v2257
    %v2259 = vrot.slane %v2254, %v2258
    %v2260 = vmul.f32 %v2259, %v2210
    %v2262 = vlaneseq
    %v2263 = vshrl.u32 %v2262, 7
    %v2264 = vsub.s32 0, %v2263
    %v2265 = vrot.slane %v2260, %v2264
    %v2267 = vsub.f32 %v2265, %v1646
    %v2268 = vsub.f32 %v2265, %v1647
    %v2269 = vmul.f32 %v2247, %v2267
    %v2270 = vmul.f32 %v2250, %v2268
    %v2271 = vadd.f32 %v1646, %v2269
    %v2272 = vadd.f32 %v1647, %v2270
    %2273 = vst [vmem:[#allocation12 + $0x2] sm:$0x1] %v2207
    %s2274 = scalar_lea.vmem [#allocation2], 3
    %v2275 = vld [vmem:[%s2274] ss:$8 sm:$0xf]
    %v2276 = vld [vmem:[%s2274] ss:$8 sm:$0x30]
    %v2277 = vor.u32 %v2275, %v2276
    %v2278 = vld [vmem:[#allocation8] sm:$0xff]
    %v2279 = vld [vmem:[#allocation8 + $0x8] sm:$0xff]
    %v2280 = vld [vmem:[#allocation8 + $0x10] sm:$0xff]
    %v2281 = vld [vmem:[#allocation8 + $0x18] sm:$0xff]
    %v2282 = vld [vmem:[#allocation8 + $0x20] sm:$0xff]
    %v2283 = vld [vmem:[#allocation8 + $0x28] sm:$0xff]
    %v2284 = vld [vmem:[#allocation8 + $0x30] sm:$0xff]
    %v2285 = vld [vmem:[#allocation8 + $0x38] sm:$0xff]
    %v2286 = vld [vmem:[#allocation8 + $0x40] sm:$0xff]
    %v2287 = vld [vmem:[#allocation8 + $0x48] sm:$0xff]
    %v2288 = vld [vmem:[#allocation8 + $0x50] sm:$0xff]
    %v2289 = vld [vmem:[#allocation8 + $0x58] sm:$0xff]
    %v2290 = vld [vmem:[#allocation8 + $0x60] sm:$0xff]
    %v2291 = vld [vmem:[#allocation8 + $0x68] sm:$0xff]
    %v2292 = vld [vmem:[#allocation8 + $0x70] sm:$0xff]
    %v2293 = vld [vmem:[#allocation8 + $0x78] sm:$0xff]
    %v2294 = vld [vmem:[#allocation8 + $0x80] sm:$0xff]
    %v2295 = vld [vmem:[#allocation8 + $0x88] sm:$0xff]
    %v2296 = vld [vmem:[#allocation8 + $0x90] sm:$0xff]
    %v2297 = vld [vmem:[#allocation8 + $0x98] sm:$0xff]
    %v2298 = vld [vmem:[#allocation8 + $0xa0] sm:$0xff]
    %v2299 = vld [vmem:[#allocation8 + $0xa8] sm:$0xff]
    %v2300 = vld [vmem:[#allocation8 + $0xb0] sm:$0xff]
    %v2301 = vld [vmem:[#allocation8 + $0xb8] sm:$0xff]
    %v2302 = vld [vmem:[#allocation8 + $0xc0] sm:$0xff]
    %v2303 = vld [vmem:[#allocation8 + $0xc8] sm:$0xff]
    %v2304 = vld [vmem:[#allocation8 + $0xd0] sm:$0xff]
    %v2305 = vld [vmem:[#allocation8 + $0xd8] sm:$0xff]
    %v2306 = vld [vmem:[#allocation8 + $0xe0] sm:$0xff]
    %v2307 = vld [vmem:[#allocation8 + $0xe8] sm:$0xff]
    %v2308 = vld [vmem:[#allocation8 + $0xf0] sm:$0xff]
    %v2309 = vld [vmem:[#allocation8 + $0xf8] sm:$0xff]
    %v2310 = vld [vmem:[#allocation8 + $0x100] sm:$0xff]
    %v2311 = vld [vmem:[#allocation8 + $0x108] sm:$0xff]
    %v2312 = vld [vmem:[#allocation8 + $0x110] sm:$0xff]
    %v2313 = vld [vmem:[#allocation8 + $0x118] sm:$0xff]
    %v2314 = vld [vmem:[#allocation8 + $0x120] sm:$0xff]
    %v2315 = vld [vmem:[#allocation8 + $0x128] sm:$0xff]
    %v2316 = vld [vmem:[#allocation8 + $0x130] sm:$0xff]
    %v2317 = vld [vmem:[#allocation8 + $0x138] sm:$0xff]
    %v2318 = vld [vmem:[#allocation8 + $0x140] sm:$0xff]
    %v2319 = vld [vmem:[#allocation8 + $0x148] sm:$0xff]
    %v2320 = vld [vmem:[#allocation8 + $0x150] sm:$0xff]
    %v2321 = vld [vmem:[#allocation8 + $0x158] sm:$0xff]
    %v2322 = vld [vmem:[#allocation8 + $0x160] sm:$0xff]
    %v2323 = vld [vmem:[#allocation8 + $0x168] sm:$0xff]
    %v2324 = vld [vmem:[#allocation8 + $0x170] sm:$0xff]
    %v2325 = vld [vmem:[#allocation8 + $0x178] sm:$0xff]
    %v2326 = vld [vmem:[#allocation8 + $0x180] sm:$0xff]
    %v2327 = vld [vmem:[#allocation8 + $0x188] sm:$0xff]
    %v2328 = vld [vmem:[#allocation8 + $0x190] sm:$0xff]
    %v2329 = vld [vmem:[#allocation8 + $0x198] sm:$0xff]
    %v2330 = vld [vmem:[#allocation8 + $0x1a0] sm:$0xff]
    %v2331 = vld [vmem:[#allocation8 + $0x1a8] sm:$0xff]
    %v2332 = vld [vmem:[#allocation8 + $0x1b0] sm:$0xff]
    %v2333 = vld [vmem:[#allocation8 + $0x1b8] sm:$0xff]
    %v2334 = vld [vmem:[#allocation8 + $0x1c0] sm:$0xff]
    %v2335 = vld [vmem:[#allocation8 + $0x1c8] sm:$0xff]
    %v2336 = vld [vmem:[#allocation8 + $0x1d0] sm:$0xff]
    %v2337 = vld [vmem:[#allocation8 + $0x1d8] sm:$0xff]
    %v2338 = vld [vmem:[#allocation8 + $0x1e0] sm:$0xff]
    %v2339 = vld [vmem:[#allocation8 + $0x1e8] sm:$0xff]
    %v2340 = vld [vmem:[#allocation8 + $0x1f0] sm:$0xff]
    %v2341 = vld [vmem:[#allocation8 + $0x1f8] sm:$0xff]
    %v2342 = vld [vmem:[#allocation8 + $0x200] sm:$0xff]
    %v2343 = vld [vmem:[#allocation8 + $0x208] sm:$0xff]
    %v2344 = vld [vmem:[#allocation8 + $0x210] sm:$0xff]
    %v2345 = vld [vmem:[#allocation8 + $0x218] sm:$0xff]
    %v2346 = vld [vmem:[#allocation8 + $0x220] sm:$0xff]
    %v2347 = vld [vmem:[#allocation8 + $0x228] sm:$0xff]
    %v2348 = vld [vmem:[#allocation8 + $0x230] sm:$0xff]
    %v2349 = vld [vmem:[#allocation8 + $0x238] sm:$0xff]
    %v2350 = vld [vmem:[#allocation8 + $0x240] sm:$0xff]
    %v2351 = vld [vmem:[#allocation8 + $0x248] sm:$0xff]
    %v2352 = vld [vmem:[#allocation8 + $0x250] sm:$0xff]
    %v2353 = vld [vmem:[#allocation8 + $0x258] sm:$0xff]
    %v2354 = vld [vmem:[#allocation8 + $0x260] sm:$0xff]
    %v2355 = vld [vmem:[#allocation8 + $0x268] sm:$0xff]
    %v2356 = vld [vmem:[#allocation8 + $0x270] sm:$0xff]
    %v2357 = vld [vmem:[#allocation8 + $0x278] sm:$0xff]
    %v2358 = vld [vmem:[#allocation8 + $0x280] sm:$0xff]
    %v2359 = vld [vmem:[#allocation8 + $0x288] sm:$0xff]
    %v2360 = vld [vmem:[#allocation8 + $0x290] sm:$0xff]
    %v2361 = vld [vmem:[#allocation8 + $0x298] sm:$0xff]
    %v2362 = vld [vmem:[#allocation8 + $0x2a0] sm:$0xff]
    %v2363 = vld [vmem:[#allocation8 + $0x2a8] sm:$0xff]
    %v2364 = vld [vmem:[#allocation8 + $0x2b0] sm:$0xff]
    %v2365 = vld [vmem:[#allocation8 + $0x2b8] sm:$0xff]
    %v2366 = vld [vmem:[#allocation8 + $0x2c0] sm:$0xff]
    %v2367 = vld [vmem:[#allocation8 + $0x2c8] sm:$0xff]
    %v2368 = vld [vmem:[#allocation8 + $0x2d0] sm:$0xff]
    %v2369 = vld [vmem:[#allocation8 + $0x2d8] sm:$0xff]
    %v2370 = vld [vmem:[#allocation8 + $0x2e0] sm:$0xff]
    %v2371 = vld [vmem:[#allocation8 + $0x2e8] sm:$0xff]
    %v2372 = vld [vmem:[#allocation8 + $0x2f0] sm:$0xff]
    %v2373 = vld [vmem:[#allocation8 + $0x2f8] sm:$0xff]
    %2374 = vmatprep.subr.mxu0 %v2369
    %2375 = vmatpush1.msra.mxu0 %v2368
    %2376 = vmatprep.subr.mxu0 %v2363
    %2377 = vmatpush1.msra.mxu0 %v2362
    %2378 = vmatprep.subr.mxu0 %v2357
    %2379 = vmatpush1.msra.mxu0 %v2356
    %2380 = vmatprep.subr.mxu0 %v2351
    %2381 = vmatpush1.msra.mxu0 %v2350
    %2382 = vmatprep.subr.mxu0 %v2345
    %2383 = vmatpush1.msra.mxu0 %v2344
    %2384 = vmatprep.subr.mxu0 %v2339
    %2385 = vmatpush1.msra.mxu0 %v2338
    %2386 = vmatprep.subr.mxu0 %v2333
    %2387 = vmatpush1.msra.mxu0 %v2332
    %2388 = vmatprep.subr.mxu0 %v2327
    %2389 = vmatpush1.msra.mxu0 %v2326
    %2390 = vmatprep.subr.mxu0 %v2321
    %2391 = vmatpush1.msra.mxu0 %v2320
    %2392 = vmatprep.subr.mxu0 %v2315
    %2393 = vmatpush1.msra.mxu0 %v2314
    %2394 = vmatprep.subr.mxu0 %v2309
    %2395 = vmatpush1.msra.mxu0 %v2308
    %2396 = vmatprep.subr.mxu0 %v2303
    %2397 = vmatpush1.msra.mxu0 %v2302
    %2398 = vmatprep.subr.mxu0 %v2297
    %2399 = vmatpush1.msra.mxu0 %v2296
    %2400 = vmatprep.subr.mxu0 %v2291
    %2401 = vmatpush1.msra.mxu0 %v2290
    %2402 = vmatprep.subr.mxu0 %v2285
    %2403 = vmatpush1.msra.mxu0 %v2284
    %2404 = vmatprep.subr.mxu0 %v2279
    %2405 = vmatpush1.msra.mxu0 %v2278
    %2406 = vmatprep.subr.mxu0 0.0
    %2407 = vmatpush2.msra.mxu0 0.0
    %2408 = vmatprep.subr.mxu0 0.0
    %2409 = vmatpush2.msra.mxu0 0.0
    %2410 = vmatprep.subr.mxu0 0.0
    %2411 = vmatpush2.msra.mxu0 0.0
    %2412 = vmatprep.subr.mxu0 0.0
    %2413 = vmatpush2.msra.mxu0 0.0
    %2414 = vmatprep.subr.mxu0 0.0
    %2415 = vmatpush2.msra.mxu0 0.0
    %2416 = vmatprep.subr.mxu0 0.0
    %2417 = vmatpush2.msra.mxu0 0.0
    %2418 = vmatprep.subr.mxu0 0.0
    %2419 = vmatpush2.msra.mxu0 0.0
    %2420 = vmatprep.subr.mxu0 0.0
    %2421 = vmatpush2.msra.mxu0 0.0
    %2422 = vmatprep.subr.mxu0 0.0
    %2423 = vmatpush2.msra.mxu0 0.0
    %2424 = vmatprep.subr.mxu0 0.0
    %2425 = vmatpush2.msra.mxu0 0.0
    %2426 = vmatprep.subr.mxu0 0.0
    %2427 = vmatpush2.msra.mxu0 0.0
    %2428 = vmatprep.subr.mxu0 0.0
    %2429 = vmatpush2.msra.mxu0 0.0
    %2430 = vmatprep.subr.mxu0 0.0
    %2431 = vmatpush2.msra.mxu0 0.0
    %2432 = vmatprep.subr.mxu0 0.0
    %2433 = vmatpush2.msra.mxu0 0.0
    %2434 = vmatprep.subr.mxu0 0.0
    %2435 = vmatpush2.msra.mxu0 0.0
    %2436 = vmatprep.subr.mxu0 0.0
    %2437 = vmatpush2.msra.mxu0 0.0
    %2438 = vmatprep.mubr.f32.mxu0 0.0
    %2439 = vmatmul.mubr.f32.gmra.mxu0 %v2207
    %v2440 = vpop.f32.mrf.mxu0
    %v2441 = vadd.f32 0.0, %v2440
    %v2442 = vpop.f32.mrf.mxu0
    %v2443 = vadd.f32 0.0, %v2442
    %2444 = vdwg.mxu0
    %2445 = vmatprep.subr.mxu0 %v2371
    %2446 = vmatpush1.msra.mxu0 %v2370
    %2447 = vmatprep.subr.mxu0 %v2365
    %2448 = vmatpush1.msra.mxu0 %v2364
    %2449 = vmatprep.subr.mxu0 %v2359
    %2450 = vmatpush1.msra.mxu0 %v2358
    %2451 = vmatprep.subr.mxu0 %v2353
    %2452 = vmatpush1.msra.mxu0 %v2352
    %2453 = vmatprep.subr.mxu0 %v2347
    %2454 = vmatpush1.msra.mxu0 %v2346
    %2455 = vmatprep.subr.mxu0 %v2341
    %2456 = vmatpush1.msra.mxu0 %v2340
    %2457 = vmatprep.subr.mxu0 %v2335
    %2458 = vmatpush1.msra.mxu0 %v2334
    %2459 = vmatprep.subr.mxu0 %v2329
    %2460 = vmatpush1.msra.mxu0 %v2328
    %2461 = vmatprep.subr.mxu0 %v2323
    %2462 = vmatpush1.msra.mxu0 %v2322
    %2463 = vmatprep.subr.mxu0 %v2317
    %2464 = vmatpush1.msra.mxu0 %v2316
    %2465 = vmatprep.subr.mxu0 %v2311
    %2466 = vmatpush1.msra.mxu0 %v2310
    %2467 = vmatprep.subr.mxu0 %v2305
    %2468 = vmatpush1.msra.mxu0 %v2304
    %2469 = vmatprep.subr.mxu0 %v2299
    %2470 = vmatpush1.msra.mxu0 %v2298
    %2471 = vmatprep.subr.mxu0 %v2293
    %2472 = vmatpush1.msra.mxu0 %v2292
    %2473 = vmatprep.subr.mxu0 %v2287
    %2474 = vmatpush1.msra.mxu0 %v2286
    %2475 = vmatprep.subr.mxu0 %v2281
    %2476 = vmatpush1.msra.mxu0 %v2280
    %2477 = vmatprep.subr.mxu0 0.0
    %2478 = vmatpush2.msra.mxu0 0.0
    %2479 = vmatprep.subr.mxu0 0.0
    %2480 = vmatpush2.msra.mxu0 0.0
    %2481 = vmatprep.subr.mxu0 0.0
    %2482 = vmatpush2.msra.mxu0 0.0
    %2483 = vmatprep.subr.mxu0 0.0
    %2484 = vmatpush2.msra.mxu0 0.0
    %2485 = vmatprep.subr.mxu0 0.0
    %2486 = vmatpush2.msra.mxu0 0.0
    %2487 = vmatprep.subr.mxu0 0.0
    %2488 = vmatpush2.msra.mxu0 0.0
    %2489 = vmatprep.subr.mxu0 0.0
    %2490 = vmatpush2.msra.mxu0 0.0
    %2491 = vmatprep.subr.mxu0 0.0
    %2492 = vmatpush2.msra.mxu0 0.0
    %2493 = vmatprep.subr.mxu0 0.0
    %2494 = vmatpush2.msra.mxu0 0.0
    %2495 = vmatprep.subr.mxu0 0.0
    %2496 = vmatpush2.msra.mxu0 0.0
    %2497 = vmatprep.subr.mxu0 0.0
    %2498 = vmatpush2.msra.mxu0 0.0
    %2499 = vmatprep.subr.mxu0 0.0
    %2500 = vmatpush2.msra.mxu0 0.0
    %2501 = vmatprep.subr.mxu0 0.0
    %2502 = vmatpush2.msra.mxu0 0.0
    %2503 = vmatprep.subr.mxu0 0.0
    %2504 = vmatpush2.msra.mxu0 0.0
    %2505 = vmatprep.subr.mxu0 0.0
    %2506 = vmatpush2.msra.mxu0 0.0
    %2507 = vmatprep.subr.mxu0 0.0
    %2508 = vmatpush2.msra.mxu0 0.0
    %2509 = vmatprep.mubr.f32.mxu0 0.0
    %2510 = vmatmul.mubr.f32.gmra.mxu0 %v2207
    %v2511 = vpop.f32.mrf.mxu0
    %v2512 = vadd.f32 0.0, %v2511
    %v2513 = vpop.f32.mrf.mxu0
    %v2514 = vadd.f32 0.0, %v2513
    %2515 = vdwg.mxu0
    %2516 = vmatprep.subr.mxu0 %v2373
    %2517 = vmatpush1.msra.mxu0 %v2372
    %2518 = vmatprep.subr.mxu0 %v2367
    %2519 = vmatpush1.msra.mxu0 %v2366
    %2520 = vmatprep.subr.mxu0 %v2361
    %2521 = vmatpush1.msra.mxu0 %v2360
    %2522 = vmatprep.subr.mxu0 %v2355
    %2523 = vmatpush1.msra.mxu0 %v2354
    %2524 = vmatprep.subr.mxu0 %v2349
    %2525 = vmatpush1.msra.mxu0 %v2348
    %2526 = vmatprep.subr.mxu0 %v2343
    %2527 = vmatpush1.msra.mxu0 %v2342
    %2528 = vmatprep.subr.mxu0 %v2337
    %2529 = vmatpush1.msra.mxu0 %v2336
    %2530 = vmatprep.subr.mxu0 %v2331
    %2531 = vmatpush1.msra.mxu0 %v2330
    %2532 = vmatprep.subr.mxu0 %v2325
    %2533 = vmatpush1.msra.mxu0 %v2324
    %2534 = vmatprep.subr.mxu0 %v2319
    %2535 = vmatpush1.msra.mxu0 %v2318
    %2536 = vmatprep.subr.mxu0 %v2313
    %2537 = vmatpush1.msra.mxu0 %v2312
    %2538 = vmatprep.subr.mxu0 %v2307
    %2539 = vmatpush1.msra.mxu0 %v2306
    %2540 = vmatprep.subr.mxu0 %v2301
    %2541 = vmatpush1.msra.mxu0 %v2300
    %2542 = vmatprep.subr.mxu0 %v2295
    %2543 = vmatpush1.msra.mxu0 %v2294
    %2544 = vmatprep.subr.mxu0 %v2289
    %2545 = vmatpush1.msra.mxu0 %v2288
    %2546 = vmatprep.subr.mxu0 %v2283
    %2547 = vmatpush1.msra.mxu0 %v2282
    %2548 = vmatprep.subr.mxu0 0.0
    %2549 = vmatpush2.msra.mxu0 0.0
    %2550 = vmatprep.subr.mxu0 0.0
    %2551 = vmatpush2.msra.mxu0 0.0
    %2552 = vmatprep.subr.mxu0 0.0
    %2553 = vmatpush2.msra.mxu0 0.0
    %2554 = vmatprep.subr.mxu0 0.0
    %2555 = vmatpush2.msra.mxu0 0.0
    %2556 = vmatprep.subr.mxu0 0.0
    %2557 = vmatpush2.msra.mxu0 0.0
    %2558 = vmatprep.subr.mxu0 0.0
    %2559 = vmatpush2.msra.mxu0 0.0
    %2560 = vmatprep.subr.mxu0 0.0
    %2561 = vmatpush2.msra.mxu0 0.0
    %2562 = vmatprep.subr.mxu0 0.0
    %2563 = vmatpush2.msra.mxu0 0.0
    %2564 = vmatprep.subr.mxu0 0.0
    %2565 = vmatpush2.msra.mxu0 0.0
    %2566 = vmatprep.subr.mxu0 0.0
    %2567 = vmatpush2.msra.mxu0 0.0
    %2568 = vmatprep.subr.mxu0 0.0
    %2569 = vmatpush2.msra.mxu0 0.0
    %2570 = vmatprep.subr.mxu0 0.0
    %2571 = vmatpush2.msra.mxu0 0.0
    %2572 = vmatprep.subr.mxu0 0.0
    %2573 = vmatpush2.msra.mxu0 0.0
    %2574 = vmatprep.subr.mxu0 0.0
    %2575 = vmatpush2.msra.mxu0 0.0
    %2576 = vmatprep.subr.mxu0 0.0
    %2577 = vmatpush2.msra.mxu0 0.0
    %2578 = vmatprep.subr.mxu0 0.0
    %2579 = vmatpush2.msra.mxu0 0.0
    %2580 = vmatprep.mubr.f32.mxu0 0.0
    %2581 = vmatmul.mubr.f32.gmra.mxu0 %v2207
    %v2582 = vpop.f32.mrf.mxu0
    %v2583 = vadd.f32 0.0, %v2582
    %v2584 = vpop.f32.mrf.mxu0
    %v2585 = vadd.f32 0.0, %v2584
    %2586 = vdwg.mxu0
    %v2593 = vcombine.low %v2441, %v2443
    %v2594 = vcombine.low %v2512, %v2514
    %v2595 = vcombine.low %v2583, %v2585
    %v2597 = vunpack.c.l.s4 1966171168
    %v2598 = vunpack.c.0.s8 %v2597
    %v2599 = vlaneseq
    %v2600 = vshrl.u32 %v2599, 7
    %v2601 = vsub.s32 %v2598, %v2600
    %v2602 = vrot.slane %v2593, %v2601
    %v2604 = vunpack.c.l.s4 1966171168
    %v2605 = vunpack.c.0.s8 %v2604
    %v2606 = vlaneseq
    %v2607 = vshrl.u32 %v2606, 7
    %v2608 = vsub.s32 %v2605, %v2607
    %v2609 = vrot.slane %v2594, %v2608
    %v2611 = vunpack.c.l.s4 1966171168
    %v2612 = vunpack.c.0.s8 %v2611
    %v2613 = vlaneseq
    %v2614 = vshrl.u32 %v2613, 7
    %v2615 = vsub.s32 %v2612, %v2614
    %v2616 = vrot.slane %v2595, %v2615
    %v2617 = vcombine.low %v2602, %v2609
    %v2619 = vunpack.c.l.s4 1966171168
    %v2620 = vunpack.c.0.s8 %v2619
    %v2621 = vlaneseq
    %v2622 = vshrl.u32 %v2621, 7
    %v2623 = vsub.s32 %v2620, %v2622
    %v2624 = vrot.slane %v2617, %v2623
    %v2626 = vunpack.c.l.s4 1966171168
    %v2627 = vunpack.c.0.s8 %v2626
    %v2628 = vlaneseq
    %v2629 = vshrl.u32 %v2628, 7
    %v2630 = vsub.s32 %v2627, %v2629
    %v2631 = vrot.slane %v2616, %v2630
    %v2632 = vcombine.low %v2624, %v2631
    %v2634 = vadd.f32 %v2277, %v2632
    %v2636 = vrot.slane %v2634, 4
    %v2638 = vxor.u32 %v2636, 2147483648
    %v2639 = vmul.f32 %v2638, 1.442695
    %v2640 = vpow.pop %v2639
    %v2641 = vadd.f32 %v2640, 1.0
    %v2642 = vrcp.pop %v2641
    %v2643 = vmul.f32 1.0, %v2642
    %v2644 = vlaneseq
    %v2645 = vshrl.u32 %v2644, 7
    %v2646 = vsub.s32 2, %v2645
    %v2647 = vrot.slane %v2634, %v2646
    %v2649 = vsel %vm774, %v2647, -inf
    %2650 = vmax.xlane.f32.xlu0 %v2649
    %v2651 = vpop.xlane.xlu0 %2650
    %v2652 = vrot.slane %v2634, 2
    %v2654 = vsub.f32 %v2652, %v2651
    %v2655 = vmul.f32 %v2654, 1.442695
    %v2656 = vpow.pop %v2655
    %v2657 = vsel %vm774, %v2656, 0.0
    %2658 = vadd.xlane.f32.xlu0 %v2657
    %v2659 = vpop.xlane.xlu0 %2658
    %v2660 = vrcp.pop %v2659
    %v2661 = vmul.f32 %v2656, %v2660
    %2663 = vset.pattern.permute.xlu0 0
    %2664 = vperm.xlu0 %2663, %v2643
    %v2665 = vpop.permute.xlu0 %2664
    %v2667 = vlaneseq
    %v2668 = vshrl.u32 %v2667, 7
    %v2669 = vsub.s32 0, %v2668
    %v2670 = vrot.slane %v2665, %v2669
    %v2671 = vmul.f32 %v2670, %v2661
    %v2673 = vsel %vm798, %v2671, 0
    %2675 = vmatprep.subr.mxu0 0.0
    %2676 = vmatpush1.msra.mxu0 0.0
    %2677 = vmatprep.subr.mxu0 0.0
    %2678 = vmatpush1.msra.mxu0 0.0
    %2679 = vmatprep.subr.mxu0 0.0
    %2680 = vmatpush1.msra.mxu0 0.0
    %2681 = vmatprep.subr.mxu0 0.0
    %2682 = vmatpush1.msra.mxu0 0.0
    %2683 = vmatprep.subr.mxu0 0.0
    %2684 = vmatpush1.msra.mxu0 0.0
    %2685 = vmatprep.subr.mxu0 0.0
    %2686 = vmatpush1.msra.mxu0 0.0
    %2687 = vmatprep.subr.mxu0 0.0
    %2688 = vmatpush1.msra.mxu0 0.0
    %2689 = vmatprep.subr.mxu0 0.0
    %2690 = vmatpush1.msra.mxu0 0.0
    %2691 = vmatprep.subr.mxu0 0.0
    %2692 = vmatpush1.msra.mxu0 0.0
    %2693 = vmatprep.subr.mxu0 0.0
    %2694 = vmatpush1.msra.mxu0 0.0
    %2695 = vmatprep.subr.mxu0 0.0
    %2696 = vmatpush1.msra.mxu0 0.0
    %2697 = vmatprep.subr.mxu0 0.0
    %2698 = vmatpush1.msra.mxu0 0.0
    %2699 = vmatprep.subr.mxu0 0.0
    %2700 = vmatpush1.msra.mxu0 0.0
    %2701 = vmatprep.subr.mxu0 0.0
    %2702 = vmatpush1.msra.mxu0 0.0
    %2703 = vmatprep.subr.mxu0 0.0
    %2704 = vmatpush1.msra.mxu0 %v2272
    %2705 = vmatprep.subr.mxu0 0.0
    %2706 = vmatpush1.msra.mxu0 %v2271
    %2707 = vmatprep.subr.mxu0 0.0
    %2708 = vmatpush2.msra.mxu0 0.0
    %2709 = vmatprep.subr.mxu0 0.0
    %2710 = vmatpush2.msra.mxu0 0.0
    %2711 = vmatprep.subr.mxu0 0.0
    %2712 = vmatpush2.msra.mxu0 0.0
    %2713 = vmatprep.subr.mxu0 0.0
    %2714 = vmatpush2.msra.mxu0 0.0
    %2715 = vmatprep.subr.mxu0 0.0
    %2716 = vmatpush2.msra.mxu0 0.0
    %2717 = vmatprep.subr.mxu0 0.0
    %2718 = vmatpush2.msra.mxu0 0.0
    %2719 = vmatprep.subr.mxu0 0.0
    %2720 = vmatpush2.msra.mxu0 0.0
    %2721 = vmatprep.subr.mxu0 0.0
    %2722 = vmatpush2.msra.mxu0 0.0
    %2723 = vmatprep.subr.mxu0 0.0
    %2724 = vmatpush2.msra.mxu0 0.0
    %2725 = vmatprep.subr.mxu0 0.0
    %2726 = vmatpush2.msra.mxu0 0.0
    %2727 = vmatprep.subr.mxu0 0.0
    %2728 = vmatpush2.msra.mxu0 0.0
    %2729 = vmatprep.subr.mxu0 0.0
    %2730 = vmatpush2.msra.mxu0 0.0
    %2731 = vmatprep.subr.mxu0 0.0
    %2732 = vmatpush2.msra.mxu0 0.0
    %2733 = vmatprep.subr.mxu0 0.0
    %2734 = vmatpush2.msra.mxu0 0.0
    %2735 = vmatprep.subr.mxu0 0.0
    %2736 = vmatpush2.msra.mxu0 0.0
    %2737 = vmatprep.subr.mxu0 0.0
    %2738 = vmatpush2.msra.mxu0 0.0
    %2739 = vmatprep.mubr.f32.mxu0 0.0
    %2740 = vmatmul.mubr.f32.gmra.mxu0 %v2673
    %v2741 = vpop.f32.mrf.mxu0
    %v2742 = vadd.f32 0.0, %v2741
    %v2743 = vpop.f32.mrf.mxu0
    %2744 = vdwg.mxu0
    %v2745 = vld [vmem:[#allocation11] sm:$0xff]
    %v2746 = vld [vmem:[#allocation11 + $0x8] sm:$0xff]
    %v2747 = vld [vmem:[#allocation11 + $0x10] sm:$0xff]
    %v2748 = vld [vmem:[#allocation11 + $0x18] sm:$0xff]
    %v2749 = vld [vmem:[#allocation11 + $0x20] sm:$0xff]
    %v2750 = vld [vmem:[#allocation11 + $0x28] sm:$0xff]
    %v2751 = vld [vmem:[#allocation11 + $0x30] sm:$0xff]
    %v2752 = vld [vmem:[#allocation11 + $0x38] sm:$0xff]
    %v2753 = vld [vmem:[#allocation11 + $0x40] sm:$0xff]
    %v2754 = vld [vmem:[#allocation11 + $0x48] sm:$0xff]
    %v2755 = vld [vmem:[#allocation11 + $0x50] sm:$0xff]
    %v2756 = vld [vmem:[#allocation11 + $0x58] sm:$0xff]
    %v2757 = vld [vmem:[#allocation11 + $0x60] sm:$0xff]
    %v2758 = vld [vmem:[#allocation11 + $0x68] sm:$0xff]
    %v2759 = vld [vmem:[#allocation11 + $0x70] sm:$0xff]
    %v2760 = vld [vmem:[#allocation11 + $0x78] sm:$0xff]
    %2761 = vmatprep.subr.mxu0 0.0
    %2762 = vmatpush1.msra.mxu0 %v2760
    %2763 = vmatprep.subr.mxu0 0.0
    %2764 = vmatpush1.msra.mxu0 %v2759
    %2765 = vmatprep.subr.mxu0 0.0
    %2766 = vmatpush1.msra.mxu0 %v2758
    %2767 = vmatprep.subr.mxu0 0.0
    %2768 = vmatpush1.msra.mxu0 %v2757
    %2769 = vmatprep.subr.mxu0 0.0
    %2770 = vmatpush1.msra.mxu0 %v2756
    %2771 = vmatprep.subr.mxu0 0.0
    %2772 = vmatpush1.msra.mxu0 %v2755
    %2773 = vmatprep.subr.mxu0 0.0
    %2774 = vmatpush1.msra.mxu0 %v2754
    %2775 = vmatprep.subr.mxu0 0.0
    %2776 = vmatpush1.msra.mxu0 %v2753
    %2777 = vmatprep.subr.mxu0 0.0
    %2778 = vmatpush1.msra.mxu0 %v2752
    %2779 = vmatprep.subr.mxu0 0.0
    %2780 = vmatpush1.msra.mxu0 %v2751
    %2781 = vmatprep.subr.mxu0 0.0
    %2782 = vmatpush1.msra.mxu0 %v2750
    %2783 = vmatprep.subr.mxu0 0.0
    %2784 = vmatpush1.msra.mxu0 %v2749
    %2785 = vmatprep.subr.mxu0 0.0
    %2786 = vmatpush1.msra.mxu0 %v2748
    %2787 = vmatprep.subr.mxu0 0.0
    %2788 = vmatpush1.msra.mxu0 %v2747
    %2789 = vmatprep.subr.mxu0 0.0
    %2790 = vmatpush1.msra.mxu0 %v2746
    %2791 = vmatprep.subr.mxu0 0.0
    %2792 = vmatpush1.msra.mxu0 %v2745
    %2793 = vmatprep.subr.mxu0 0.0
    %2794 = vmatpush2.msra.mxu0 0.0
    %2795 = vmatprep.subr.mxu0 0.0
    %2796 = vmatpush2.msra.mxu0 0.0
    %2797 = vmatprep.subr.mxu0 0.0
    %2798 = vmatpush2.msra.mxu0 0.0
    %2799 = vmatprep.subr.mxu0 0.0
    %2800 = vmatpush2.msra.mxu0 0.0
    %2801 = vmatprep.subr.mxu0 0.0
    %2802 = vmatpush2.msra.mxu0 0.0
    %2803 = vmatprep.subr.mxu0 0.0
    %2804 = vmatpush2.msra.mxu0 0.0
    %2805 = vmatprep.subr.mxu0 0.0
    %2806 = vmatpush2.msra.mxu0 0.0
    %2807 = vmatprep.subr.mxu0 0.0
    %2808 = vmatpush2.msra.mxu0 0.0
    %2809 = vmatprep.subr.mxu0 0.0
    %2810 = vmatpush2.msra.mxu0 0.0
    %2811 = vmatprep.subr.mxu0 0.0
    %2812 = vmatpush2.msra.mxu0 0.0
    %2813 = vmatprep.subr.mxu0 0.0
    %2814 = vmatpush2.msra.mxu0 0.0
    %2815 = vmatprep.subr.mxu0 0.0
    %2816 = vmatpush2.msra.mxu0 0.0
    %2817 = vmatprep.subr.mxu0 0.0
    %2818 = vmatpush2.msra.mxu0 0.0
    %2819 = vmatprep.subr.mxu0 0.0
    %2820 = vmatpush2.msra.mxu0 0.0
    %2821 = vmatprep.subr.mxu0 0.0
    %2822 = vmatpush2.msra.mxu0 0.0
    %2823 = vmatprep.subr.mxu0 0.0
    %2824 = vmatpush2.msra.mxu0 0.0
    %2825 = vmatprep.mubr.f32.mxu0 0.0
    %2826 = vmatmul.mubr.f32.gmra.mxu0 %v2742
    %v2827 = vpop.f32.mrf.mxu0
    %v2828 = vadd.f32 0.0, %v2827
    %v2829 = vpop.f32.mrf.mxu0
    %2830 = vdwg.mxu0
    %v2831 = vadd.f32 %v2634, %v2828
    %v2832 = vmax.f32 %v2831, 0.0
    %v2833 = vrot.slane %v2634, 1
    %v2835 = vmax.f32 %v2833, 0.0
    %v2836 = vlaneseq
    %v2837 = vshrl.u32 %v2836, 7
    %v2838 = vsub.s32 3, %v2837
    %v2839 = vrot.slane %v2634, %v2838
    %v2841 = vsel %vm774, %v2839, -inf
    %2842 = vmax.xlane.f32.xlu0 %v2841
    %v2843 = vpop.xlane.xlu0 %2842
    %v2844 = vrot.slane %v2634, 3
    %v2846 = vsub.f32 %v2844, %v2843
    %v2847 = vmul.f32 %v2846, 1.442695
    %v2848 = vpow.pop %v2847
    %v2849 = vsel %vm774, %v2848, 0.0
    %2850 = vadd.xlane.f32.xlu0 %v2849
    %v2851 = vpop.xlane.xlu0 %2850
    %v2852 = vrcp.pop %v2851
    %v2853 = vmul.f32 %v2848, %v2852
    %v2854 = vrot.slane %v2634, 5
    %v2856 = vxor.u32 %v2854, 2147483648
    %v2857 = vmul.f32 %v2856, 1.442695
    %v2858 = vpow.pop %v2857
    %v2859 = vadd.f32 %v2858, 1.0
    %v2860 = vrcp.pop %v2859
    %v2861 = vmul.f32 1.0, %v2860
    %v2863 = vlaneseq
    %v2864 = vshrl.u32 %v2863, 7
    %v2865 = vsub.s32 0, %v2864
    %v2866 = vrot.slane %v2853, %v2865
    %v2868 = vmul.f32 %v2866, %v398
    %v2869 = vmul.f32 %v2866, %v399
    %v2870 = vsel %vm798, %v2868, 0.0
    %2871 = vadd.xlane.f32.xlu0 %v2870
    %v2872 = vpop.xlane.xlu0 %2871
    %v2873 = vsel %vm798, %v2869, 0.0
    %2874 = vadd.xlane.f32.xlu0 %v2873
    %v2875 = vpop.xlane.xlu0 %2874
    %2877 = vset.pattern.permute.xlu0 0
    %2878 = vperm.xlu0 %2877, %v2861
    %v2879 = vpop.permute.xlu0 %2878
    %v2881 = vlaneseq
    %v2882 = vshrl.u32 %v2881, 7
    %v2883 = vsub.s32 0, %v2882
    %v2884 = vrot.slane %v2879, %v2883
    %v2885 = vmul.f32 %v2884, %v2835
    %v2887 = vlaneseq
    %v2888 = vshrl.u32 %v2887, 7
    %v2889 = vsub.s32 0, %v2888
    %v2890 = vrot.slane %v2885, %v2889
    %v2892 = vsub.f32 %v2890, %v2271
    %v2893 = vsub.f32 %v2890, %v2272
    %v2894 = vmul.f32 %v2872, %v2892
    %v2895 = vmul.f32 %v2875, %v2893
    %v2896 = vadd.f32 %v2271, %v2894
    %v2897 = vadd.f32 %v2272, %v2895
    %2898 = vst [vmem:[#allocation12 + $0x3] sm:$0x1] %v2832
    %s2899 = scalar_lea.vmem [#allocation2], 4
    %v2900 = vld [vmem:[%s2899] ss:$8 sm:$0xf]
    %v2901 = vld [vmem:[%s2899] ss:$8 sm:$0x30]
    %v2902 = vor.u32 %v2900, %v2901
    %v2903 = vld [vmem:[#allocation8] sm:$0xff]
    %v2904 = vld [vmem:[#allocation8 + $0x8] sm:$0xff]
    %v2905 = vld [vmem:[#allocation8 + $0x10] sm:$0xff]
    %v2906 = vld [vmem:[#allocation8 + $0x18] sm:$0xff]
    %v2907 = vld [vmem:[#allocation8 + $0x20] sm:$0xff]
    %v2908 = vld [vmem:[#allocation8 + $0x28] sm:$0xff]
    %v2909 = vld [vmem:[#allocation8 + $0x30] sm:$0xff]
    %v2910 = vld [vmem:[#allocation8 + $0x38] sm:$0xff]
    %v2911 = vld [vmem:[#allocation8 + $0x40] sm:$0xff]
    %v2912 = vld [vmem:[#allocation8 + $0x48] sm:$0xff]
    %v2913 = vld [vmem:[#allocation8 + $0x50] sm:$0xff]
    %v2914 = vld [vmem:[#allocation8 + $0x58] sm:$0xff]
    %v2915 = vld [vmem:[#allocation8 + $0x60] sm:$0xff]
    %v2916 = vld [vmem:[#allocation8 + $0x68] sm:$0xff]
    %v2917 = vld [vmem:[#allocation8 + $0x70] sm:$0xff]
    %v2918 = vld [vmem:[#allocation8 + $0x78] sm:$0xff]
    %v2919 = vld [vmem:[#allocation8 + $0x80] sm:$0xff]
    %v2920 = vld [vmem:[#allocation8 + $0x88] sm:$0xff]
    %v2921 = vld [vmem:[#allocation8 + $0x90] sm:$0xff]
    %v2922 = vld [vmem:[#allocation8 + $0x98] sm:$0xff]
    %v2923 = vld [vmem:[#allocation8 + $0xa0] sm:$0xff]
    %v2924 = vld [vmem:[#allocation8 + $0xa8] sm:$0xff]
    %v2925 = vld [vmem:[#allocation8 + $0xb0] sm:$0xff]
    %v2926 = vld [vmem:[#allocation8 + $0xb8] sm:$0xff]
    %v2927 = vld [vmem:[#allocation8 + $0xc0] sm:$0xff]
    %v2928 = vld [vmem:[#allocation8 + $0xc8] sm:$0xff]
    %v2929 = vld [vmem:[#allocation8 + $0xd0] sm:$0xff]
    %v2930 = vld [vmem:[#allocation8 + $0xd8] sm:$0xff]
    %v2931 = vld [vmem:[#allocation8 + $0xe0] sm:$0xff]
    %v2932 = vld [vmem:[#allocation8 + $0xe8] sm:$0xff]
    %v2933 = vld [vmem:[#allocation8 + $0xf0] sm:$0xff]
    %v2934 = vld [vmem:[#allocation8 + $0xf8] sm:$0xff]
    %v2935 = vld [vmem:[#allocation8 + $0x100] sm:$0xff]
    %v2936 = vld [vmem:[#allocation8 + $0x108] sm:$0xff]
    %v2937 = vld [vmem:[#allocation8 + $0x110] sm:$0xff]
    %v2938 = vld [vmem:[#allocation8 + $0x118] sm:$0xff]
    %v2939 = vld [vmem:[#allocation8 + $0x120] sm:$0xff]
    %v2940 = vld [vmem:[#allocation8 + $0x128] sm:$0xff]
    %v2941 = vld [vmem:[#allocation8 + $0x130] sm:$0xff]
    %v2942 = vld [vmem:[#allocation8 + $0x138] sm:$0xff]
    %v2943 = vld [vmem:[#allocation8 + $0x140] sm:$0xff]
    %v2944 = vld [vmem:[#allocation8 + $0x148] sm:$0xff]
    %v2945 = vld [vmem:[#allocation8 + $0x150] sm:$0xff]
    %v2946 = vld [vmem:[#allocation8 + $0x158] sm:$0xff]
    %v2947 = vld [vmem:[#allocation8 + $0x160] sm:$0xff]
    %v2948 = vld [vmem:[#allocation8 + $0x168] sm:$0xff]
    %v2949 = vld [vmem:[#allocation8 + $0x170] sm:$0xff]
    %v2950 = vld [vmem:[#allocation8 + $0x178] sm:$0xff]
    %v2951 = vld [vmem:[#allocation8 + $0x180] sm:$0xff]
    %v2952 = vld [vmem:[#allocation8 + $0x188] sm:$0xff]
    %v2953 = vld [vmem:[#allocation8 + $0x190] sm:$0xff]
    %v2954 = vld [vmem:[#allocation8 + $0x198] sm:$0xff]
    %v2955 = vld [vmem:[#allocation8 + $0x1a0] sm:$0xff]
    %v2956 = vld [vmem:[#allocation8 + $0x1a8] sm:$0xff]
    %v2957 = vld [vmem:[#allocation8 + $0x1b0] sm:$0xff]
    %v2958 = vld [vmem:[#allocation8 + $0x1b8] sm:$0xff]
    %v2959 = vld [vmem:[#allocation8 + $0x1c0] sm:$0xff]
    %v2960 = vld [vmem:[#allocation8 + $0x1c8] sm:$0xff]
    %v2961 = vld [vmem:[#allocation8 + $0x1d0] sm:$0xff]
    %v2962 = vld [vmem:[#allocation8 + $0x1d8] sm:$0xff]
    %v2963 = vld [vmem:[#allocation8 + $0x1e0] sm:$0xff]
    %v2964 = vld [vmem:[#allocation8 + $0x1e8] sm:$0xff]
    %v2965 = vld [vmem:[#allocation8 + $0x1f0] sm:$0xff]
    %v2966 = vld [vmem:[#allocation8 + $0x1f8] sm:$0xff]
    %v2967 = vld [vmem:[#allocation8 + $0x200] sm:$0xff]
    %v2968 = vld [vmem:[#allocation8 + $0x208] sm:$0xff]
    %v2969 = vld [vmem:[#allocation8 + $0x210] sm:$0xff]
    %v2970 = vld [vmem:[#allocation8 + $0x218] sm:$0xff]
    %v2971 = vld [vmem:[#allocation8 + $0x220] sm:$0xff]
    %v2972 = vld [vmem:[#allocation8 + $0x228] sm:$0xff]
    %v2973 = vld [vmem:[#allocation8 + $0x230] sm:$0xff]
    %v2974 = vld [vmem:[#allocation8 + $0x238] sm:$0xff]
    %v2975 = vld [vmem:[#allocation8 + $0x240] sm:$0xff]
    %v2976 = vld [vmem:[#allocation8 + $0x248] sm:$0xff]
    %v2977 = vld [vmem:[#allocation8 + $0x250] sm:$0xff]
    %v2978 = vld [vmem:[#allocation8 + $0x258] sm:$0xff]
    %v2979 = vld [vmem:[#allocation8 + $0x260] sm:$0xff]
    %v2980 = vld [vmem:[#allocation8 + $0x268] sm:$0xff]
    %v2981 = vld [vmem:[#allocation8 + $0x270] sm:$0xff]
    %v2982 = vld [vmem:[#allocation8 + $0x278] sm:$0xff]
    %v2983 = vld [vmem:[#allocation8 + $0x280] sm:$0xff]
    %v2984 = vld [vmem:[#allocation8 + $0x288] sm:$0xff]
    %v2985 = vld [vmem:[#allocation8 + $0x290] sm:$0xff]
    %v2986 = vld [vmem:[#allocation8 + $0x298] sm:$0xff]
    %v2987 = vld [vmem:[#allocation8 + $0x2a0] sm:$0xff]
    %v2988 = vld [vmem:[#allocation8 + $0x2a8] sm:$0xff]
    %v2989 = vld [vmem:[#allocation8 + $0x2b0] sm:$0xff]
    %v2990 = vld [vmem:[#allocation8 + $0x2b8] sm:$0xff]
    %v2991 = vld [vmem:[#allocation8 + $0x2c0] sm:$0xff]
    %v2992 = vld [vmem:[#allocation8 + $0x2c8] sm:$0xff]
    %v2993 = vld [vmem:[#allocation8 + $0x2d0] sm:$0xff]
    %v2994 = vld [vmem:[#allocation8 + $0x2d8] sm:$0xff]
    %v2995 = vld [vmem:[#allocation8 + $0x2e0] sm:$0xff]
    %v2996 = vld [vmem:[#allocation8 + $0x2e8] sm:$0xff]
    %v2997 = vld [vmem:[#allocation8 + $0x2f0] sm:$0xff]
    %v2998 = vld [vmem:[#allocation8 + $0x2f8] sm:$0xff]
    %2999 = vmatprep.subr.mxu0 %v2994
    %3000 = vmatpush1.msra.mxu0 %v2993
    %3001 = vmatprep.subr.mxu0 %v2988
    %3002 = vmatpush1.msra.mxu0 %v2987
    %3003 = vmatprep.subr.mxu0 %v2982
    %3004 = vmatpush1.msra.mxu0 %v2981
    %3005 = vmatprep.subr.mxu0 %v2976
    %3006 = vmatpush1.msra.mxu0 %v2975
    %3007 = vmatprep.subr.mxu0 %v2970
    %3008 = vmatpush1.msra.mxu0 %v2969
    %3009 = vmatprep.subr.mxu0 %v2964
    %3010 = vmatpush1.msra.mxu0 %v2963
    %3011 = vmatprep.subr.mxu0 %v2958
    %3012 = vmatpush1.msra.mxu0 %v2957
    %3013 = vmatprep.subr.mxu0 %v2952
    %3014 = vmatpush1.msra.mxu0 %v2951
    %3015 = vmatprep.subr.mxu0 %v2946
    %3016 = vmatpush1.msra.mxu0 %v2945
    %3017 = vmatprep.subr.mxu0 %v2940
    %3018 = vmatpush1.msra.mxu0 %v2939
    %3019 = vmatprep.subr.mxu0 %v2934
    %3020 = vmatpush1.msra.mxu0 %v2933
    %3021 = vmatprep.subr.mxu0 %v2928
    %3022 = vmatpush1.msra.mxu0 %v2927
    %3023 = vmatprep.subr.mxu0 %v2922
    %3024 = vmatpush1.msra.mxu0 %v2921
    %3025 = vmatprep.subr.mxu0 %v2916
    %3026 = vmatpush1.msra.mxu0 %v2915
    %3027 = vmatprep.subr.mxu0 %v2910
    %3028 = vmatpush1.msra.mxu0 %v2909
    %3029 = vmatprep.subr.mxu0 %v2904
    %3030 = vmatpush1.msra.mxu0 %v2903
    %3031 = vmatprep.subr.mxu0 0.0
    %3032 = vmatpush2.msra.mxu0 0.0
    %3033 = vmatprep.subr.mxu0 0.0
    %3034 = vmatpush2.msra.mxu0 0.0
    %3035 = vmatprep.subr.mxu0 0.0
    %3036 = vmatpush2.msra.mxu0 0.0
    %3037 = vmatprep.subr.mxu0 0.0
    %3038 = vmatpush2.msra.mxu0 0.0
    %3039 = vmatprep.subr.mxu0 0.0
    %3040 = vmatpush2.msra.mxu0 0.0
    %3041 = vmatprep.subr.mxu0 0.0
    %3042 = vmatpush2.msra.mxu0 0.0
    %3043 = vmatprep.subr.mxu0 0.0
    %3044 = vmatpush2.msra.mxu0 0.0
    %3045 = vmatprep.subr.mxu0 0.0
    %3046 = vmatpush2.msra.mxu0 0.0
    %3047 = vmatprep.subr.mxu0 0.0
    %3048 = vmatpush2.msra.mxu0 0.0
    %3049 = vmatprep.subr.mxu0 0.0
    %3050 = vmatpush2.msra.mxu0 0.0
    %3051 = vmatprep.subr.mxu0 0.0
    %3052 = vmatpush2.msra.mxu0 0.0
    %3053 = vmatprep.subr.mxu0 0.0
    %3054 = vmatpush2.msra.mxu0 0.0
    %3055 = vmatprep.subr.mxu0 0.0
    %3056 = vmatpush2.msra.mxu0 0.0
    %3057 = vmatprep.subr.mxu0 0.0
    %3058 = vmatpush2.msra.mxu0 0.0
    %3059 = vmatprep.subr.mxu0 0.0
    %3060 = vmatpush2.msra.mxu0 0.0
    %3061 = vmatprep.subr.mxu0 0.0
    %3062 = vmatpush2.msra.mxu0 0.0
    %3063 = vmatprep.mubr.f32.mxu0 0.0
    %3064 = vmatmul.mubr.f32.gmra.mxu0 %v2832
    %v3065 = vpop.f32.mrf.mxu0
    %v3066 = vadd.f32 0.0, %v3065
    %v3067 = vpop.f32.mrf.mxu0
    %v3068 = vadd.f32 0.0, %v3067
    %3069 = vdwg.mxu0
    %3070 = vmatprep.subr.mxu0 %v2996
    %3071 = vmatpush1.msra.mxu0 %v2995
    %3072 = vmatprep.subr.mxu0 %v2990
    %3073 = vmatpush1.msra.mxu0 %v2989
    %3074 = vmatprep.subr.mxu0 %v2984
    %3075 = vmatpush1.msra.mxu0 %v2983
    %3076 = vmatprep.subr.mxu0 %v2978
    %3077 = vmatpush1.msra.mxu0 %v2977
    %3078 = vmatprep.subr.mxu0 %v2972
    %3079 = vmatpush1.msra.mxu0 %v2971
    %3080 = vmatprep.subr.mxu0 %v2966
    %3081 = vmatpush1.msra.mxu0 %v2965
    %3082 = vmatprep.subr.mxu0 %v2960
    %3083 = vmatpush1.msra.mxu0 %v2959
    %3084 = vmatprep.subr.mxu0 %v2954
    %3085 = vmatpush1.msra.mxu0 %v2953
    %3086 = vmatprep.subr.mxu0 %v2948
    %3087 = vmatpush1.msra.mxu0 %v2947
    %3088 = vmatprep.subr.mxu0 %v2942
    %3089 = vmatpush1.msra.mxu0 %v2941
    %3090 = vmatprep.subr.mxu0 %v2936
    %3091 = vmatpush1.msra.mxu0 %v2935
    %3092 = vmatprep.subr.mxu0 %v2930
    %3093 = vmatpush1.msra.mxu0 %v2929
    %3094 = vmatprep.subr.mxu0 %v2924
    %3095 = vmatpush1.msra.mxu0 %v2923
    %3096 = vmatprep.subr.mxu0 %v2918
    %3097 = vmatpush1.msra.mxu0 %v2917
    %3098 = vmatprep.subr.mxu0 %v2912
    %3099 = vmatpush1.msra.mxu0 %v2911
    %3100 = vmatprep.subr.mxu0 %v2906
    %3101 = vmatpush1.msra.mxu0 %v2905
    %3102 = vmatprep.subr.mxu0 0.0
    %3103 = vmatpush2.msra.mxu0 0.0
    %3104 = vmatprep.subr.mxu0 0.0
    %3105 = vmatpush2.msra.mxu0 0.0
    %3106 = vmatprep.subr.mxu0 0.0
    %3107 = vmatpush2.msra.mxu0 0.0
    %3108 = vmatprep.subr.mxu0 0.0
    %3109 = vmatpush2.msra.mxu0 0.0
    %3110 = vmatprep.subr.mxu0 0.0
    %3111 = vmatpush2.msra.mxu0 0.0
    %3112 = vmatprep.subr.mxu0 0.0
    %3113 = vmatpush2.msra.mxu0 0.0
    %3114 = vmatprep.subr.mxu0 0.0
    %3115 = vmatpush2.msra.mxu0 0.0
    %3116 = vmatprep.subr.mxu0 0.0
    %3117 = vmatpush2.msra.mxu0 0.0
    %3118 = vmatprep.subr.mxu0 0.0
    %3119 = vmatpush2.msra.mxu0 0.0
    %3120 = vmatprep.subr.mxu0 0.0
    %3121 = vmatpush2.msra.mxu0 0.0
    %3122 = vmatprep.subr.mxu0 0.0
    %3123 = vmatpush2.msra.mxu0 0.0
    %3124 = vmatprep.subr.mxu0 0.0
    %3125 = vmatpush2.msra.mxu0 0.0
    %3126 = vmatprep.subr.mxu0 0.0
    %3127 = vmatpush2.msra.mxu0 0.0
    %3128 = vmatprep.subr.mxu0 0.0
    %3129 = vmatpush2.msra.mxu0 0.0
    %3130 = vmatprep.subr.mxu0 0.0
    %3131 = vmatpush2.msra.mxu0 0.0
    %3132 = vmatprep.subr.mxu0 0.0
    %3133 = vmatpush2.msra.mxu0 0.0
    %3134 = vmatprep.mubr.f32.mxu0 0.0
    %3135 = vmatmul.mubr.f32.gmra.mxu0 %v2832
    %v3136 = vpop.f32.mrf.mxu0
    %v3137 = vadd.f32 0.0, %v3136
    %v3138 = vpop.f32.mrf.mxu0
    %v3139 = vadd.f32 0.0, %v3138
    %3140 = vdwg.mxu0
    %3141 = vmatprep.subr.mxu0 %v2998
    %3142 = vmatpush1.msra.mxu0 %v2997
    %3143 = vmatprep.subr.mxu0 %v2992
    %3144 = vmatpush1.msra.mxu0 %v2991
    %3145 = vmatprep.subr.mxu0 %v2986
    %3146 = vmatpush1.msra.mxu0 %v2985
    %3147 = vmatprep.subr.mxu0 %v2980
    %3148 = vmatpush1.msra.mxu0 %v2979
    %3149 = vmatprep.subr.mxu0 %v2974
    %3150 = vmatpush1.msra.mxu0 %v2973
    %3151 = vmatprep.subr.mxu0 %v2968
    %3152 = vmatpush1.msra.mxu0 %v2967
    %3153 = vmatprep.subr.mxu0 %v2962
    %3154 = vmatpush1.msra.mxu0 %v2961
    %3155 = vmatprep.subr.mxu0 %v2956
    %3156 = vmatpush1.msra.mxu0 %v2955
    %3157 = vmatprep.subr.mxu0 %v2950
    %3158 = vmatpush1.msra.mxu0 %v2949
    %3159 = vmatprep.subr.mxu0 %v2944
    %3160 = vmatpush1.msra.mxu0 %v2943
    %3161 = vmatprep.subr.mxu0 %v2938
    %3162 = vmatpush1.msra.mxu0 %v2937
    %3163 = vmatprep.subr.mxu0 %v2932
    %3164 = vmatpush1.msra.mxu0 %v2931
    %3165 = vmatprep.subr.mxu0 %v2926
    %3166 = vmatpush1.msra.mxu0 %v2925
    %3167 = vmatprep.subr.mxu0 %v2920
    %3168 = vmatpush1.msra.mxu0 %v2919
    %3169 = vmatprep.subr.mxu0 %v2914
    %3170 = vmatpush1.msra.mxu0 %v2913
    %3171 = vmatprep.subr.mxu0 %v2908
    %3172 = vmatpush1.msra.mxu0 %v2907
    %3173 = vmatprep.subr.mxu0 0.0
    %3174 = vmatpush2.msra.mxu0 0.0
    %3175 = vmatprep.subr.mxu0 0.0
    %3176 = vmatpush2.msra.mxu0 0.0
    %3177 = vmatprep.subr.mxu0 0.0
    %3178 = vmatpush2.msra.mxu0 0.0
    %3179 = vmatprep.subr.mxu0 0.0
    %3180 = vmatpush2.msra.mxu0 0.0
    %3181 = vmatprep.subr.mxu0 0.0
    %3182 = vmatpush2.msra.mxu0 0.0
    %3183 = vmatprep.subr.mxu0 0.0
    %3184 = vmatpush2.msra.mxu0 0.0
    %3185 = vmatprep.subr.mxu0 0.0
    %3186 = vmatpush2.msra.mxu0 0.0
    %3187 = vmatprep.subr.mxu0 0.0
    %3188 = vmatpush2.msra.mxu0 0.0
    %3189 = vmatprep.subr.mxu0 0.0
    %3190 = vmatpush2.msra.mxu0 0.0
    %3191 = vmatprep.subr.mxu0 0.0
    %3192 = vmatpush2.msra.mxu0 0.0
    %3193 = vmatprep.subr.mxu0 0.0
    %3194 = vmatpush2.msra.mxu0 0.0
    %3195 = vmatprep.subr.mxu0 0.0
    %3196 = vmatpush2.msra.mxu0 0.0
    %3197 = vmatprep.subr.mxu0 0.0
    %3198 = vmatpush2.msra.mxu0 0.0
    %3199 = vmatprep.subr.mxu0 0.0
    %3200 = vmatpush2.msra.mxu0 0.0
    %3201 = vmatprep.subr.mxu0 0.0
    %3202 = vmatpush2.msra.mxu0 0.0
    %3203 = vmatprep.subr.mxu0 0.0
    %3204 = vmatpush2.msra.mxu0 0.0
    %3205 = vmatprep.mubr.f32.mxu0 0.0
    %3206 = vmatmul.mubr.f32.gmra.mxu0 %v2832
    %v3207 = vpop.f32.mrf.mxu0
    %v3208 = vadd.f32 0.0, %v3207
    %v3209 = vpop.f32.mrf.mxu0
    %v3210 = vadd.f32 0.0, %v3209
    %3211 = vdwg.mxu0
    %v3218 = vcombine.low %v3066, %v3068
    %v3219 = vcombine.low %v3137, %v3139
    %v3220 = vcombine.low %v3208, %v3210
    %v3222 = vunpack.c.l.s4 1966171168
    %v3223 = vunpack.c.0.s8 %v3222
    %v3224 = vlaneseq
    %v3225 = vshrl.u32 %v3224, 7
    %v3226 = vsub.s32 %v3223, %v3225
    %v3227 = vrot.slane %v3218, %v3226
    %v3229 = vunpack.c.l.s4 1966171168
    %v3230 = vunpack.c.0.s8 %v3229
    %v3231 = vlaneseq
    %v3232 = vshrl.u32 %v3231, 7
    %v3233 = vsub.s32 %v3230, %v3232
    %v3234 = vrot.slane %v3219, %v3233
    %v3236 = vunpack.c.l.s4 1966171168
    %v3237 = vunpack.c.0.s8 %v3236
    %v3238 = vlaneseq
    %v3239 = vshrl.u32 %v3238, 7
    %v3240 = vsub.s32 %v3237, %v3239
    %v3241 = vrot.slane %v3220, %v3240
    %v3242 = vcombine.low %v3227, %v3234
    %v3244 = vunpack.c.l.s4 1966171168
    %v3245 = vunpack.c.0.s8 %v3244
    %v3246 = vlaneseq
    %v3247 = vshrl.u32 %v3246, 7
    %v3248 = vsub.s32 %v3245, %v3247
    %v3249 = vrot.slane %v3242, %v3248
    %v3251 = vunpack.c.l.s4 1966171168
    %v3252 = vunpack.c.0.s8 %v3251
    %v3253 = vlaneseq
    %v3254 = vshrl.u32 %v3253, 7
    %v3255 = vsub.s32 %v3252, %v3254
    %v3256 = vrot.slane %v3241, %v3255
    %v3257 = vcombine.low %v3249, %v3256
    %v3259 = vadd.f32 %v2902, %v3257
    %v3261 = vrot.slane %v3259, 4
    %v3263 = vxor.u32 %v3261, 2147483648
    %v3264 = vmul.f32 %v3263, 1.442695
    %v3265 = vpow.pop %v3264
    %v3266 = vadd.f32 %v3265, 1.0
    %v3267 = vrcp.pop %v3266
    %v3268 = vmul.f32 1.0, %v3267
    %v3269 = vlaneseq
    %v3270 = vshrl.u32 %v3269, 7
    %v3271 = vsub.s32 2, %v3270
    %v3272 = vrot.slane %v3259, %v3271
    %v3274 = vsel %vm774, %v3272, -inf
    %3275 = vmax.xlane.f32.xlu0 %v3274
    %v3276 = vpop.xlane.xlu0 %3275
    %v3277 = vrot.slane %v3259, 2
    %v3279 = vsub.f32 %v3277, %v3276
    %v3280 = vmul.f32 %v3279, 1.442695
    %v3281 = vpow.pop %v3280
    %v3282 = vsel %vm774, %v3281, 0.0
    %3283 = vadd.xlane.f32.xlu0 %v3282
    %v3284 = vpop.xlane.xlu0 %3283
    %v3285 = vrcp.pop %v3284
    %v3286 = vmul.f32 %v3281, %v3285
    %3288 = vset.pattern.permute.xlu0 0
    %3289 = vperm.xlu0 %3288, %v3268
    %v3290 = vpop.permute.xlu0 %3289
    %v3292 = vlaneseq
    %v3293 = vshrl.u32 %v3292, 7
    %v3294 = vsub.s32 0, %v3293
    %v3295 = vrot.slane %v3290, %v3294
    %v3296 = vmul.f32 %v3295, %v3286
    %v3298 = vsel %vm798, %v3296, 0
    %3300 = vmatprep.subr.mxu0 0.0
    %3301 = vmatpush1.msra.mxu0 0.0
    %3302 = vmatprep.subr.mxu0 0.0
    %3303 = vmatpush1.msra.mxu0 0.0
    %3304 = vmatprep.subr.mxu0 0.0
    %3305 = vmatpush1.msra.mxu0 0.0
    %3306 = vmatprep.subr.mxu0 0.0
    %3307 = vmatpush1.msra.mxu0 0.0
    %3308 = vmatprep.subr.mxu0 0.0
    %3309 = vmatpush1.msra.mxu0 0.0
    %3310 = vmatprep.subr.mxu0 0.0
    %3311 = vmatpush1.msra.mxu0 0.0
    %3312 = vmatprep.subr.mxu0 0.0
    %3313 = vmatpush1.msra.mxu0 0.0
    %3314 = vmatprep.subr.mxu0 0.0
    %3315 = vmatpush1.msra.mxu0 0.0
    %3316 = vmatprep.subr.mxu0 0.0
    %3317 = vmatpush1.msra.mxu0 0.0
    %3318 = vmatprep.subr.mxu0 0.0
    %3319 = vmatpush1.msra.mxu0 0.0
    %3320 = vmatprep.subr.mxu0 0.0
    %3321 = vmatpush1.msra.mxu0 0.0
    %3322 = vmatprep.subr.mxu0 0.0
    %3323 = vmatpush1.msra.mxu0 0.0
    %3324 = vmatprep.subr.mxu0 0.0
    %3325 = vmatpush1.msra.mxu0 0.0
    %3326 = vmatprep.subr.mxu0 0.0
    %3327 = vmatpush1.msra.mxu0 0.0
    %3328 = vmatprep.subr.mxu0 0.0
    %3329 = vmatpush1.msra.mxu0 %v2897
    %3330 = vmatprep.subr.mxu0 0.0
    %3331 = vmatpush1.msra.mxu0 %v2896
    %3332 = vmatprep.subr.mxu0 0.0
    %3333 = vmatpush2.msra.mxu0 0.0
    %3334 = vmatprep.subr.mxu0 0.0
    %3335 = vmatpush2.msra.mxu0 0.0
    %3336 = vmatprep.subr.mxu0 0.0
    %3337 = vmatpush2.msra.mxu0 0.0
    %3338 = vmatprep.subr.mxu0 0.0
    %3339 = vmatpush2.msra.mxu0 0.0
    %3340 = vmatprep.subr.mxu0 0.0
    %3341 = vmatpush2.msra.mxu0 0.0
    %3342 = vmatprep.subr.mxu0 0.0
    %3343 = vmatpush2.msra.mxu0 0.0
    %3344 = vmatprep.subr.mxu0 0.0
    %3345 = vmatpush2.msra.mxu0 0.0
    %3346 = vmatprep.subr.mxu0 0.0
    %3347 = vmatpush2.msra.mxu0 0.0
    %3348 = vmatprep.subr.mxu0 0.0
    %3349 = vmatpush2.msra.mxu0 0.0
    %3350 = vmatprep.subr.mxu0 0.0
    %3351 = vmatpush2.msra.mxu0 0.0
    %3352 = vmatprep.subr.mxu0 0.0
    %3353 = vmatpush2.msra.mxu0 0.0
    %3354 = vmatprep.subr.mxu0 0.0
    %3355 = vmatpush2.msra.mxu0 0.0
    %3356 = vmatprep.subr.mxu0 0.0
    %3357 = vmatpush2.msra.mxu0 0.0
    %3358 = vmatprep.subr.mxu0 0.0
    %3359 = vmatpush2.msra.mxu0 0.0
    %3360 = vmatprep.subr.mxu0 0.0
    %3361 = vmatpush2.msra.mxu0 0.0
    %3362 = vmatprep.subr.mxu0 0.0
    %3363 = vmatpush2.msra.mxu0 0.0
    %3364 = vmatprep.mubr.f32.mxu0 0.0
    %3365 = vmatmul.mubr.f32.gmra.mxu0 %v3298
    %v3366 = vpop.f32.mrf.mxu0
    %v3367 = vadd.f32 0.0, %v3366
    %v3368 = vpop.f32.mrf.mxu0
    %3369 = vdwg.mxu0
    %v3370 = vld [vmem:[#allocation11] sm:$0xff]
    %v3371 = vld [vmem:[#allocation11 + $0x8] sm:$0xff]
    %v3372 = vld [vmem:[#allocation11 + $0x10] sm:$0xff]
    %v3373 = vld [vmem:[#allocation11 + $0x18] sm:$0xff]
    %v3374 = vld [vmem:[#allocation11 + $0x20] sm:$0xff]
    %v3375 = vld [vmem:[#allocation11 + $0x28] sm:$0xff]
    %v3376 = vld [vmem:[#allocation11 + $0x30] sm:$0xff]
    %v3377 = vld [vmem:[#allocation11 + $0x38] sm:$0xff]
    %v3378 = vld [vmem:[#allocation11 + $0x40] sm:$0xff]
    %v3379 = vld [vmem:[#allocation11 + $0x48] sm:$0xff]
    %v3380 = vld [vmem:[#allocation11 + $0x50] sm:$0xff]
    %v3381 = vld [vmem:[#allocation11 + $0x58] sm:$0xff]
    %v3382 = vld [vmem:[#allocation11 + $0x60] sm:$0xff]
    %v3383 = vld [vmem:[#allocation11 + $0x68] sm:$0xff]
    %v3384 = vld [vmem:[#allocation11 + $0x70] sm:$0xff]
    %v3385 = vld [vmem:[#allocation11 + $0x78] sm:$0xff]
    %3386 = vmatprep.subr.mxu0 0.0
    %3387 = vmatpush1.msra.mxu0 %v3385
    %3388 = vmatprep.subr.mxu0 0.0
    %3389 = vmatpush1.msra.mxu0 %v3384
    %3390 = vmatprep.subr.mxu0 0.0
    %3391 = vmatpush1.msra.mxu0 %v3383
    %3392 = vmatprep.subr.mxu0 0.0
    %3393 = vmatpush1.msra.mxu0 %v3382
    %3394 = vmatprep.subr.mxu0 0.0
    %3395 = vmatpush1.msra.mxu0 %v3381
    %3396 = vmatprep.subr.mxu0 0.0
    %3397 = vmatpush1.msra.mxu0 %v3380
    %3398 = vmatprep.subr.mxu0 0.0
    %3399 = vmatpush1.msra.mxu0 %v3379
    %3400 = vmatprep.subr.mxu0 0.0
    %3401 = vmatpush1.msra.mxu0 %v3378
    %3402 = vmatprep.subr.mxu0 0.0
    %3403 = vmatpush1.msra.mxu0 %v3377
    %3404 = vmatprep.subr.mxu0 0.0
    %3405 = vmatpush1.msra.mxu0 %v3376
    %3406 = vmatprep.subr.mxu0 0.0
    %3407 = vmatpush1.msra.mxu0 %v3375
    %3408 = vmatprep.subr.mxu0 0.0
    %3409 = vmatpush1.msra.mxu0 %v3374
    %3410 = vmatprep.subr.mxu0 0.0
    %3411 = vmatpush1.msra.mxu0 %v3373
    %3412 = vmatprep.subr.mxu0 0.0
    %3413 = vmatpush1.msra.mxu0 %v3372
    %3414 = vmatprep.subr.mxu0 0.0
    %3415 = vmatpush1.msra.mxu0 %v3371
    %3416 = vmatprep.subr.mxu0 0.0
    %3417 = vmatpush1.msra.mxu0 %v3370
    %3418 = vmatprep.subr.mxu0 0.0
    %3419 = vmatpush2.msra.mxu0 0.0
    %3420 = vmatprep.subr.mxu0 0.0
    %3421 = vmatpush2.msra.mxu0 0.0
    %3422 = vmatprep.subr.mxu0 0.0
    %3423 = vmatpush2.msra.mxu0 0.0
    %3424 = vmatprep.subr.mxu0 0.0
    %3425 = vmatpush2.msra.mxu0 0.0
    %3426 = vmatprep.subr.mxu0 0.0
    %3427 = vmatpush2.msra.mxu0 0.0
    %3428 = vmatprep.subr.mxu0 0.0
    %3429 = vmatpush2.msra.mxu0 0.0
    %3430 = vmatprep.subr.mxu0 0.0
    %3431 = vmatpush2.msra.mxu0 0.0
    %3432 = vmatprep.subr.mxu0 0.0
    %3433 = vmatpush2.msra.mxu0 0.0
    %3434 = vmatprep.subr.mxu0 0.0
    %3435 = vmatpush2.msra.mxu0 0.0
    %3436 = vmatprep.subr.mxu0 0.0
    %3437 = vmatpush2.msra.mxu0 0.0
    %3438 = vmatprep.subr.mxu0 0.0
    %3439 = vmatpush2.msra.mxu0 0.0
    %3440 = vmatprep.subr.mxu0 0.0
    %3441 = vmatpush2.msra.mxu0 0.0
    %3442 = vmatprep.subr.mxu0 0.0
    %3443 = vmatpush2.msra.mxu0 0.0
    %3444 = vmatprep.subr.mxu0 0.0
    %3445 = vmatpush2.msra.mxu0 0.0
    %3446 = vmatprep.subr.mxu0 0.0
    %3447 = vmatpush2.msra.mxu0 0.0
    %3448 = vmatprep.subr.mxu0 0.0
    %3449 = vmatpush2.msra.mxu0 0.0
    %3450 = vmatprep.mubr.f32.mxu0 0.0
    %3451 = vmatmul.mubr.f32.gmra.mxu0 %v3367
    %v3452 = vpop.f32.mrf.mxu0
    %v3453 = vadd.f32 0.0, %v3452
    %v3454 = vpop.f32.mrf.mxu0
    %3455 = vdwg.mxu0
    %v3456 = vadd.f32 %v3259, %v3453
    %v3457 = vmax.f32 %v3456, 0.0
    %v3458 = vrot.slane %v3259, 1
    %v3460 = vmax.f32 %v3458, 0.0
    %v3461 = vlaneseq
    %v3462 = vshrl.u32 %v3461, 7
    %v3463 = vsub.s32 3, %v3462
    %v3464 = vrot.slane %v3259, %v3463
    %v3466 = vsel %vm774, %v3464, -inf
    %3467 = vmax.xlane.f32.xlu0 %v3466
    %v3468 = vpop.xlane.xlu0 %3467
    %v3469 = vrot.slane %v3259, 3
    %v3471 = vsub.f32 %v3469, %v3468
    %v3472 = vmul.f32 %v3471, 1.442695
    %v3473 = vpow.pop %v3472
    %v3474 = vsel %vm774, %v3473, 0.0
    %3475 = vadd.xlane.f32.xlu0 %v3474
    %v3476 = vpop.xlane.xlu0 %3475
    %v3477 = vrcp.pop %v3476
    %v3478 = vmul.f32 %v3473, %v3477
    %v3479 = vrot.slane %v3259, 5
    %v3481 = vxor.u32 %v3479, 2147483648
    %v3482 = vmul.f32 %v3481, 1.442695
    %v3483 = vpow.pop %v3482
    %v3484 = vadd.f32 %v3483, 1.0
    %v3485 = vrcp.pop %v3484
    %v3486 = vmul.f32 1.0, %v3485
    %v3488 = vlaneseq
    %v3489 = vshrl.u32 %v3488, 7
    %v3490 = vsub.s32 0, %v3489
    %v3491 = vrot.slane %v3478, %v3490
    %v3493 = vmul.f32 %v3491, %v398
    %v3494 = vmul.f32 %v3491, %v399
    %v3495 = vsel %vm798, %v3493, 0.0
    %3496 = vadd.xlane.f32.xlu0 %v3495
    %v3497 = vpop.xlane.xlu0 %3496
    %v3498 = vsel %vm798, %v3494, 0.0
    %3499 = vadd.xlane.f32.xlu0 %v3498
    %v3500 = vpop.xlane.xlu0 %3499
    %3502 = vset.pattern.permute.xlu0 0
    %3503 = vperm.xlu0 %3502, %v3486
    %v3504 = vpop.permute.xlu0 %3503
    %v3506 = vlaneseq
    %v3507 = vshrl.u32 %v3506, 7
    %v3508 = vsub.s32 0, %v3507
    %v3509 = vrot.slane %v3504, %v3508
    %v3510 = vmul.f32 %v3509, %v3460
    %v3512 = vlaneseq
    %v3513 = vshrl.u32 %v3512, 7
    %v3514 = vsub.s32 0, %v3513
    %v3515 = vrot.slane %v3510, %v3514
    %v3517 = vsub.f32 %v3515, %v2896
    %v3518 = vsub.f32 %v3515, %v2897
    %v3519 = vmul.f32 %v3497, %v3517
    %v3520 = vmul.f32 %v3500, %v3518
    %v3521 = vadd.f32 %v2896, %v3519
    %v3522 = vadd.f32 %v2897, %v3520
    %3523 = vst [vmem:[#allocation12 + $0x4] sm:$0x1] %v3457
    %s3524 = scalar_lea.vmem [#allocation2], 5
    %v3525 = vld [vmem:[%s3524] ss:$8 sm:$0xf]
    %v3526 = vld [vmem:[%s3524] ss:$8 sm:$0x30]
    %v3527 = vor.u32 %v3525, %v3526
    %v3528 = vld [vmem:[#allocation8] sm:$0xff]
    %v3529 = vld [vmem:[#allocation8 + $0x8] sm:$0xff]
    %v3530 = vld [vmem:[#allocation8 + $0x10] sm:$0xff]
    %v3531 = vld [vmem:[#allocation8 + $0x18] sm:$0xff]
    %v3532 = vld [vmem:[#allocation8 + $0x20] sm:$0xff]
    %v3533 = vld [vmem:[#allocation8 + $0x28] sm:$0xff]
    %v3534 = vld [vmem:[#allocation8 + $0x30] sm:$0xff]
    %v3535 = vld [vmem:[#allocation8 + $0x38] sm:$0xff]
    %v3536 = vld [vmem:[#allocation8 + $0x40] sm:$0xff]
    %v3537 = vld [vmem:[#allocation8 + $0x48] sm:$0xff]
    %v3538 = vld [vmem:[#allocation8 + $0x50] sm:$0xff]
    %v3539 = vld [vmem:[#allocation8 + $0x58] sm:$0xff]
    %v3540 = vld [vmem:[#allocation8 + $0x60] sm:$0xff]
    %v3541 = vld [vmem:[#allocation8 + $0x68] sm:$0xff]
    %v3542 = vld [vmem:[#allocation8 + $0x70] sm:$0xff]
    %v3543 = vld [vmem:[#allocation8 + $0x78] sm:$0xff]
    %v3544 = vld [vmem:[#allocation8 + $0x80] sm:$0xff]
    %v3545 = vld [vmem:[#allocation8 + $0x88] sm:$0xff]
    %v3546 = vld [vmem:[#allocation8 + $0x90] sm:$0xff]
    %v3547 = vld [vmem:[#allocation8 + $0x98] sm:$0xff]
    %v3548 = vld [vmem:[#allocation8 + $0xa0] sm:$0xff]
    %v3549 = vld [vmem:[#allocation8 + $0xa8] sm:$0xff]
    %v3550 = vld [vmem:[#allocation8 + $0xb0] sm:$0xff]
    %v3551 = vld [vmem:[#allocation8 + $0xb8] sm:$0xff]
    %v3552 = vld [vmem:[#allocation8 + $0xc0] sm:$0xff]
    %v3553 = vld [vmem:[#allocation8 + $0xc8] sm:$0xff]
    %v3554 = vld [vmem:[#allocation8 + $0xd0] sm:$0xff]
    %v3555 = vld [vmem:[#allocation8 + $0xd8] sm:$0xff]
    %v3556 = vld [vmem:[#allocation8 + $0xe0] sm:$0xff]
    %v3557 = vld [vmem:[#allocation8 + $0xe8] sm:$0xff]
    %v3558 = vld [vmem:[#allocation8 + $0xf0] sm:$0xff]
    %v3559 = vld [vmem:[#allocation8 + $0xf8] sm:$0xff]
    %v3560 = vld [vmem:[#allocation8 + $0x100] sm:$0xff]
    %v3561 = vld [vmem:[#allocation8 + $0x108] sm:$0xff]
    %v3562 = vld [vmem:[#allocation8 + $0x110] sm:$0xff]
    %v3563 = vld [vmem:[#allocation8 + $0x118] sm:$0xff]
    %v3564 = vld [vmem:[#allocation8 + $0x120] sm:$0xff]
    %v3565 = vld [vmem:[#allocation8 + $0x128] sm:$0xff]
    %v3566 = vld [vmem:[#allocation8 + $0x130] sm:$0xff]
    %v3567 = vld [vmem:[#allocation8 + $0x138] sm:$0xff]
    %v3568 = vld [vmem:[#allocation8 + $0x140] sm:$0xff]
    %v3569 = vld [vmem:[#allocation8 + $0x148] sm:$0xff]
    %v3570 = vld [vmem:[#allocation8 + $0x150] sm:$0xff]
    %v3571 = vld [vmem:[#allocation8 + $0x158] sm:$0xff]
    %v3572 = vld [vmem:[#allocation8 + $0x160] sm:$0xff]
    %v3573 = vld [vmem:[#allocation8 + $0x168] sm:$0xff]
    %v3574 = vld [vmem:[#allocation8 + $0x170] sm:$0xff]
    %v3575 = vld [vmem:[#allocation8 + $0x178] sm:$0xff]
    %v3576 = vld [vmem:[#allocation8 + $0x180] sm:$0xff]
    %v3577 = vld [vmem:[#allocation8 + $0x188] sm:$0xff]
    %v3578 = vld [vmem:[#allocation8 + $0x190] sm:$0xff]
    %v3579 = vld [vmem:[#allocation8 + $0x198] sm:$0xff]
    %v3580 = vld [vmem:[#allocation8 + $0x1a0] sm:$0xff]
    %v3581 = vld [vmem:[#allocation8 + $0x1a8] sm:$0xff]
    %v3582 = vld [vmem:[#allocation8 + $0x1b0] sm:$0xff]
    %v3583 = vld [vmem:[#allocation8 + $0x1b8] sm:$0xff]
    %v3584 = vld [vmem:[#allocation8 + $0x1c0] sm:$0xff]
    %v3585 = vld [vmem:[#allocation8 + $0x1c8] sm:$0xff]
    %v3586 = vld [vmem:[#allocation8 + $0x1d0] sm:$0xff]
    %v3587 = vld [vmem:[#allocation8 + $0x1d8] sm:$0xff]
    %v3588 = vld [vmem:[#allocation8 + $0x1e0] sm:$0xff]
    %v3589 = vld [vmem:[#allocation8 + $0x1e8] sm:$0xff]
    %v3590 = vld [vmem:[#allocation8 + $0x1f0] sm:$0xff]
    %v3591 = vld [vmem:[#allocation8 + $0x1f8] sm:$0xff]
    %v3592 = vld [vmem:[#allocation8 + $0x200] sm:$0xff]
    %v3593 = vld [vmem:[#allocation8 + $0x208] sm:$0xff]
    %v3594 = vld [vmem:[#allocation8 + $0x210] sm:$0xff]
    %v3595 = vld [vmem:[#allocation8 + $0x218] sm:$0xff]
    %v3596 = vld [vmem:[#allocation8 + $0x220] sm:$0xff]
    %v3597 = vld [vmem:[#allocation8 + $0x228] sm:$0xff]
    %v3598 = vld [vmem:[#allocation8 + $0x230] sm:$0xff]
    %v3599 = vld [vmem:[#allocation8 + $0x238] sm:$0xff]
    %v3600 = vld [vmem:[#allocation8 + $0x240] sm:$0xff]
    %v3601 = vld [vmem:[#allocation8 + $0x248] sm:$0xff]
    %v3602 = vld [vmem:[#allocation8 + $0x250] sm:$0xff]
    %v3603 = vld [vmem:[#allocation8 + $0x258] sm:$0xff]
    %v3604 = vld [vmem:[#allocation8 + $0x260] sm:$0xff]
    %v3605 = vld [vmem:[#allocation8 + $0x268] sm:$0xff]
    %v3606 = vld [vmem:[#allocation8 + $0x270] sm:$0xff]
    %v3607 = vld [vmem:[#allocation8 + $0x278] sm:$0xff]
    %v3608 = vld [vmem:[#allocation8 + $0x280] sm:$0xff]
    %v3609 = vld [vmem:[#allocation8 + $0x288] sm:$0xff]
    %v3610 = vld [vmem:[#allocation8 + $0x290] sm:$0xff]
    %v3611 = vld [vmem:[#allocation8 + $0x298] sm:$0xff]
    %v3612 = vld [vmem:[#allocation8 + $0x2a0] sm:$0xff]
    %v3613 = vld [vmem:[#allocation8 + $0x2a8] sm:$0xff]
    %v3614 = vld [vmem:[#allocation8 + $0x2b0] sm:$0xff]
    %v3615 = vld [vmem:[#allocation8 + $0x2b8] sm:$0xff]
    %v3616 = vld [vmem:[#allocation8 + $0x2c0] sm:$0xff]
    %v3617 = vld [vmem:[#allocation8 + $0x2c8] sm:$0xff]
    %v3618 = vld [vmem:[#allocation8 + $0x2d0] sm:$0xff]
    %v3619 = vld [vmem:[#allocation8 + $0x2d8] sm:$0xff]
    %v3620 = vld [vmem:[#allocation8 + $0x2e0] sm:$0xff]
    %v3621 = vld [vmem:[#allocation8 + $0x2e8] sm:$0xff]
    %v3622 = vld [vmem:[#allocation8 + $0x2f0] sm:$0xff]
    %v3623 = vld [vmem:[#allocation8 + $0x2f8] sm:$0xff]
    %3624 = vmatprep.subr.mxu0 %v3619
    %3625 = vmatpush1.msra.mxu0 %v3618
    %3626 = vmatprep.subr.mxu0 %v3613
    %3627 = vmatpush1.msra.mxu0 %v3612
    %3628 = vmatprep.subr.mxu0 %v3607
    %3629 = vmatpush1.msra.mxu0 %v3606
    %3630 = vmatprep.subr.mxu0 %v3601
    %3631 = vmatpush1.msra.mxu0 %v3600
    %3632 = vmatprep.subr.mxu0 %v3595
    %3633 = vmatpush1.msra.mxu0 %v3594
    %3634 = vmatprep.subr.mxu0 %v3589
    %3635 = vmatpush1.msra.mxu0 %v3588
    %3636 = vmatprep.subr.mxu0 %v3583
    %3637 = vmatpush1.msra.mxu0 %v3582
    %3638 = vmatprep.subr.mxu0 %v3577
    %3639 = vmatpush1.msra.mxu0 %v3576
    %3640 = vmatprep.subr.mxu0 %v3571
    %3641 = vmatpush1.msra.mxu0 %v3570
    %3642 = vmatprep.subr.mxu0 %v3565
    %3643 = vmatpush1.msra.mxu0 %v3564
    %3644 = vmatprep.subr.mxu0 %v3559
    %3645 = vmatpush1.msra.mxu0 %v3558
    %3646 = vmatprep.subr.mxu0 %v3553
    %3647 = vmatpush1.msra.mxu0 %v3552
    %3648 = vmatprep.subr.mxu0 %v3547
    %3649 = vmatpush1.msra.mxu0 %v3546
    %3650 = vmatprep.subr.mxu0 %v3541
    %3651 = vmatpush1.msra.mxu0 %v3540
    %3652 = vmatprep.subr.mxu0 %v3535
    %3653 = vmatpush1.msra.mxu0 %v3534
    %3654 = vmatprep.subr.mxu0 %v3529
    %3655 = vmatpush1.msra.mxu0 %v3528
    %3656 = vmatprep.subr.mxu0 0.0
    %3657 = vmatpush2.msra.mxu0 0.0
    %3658 = vmatprep.subr.mxu0 0.0
    %3659 = vmatpush2.msra.mxu0 0.0
    %3660 = vmatprep.subr.mxu0 0.0
    %3661 = vmatpush2.msra.mxu0 0.0
    %3662 = vmatprep.subr.mxu0 0.0
    %3663 = vmatpush2.msra.mxu0 0.0
    %3664 = vmatprep.subr.mxu0 0.0
    %3665 = vmatpush2.msra.mxu0 0.0
    %3666 = vmatprep.subr.mxu0 0.0
    %3667 = vmatpush2.msra.mxu0 0.0
    %3668 = vmatprep.subr.mxu0 0.0
    %3669 = vmatpush2.msra.mxu0 0.0
    %3670 = vmatprep.subr.mxu0 0.0
    %3671 = vmatpush2.msra.mxu0 0.0
    %3672 = vmatprep.subr.mxu0 0.0
    %3673 = vmatpush2.msra.mxu0 0.0
    %3674 = vmatprep.subr.mxu0 0.0
    %3675 = vmatpush2.msra.mxu0 0.0
    %3676 = vmatprep.subr.mxu0 0.0
    %3677 = vmatpush2.msra.mxu0 0.0
    %3678 = vmatprep.subr.mxu0 0.0
    %3679 = vmatpush2.msra.mxu0 0.0
    %3680 = vmatprep.subr.mxu0 0.0
    %3681 = vmatpush2.msra.mxu0 0.0
    %3682 = vmatprep.subr.mxu0 0.0
    %3683 = vmatpush2.msra.mxu0 0.0
    %3684 = vmatprep.subr.mxu0 0.0
    %3685 = vmatpush2.msra.mxu0 0.0
    %3686 = vmatprep.subr.mxu0 0.0
    %3687 = vmatpush2.msra.mxu0 0.0
    %3688 = vmatprep.mubr.f32.mxu0 0.0
    %3689 = vmatmul.mubr.f32.gmra.mxu0 %v3457
    %v3690 = vpop.f32.mrf.mxu0
    %v3691 = vadd.f32 0.0, %v3690
    %v3692 = vpop.f32.mrf.mxu0
    %v3693 = vadd.f32 0.0, %v3692
    %3694 = vdwg.mxu0
    %3695 = vmatprep.subr.mxu0 %v3621
    %3696 = vmatpush1.msra.mxu0 %v3620
    %3697 = vmatprep.subr.mxu0 %v3615
    %3698 = vmatpush1.msra.mxu0 %v3614
    %3699 = vmatprep.subr.mxu0 %v3609
    %3700 = vmatpush1.msra.mxu0 %v3608
    %3701 = vmatprep.subr.mxu0 %v3603
    %3702 = vmatpush1.msra.mxu0 %v3602
    %3703 = vmatprep.subr.mxu0 %v3597
    %3704 = vmatpush1.msra.mxu0 %v3596
    %3705 = vmatprep.subr.mxu0 %v3591
    %3706 = vmatpush1.msra.mxu0 %v3590
    %3707 = vmatprep.subr.mxu0 %v3585
    %3708 = vmatpush1.msra.mxu0 %v3584
    %3709 = vmatprep.subr.mxu0 %v3579
    %3710 = vmatpush1.msra.mxu0 %v3578
    %3711 = vmatprep.subr.mxu0 %v3573
    %3712 = vmatpush1.msra.mxu0 %v3572
    %3713 = vmatprep.subr.mxu0 %v3567
    %3714 = vmatpush1.msra.mxu0 %v3566
    %3715 = vmatprep.subr.mxu0 %v3561
    %3716 = vmatpush1.msra.mxu0 %v3560
    %3717 = vmatprep.subr.mxu0 %v3555
    %3718 = vmatpush1.msra.mxu0 %v3554
    %3719 = vmatprep.subr.mxu0 %v3549
    %3720 = vmatpush1.msra.mxu0 %v3548
    %3721 = vmatprep.subr.mxu0 %v3543
    %3722 = vmatpush1.msra.mxu0 %v3542
    %3723 = vmatprep.subr.mxu0 %v3537
    %3724 = vmatpush1.msra.mxu0 %v3536
    %3725 = vmatprep.subr.mxu0 %v3531
    %3726 = vmatpush1.msra.mxu0 %v3530
    %3727 = vmatprep.subr.mxu0 0.0
    %3728 = vmatpush2.msra.mxu0 0.0
    %3729 = vmatprep.subr.mxu0 0.0
    %3730 = vmatpush2.msra.mxu0 0.0
    %3731 = vmatprep.subr.mxu0 0.0
    %3732 = vmatpush2.msra.mxu0 0.0
    %3733 = vmatprep.subr.mxu0 0.0
    %3734 = vmatpush2.msra.mxu0 0.0
    %3735 = vmatprep.subr.mxu0 0.0
    %3736 = vmatpush2.msra.mxu0 0.0
    %3737 = vmatprep.subr.mxu0 0.0
    %3738 = vmatpush2.msra.mxu0 0.0
    %3739 = vmatprep.subr.mxu0 0.0
    %3740 = vmatpush2.msra.mxu0 0.0
    %3741 = vmatprep.subr.mxu0 0.0
    %3742 = vmatpush2.msra.mxu0 0.0
    %3743 = vmatprep.subr.mxu0 0.0
    %3744 = vmatpush2.msra.mxu0 0.0
    %3745 = vmatprep.subr.mxu0 0.0
    %3746 = vmatpush2.msra.mxu0 0.0
    %3747 = vmatprep.subr.mxu0 0.0
    %3748 = vmatpush2.msra.mxu0 0.0
    %3749 = vmatprep.subr.mxu0 0.0
    %3750 = vmatpush2.msra.mxu0 0.0
    %3751 = vmatprep.subr.mxu0 0.0
    %3752 = vmatpush2.msra.mxu0 0.0
    %3753 = vmatprep.subr.mxu0 0.0
    %3754 = vmatpush2.msra.mxu0 0.0
    %3755 = vmatprep.subr.mxu0 0.0
    %3756 = vmatpush2.msra.mxu0 0.0
    %3757 = vmatprep.subr.mxu0 0.0
    %3758 = vmatpush2.msra.mxu0 0.0
    %3759 = vmatprep.mubr.f32.mxu0 0.0
    %3760 = vmatmul.mubr.f32.gmra.mxu0 %v3457
    %v3761 = vpop.f32.mrf.mxu0
    %v3762 = vadd.f32 0.0, %v3761
    %v3763 = vpop.f32.mrf.mxu0
    %v3764 = vadd.f32 0.0, %v3763
    %3765 = vdwg.mxu0
    %3766 = vmatprep.subr.mxu0 %v3623
    %3767 = vmatpush1.msra.mxu0 %v3622
    %3768 = vmatprep.subr.mxu0 %v3617
    %3769 = vmatpush1.msra.mxu0 %v3616
    %3770 = vmatprep.subr.mxu0 %v3611
    %3771 = vmatpush1.msra.mxu0 %v3610
    %3772 = vmatprep.subr.mxu0 %v3605
    %3773 = vmatpush1.msra.mxu0 %v3604
    %3774 = vmatprep.subr.mxu0 %v3599
    %3775 = vmatpush1.msra.mxu0 %v3598
    %3776 = vmatprep.subr.mxu0 %v3593
    %3777 = vmatpush1.msra.mxu0 %v3592
    %3778 = vmatprep.subr.mxu0 %v3587
    %3779 = vmatpush1.msra.mxu0 %v3586
    %3780 = vmatprep.subr.mxu0 %v3581
    %3781 = vmatpush1.msra.mxu0 %v3580
    %3782 = vmatprep.subr.mxu0 %v3575
    %3783 = vmatpush1.msra.mxu0 %v3574
    %3784 = vmatprep.subr.mxu0 %v3569
    %3785 = vmatpush1.msra.mxu0 %v3568
    %3786 = vmatprep.subr.mxu0 %v3563
    %3787 = vmatpush1.msra.mxu0 %v3562
    %3788 = vmatprep.subr.mxu0 %v3557
    %3789 = vmatpush1.msra.mxu0 %v3556
    %3790 = vmatprep.subr.mxu0 %v3551
    %3791 = vmatpush1.msra.mxu0 %v3550
    %3792 = vmatprep.subr.mxu0 %v3545
    %3793 = vmatpush1.msra.mxu0 %v3544
    %3794 = vmatprep.subr.mxu0 %v3539
    %3795 = vmatpush1.msra.mxu0 %v3538
    %3796 = vmatprep.subr.mxu0 %v3533
    %3797 = vmatpush1.msra.mxu0 %v3532
    %3798 = vmatprep.subr.mxu0 0.0
    %3799 = vmatpush2.msra.mxu0 0.0
    %3800 = vmatprep.subr.mxu0 0.0
    %3801 = vmatpush2.msra.mxu0 0.0
    %3802 = vmatprep.subr.mxu0 0.0
    %3803 = vmatpush2.msra.mxu0 0.0
    %3804 = vmatprep.subr.mxu0 0.0
    %3805 = vmatpush2.msra.mxu0 0.0
    %3806 = vmatprep.subr.mxu0 0.0
    %3807 = vmatpush2.msra.mxu0 0.0
    %3808 = vmatprep.subr.mxu0 0.0
    %3809 = vmatpush2.msra.mxu0 0.0
    %3810 = vmatprep.subr.mxu0 0.0
    %3811 = vmatpush2.msra.mxu0 0.0
    %3812 = vmatprep.subr.mxu0 0.0
    %3813 = vmatpush2.msra.mxu0 0.0
    %3814 = vmatprep.subr.mxu0 0.0
    %3815 = vmatpush2.msra.mxu0 0.0
    %3816 = vmatprep.subr.mxu0 0.0
    %3817 = vmatpush2.msra.mxu0 0.0
    %3818 = vmatprep.subr.mxu0 0.0
    %3819 = vmatpush2.msra.mxu0 0.0
    %3820 = vmatprep.subr.mxu0 0.0
    %3821 = vmatpush2.msra.mxu0 0.0
    %3822 = vmatprep.subr.mxu0 0.0
    %3823 = vmatpush2.msra.mxu0 0.0
    %3824 = vmatprep.subr.mxu0 0.0
    %3825 = vmatpush2.msra.mxu0 0.0
    %3826 = vmatprep.subr.mxu0 0.0
    %3827 = vmatpush2.msra.mxu0 0.0
    %3828 = vmatprep.subr.mxu0 0.0
    %3829 = vmatpush2.msra.mxu0 0.0
    %3830 = vmatprep.mubr.f32.mxu0 0.0
    %3831 = vmatmul.mubr.f32.gmra.mxu0 %v3457
    %v3832 = vpop.f32.mrf.mxu0
    %v3833 = vadd.f32 0.0, %v3832
    %v3834 = vpop.f32.mrf.mxu0
    %v3835 = vadd.f32 0.0, %v3834
    %3836 = vdwg.mxu0
    %v3843 = vcombine.low %v3691, %v3693
    %v3844 = vcombine.low %v3762, %v3764
    %v3845 = vcombine.low %v3833, %v3835
    %v3847 = vunpack.c.l.s4 1966171168
    %v3848 = vunpack.c.0.s8 %v3847
    %v3849 = vlaneseq
    %v3850 = vshrl.u32 %v3849, 7
    %v3851 = vsub.s32 %v3848, %v3850
    %v3852 = vrot.slane %v3843, %v3851
    %v3854 = vunpack.c.l.s4 1966171168
    %v3855 = vunpack.c.0.s8 %v3854
    %v3856 = vlaneseq
    %v3857 = vshrl.u32 %v3856, 7
    %v3858 = vsub.s32 %v3855, %v3857
    %v3859 = vrot.slane %v3844, %v3858
    %v3861 = vunpack.c.l.s4 1966171168
    %v3862 = vunpack.c.0.s8 %v3861
    %v3863 = vlaneseq
    %v3864 = vshrl.u32 %v3863, 7
    %v3865 = vsub.s32 %v3862, %v3864
    %v3866 = vrot.slane %v3845, %v3865
    %v3867 = vcombine.low %v3852, %v3859
    %v3869 = vunpack.c.l.s4 1966171168
    %v3870 = vunpack.c.0.s8 %v3869
    %v3871 = vlaneseq
    %v3872 = vshrl.u32 %v3871, 7
    %v3873 = vsub.s32 %v3870, %v3872
    %v3874 = vrot.slane %v3867, %v3873
    %v3876 = vunpack.c.l.s4 1966171168
    %v3877 = vunpack.c.0.s8 %v3876
    %v3878 = vlaneseq
    %v3879 = vshrl.u32 %v3878, 7
    %v3880 = vsub.s32 %v3877, %v3879
    %v3881 = vrot.slane %v3866, %v3880
    %v3882 = vcombine.low %v3874, %v3881
    %v3884 = vadd.f32 %v3527, %v3882
    %v3886 = vrot.slane %v3884, 4
    %v3888 = vxor.u32 %v3886, 2147483648
    %v3889 = vmul.f32 %v3888, 1.442695
    %v3890 = vpow.pop %v3889
    %v3891 = vadd.f32 %v3890, 1.0
    %v3892 = vrcp.pop %v3891
    %v3893 = vmul.f32 1.0, %v3892
    %v3894 = vlaneseq
    %v3895 = vshrl.u32 %v3894, 7
    %v3896 = vsub.s32 2, %v3895
    %v3897 = vrot.slane %v3884, %v3896
    %v3899 = vsel %vm774, %v3897, -inf
    %3900 = vmax.xlane.f32.xlu0 %v3899
    %v3901 = vpop.xlane.xlu0 %3900
    %v3902 = vrot.slane %v3884, 2
    %v3904 = vsub.f32 %v3902, %v3901
    %v3905 = vmul.f32 %v3904, 1.442695
    %v3906 = vpow.pop %v3905
    %v3907 = vsel %vm774, %v3906, 0.0
    %3908 = vadd.xlane.f32.xlu0 %v3907
    %v3909 = vpop.xlane.xlu0 %3908
    %v3910 = vrcp.pop %v3909
    %v3911 = vmul.f32 %v3906, %v3910
    %3913 = vset.pattern.permute.xlu0 0
    %3914 = vperm.xlu0 %3913, %v3893
    %v3915 = vpop.permute.xlu0 %3914
    %v3917 = vlaneseq
    %v3918 = vshrl.u32 %v3917, 7
    %v3919 = vsub.s32 0, %v3918
    %v3920 = vrot.slane %v3915, %v3919
    %v3921 = vmul.f32 %v3920, %v3911
    %v3923 = vsel %vm798, %v3921, 0
    %3925 = vmatprep.subr.mxu0 0.0
    %3926 = vmatpush1.msra.mxu0 0.0
    %3927 = vmatprep.subr.mxu0 0.0
    %3928 = vmatpush1.msra.mxu0 0.0
    %3929 = vmatprep.subr.mxu0 0.0
    %3930 = vmatpush1.msra.mxu0 0.0
    %3931 = vmatprep.subr.mxu0 0.0
    %3932 = vmatpush1.msra.mxu0 0.0
    %3933 = vmatprep.subr.mxu0 0.0
    %3934 = vmatpush1.msra.mxu0 0.0
    %3935 = vmatprep.subr.mxu0 0.0
    %3936 = vmatpush1.msra.mxu0 0.0
    %3937 = vmatprep.subr.mxu0 0.0
    %3938 = vmatpush1.msra.mxu0 0.0
    %3939 = vmatprep.subr.mxu0 0.0
    %3940 = vmatpush1.msra.mxu0 0.0
    %3941 = vmatprep.subr.mxu0 0.0
    %3942 = vmatpush1.msra.mxu0 0.0
    %3943 = vmatprep.subr.mxu0 0.0
    %3944 = vmatpush1.msra.mxu0 0.0
    %3945 = vmatprep.subr.mxu0 0.0
    %3946 = vmatpush1.msra.mxu0 0.0
    %3947 = vmatprep.subr.mxu0 0.0
    %3948 = vmatpush1.msra.mxu0 0.0
    %3949 = vmatprep.subr.mxu0 0.0
    %3950 = vmatpush1.msra.mxu0 0.0
    %3951 = vmatprep.subr.mxu0 0.0
    %3952 = vmatpush1.msra.mxu0 0.0
    %3953 = vmatprep.subr.mxu0 0.0
    %3954 = vmatpush1.msra.mxu0 %v3522
    %3955 = vmatprep.subr.mxu0 0.0
    %3956 = vmatpush1.msra.mxu0 %v3521
    %3957 = vmatprep.subr.mxu0 0.0
    %3958 = vmatpush2.msra.mxu0 0.0
    %3959 = vmatprep.subr.mxu0 0.0
    %3960 = vmatpush2.msra.mxu0 0.0
    %3961 = vmatprep.subr.mxu0 0.0
    %3962 = vmatpush2.msra.mxu0 0.0
    %3963 = vmatprep.subr.mxu0 0.0
    %3964 = vmatpush2.msra.mxu0 0.0
    %3965 = vmatprep.subr.mxu0 0.0
    %3966 = vmatpush2.msra.mxu0 0.0
    %3967 = vmatprep.subr.mxu0 0.0
    %3968 = vmatpush2.msra.mxu0 0.0
    %3969 = vmatprep.subr.mxu0 0.0
    %3970 = vmatpush2.msra.mxu0 0.0
    %3971 = vmatprep.subr.mxu0 0.0
    %3972 = vmatpush2.msra.mxu0 0.0
    %3973 = vmatprep.subr.mxu0 0.0
    %3974 = vmatpush2.msra.mxu0 0.0
    %3975 = vmatprep.subr.mxu0 0.0
    %3976 = vmatpush2.msra.mxu0 0.0
    %3977 = vmatprep.subr.mxu0 0.0
    %3978 = vmatpush2.msra.mxu0 0.0
    %3979 = vmatprep.subr.mxu0 0.0
    %3980 = vmatpush2.msra.mxu0 0.0
    %3981 = vmatprep.subr.mxu0 0.0
    %3982 = vmatpush2.msra.mxu0 0.0
    %3983 = vmatprep.subr.mxu0 0.0
    %3984 = vmatpush2.msra.mxu0 0.0
    %3985 = vmatprep.subr.mxu0 0.0
    %3986 = vmatpush2.msra.mxu0 0.0
    %3987 = vmatprep.subr.mxu0 0.0
    %3988 = vmatpush2.msra.mxu0 0.0
    %3989 = vmatprep.mubr.f32.mxu0 0.0
    %3990 = vmatmul.mubr.f32.gmra.mxu0 %v3923
    %v3991 = vpop.f32.mrf.mxu0
    %v3992 = vadd.f32 0.0, %v3991
    %v3993 = vpop.f32.mrf.mxu0
    %3994 = vdwg.mxu0
    %v3995 = vld [vmem:[#allocation11] sm:$0xff]
    %v3996 = vld [vmem:[#allocation11 + $0x8] sm:$0xff]
    %v3997 = vld [vmem:[#allocation11 + $0x10] sm:$0xff]
    %v3998 = vld [vmem:[#allocation11 + $0x18] sm:$0xff]
    %v3999 = vld [vmem:[#allocation11 + $0x20] sm:$0xff]
    %v4000 = vld [vmem:[#allocation11 + $0x28] sm:$0xff]
    %v4001 = vld [vmem:[#allocation11 + $0x30] sm:$0xff]
    %v4002 = vld [vmem:[#allocation11 + $0x38] sm:$0xff]
    %v4003 = vld [vmem:[#allocation11 + $0x40] sm:$0xff]
    %v4004 = vld [vmem:[#allocation11 + $0x48] sm:$0xff]
    %v4005 = vld [vmem:[#allocation11 + $0x50] sm:$0xff]
    %v4006 = vld [vmem:[#allocation11 + $0x58] sm:$0xff]
    %v4007 = vld [vmem:[#allocation11 + $0x60] sm:$0xff]
    %v4008 = vld [vmem:[#allocation11 + $0x68] sm:$0xff]
    %v4009 = vld [vmem:[#allocation11 + $0x70] sm:$0xff]
    %v4010 = vld [vmem:[#allocation11 + $0x78] sm:$0xff]
    %4011 = vmatprep.subr.mxu0 0.0
    %4012 = vmatpush1.msra.mxu0 %v4010
    %4013 = vmatprep.subr.mxu0 0.0
    %4014 = vmatpush1.msra.mxu0 %v4009
    %4015 = vmatprep.subr.mxu0 0.0
    %4016 = vmatpush1.msra.mxu0 %v4008
    %4017 = vmatprep.subr.mxu0 0.0
    %4018 = vmatpush1.msra.mxu0 %v4007
    %4019 = vmatprep.subr.mxu0 0.0
    %4020 = vmatpush1.msra.mxu0 %v4006
    %4021 = vmatprep.subr.mxu0 0.0
    %4022 = vmatpush1.msra.mxu0 %v4005
    %4023 = vmatprep.subr.mxu0 0.0
    %4024 = vmatpush1.msra.mxu0 %v4004
    %4025 = vmatprep.subr.mxu0 0.0
    %4026 = vmatpush1.msra.mxu0 %v4003
    %4027 = vmatprep.subr.mxu0 0.0
    %4028 = vmatpush1.msra.mxu0 %v4002
    %4029 = vmatprep.subr.mxu0 0.0
    %4030 = vmatpush1.msra.mxu0 %v4001
    %4031 = vmatprep.subr.mxu0 0.0
    %4032 = vmatpush1.msra.mxu0 %v4000
    %4033 = vmatprep.subr.mxu0 0.0
    %4034 = vmatpush1.msra.mxu0 %v3999
    %4035 = vmatprep.subr.mxu0 0.0
    %4036 = vmatpush1.msra.mxu0 %v3998
    %4037 = vmatprep.subr.mxu0 0.0
    %4038 = vmatpush1.msra.mxu0 %v3997
    %4039 = vmatprep.subr.mxu0 0.0
    %4040 = vmatpush1.msra.mxu0 %v3996
    %4041 = vmatprep.subr.mxu0 0.0
    %4042 = vmatpush1.msra.mxu0 %v3995
    %4043 = vmatprep.subr.mxu0 0.0
    %4044 = vmatpush2.msra.mxu0 0.0
    %4045 = vmatprep.subr.mxu0 0.0
    %4046 = vmatpush2.msra.mxu0 0.0
    %4047 = vmatprep.subr.mxu0 0.0
    %4048 = vmatpush2.msra.mxu0 0.0
    %4049 = vmatprep.subr.mxu0 0.0
    %4050 = vmatpush2.msra.mxu0 0.0
    %4051 = vmatprep.subr.mxu0 0.0
    %4052 = vmatpush2.msra.mxu0 0.0
    %4053 = vmatprep.subr.mxu0 0.0
    %4054 = vmatpush2.msra.mxu0 0.0
    %4055 = vmatprep.subr.mxu0 0.0
    %4056 = vmatpush2.msra.mxu0 0.0
    %4057 = vmatprep.subr.mxu0 0.0
    %4058 = vmatpush2.msra.mxu0 0.0
    %4059 = vmatprep.subr.mxu0 0.0
    %4060 = vmatpush2.msra.mxu0 0.0
    %4061 = vmatprep.subr.mxu0 0.0
    %4062 = vmatpush2.msra.mxu0 0.0
    %4063 = vmatprep.subr.mxu0 0.0
    %4064 = vmatpush2.msra.mxu0 0.0
    %4065 = vmatprep.subr.mxu0 0.0
    %4066 = vmatpush2.msra.mxu0 0.0
    %4067 = vmatprep.subr.mxu0 0.0
    %4068 = vmatpush2.msra.mxu0 0.0
    %4069 = vmatprep.subr.mxu0 0.0
    %4070 = vmatpush2.msra.mxu0 0.0
    %4071 = vmatprep.subr.mxu0 0.0
    %4072 = vmatpush2.msra.mxu0 0.0
    %4073 = vmatprep.subr.mxu0 0.0
    %4074 = vmatpush2.msra.mxu0 0.0
    %4075 = vmatprep.mubr.f32.mxu0 0.0
    %4076 = vmatmul.mubr.f32.gmra.mxu0 %v3992
    %v4077 = vpop.f32.mrf.mxu0
    %v4078 = vadd.f32 0.0, %v4077
    %v4079 = vpop.f32.mrf.mxu0
    %4080 = vdwg.mxu0
    %v4081 = vadd.f32 %v3884, %v4078
    %v4082 = vmax.f32 %v4081, 0.0
    %v4083 = vrot.slane %v3884, 1
    %v4085 = vmax.f32 %v4083, 0.0
    %v4086 = vlaneseq
    %v4087 = vshrl.u32 %v4086, 7
    %v4088 = vsub.s32 3, %v4087
    %v4089 = vrot.slane %v3884, %v4088
    %v4091 = vsel %vm774, %v4089, -inf
    %4092 = vmax.xlane.f32.xlu0 %v4091
    %v4093 = vpop.xlane.xlu0 %4092
    %v4094 = vrot.slane %v3884, 3
    %v4096 = vsub.f32 %v4094, %v4093
    %v4097 = vmul.f32 %v4096, 1.442695
    %v4098 = vpow.pop %v4097
    %v4099 = vsel %vm774, %v4098, 0.0
    %4100 = vadd.xlane.f32.xlu0 %v4099
    %v4101 = vpop.xlane.xlu0 %4100
    %v4102 = vrcp.pop %v4101
    %v4103 = vmul.f32 %v4098, %v4102
    %v4104 = vrot.slane %v3884, 5
    %v4106 = vxor.u32 %v4104, 2147483648
    %v4107 = vmul.f32 %v4106, 1.442695
    %v4108 = vpow.pop %v4107
    %v4109 = vadd.f32 %v4108, 1.0
    %v4110 = vrcp.pop %v4109
    %v4111 = vmul.f32 1.0, %v4110
    %v4113 = vlaneseq
    %v4114 = vshrl.u32 %v4113, 7
    %v4115 = vsub.s32 0, %v4114
    %v4116 = vrot.slane %v4103, %v4115
    %v4118 = vmul.f32 %v4116, %v398
    %v4119 = vmul.f32 %v4116, %v399
    %v4120 = vsel %vm798, %v4118, 0.0
    %4121 = vadd.xlane.f32.xlu0 %v4120
    %v4122 = vpop.xlane.xlu0 %4121
    %v4123 = vsel %vm798, %v4119, 0.0
    %4124 = vadd.xlane.f32.xlu0 %v4123
    %v4125 = vpop.xlane.xlu0 %4124
    %4127 = vset.pattern.permute.xlu0 0
    %4128 = vperm.xlu0 %4127, %v4111
    %v4129 = vpop.permute.xlu0 %4128
    %v4131 = vlaneseq
    %v4132 = vshrl.u32 %v4131, 7
    %v4133 = vsub.s32 0, %v4132
    %v4134 = vrot.slane %v4129, %v4133
    %v4135 = vmul.f32 %v4134, %v4085
    %v4137 = vlaneseq
    %v4138 = vshrl.u32 %v4137, 7
    %v4139 = vsub.s32 0, %v4138
    %v4140 = vrot.slane %v4135, %v4139
    %v4142 = vsub.f32 %v4140, %v3521
    %v4143 = vsub.f32 %v4140, %v3522
    %v4144 = vmul.f32 %v4122, %v4142
    %v4145 = vmul.f32 %v4125, %v4143
    %v4146 = vadd.f32 %v3521, %v4144
    %v4147 = vadd.f32 %v3522, %v4145
    %4148 = vst [vmem:[#allocation12 + $0x5] sm:$0x1] %v4082
    %s4149 = scalar_lea.vmem [#allocation2], 6
    %v4150 = vld [vmem:[%s4149] ss:$8 sm:$0xf]
    %v4151 = vld [vmem:[%s4149] ss:$8 sm:$0x30]
    %v4152 = vor.u32 %v4150, %v4151
    %v4153 = vld [vmem:[#allocation8] sm:$0xff]
    %v4154 = vld [vmem:[#allocation8 + $0x8] sm:$0xff]
    %v4155 = vld [vmem:[#allocation8 + $0x10] sm:$0xff]
    %v4156 = vld [vmem:[#allocation8 + $0x18] sm:$0xff]
    %v4157 = vld [vmem:[#allocation8 + $0x20] sm:$0xff]
    %v4158 = vld [vmem:[#allocation8 + $0x28] sm:$0xff]
    %v4159 = vld [vmem:[#allocation8 + $0x30] sm:$0xff]
    %v4160 = vld [vmem:[#allocation8 + $0x38] sm:$0xff]
    %v4161 = vld [vmem:[#allocation8 + $0x40] sm:$0xff]
    %v4162 = vld [vmem:[#allocation8 + $0x48] sm:$0xff]
    %v4163 = vld [vmem:[#allocation8 + $0x50] sm:$0xff]
    %v4164 = vld [vmem:[#allocation8 + $0x58] sm:$0xff]
    %v4165 = vld [vmem:[#allocation8 + $0x60] sm:$0xff]
    %v4166 = vld [vmem:[#allocation8 + $0x68] sm:$0xff]
    %v4167 = vld [vmem:[#allocation8 + $0x70] sm:$0xff]
    %v4168 = vld [vmem:[#allocation8 + $0x78] sm:$0xff]
    %v4169 = vld [vmem:[#allocation8 + $0x80] sm:$0xff]
    %v4170 = vld [vmem:[#allocation8 + $0x88] sm:$0xff]
    %v4171 = vld [vmem:[#allocation8 + $0x90] sm:$0xff]
    %v4172 = vld [vmem:[#allocation8 + $0x98] sm:$0xff]
    %v4173 = vld [vmem:[#allocation8 + $0xa0] sm:$0xff]
    %v4174 = vld [vmem:[#allocation8 + $0xa8] sm:$0xff]
    %v4175 = vld [vmem:[#allocation8 + $0xb0] sm:$0xff]
    %v4176 = vld [vmem:[#allocation8 + $0xb8] sm:$0xff]
    %v4177 = vld [vmem:[#allocation8 + $0xc0] sm:$0xff]
    %v4178 = vld [vmem:[#allocation8 + $0xc8] sm:$0xff]
    %v4179 = vld [vmem:[#allocation8 + $0xd0] sm:$0xff]
    %v4180 = vld [vmem:[#allocation8 + $0xd8] sm:$0xff]
    %v4181 = vld [vmem:[#allocation8 + $0xe0] sm:$0xff]
    %v4182 = vld [vmem:[#allocation8 + $0xe8] sm:$0xff]
    %v4183 = vld [vmem:[#allocation8 + $0xf0] sm:$0xff]
    %v4184 = vld [vmem:[#allocation8 + $0xf8] sm:$0xff]
    %v4185 = vld [vmem:[#allocation8 + $0x100] sm:$0xff]
    %v4186 = vld [vmem:[#allocation8 + $0x108] sm:$0xff]
    %v4187 = vld [vmem:[#allocation8 + $0x110] sm:$0xff]
    %v4188 = vld [vmem:[#allocation8 + $0x118] sm:$0xff]
    %v4189 = vld [vmem:[#allocation8 + $0x120] sm:$0xff]
    %v4190 = vld [vmem:[#allocation8 + $0x128] sm:$0xff]
    %v4191 = vld [vmem:[#allocation8 + $0x130] sm:$0xff]
    %v4192 = vld [vmem:[#allocation8 + $0x138] sm:$0xff]
    %v4193 = vld [vmem:[#allocation8 + $0x140] sm:$0xff]
    %v4194 = vld [vmem:[#allocation8 + $0x148] sm:$0xff]
    %v4195 = vld [vmem:[#allocation8 + $0x150] sm:$0xff]
    %v4196 = vld [vmem:[#allocation8 + $0x158] sm:$0xff]
    %v4197 = vld [vmem:[#allocation8 + $0x160] sm:$0xff]
    %v4198 = vld [vmem:[#allocation8 + $0x168] sm:$0xff]
    %v4199 = vld [vmem:[#allocation8 + $0x170] sm:$0xff]
    %v4200 = vld [vmem:[#allocation8 + $0x178] sm:$0xff]
    %v4201 = vld [vmem:[#allocation8 + $0x180] sm:$0xff]
    %v4202 = vld [vmem:[#allocation8 + $0x188] sm:$0xff]
    %v4203 = vld [vmem:[#allocation8 + $0x190] sm:$0xff]
    %v4204 = vld [vmem:[#allocation8 + $0x198] sm:$0xff]
    %v4205 = vld [vmem:[#allocation8 + $0x1a0] sm:$0xff]
    %v4206 = vld [vmem:[#allocation8 + $0x1a8] sm:$0xff]
    %v4207 = vld [vmem:[#allocation8 + $0x1b0] sm:$0xff]
    %v4208 = vld [vmem:[#allocation8 + $0x1b8] sm:$0xff]
    %v4209 = vld [vmem:[#allocation8 + $0x1c0] sm:$0xff]
    %v4210 = vld [vmem:[#allocation8 + $0x1c8] sm:$0xff]
    %v4211 = vld [vmem:[#allocation8 + $0x1d0] sm:$0xff]
    %v4212 = vld [vmem:[#allocation8 + $0x1d8] sm:$0xff]
    %v4213 = vld [vmem:[#allocation8 + $0x1e0] sm:$0xff]
    %v4214 = vld [vmem:[#allocation8 + $0x1e8] sm:$0xff]
    %v4215 = vld [vmem:[#allocation8 + $0x1f0] sm:$0xff]
    %v4216 = vld [vmem:[#allocation8 + $0x1f8] sm:$0xff]
    %v4217 = vld [vmem:[#allocation8 + $0x200] sm:$0xff]
    %v4218 = vld [vmem:[#allocation8 + $0x208] sm:$0xff]
    %v4219 = vld [vmem:[#allocation8 + $0x210] sm:$0xff]
    %v4220 = vld [vmem:[#allocation8 + $0x218] sm:$0xff]
    %v4221 = vld [vmem:[#allocation8 + $0x220] sm:$0xff]
    %v4222 = vld [vmem:[#allocation8 + $0x228] sm:$0xff]
    %v4223 = vld [vmem:[#allocation8 + $0x230] sm:$0xff]
    %v4224 = vld [vmem:[#allocation8 + $0x238] sm:$0xff]
    %v4225 = vld [vmem:[#allocation8 + $0x240] sm:$0xff]
    %v4226 = vld [vmem:[#allocation8 + $0x248] sm:$0xff]
    %v4227 = vld [vmem:[#allocation8 + $0x250] sm:$0xff]
    %v4228 = vld [vmem:[#allocation8 + $0x258] sm:$0xff]
    %v4229 = vld [vmem:[#allocation8 + $0x260] sm:$0xff]
    %v4230 = vld [vmem:[#allocation8 + $0x268] sm:$0xff]
    %v4231 = vld [vmem:[#allocation8 + $0x270] sm:$0xff]
    %v4232 = vld [vmem:[#allocation8 + $0x278] sm:$0xff]
    %v4233 = vld [vmem:[#allocation8 + $0x280] sm:$0xff]
    %v4234 = vld [vmem:[#allocation8 + $0x288] sm:$0xff]
    %v4235 = vld [vmem:[#allocation8 + $0x290] sm:$0xff]
    %v4236 = vld [vmem:[#allocation8 + $0x298] sm:$0xff]
    %v4237 = vld [vmem:[#allocation8 + $0x2a0] sm:$0xff]
    %v4238 = vld [vmem:[#allocation8 + $0x2a8] sm:$0xff]
    %v4239 = vld [vmem:[#allocation8 + $0x2b0] sm:$0xff]
    %v4240 = vld [vmem:[#allocation8 + $0x2b8] sm:$0xff]
    %v4241 = vld [vmem:[#allocation8 + $0x2c0] sm:$0xff]
    %v4242 = vld [vmem:[#allocation8 + $0x2c8] sm:$0xff]
    %v4243 = vld [vmem:[#allocation8 + $0x2d0] sm:$0xff]
    %v4244 = vld [vmem:[#allocation8 + $0x2d8] sm:$0xff]
    %v4245 = vld [vmem:[#allocation8 + $0x2e0] sm:$0xff]
    %v4246 = vld [vmem:[#allocation8 + $0x2e8] sm:$0xff]
    %v4247 = vld [vmem:[#allocation8 + $0x2f0] sm:$0xff]
    %v4248 = vld [vmem:[#allocation8 + $0x2f8] sm:$0xff]
    %4249 = vmatprep.subr.mxu0 %v4244
    %4250 = vmatpush1.msra.mxu0 %v4243
    %4251 = vmatprep.subr.mxu0 %v4238
    %4252 = vmatpush1.msra.mxu0 %v4237
    %4253 = vmatprep.subr.mxu0 %v4232
    %4254 = vmatpush1.msra.mxu0 %v4231
    %4255 = vmatprep.subr.mxu0 %v4226
    %4256 = vmatpush1.msra.mxu0 %v4225
    %4257 = vmatprep.subr.mxu0 %v4220
    %4258 = vmatpush1.msra.mxu0 %v4219
    %4259 = vmatprep.subr.mxu0 %v4214
    %4260 = vmatpush1.msra.mxu0 %v4213
    %4261 = vmatprep.subr.mxu0 %v4208
    %4262 = vmatpush1.msra.mxu0 %v4207
    %4263 = vmatprep.subr.mxu0 %v4202
    %4264 = vmatpush1.msra.mxu0 %v4201
    %4265 = vmatprep.subr.mxu0 %v4196
    %4266 = vmatpush1.msra.mxu0 %v4195
    %4267 = vmatprep.subr.mxu0 %v4190
    %4268 = vmatpush1.msra.mxu0 %v4189
    %4269 = vmatprep.subr.mxu0 %v4184
    %4270 = vmatpush1.msra.mxu0 %v4183
    %4271 = vmatprep.subr.mxu0 %v4178
    %4272 = vmatpush1.msra.mxu0 %v4177
    %4273 = vmatprep.subr.mxu0 %v4172
    %4274 = vmatpush1.msra.mxu0 %v4171
    %4275 = vmatprep.subr.mxu0 %v4166
    %4276 = vmatpush1.msra.mxu0 %v4165
    %4277 = vmatprep.subr.mxu0 %v4160
    %4278 = vmatpush1.msra.mxu0 %v4159
    %4279 = vmatprep.subr.mxu0 %v4154
    %4280 = vmatpush1.msra.mxu0 %v4153
    %4281 = vmatprep.subr.mxu0 0.0
    %4282 = vmatpush2.msra.mxu0 0.0
    %4283 = vmatprep.subr.mxu0 0.0
    %4284 = vmatpush2.msra.mxu0 0.0
    %4285 = vmatprep.subr.mxu0 0.0
    %4286 = vmatpush2.msra.mxu0 0.0
    %4287 = vmatprep.subr.mxu0 0.0
    %4288 = vmatpush2.msra.mxu0 0.0
    %4289 = vmatprep.subr.mxu0 0.0
    %4290 = vmatpush2.msra.mxu0 0.0
    %4291 = vmatprep.subr.mxu0 0.0
    %4292 = vmatpush2.msra.mxu0 0.0
    %4293 = vmatprep.subr.mxu0 0.0
    %4294 = vmatpush2.msra.mxu0 0.0
    %4295 = vmatprep.subr.mxu0 0.0
    %4296 = vmatpush2.msra.mxu0 0.0
    %4297 = vmatprep.subr.mxu0 0.0
    %4298 = vmatpush2.msra.mxu0 0.0
    %4299 = vmatprep.subr.mxu0 0.0
    %4300 = vmatpush2.msra.mxu0 0.0
    %4301 = vmatprep.subr.mxu0 0.0
    %4302 = vmatpush2.msra.mxu0 0.0
    %4303 = vmatprep.subr.mxu0 0.0
    %4304 = vmatpush2.msra.mxu0 0.0
    %4305 = vmatprep.subr.mxu0 0.0
    %4306 = vmatpush2.msra.mxu0 0.0
    %4307 = vmatprep.subr.mxu0 0.0
    %4308 = vmatpush2.msra.mxu0 0.0
    %4309 = vmatprep.subr.mxu0 0.0
    %4310 = vmatpush2.msra.mxu0 0.0
    %4311 = vmatprep.subr.mxu0 0.0
    %4312 = vmatpush2.msra.mxu0 0.0
    %4313 = vmatprep.mubr.f32.mxu0 0.0
    %4314 = vmatmul.mubr.f32.gmra.mxu0 %v4082
    %v4315 = vpop.f32.mrf.mxu0
    %v4316 = vadd.f32 0.0, %v4315
    %v4317 = vpop.f32.mrf.mxu0
    %v4318 = vadd.f32 0.0, %v4317
    %4319 = vdwg.mxu0
    %4320 = vmatprep.subr.mxu0 %v4246
    %4321 = vmatpush1.msra.mxu0 %v4245
    %4322 = vmatprep.subr.mxu0 %v4240
    %4323 = vmatpush1.msra.mxu0 %v4239
    %4324 = vmatprep.subr.mxu0 %v4234
    %4325 = vmatpush1.msra.mxu0 %v4233
    %4326 = vmatprep.subr.mxu0 %v4228
    %4327 = vmatpush1.msra.mxu0 %v4227
    %4328 = vmatprep.subr.mxu0 %v4222
    %4329 = vmatpush1.msra.mxu0 %v4221
    %4330 = vmatprep.subr.mxu0 %v4216
    %4331 = vmatpush1.msra.mxu0 %v4215
    %4332 = vmatprep.subr.mxu0 %v4210
    %4333 = vmatpush1.msra.mxu0 %v4209
    %4334 = vmatprep.subr.mxu0 %v4204
    %4335 = vmatpush1.msra.mxu0 %v4203
    %4336 = vmatprep.subr.mxu0 %v4198
    %4337 = vmatpush1.msra.mxu0 %v4197
    %4338 = vmatprep.subr.mxu0 %v4192
    %4339 = vmatpush1.msra.mxu0 %v4191
    %4340 = vmatprep.subr.mxu0 %v4186
    %4341 = vmatpush1.msra.mxu0 %v4185
    %4342 = vmatprep.subr.mxu0 %v4180
    %4343 = vmatpush1.msra.mxu0 %v4179
    %4344 = vmatprep.subr.mxu0 %v4174
    %4345 = vmatpush1.msra.mxu0 %v4173
    %4346 = vmatprep.subr.mxu0 %v4168
    %4347 = vmatpush1.msra.mxu0 %v4167
    %4348 = vmatprep.subr.mxu0 %v4162
    %4349 = vmatpush1.msra.mxu0 %v4161
    %4350 = vmatprep.subr.mxu0 %v4156
    %4351 = vmatpush1.msra.mxu0 %v4155
    %4352 = vmatprep.subr.mxu0 0.0
    %4353 = vmatpush2.msra.mxu0 0.0
    %4354 = vmatprep.subr.mxu0 0.0
    %4355 = vmatpush2.msra.mxu0 0.0
    %4356 = vmatprep.subr.mxu0 0.0
    %4357 = vmatpush2.msra.mxu0 0.0
    %4358 = vmatprep.subr.mxu0 0.0
    %4359 = vmatpush2.msra.mxu0 0.0
    %4360 = vmatprep.subr.mxu0 0.0
    %4361 = vmatpush2.msra.mxu0 0.0
    %4362 = vmatprep.subr.mxu0 0.0
    %4363 = vmatpush2.msra.mxu0 0.0
    %4364 = vmatprep.subr.mxu0 0.0
    %4365 = vmatpush2.msra.mxu0 0.0
    %4366 = vmatprep.subr.mxu0 0.0
    %4367 = vmatpush2.msra.mxu0 0.0
    %4368 = vmatprep.subr.mxu0 0.0
    %4369 = vmatpush2.msra.mxu0 0.0
    %4370 = vmatprep.subr.mxu0 0.0
    %4371 = vmatpush2.msra.mxu0 0.0
    %4372 = vmatprep.subr.mxu0 0.0
    %4373 = vmatpush2.msra.mxu0 0.0
    %4374 = vmatprep.subr.mxu0 0.0
    %4375 = vmatpush2.msra.mxu0 0.0
    %4376 = vmatprep.subr.mxu0 0.0
    %4377 = vmatpush2.msra.mxu0 0.0
    %4378 = vmatprep.subr.mxu0 0.0
    %4379 = vmatpush2.msra.mxu0 0.0
    %4380 = vmatprep.subr.mxu0 0.0
    %4381 = vmatpush2.msra.mxu0 0.0
    %4382 = vmatprep.subr.mxu0 0.0
    %4383 = vmatpush2.msra.mxu0 0.0
    %4384 = vmatprep.mubr.f32.mxu0 0.0
    %4385 = vmatmul.mubr.f32.gmra.mxu0 %v4082
    %v4386 = vpop.f32.mrf.mxu0
    %v4387 = vadd.f32 0.0, %v4386
    %v4388 = vpop.f32.mrf.mxu0
    %v4389 = vadd.f32 0.0, %v4388
    %4390 = vdwg.mxu0
    %4391 = vmatprep.subr.mxu0 %v4248
    %4392 = vmatpush1.msra.mxu0 %v4247
    %4393 = vmatprep.subr.mxu0 %v4242
    %4394 = vmatpush1.msra.mxu0 %v4241
    %4395 = vmatprep.subr.mxu0 %v4236
    %4396 = vmatpush1.msra.mxu0 %v4235
    %4397 = vmatprep.subr.mxu0 %v4230
    %4398 = vmatpush1.msra.mxu0 %v4229
    %4399 = vmatprep.subr.mxu0 %v4224
    %4400 = vmatpush1.msra.mxu0 %v4223
    %4401 = vmatprep.subr.mxu0 %v4218
    %4402 = vmatpush1.msra.mxu0 %v4217
    %4403 = vmatprep.subr.mxu0 %v4212
    %4404 = vmatpush1.msra.mxu0 %v4211
    %4405 = vmatprep.subr.mxu0 %v4206
    %4406 = vmatpush1.msra.mxu0 %v4205
    %4407 = vmatprep.subr.mxu0 %v4200
    %4408 = vmatpush1.msra.mxu0 %v4199
    %4409 = vmatprep.subr.mxu0 %v4194
    %4410 = vmatpush1.msra.mxu0 %v4193
    %4411 = vmatprep.subr.mxu0 %v4188
    %4412 = vmatpush1.msra.mxu0 %v4187
    %4413 = vmatprep.subr.mxu0 %v4182
    %4414 = vmatpush1.msra.mxu0 %v4181
    %4415 = vmatprep.subr.mxu0 %v4176
    %4416 = vmatpush1.msra.mxu0 %v4175
    %4417 = vmatprep.subr.mxu0 %v4170
    %4418 = vmatpush1.msra.mxu0 %v4169
    %4419 = vmatprep.subr.mxu0 %v4164
    %4420 = vmatpush1.msra.mxu0 %v4163
    %4421 = vmatprep.subr.mxu0 %v4158
    %4422 = vmatpush1.msra.mxu0 %v4157
    %4423 = vmatprep.subr.mxu0 0.0
    %4424 = vmatpush2.msra.mxu0 0.0
    %4425 = vmatprep.subr.mxu0 0.0
    %4426 = vmatpush2.msra.mxu0 0.0
    %4427 = vmatprep.subr.mxu0 0.0
    %4428 = vmatpush2.msra.mxu0 0.0
    %4429 = vmatprep.subr.mxu0 0.0
    %4430 = vmatpush2.msra.mxu0 0.0
    %4431 = vmatprep.subr.mxu0 0.0
    %4432 = vmatpush2.msra.mxu0 0.0
    %4433 = vmatprep.subr.mxu0 0.0
    %4434 = vmatpush2.msra.mxu0 0.0
    %4435 = vmatprep.subr.mxu0 0.0
    %4436 = vmatpush2.msra.mxu0 0.0
    %4437 = vmatprep.subr.mxu0 0.0
    %4438 = vmatpush2.msra.mxu0 0.0
    %4439 = vmatprep.subr.mxu0 0.0
    %4440 = vmatpush2.msra.mxu0 0.0
    %4441 = vmatprep.subr.mxu0 0.0
    %4442 = vmatpush2.msra.mxu0 0.0
    %4443 = vmatprep.subr.mxu0 0.0
    %4444 = vmatpush2.msra.mxu0 0.0
    %4445 = vmatprep.subr.mxu0 0.0
    %4446 = vmatpush2.msra.mxu0 0.0
    %4447 = vmatprep.subr.mxu0 0.0
    %4448 = vmatpush2.msra.mxu0 0.0
    %4449 = vmatprep.subr.mxu0 0.0
    %4450 = vmatpush2.msra.mxu0 0.0
    %4451 = vmatprep.subr.mxu0 0.0
    %4452 = vmatpush2.msra.mxu0 0.0
    %4453 = vmatprep.subr.mxu0 0.0
    %4454 = vmatpush2.msra.mxu0 0.0
    %4455 = vmatprep.mubr.f32.mxu0 0.0
    %4456 = vmatmul.mubr.f32.gmra.mxu0 %v4082
    %v4457 = vpop.f32.mrf.mxu0
    %v4458 = vadd.f32 0.0, %v4457
    %v4459 = vpop.f32.mrf.mxu0
    %v4460 = vadd.f32 0.0, %v4459
    %4461 = vdwg.mxu0
    %v4468 = vcombine.low %v4316, %v4318
    %v4469 = vcombine.low %v4387, %v4389
    %v4470 = vcombine.low %v4458, %v4460
    %v4472 = vunpack.c.l.s4 1966171168
    %v4473 = vunpack.c.0.s8 %v4472
    %v4474 = vlaneseq
    %v4475 = vshrl.u32 %v4474, 7
    %v4476 = vsub.s32 %v4473, %v4475
    %v4477 = vrot.slane %v4468, %v4476
    %v4479 = vunpack.c.l.s4 1966171168
    %v4480 = vunpack.c.0.s8 %v4479
    %v4481 = vlaneseq
    %v4482 = vshrl.u32 %v4481, 7
    %v4483 = vsub.s32 %v4480, %v4482
    %v4484 = vrot.slane %v4469, %v4483
    %v4486 = vunpack.c.l.s4 1966171168
    %v4487 = vunpack.c.0.s8 %v4486
    %v4488 = vlaneseq
    %v4489 = vshrl.u32 %v4488, 7
    %v4490 = vsub.s32 %v4487, %v4489
    %v4491 = vrot.slane %v4470, %v4490
    %v4492 = vcombine.low %v4477, %v4484
    %v4494 = vunpack.c.l.s4 1966171168
    %v4495 = vunpack.c.0.s8 %v4494
    %v4496 = vlaneseq
    %v4497 = vshrl.u32 %v4496, 7
    %v4498 = vsub.s32 %v4495, %v4497
    %v4499 = vrot.slane %v4492, %v4498
    %v4501 = vunpack.c.l.s4 1966171168
    %v4502 = vunpack.c.0.s8 %v4501
    %v4503 = vlaneseq
    %v4504 = vshrl.u32 %v4503, 7
    %v4505 = vsub.s32 %v4502, %v4504
    %v4506 = vrot.slane %v4491, %v4505
    %v4507 = vcombine.low %v4499, %v4506
    %v4509 = vadd.f32 %v4152, %v4507
    %v4511 = vrot.slane %v4509, 4
    %v4513 = vxor.u32 %v4511, 2147483648
    %v4514 = vmul.f32 %v4513, 1.442695
    %v4515 = vpow.pop %v4514
    %v4516 = vadd.f32 %v4515, 1.0
    %v4517 = vrcp.pop %v4516
    %v4518 = vmul.f32 1.0, %v4517
    %v4519 = vlaneseq
    %v4520 = vshrl.u32 %v4519, 7
    %v4521 = vsub.s32 2, %v4520
    %v4522 = vrot.slane %v4509, %v4521
    %v4524 = vsel %vm774, %v4522, -inf
    %4525 = vmax.xlane.f32.xlu0 %v4524
    %v4526 = vpop.xlane.xlu0 %4525
    %v4527 = vrot.slane %v4509, 2
    %v4529 = vsub.f32 %v4527, %v4526
    %v4530 = vmul.f32 %v4529, 1.442695
    %v4531 = vpow.pop %v4530
    %v4532 = vsel %vm774, %v4531, 0.0
    %4533 = vadd.xlane.f32.xlu0 %v4532
    %v4534 = vpop.xlane.xlu0 %4533
    %v4535 = vrcp.pop %v4534
    %v4536 = vmul.f32 %v4531, %v4535
    %4538 = vset.pattern.permute.xlu0 0
    %4539 = vperm.xlu0 %4538, %v4518
    %v4540 = vpop.permute.xlu0 %4539
    %v4542 = vlaneseq
    %v4543 = vshrl.u32 %v4542, 7
    %v4544 = vsub.s32 0, %v4543
    %v4545 = vrot.slane %v4540, %v4544
    %v4546 = vmul.f32 %v4545, %v4536
    %v4548 = vsel %vm798, %v4546, 0
    %4550 = vmatprep.subr.mxu0 0.0
    %4551 = vmatpush1.msra.mxu0 0.0
    %4552 = vmatprep.subr.mxu0 0.0
    %4553 = vmatpush1.msra.mxu0 0.0
    %4554 = vmatprep.subr.mxu0 0.0
    %4555 = vmatpush1.msra.mxu0 0.0
    %4556 = vmatprep.subr.mxu0 0.0
    %4557 = vmatpush1.msra.mxu0 0.0
    %4558 = vmatprep.subr.mxu0 0.0
    %4559 = vmatpush1.msra.mxu0 0.0
    %4560 = vmatprep.subr.mxu0 0.0
    %4561 = vmatpush1.msra.mxu0 0.0
    %4562 = vmatprep.subr.mxu0 0.0
    %4563 = vmatpush1.msra.mxu0 0.0
    %4564 = vmatprep.subr.mxu0 0.0
    %4565 = vmatpush1.msra.mxu0 0.0
    %4566 = vmatprep.subr.mxu0 0.0
    %4567 = vmatpush1.msra.mxu0 0.0
    %4568 = vmatprep.subr.mxu0 0.0
    %4569 = vmatpush1.msra.mxu0 0.0
    %4570 = vmatprep.subr.mxu0 0.0
    %4571 = vmatpush1.msra.mxu0 0.0
    %4572 = vmatprep.subr.mxu0 0.0
    %4573 = vmatpush1.msra.mxu0 0.0
    %4574 = vmatprep.subr.mxu0 0.0
    %4575 = vmatpush1.msra.mxu0 0.0
    %4576 = vmatprep.subr.mxu0 0.0
    %4577 = vmatpush1.msra.mxu0 0.0
    %4578 = vmatprep.subr.mxu0 0.0
    %4579 = vmatpush1.msra.mxu0 %v4147
    %4580 = vmatprep.subr.mxu0 0.0
    %4581 = vmatpush1.msra.mxu0 %v4146
    %4582 = vmatprep.subr.mxu0 0.0
    %4583 = vmatpush2.msra.mxu0 0.0
    %4584 = vmatprep.subr.mxu0 0.0
    %4585 = vmatpush2.msra.mxu0 0.0
    %4586 = vmatprep.subr.mxu0 0.0
    %4587 = vmatpush2.msra.mxu0 0.0
    %4588 = vmatprep.subr.mxu0 0.0
    %4589 = vmatpush2.msra.mxu0 0.0
    %4590 = vmatprep.subr.mxu0 0.0
    %4591 = vmatpush2.msra.mxu0 0.0
    %4592 = vmatprep.subr.mxu0 0.0
    %4593 = vmatpush2.msra.mxu0 0.0
    %4594 = vmatprep.subr.mxu0 0.0
    %4595 = vmatpush2.msra.mxu0 0.0
    %4596 = vmatprep.subr.mxu0 0.0
    %4597 = vmatpush2.msra.mxu0 0.0
    %4598 = vmatprep.subr.mxu0 0.0
    %4599 = vmatpush2.msra.mxu0 0.0
    %4600 = vmatprep.subr.mxu0 0.0
    %4601 = vmatpush2.msra.mxu0 0.0
    %4602 = vmatprep.subr.mxu0 0.0
    %4603 = vmatpush2.msra.mxu0 0.0
    %4604 = vmatprep.subr.mxu0 0.0
    %4605 = vmatpush2.msra.mxu0 0.0
    %4606 = vmatprep.subr.mxu0 0.0
    %4607 = vmatpush2.msra.mxu0 0.0
    %4608 = vmatprep.subr.mxu0 0.0
    %4609 = vmatpush2.msra.mxu0 0.0
    %4610 = vmatprep.subr.mxu0 0.0
    %4611 = vmatpush2.msra.mxu0 0.0
    %4612 = vmatprep.subr.mxu0 0.0
    %4613 = vmatpush2.msra.mxu0 0.0
    %4614 = vmatprep.mubr.f32.mxu0 0.0
    %4615 = vmatmul.mubr.f32.gmra.mxu0 %v4548
    %v4616 = vpop.f32.mrf.mxu0
    %v4617 = vadd.f32 0.0, %v4616
    %v4618 = vpop.f32.mrf.mxu0
    %4619 = vdwg.mxu0
    %v4620 = vld [vmem:[#allocation11] sm:$0xff]
    %v4621 = vld [vmem:[#allocation11 + $0x8] sm:$0xff]
    %v4622 = vld [vmem:[#allocation11 + $0x10] sm:$0xff]
    %v4623 = vld [vmem:[#allocation11 + $0x18] sm:$0xff]
    %v4624 = vld [vmem:[#allocation11 + $0x20] sm:$0xff]
    %v4625 = vld [vmem:[#allocation11 + $0x28] sm:$0xff]
    %v4626 = vld [vmem:[#allocation11 + $0x30] sm:$0xff]
    %v4627 = vld [vmem:[#allocation11 + $0x38] sm:$0xff]
    %v4628 = vld [vmem:[#allocation11 + $0x40] sm:$0xff]
    %v4629 = vld [vmem:[#allocation11 + $0x48] sm:$0xff]
    %v4630 = vld [vmem:[#allocation11 + $0x50] sm:$0xff]
    %v4631 = vld [vmem:[#allocation11 + $0x58] sm:$0xff]
    %v4632 = vld [vmem:[#allocation11 + $0x60] sm:$0xff]
    %v4633 = vld [vmem:[#allocation11 + $0x68] sm:$0xff]
    %v4634 = vld [vmem:[#allocation11 + $0x70] sm:$0xff]
    %v4635 = vld [vmem:[#allocation11 + $0x78] sm:$0xff]
    %4636 = vmatprep.subr.mxu0 0.0
    %4637 = vmatpush1.msra.mxu0 %v4635
    %4638 = vmatprep.subr.mxu0 0.0
    %4639 = vmatpush1.msra.mxu0 %v4634
    %4640 = vmatprep.subr.mxu0 0.0
    %4641 = vmatpush1.msra.mxu0 %v4633
    %4642 = vmatprep.subr.mxu0 0.0
    %4643 = vmatpush1.msra.mxu0 %v4632
    %4644 = vmatprep.subr.mxu0 0.0
    %4645 = vmatpush1.msra.mxu0 %v4631
    %4646 = vmatprep.subr.mxu0 0.0
    %4647 = vmatpush1.msra.mxu0 %v4630
    %4648 = vmatprep.subr.mxu0 0.0
    %4649 = vmatpush1.msra.mxu0 %v4629
    %4650 = vmatprep.subr.mxu0 0.0
    %4651 = vmatpush1.msra.mxu0 %v4628
    %4652 = vmatprep.subr.mxu0 0.0
    %4653 = vmatpush1.msra.mxu0 %v4627
    %4654 = vmatprep.subr.mxu0 0.0
    %4655 = vmatpush1.msra.mxu0 %v4626
    %4656 = vmatprep.subr.mxu0 0.0
    %4657 = vmatpush1.msra.mxu0 %v4625
    %4658 = vmatprep.subr.mxu0 0.0
    %4659 = vmatpush1.msra.mxu0 %v4624
    %4660 = vmatprep.subr.mxu0 0.0
    %4661 = vmatpush1.msra.mxu0 %v4623
    %4662 = vmatprep.subr.mxu0 0.0
    %4663 = vmatpush1.msra.mxu0 %v4622
    %4664 = vmatprep.subr.mxu0 0.0
    %4665 = vmatpush1.msra.mxu0 %v4621
    %4666 = vmatprep.subr.mxu0 0.0
    %4667 = vmatpush1.msra.mxu0 %v4620
    %4668 = vmatprep.subr.mxu0 0.0
    %4669 = vmatpush2.msra.mxu0 0.0
    %4670 = vmatprep.subr.mxu0 0.0
    %4671 = vmatpush2.msra.mxu0 0.0
    %4672 = vmatprep.subr.mxu0 0.0
    %4673 = vmatpush2.msra.mxu0 0.0
    %4674 = vmatprep.subr.mxu0 0.0
    %4675 = vmatpush2.msra.mxu0 0.0
    %4676 = vmatprep.subr.mxu0 0.0
    %4677 = vmatpush2.msra.mxu0 0.0
    %4678 = vmatprep.subr.mxu0 0.0
    %4679 = vmatpush2.msra.mxu0 0.0
    %4680 = vmatprep.subr.mxu0 0.0
    %4681 = vmatpush2.msra.mxu0 0.0
    %4682 = vmatprep.subr.mxu0 0.0
    %4683 = vmatpush2.msra.mxu0 0.0
    %4684 = vmatprep.subr.mxu0 0.0
    %4685 = vmatpush2.msra.mxu0 0.0
    %4686 = vmatprep.subr.mxu0 0.0
    %4687 = vmatpush2.msra.mxu0 0.0
    %4688 = vmatprep.subr.mxu0 0.0
    %4689 = vmatpush2.msra.mxu0 0.0
    %4690 = vmatprep.subr.mxu0 0.0
    %4691 = vmatpush2.msra.mxu0 0.0
    %4692 = vmatprep.subr.mxu0 0.0
    %4693 = vmatpush2.msra.mxu0 0.0
    %4694 = vmatprep.subr.mxu0 0.0
    %4695 = vmatpush2.msra.mxu0 0.0
    %4696 = vmatprep.subr.mxu0 0.0
    %4697 = vmatpush2.msra.mxu0 0.0
    %4698 = vmatprep.subr.mxu0 0.0
    %4699 = vmatpush2.msra.mxu0 0.0
    %4700 = vmatprep.mubr.f32.mxu0 0.0
    %4701 = vmatmul.mubr.f32.gmra.mxu0 %v4617
    %v4702 = vpop.f32.mrf.mxu0
    %v4703 = vadd.f32 0.0, %v4702
    %v4704 = vpop.f32.mrf.mxu0
    %4705 = vdwg.mxu0
    %v4706 = vadd.f32 %v4509, %v4703
    %v4707 = vmax.f32 %v4706, 0.0
    %v4708 = vrot.slane %v4509, 1
    %v4710 = vmax.f32 %v4708, 0.0
    %v4711 = vlaneseq
    %v4712 = vshrl.u32 %v4711, 7
    %v4713 = vsub.s32 3, %v4712
    %v4714 = vrot.slane %v4509, %v4713
    %v4716 = vsel %vm774, %v4714, -inf
    %4717 = vmax.xlane.f32.xlu0 %v4716
    %v4718 = vpop.xlane.xlu0 %4717
    %v4719 = vrot.slane %v4509, 3
    %v4721 = vsub.f32 %v4719, %v4718
    %v4722 = vmul.f32 %v4721, 1.442695
    %v4723 = vpow.pop %v4722
    %v4724 = vsel %vm774, %v4723, 0.0
    %4725 = vadd.xlane.f32.xlu0 %v4724
    %v4726 = vpop.xlane.xlu0 %4725
    %v4727 = vrcp.pop %v4726
    %v4728 = vmul.f32 %v4723, %v4727
    %v4729 = vrot.slane %v4509, 5
    %v4731 = vxor.u32 %v4729, 2147483648
    %v4732 = vmul.f32 %v4731, 1.442695
    %v4733 = vpow.pop %v4732
    %v4734 = vadd.f32 %v4733, 1.0
    %v4735 = vrcp.pop %v4734
    %v4736 = vmul.f32 1.0, %v4735
    %v4738 = vlaneseq
    %v4739 = vshrl.u32 %v4738, 7
    %v4740 = vsub.s32 0, %v4739
    %v4741 = vrot.slane %v4728, %v4740
    %v4743 = vmul.f32 %v4741, %v398
    %v4744 = vmul.f32 %v4741, %v399
    %v4745 = vsel %vm798, %v4743, 0.0
    %4746 = vadd.xlane.f32.xlu0 %v4745
    %v4747 = vpop.xlane.xlu0 %4746
    %v4748 = vsel %vm798, %v4744, 0.0
    %4749 = vadd.xlane.f32.xlu0 %v4748
    %v4750 = vpop.xlane.xlu0 %4749
    %4752 = vset.pattern.permute.xlu0 0
    %4753 = vperm.xlu0 %4752, %v4736
    %v4754 = vpop.permute.xlu0 %4753
    %v4756 = vlaneseq
    %v4757 = vshrl.u32 %v4756, 7
    %v4758 = vsub.s32 0, %v4757
    %v4759 = vrot.slane %v4754, %v4758
    %v4760 = vmul.f32 %v4759, %v4710
    %v4762 = vlaneseq
    %v4763 = vshrl.u32 %v4762, 7
    %v4764 = vsub.s32 0, %v4763
    %v4765 = vrot.slane %v4760, %v4764
    %v4767 = vsub.f32 %v4765, %v4146
    %v4768 = vsub.f32 %v4765, %v4147
    %v4769 = vmul.f32 %v4747, %v4767
    %v4770 = vmul.f32 %v4750, %v4768
    %v4771 = vadd.f32 %v4146, %v4769
    %v4772 = vadd.f32 %v4147, %v4770
    %4773 = vst [vmem:[#allocation12 + $0x6] sm:$0x1] %v4707
    %s4774 = scalar_lea.vmem [#allocation2], 7
    %v4775 = vld [vmem:[%s4774] ss:$8 sm:$0xf]
    %v4776 = vld [vmem:[%s4774] ss:$8 sm:$0x30]
    %v4777 = vor.u32 %v4775, %v4776
    %v4778 = vld [vmem:[#allocation8] sm:$0xff]
    %v4779 = vld [vmem:[#allocation8 + $0x8] sm:$0xff]
    %v4780 = vld [vmem:[#allocation8 + $0x10] sm:$0xff]
    %v4781 = vld [vmem:[#allocation8 + $0x18] sm:$0xff]
    %v4782 = vld [vmem:[#allocation8 + $0x20] sm:$0xff]
    %v4783 = vld [vmem:[#allocation8 + $0x28] sm:$0xff]
    %v4784 = vld [vmem:[#allocation8 + $0x30] sm:$0xff]
    %v4785 = vld [vmem:[#allocation8 + $0x38] sm:$0xff]
    %v4786 = vld [vmem:[#allocation8 + $0x40] sm:$0xff]
    %v4787 = vld [vmem:[#allocation8 + $0x48] sm:$0xff]
    %v4788 = vld [vmem:[#allocation8 + $0x50] sm:$0xff]
    %v4789 = vld [vmem:[#allocation8 + $0x58] sm:$0xff]
    %v4790 = vld [vmem:[#allocation8 + $0x60] sm:$0xff]
    %v4791 = vld [vmem:[#allocation8 + $0x68] sm:$0xff]
    %v4792 = vld [vmem:[#allocation8 + $0x70] sm:$0xff]
    %v4793 = vld [vmem:[#allocation8 + $0x78] sm:$0xff]
    %v4794 = vld [vmem:[#allocation8 + $0x80] sm:$0xff]
    %v4795 = vld [vmem:[#allocation8 + $0x88] sm:$0xff]
    %v4796 = vld [vmem:[#allocation8 + $0x90] sm:$0xff]
    %v4797 = vld [vmem:[#allocation8 + $0x98] sm:$0xff]
    %v4798 = vld [vmem:[#allocation8 + $0xa0] sm:$0xff]
    %v4799 = vld [vmem:[#allocation8 + $0xa8] sm:$0xff]
    %v4800 = vld [vmem:[#allocation8 + $0xb0] sm:$0xff]
    %v4801 = vld [vmem:[#allocation8 + $0xb8] sm:$0xff]
    %v4802 = vld [vmem:[#allocation8 + $0xc0] sm:$0xff]
    %v4803 = vld [vmem:[#allocation8 + $0xc8] sm:$0xff]
    %v4804 = vld [vmem:[#allocation8 + $0xd0] sm:$0xff]
    %v4805 = vld [vmem:[#allocation8 + $0xd8] sm:$0xff]
    %v4806 = vld [vmem:[#allocation8 + $0xe0] sm:$0xff]
    %v4807 = vld [vmem:[#allocation8 + $0xe8] sm:$0xff]
    %v4808 = vld [vmem:[#allocation8 + $0xf0] sm:$0xff]
    %v4809 = vld [vmem:[#allocation8 + $0xf8] sm:$0xff]
    %v4810 = vld [vmem:[#allocation8 + $0x100] sm:$0xff]
    %v4811 = vld [vmem:[#allocation8 + $0x108] sm:$0xff]
    %v4812 = vld [vmem:[#allocation8 + $0x110] sm:$0xff]
    %v4813 = vld [vmem:[#allocation8 + $0x118] sm:$0xff]
    %v4814 = vld [vmem:[#allocation8 + $0x120] sm:$0xff]
    %v4815 = vld [vmem:[#allocation8 + $0x128] sm:$0xff]
    %v4816 = vld [vmem:[#allocation8 + $0x130] sm:$0xff]
    %v4817 = vld [vmem:[#allocation8 + $0x138] sm:$0xff]
    %v4818 = vld [vmem:[#allocation8 + $0x140] sm:$0xff]
    %v4819 = vld [vmem:[#allocation8 + $0x148] sm:$0xff]
    %v4820 = vld [vmem:[#allocation8 + $0x150] sm:$0xff]
    %v4821 = vld [vmem:[#allocation8 + $0x158] sm:$0xff]
    %v4822 = vld [vmem:[#allocation8 + $0x160] sm:$0xff]
    %v4823 = vld [vmem:[#allocation8 + $0x168] sm:$0xff]
    %v4824 = vld [vmem:[#allocation8 + $0x170] sm:$0xff]
    %v4825 = vld [vmem:[#allocation8 + $0x178] sm:$0xff]
    %v4826 = vld [vmem:[#allocation8 + $0x180] sm:$0xff]
    %v4827 = vld [vmem:[#allocation8 + $0x188] sm:$0xff]
    %v4828 = vld [vmem:[#allocation8 + $0x190] sm:$0xff]
    %v4829 = vld [vmem:[#allocation8 + $0x198] sm:$0xff]
    %v4830 = vld [vmem:[#allocation8 + $0x1a0] sm:$0xff]
    %v4831 = vld [vmem:[#allocation8 + $0x1a8] sm:$0xff]
    %v4832 = vld [vmem:[#allocation8 + $0x1b0] sm:$0xff]
    %v4833 = vld [vmem:[#allocation8 + $0x1b8] sm:$0xff]
    %v4834 = vld [vmem:[#allocation8 + $0x1c0] sm:$0xff]
    %v4835 = vld [vmem:[#allocation8 + $0x1c8] sm:$0xff]
    %v4836 = vld [vmem:[#allocation8 + $0x1d0] sm:$0xff]
    %v4837 = vld [vmem:[#allocation8 + $0x1d8] sm:$0xff]
    %v4838 = vld [vmem:[#allocation8 + $0x1e0] sm:$0xff]
    %v4839 = vld [vmem:[#allocation8 + $0x1e8] sm:$0xff]
    %v4840 = vld [vmem:[#allocation8 + $0x1f0] sm:$0xff]
    %v4841 = vld [vmem:[#allocation8 + $0x1f8] sm:$0xff]
    %v4842 = vld [vmem:[#allocation8 + $0x200] sm:$0xff]
    %v4843 = vld [vmem:[#allocation8 + $0x208] sm:$0xff]
    %v4844 = vld [vmem:[#allocation8 + $0x210] sm:$0xff]
    %v4845 = vld [vmem:[#allocation8 + $0x218] sm:$0xff]
    %v4846 = vld [vmem:[#allocation8 + $0x220] sm:$0xff]
    %v4847 = vld [vmem:[#allocation8 + $0x228] sm:$0xff]
    %v4848 = vld [vmem:[#allocation8 + $0x230] sm:$0xff]
    %v4849 = vld [vmem:[#allocation8 + $0x238] sm:$0xff]
    %v4850 = vld [vmem:[#allocation8 + $0x240] sm:$0xff]
    %v4851 = vld [vmem:[#allocation8 + $0x248] sm:$0xff]
    %v4852 = vld [vmem:[#allocation8 + $0x250] sm:$0xff]
    %v4853 = vld [vmem:[#allocation8 + $0x258] sm:$0xff]
    %v4854 = vld [vmem:[#allocation8 + $0x260] sm:$0xff]
    %v4855 = vld [vmem:[#allocation8 + $0x268] sm:$0xff]
    %v4856 = vld [vmem:[#allocation8 + $0x270] sm:$0xff]
    %v4857 = vld [vmem:[#allocation8 + $0x278] sm:$0xff]
    %v4858 = vld [vmem:[#allocation8 + $0x280] sm:$0xff]
    %v4859 = vld [vmem:[#allocation8 + $0x288] sm:$0xff]
    %v4860 = vld [vmem:[#allocation8 + $0x290] sm:$0xff]
    %v4861 = vld [vmem:[#allocation8 + $0x298] sm:$0xff]
    %v4862 = vld [vmem:[#allocation8 + $0x2a0] sm:$0xff]
    %v4863 = vld [vmem:[#allocation8 + $0x2a8] sm:$0xff]
    %v4864 = vld [vmem:[#allocation8 + $0x2b0] sm:$0xff]
    %v4865 = vld [vmem:[#allocation8 + $0x2b8] sm:$0xff]
    %v4866 = vld [vmem:[#allocation8 + $0x2c0] sm:$0xff]
    %v4867 = vld [vmem:[#allocation8 + $0x2c8] sm:$0xff]
    %v4868 = vld [vmem:[#allocation8 + $0x2d0] sm:$0xff]
    %v4869 = vld [vmem:[#allocation8 + $0x2d8] sm:$0xff]
    %v4870 = vld [vmem:[#allocation8 + $0x2e0] sm:$0xff]
    %v4871 = vld [vmem:[#allocation8 + $0x2e8] sm:$0xff]
    %v4872 = vld [vmem:[#allocation8 + $0x2f0] sm:$0xff]
    %v4873 = vld [vmem:[#allocation8 + $0x2f8] sm:$0xff]
    %4874 = vmatprep.subr.mxu0 %v4869
    %4875 = vmatpush1.msra.mxu0 %v4868
    %4876 = vmatprep.subr.mxu0 %v4863
    %4877 = vmatpush1.msra.mxu0 %v4862
    %4878 = vmatprep.subr.mxu0 %v4857
    %4879 = vmatpush1.msra.mxu0 %v4856
    %4880 = vmatprep.subr.mxu0 %v4851
    %4881 = vmatpush1.msra.mxu0 %v4850
    %4882 = vmatprep.subr.mxu0 %v4845
    %4883 = vmatpush1.msra.mxu0 %v4844
    %4884 = vmatprep.subr.mxu0 %v4839
    %4885 = vmatpush1.msra.mxu0 %v4838
    %4886 = vmatprep.subr.mxu0 %v4833
    %4887 = vmatpush1.msra.mxu0 %v4832
    %4888 = vmatprep.subr.mxu0 %v4827
    %4889 = vmatpush1.msra.mxu0 %v4826
    %4890 = vmatprep.subr.mxu0 %v4821
    %4891 = vmatpush1.msra.mxu0 %v4820
    %4892 = vmatprep.subr.mxu0 %v4815
    %4893 = vmatpush1.msra.mxu0 %v4814
    %4894 = vmatprep.subr.mxu0 %v4809
    %4895 = vmatpush1.msra.mxu0 %v4808
    %4896 = vmatprep.subr.mxu0 %v4803
    %4897 = vmatpush1.msra.mxu0 %v4802
    %4898 = vmatprep.subr.mxu0 %v4797
    %4899 = vmatpush1.msra.mxu0 %v4796
    %4900 = vmatprep.subr.mxu0 %v4791
    %4901 = vmatpush1.msra.mxu0 %v4790
    %4902 = vmatprep.subr.mxu0 %v4785
    %4903 = vmatpush1.msra.mxu0 %v4784
    %4904 = vmatprep.subr.mxu0 %v4779
    %4905 = vmatpush1.msra.mxu0 %v4778
    %4906 = vmatprep.subr.mxu0 0.0
    %4907 = vmatpush2.msra.mxu0 0.0
    %4908 = vmatprep.subr.mxu0 0.0
    %4909 = vmatpush2.msra.mxu0 0.0
    %4910 = vmatprep.subr.mxu0 0.0
    %4911 = vmatpush2.msra.mxu0 0.0
    %4912 = vmatprep.subr.mxu0 0.0
    %4913 = vmatpush2.msra.mxu0 0.0
    %4914 = vmatprep.subr.mxu0 0.0
    %4915 = vmatpush2.msra.mxu0 0.0
    %4916 = vmatprep.subr.mxu0 0.0
    %4917 = vmatpush2.msra.mxu0 0.0
    %4918 = vmatprep.subr.mxu0 0.0
    %4919 = vmatpush2.msra.mxu0 0.0
    %4920 = vmatprep.subr.mxu0 0.0
    %4921 = vmatpush2.msra.mxu0 0.0
    %4922 = vmatprep.subr.mxu0 0.0
    %4923 = vmatpush2.msra.mxu0 0.0
    %4924 = vmatprep.subr.mxu0 0.0
    %4925 = vmatpush2.msra.mxu0 0.0
    %4926 = vmatprep.subr.mxu0 0.0
    %4927 = vmatpush2.msra.mxu0 0.0
    %4928 = vmatprep.subr.mxu0 0.0
    %4929 = vmatpush2.msra.mxu0 0.0
    %4930 = vmatprep.subr.mxu0 0.0
    %4931 = vmatpush2.msra.mxu0 0.0
    %4932 = vmatprep.subr.mxu0 0.0
    %4933 = vmatpush2.msra.mxu0 0.0
    %4934 = vmatprep.subr.mxu0 0.0
    %4935 = vmatpush2.msra.mxu0 0.0
    %4936 = vmatprep.subr.mxu0 0.0
    %4937 = vmatpush2.msra.mxu0 0.0
    %4938 = vmatprep.mubr.f32.mxu0 0.0
    %4939 = vmatmul.mubr.f32.gmra.mxu0 %v4707
    %v4940 = vpop.f32.mrf.mxu0
    %v4941 = vadd.f32 0.0, %v4940
    %v4942 = vpop.f32.mrf.mxu0
    %v4943 = vadd.f32 0.0, %v4942
    %4944 = vdwg.mxu0
    %4945 = vmatprep.subr.mxu0 %v4871
    %4946 = vmatpush1.msra.mxu0 %v4870
    %4947 = vmatprep.subr.mxu0 %v4865
    %4948 = vmatpush1.msra.mxu0 %v4864
    %4949 = vmatprep.subr.mxu0 %v4859
    %4950 = vmatpush1.msra.mxu0 %v4858
    %4951 = vmatprep.subr.mxu0 %v4853
    %4952 = vmatpush1.msra.mxu0 %v4852
    %4953 = vmatprep.subr.mxu0 %v4847
    %4954 = vmatpush1.msra.mxu0 %v4846
    %4955 = vmatprep.subr.mxu0 %v4841
    %4956 = vmatpush1.msra.mxu0 %v4840
    %4957 = vmatprep.subr.mxu0 %v4835
    %4958 = vmatpush1.msra.mxu0 %v4834
    %4959 = vmatprep.subr.mxu0 %v4829
    %4960 = vmatpush1.msra.mxu0 %v4828
    %4961 = vmatprep.subr.mxu0 %v4823
    %4962 = vmatpush1.msra.mxu0 %v4822
    %4963 = vmatprep.subr.mxu0 %v4817
    %4964 = vmatpush1.msra.mxu0 %v4816
    %4965 = vmatprep.subr.mxu0 %v4811
    %4966 = vmatpush1.msra.mxu0 %v4810
    %4967 = vmatprep.subr.mxu0 %v4805
    %4968 = vmatpush1.msra.mxu0 %v4804
    %4969 = vmatprep.subr.mxu0 %v4799
    %4970 = vmatpush1.msra.mxu0 %v4798
    %4971 = vmatprep.subr.mxu0 %v4793
    %4972 = vmatpush1.msra.mxu0 %v4792
    %4973 = vmatprep.subr.mxu0 %v4787
    %4974 = vmatpush1.msra.mxu0 %v4786
    %4975 = vmatprep.subr.mxu0 %v4781
    %4976 = vmatpush1.msra.mxu0 %v4780
    %4977 = vmatprep.subr.mxu0 0.0
    %4978 = vmatpush2.msra.mxu0 0.0
    %4979 = vmatprep.subr.mxu0 0.0
    %4980 = vmatpush2.msra.mxu0 0.0
    %4981 = vmatprep.subr.mxu0 0.0
    %4982 = vmatpush2.msra.mxu0 0.0
    %4983 = vmatprep.subr.mxu0 0.0
    %4984 = vmatpush2.msra.mxu0 0.0
    %4985 = vmatprep.subr.mxu0 0.0
    %4986 = vmatpush2.msra.mxu0 0.0
    %4987 = vmatprep.subr.mxu0 0.0
    %4988 = vmatpush2.msra.mxu0 0.0
    %4989 = vmatprep.subr.mxu0 0.0
    %4990 = vmatpush2.msra.mxu0 0.0
    %4991 = vmatprep.subr.mxu0 0.0
    %4992 = vmatpush2.msra.mxu0 0.0
    %4993 = vmatprep.subr.mxu0 0.0
    %4994 = vmatpush2.msra.mxu0 0.0
    %4995 = vmatprep.subr.mxu0 0.0
    %4996 = vmatpush2.msra.mxu0 0.0
    %4997 = vmatprep.subr.mxu0 0.0
    %4998 = vmatpush2.msra.mxu0 0.0
    %4999 = vmatprep.subr.mxu0 0.0
    %5000 = vmatpush2.msra.mxu0 0.0
    %5001 = vmatprep.subr.mxu0 0.0
    %5002 = vmatpush2.msra.mxu0 0.0
    %5003 = vmatprep.subr.mxu0 0.0
    %5004 = vmatpush2.msra.mxu0 0.0
    %5005 = vmatprep.subr.mxu0 0.0
    %5006 = vmatpush2.msra.mxu0 0.0
    %5007 = vmatprep.subr.mxu0 0.0
    %5008 = vmatpush2.msra.mxu0 0.0
    %5009 = vmatprep.mubr.f32.mxu0 0.0
    %5010 = vmatmul.mubr.f32.gmra.mxu0 %v4707
    %v5011 = vpop.f32.mrf.mxu0
    %v5012 = vadd.f32 0.0, %v5011
    %v5013 = vpop.f32.mrf.mxu0
    %v5014 = vadd.f32 0.0, %v5013
    %5015 = vdwg.mxu0
    %5016 = vmatprep.subr.mxu0 %v4873
    %5017 = vmatpush1.msra.mxu0 %v4872
    %5018 = vmatprep.subr.mxu0 %v4867
    %5019 = vmatpush1.msra.mxu0 %v4866
    %5020 = vmatprep.subr.mxu0 %v4861
    %5021 = vmatpush1.msra.mxu0 %v4860
    %5022 = vmatprep.subr.mxu0 %v4855
    %5023 = vmatpush1.msra.mxu0 %v4854
    %5024 = vmatprep.subr.mxu0 %v4849
    %5025 = vmatpush1.msra.mxu0 %v4848
    %5026 = vmatprep.subr.mxu0 %v4843
    %5027 = vmatpush1.msra.mxu0 %v4842
    %5028 = vmatprep.subr.mxu0 %v4837
    %5029 = vmatpush1.msra.mxu0 %v4836
    %5030 = vmatprep.subr.mxu0 %v4831
    %5031 = vmatpush1.msra.mxu0 %v4830
    %5032 = vmatprep.subr.mxu0 %v4825
    %5033 = vmatpush1.msra.mxu0 %v4824
    %5034 = vmatprep.subr.mxu0 %v4819
    %5035 = vmatpush1.msra.mxu0 %v4818
    %5036 = vmatprep.subr.mxu0 %v4813
    %5037 = vmatpush1.msra.mxu0 %v4812
    %5038 = vmatprep.subr.mxu0 %v4807
    %5039 = vmatpush1.msra.mxu0 %v4806
    %5040 = vmatprep.subr.mxu0 %v4801
    %5041 = vmatpush1.msra.mxu0 %v4800
    %5042 = vmatprep.subr.mxu0 %v4795
    %5043 = vmatpush1.msra.mxu0 %v4794
    %5044 = vmatprep.subr.mxu0 %v4789
    %5045 = vmatpush1.msra.mxu0 %v4788
    %5046 = vmatprep.subr.mxu0 %v4783
    %5047 = vmatpush1.msra.mxu0 %v4782
    %5048 = vmatprep.subr.mxu0 0.0
    %5049 = vmatpush2.msra.mxu0 0.0
    %5050 = vmatprep.subr.mxu0 0.0
    %5051 = vmatpush2.msra.mxu0 0.0
    %5052 = vmatprep.subr.mxu0 0.0
    %5053 = vmatpush2.msra.mxu0 0.0
    %5054 = vmatprep.subr.mxu0 0.0
    %5055 = vmatpush2.msra.mxu0 0.0
    %5056 = vmatprep.subr.mxu0 0.0
    %5057 = vmatpush2.msra.mxu0 0.0
    %5058 = vmatprep.subr.mxu0 0.0
    %5059 = vmatpush2.msra.mxu0 0.0
    %5060 = vmatprep.subr.mxu0 0.0
    %5061 = vmatpush2.msra.mxu0 0.0
    %5062 = vmatprep.subr.mxu0 0.0
    %5063 = vmatpush2.msra.mxu0 0.0
    %5064 = vmatprep.subr.mxu0 0.0
    %5065 = vmatpush2.msra.mxu0 0.0
    %5066 = vmatprep.subr.mxu0 0.0
    %5067 = vmatpush2.msra.mxu0 0.0
    %5068 = vmatprep.subr.mxu0 0.0
    %5069 = vmatpush2.msra.mxu0 0.0
    %5070 = vmatprep.subr.mxu0 0.0
    %5071 = vmatpush2.msra.mxu0 0.0
    %5072 = vmatprep.subr.mxu0 0.0
    %5073 = vmatpush2.msra.mxu0 0.0
    %5074 = vmatprep.subr.mxu0 0.0
    %5075 = vmatpush2.msra.mxu0 0.0
    %5076 = vmatprep.subr.mxu0 0.0
    %5077 = vmatpush2.msra.mxu0 0.0
    %5078 = vmatprep.subr.mxu0 0.0
    %5079 = vmatpush2.msra.mxu0 0.0
    %5080 = vmatprep.mubr.f32.mxu0 0.0
    %5081 = vmatmul.mubr.f32.gmra.mxu0 %v4707
    %v5082 = vpop.f32.mrf.mxu0
    %v5083 = vadd.f32 0.0, %v5082
    %v5084 = vpop.f32.mrf.mxu0
    %v5085 = vadd.f32 0.0, %v5084
    %5086 = vdwg.mxu0
    %v5093 = vcombine.low %v4941, %v4943
    %v5094 = vcombine.low %v5012, %v5014
    %v5095 = vcombine.low %v5083, %v5085
    %v5097 = vunpack.c.l.s4 1966171168
    %v5098 = vunpack.c.0.s8 %v5097
    %v5099 = vlaneseq
    %v5100 = vshrl.u32 %v5099, 7
    %v5101 = vsub.s32 %v5098, %v5100
    %v5102 = vrot.slane %v5093, %v5101
    %v5104 = vunpack.c.l.s4 1966171168
    %v5105 = vunpack.c.0.s8 %v5104
    %v5106 = vlaneseq
    %v5107 = vshrl.u32 %v5106, 7
    %v5108 = vsub.s32 %v5105, %v5107
    %v5109 = vrot.slane %v5094, %v5108
    %v5111 = vunpack.c.l.s4 1966171168
    %v5112 = vunpack.c.0.s8 %v5111
    %v5113 = vlaneseq
    %v5114 = vshrl.u32 %v5113, 7
    %v5115 = vsub.s32 %v5112, %v5114
    %v5116 = vrot.slane %v5095, %v5115
    %v5117 = vcombine.low %v5102, %v5109
    %v5119 = vunpack.c.l.s4 1966171168
    %v5120 = vunpack.c.0.s8 %v5119
    %v5121 = vlaneseq
    %v5122 = vshrl.u32 %v5121, 7
    %v5123 = vsub.s32 %v5120, %v5122
    %v5124 = vrot.slane %v5117, %v5123
    %v5126 = vunpack.c.l.s4 1966171168
    %v5127 = vunpack.c.0.s8 %v5126
    %v5128 = vlaneseq
    %v5129 = vshrl.u32 %v5128, 7
    %v5130 = vsub.s32 %v5127, %v5129
    %v5131 = vrot.slane %v5116, %v5130
    %v5132 = vcombine.low %v5124, %v5131
    %v5134 = vadd.f32 %v4777, %v5132
    %v5136 = vrot.slane %v5134, 4
    %v5138 = vxor.u32 %v5136, 2147483648
    %v5139 = vmul.f32 %v5138, 1.442695
    %v5140 = vpow.pop %v5139
    %v5141 = vadd.f32 %v5140, 1.0
    %v5142 = vrcp.pop %v5141
    %v5143 = vmul.f32 1.0, %v5142
    %v5144 = vlaneseq
    %v5145 = vshrl.u32 %v5144, 7
    %v5146 = vsub.s32 2, %v5145
    %v5147 = vrot.slane %v5134, %v5146
    %v5149 = vsel %vm774, %v5147, -inf
    %5150 = vmax.xlane.f32.xlu0 %v5149
    %v5151 = vpop.xlane.xlu0 %5150
    %v5152 = vrot.slane %v5134, 2
    %v5154 = vsub.f32 %v5152, %v5151
    %v5155 = vmul.f32 %v5154, 1.442695
    %v5156 = vpow.pop %v5155
    %v5157 = vsel %vm774, %v5156, 0.0
    %5158 = vadd.xlane.f32.xlu0 %v5157
    %v5159 = vpop.xlane.xlu0 %5158
    %v5160 = vrcp.pop %v5159
    %v5161 = vmul.f32 %v5156, %v5160
    %5163 = vset.pattern.permute.xlu0 0
    %5164 = vperm.xlu0 %5163, %v5143
    %v5165 = vpop.permute.xlu0 %5164
    %v5167 = vlaneseq
    %v5168 = vshrl.u32 %v5167, 7
    %v5169 = vsub.s32 0, %v5168
    %v5170 = vrot.slane %v5165, %v5169
    %v5171 = vmul.f32 %v5170, %v5161
    %v5173 = vsel %vm798, %v5171, 0
    %5175 = vmatprep.subr.mxu0 0.0
    %5176 = vmatpush1.msra.mxu0 0.0
    %5177 = vmatprep.subr.mxu0 0.0
    %5178 = vmatpush1.msra.mxu0 0.0
    %5179 = vmatprep.subr.mxu0 0.0
    %5180 = vmatpush1.msra.mxu0 0.0
    %5181 = vmatprep.subr.mxu0 0.0
    %5182 = vmatpush1.msra.mxu0 0.0
    %5183 = vmatprep.subr.mxu0 0.0
    %5184 = vmatpush1.msra.mxu0 0.0
    %5185 = vmatprep.subr.mxu0 0.0
    %5186 = vmatpush1.msra.mxu0 0.0
    %5187 = vmatprep.subr.mxu0 0.0
    %5188 = vmatpush1.msra.mxu0 0.0
    %5189 = vmatprep.subr.mxu0 0.0
    %5190 = vmatpush1.msra.mxu0 0.0
    %5191 = vmatprep.subr.mxu0 0.0
    %5192 = vmatpush1.msra.mxu0 0.0
    %5193 = vmatprep.subr.mxu0 0.0
    %5194 = vmatpush1.msra.mxu0 0.0
    %5195 = vmatprep.subr.mxu0 0.0
    %5196 = vmatpush1.msra.mxu0 0.0
    %5197 = vmatprep.subr.mxu0 0.0
    %5198 = vmatpush1.msra.mxu0 0.0
    %5199 = vmatprep.subr.mxu0 0.0
    %5200 = vmatpush1.msra.mxu0 0.0
    %5201 = vmatprep.subr.mxu0 0.0
    %5202 = vmatpush1.msra.mxu0 0.0
    %5203 = vmatprep.subr.mxu0 0.0
    %5204 = vmatpush1.msra.mxu0 %v4772
    %5205 = vmatprep.subr.mxu0 0.0
    %5206 = vmatpush1.msra.mxu0 %v4771
    %5207 = vmatprep.subr.mxu0 0.0
    %5208 = vmatpush2.msra.mxu0 0.0
    %5209 = vmatprep.subr.mxu0 0.0
    %5210 = vmatpush2.msra.mxu0 0.0
    %5211 = vmatprep.subr.mxu0 0.0
    %5212 = vmatpush2.msra.mxu0 0.0
    %5213 = vmatprep.subr.mxu0 0.0
    %5214 = vmatpush2.msra.mxu0 0.0
    %5215 = vmatprep.subr.mxu0 0.0
    %5216 = vmatpush2.msra.mxu0 0.0
    %5217 = vmatprep.subr.mxu0 0.0
    %5218 = vmatpush2.msra.mxu0 0.0
    %5219 = vmatprep.subr.mxu0 0.0
    %5220 = vmatpush2.msra.mxu0 0.0
    %5221 = vmatprep.subr.mxu0 0.0
    %5222 = vmatpush2.msra.mxu0 0.0
    %5223 = vmatprep.subr.mxu0 0.0
    %5224 = vmatpush2.msra.mxu0 0.0
    %5225 = vmatprep.subr.mxu0 0.0
    %5226 = vmatpush2.msra.mxu0 0.0
    %5227 = vmatprep.subr.mxu0 0.0
    %5228 = vmatpush2.msra.mxu0 0.0
    %5229 = vmatprep.subr.mxu0 0.0
    %5230 = vmatpush2.msra.mxu0 0.0
    %5231 = vmatprep.subr.mxu0 0.0
    %5232 = vmatpush2.msra.mxu0 0.0
    %5233 = vmatprep.subr.mxu0 0.0
    %5234 = vmatpush2.msra.mxu0 0.0
    %5235 = vmatprep.subr.mxu0 0.0
    %5236 = vmatpush2.msra.mxu0 0.0
    %5237 = vmatprep.subr.mxu0 0.0
    %5238 = vmatpush2.msra.mxu0 0.0
    %5239 = vmatprep.mubr.f32.mxu0 0.0
    %5240 = vmatmul.mubr.f32.gmra.mxu0 %v5173
    %v5241 = vpop.f32.mrf.mxu0
    %v5242 = vadd.f32 0.0, %v5241
    %v5243 = vpop.f32.mrf.mxu0
    %5244 = vdwg.mxu0
    %v5245 = vld [vmem:[#allocation11] sm:$0xff]
    %v5246 = vld [vmem:[#allocation11 + $0x8] sm:$0xff]
    %v5247 = vld [vmem:[#allocation11 + $0x10] sm:$0xff]
    %v5248 = vld [vmem:[#allocation11 + $0x18] sm:$0xff]
    %v5249 = vld [vmem:[#allocation11 + $0x20] sm:$0xff]
    %v5250 = vld [vmem:[#allocation11 + $0x28] sm:$0xff]
    %v5251 = vld [vmem:[#allocation11 + $0x30] sm:$0xff]
    %v5252 = vld [vmem:[#allocation11 + $0x38] sm:$0xff]
    %v5253 = vld [vmem:[#allocation11 + $0x40] sm:$0xff]
    %v5254 = vld [vmem:[#allocation11 + $0x48] sm:$0xff]
    %v5255 = vld [vmem:[#allocation11 + $0x50] sm:$0xff]
    %v5256 = vld [vmem:[#allocation11 + $0x58] sm:$0xff]
    %v5257 = vld [vmem:[#allocation11 + $0x60] sm:$0xff]
    %v5258 = vld [vmem:[#allocation11 + $0x68] sm:$0xff]
    %v5259 = vld [vmem:[#allocation11 + $0x70] sm:$0xff]
    %v5260 = vld [vmem:[#allocation11 + $0x78] sm:$0xff]
    %5261 = vmatprep.subr.mxu0 0.0
    %5262 = vmatpush1.msra.mxu0 %v5260
    %5263 = vmatprep.subr.mxu0 0.0
    %5264 = vmatpush1.msra.mxu0 %v5259
    %5265 = vmatprep.subr.mxu0 0.0
    %5266 = vmatpush1.msra.mxu0 %v5258
    %5267 = vmatprep.subr.mxu0 0.0
    %5268 = vmatpush1.msra.mxu0 %v5257
    %5269 = vmatprep.subr.mxu0 0.0
    %5270 = vmatpush1.msra.mxu0 %v5256
    %5271 = vmatprep.subr.mxu0 0.0
    %5272 = vmatpush1.msra.mxu0 %v5255
    %5273 = vmatprep.subr.mxu0 0.0
    %5274 = vmatpush1.msra.mxu0 %v5254
    %5275 = vmatprep.subr.mxu0 0.0
    %5276 = vmatpush1.msra.mxu0 %v5253
    %5277 = vmatprep.subr.mxu0 0.0
    %5278 = vmatpush1.msra.mxu0 %v5252
    %5279 = vmatprep.subr.mxu0 0.0
    %5280 = vmatpush1.msra.mxu0 %v5251
    %5281 = vmatprep.subr.mxu0 0.0
    %5282 = vmatpush1.msra.mxu0 %v5250
    %5283 = vmatprep.subr.mxu0 0.0
    %5284 = vmatpush1.msra.mxu0 %v5249
    %5285 = vmatprep.subr.mxu0 0.0
    %5286 = vmatpush1.msra.mxu0 %v5248
    %5287 = vmatprep.subr.mxu0 0.0
    %5288 = vmatpush1.msra.mxu0 %v5247
    %5289 = vmatprep.subr.mxu0 0.0
    %5290 = vmatpush1.msra.mxu0 %v5246
    %5291 = vmatprep.subr.mxu0 0.0
    %5292 = vmatpush1.msra.mxu0 %v5245
    %5293 = vmatprep.subr.mxu0 0.0
    %5294 = vmatpush2.msra.mxu0 0.0
    %5295 = vmatprep.subr.mxu0 0.0
    %5296 = vmatpush2.msra.mxu0 0.0
    %5297 = vmatprep.subr.mxu0 0.0
    %5298 = vmatpush2.msra.mxu0 0.0
    %5299 = vmatprep.subr.mxu0 0.0
    %5300 = vmatpush2.msra.mxu0 0.0
    %5301 = vmatprep.subr.mxu0 0.0
    %5302 = vmatpush2.msra.mxu0 0.0
    %5303 = vmatprep.subr.mxu0 0.0
    %5304 = vmatpush2.msra.mxu0 0.0
    %5305 = vmatprep.subr.mxu0 0.0
    %5306 = vmatpush2.msra.mxu0 0.0
    %5307 = vmatprep.subr.mxu0 0.0
    %5308 = vmatpush2.msra.mxu0 0.0
    %5309 = vmatprep.subr.mxu0 0.0
    %5310 = vmatpush2.msra.mxu0 0.0
    %5311 = vmatprep.subr.mxu0 0.0
    %5312 = vmatpush2.msra.mxu0 0.0
    %5313 = vmatprep.subr.mxu0 0.0
    %5314 = vmatpush2.msra.mxu0 0.0
    %5315 = vmatprep.subr.mxu0 0.0
    %5316 = vmatpush2.msra.mxu0 0.0
    %5317 = vmatprep.subr.mxu0 0.0
    %5318 = vmatpush2.msra.mxu0 0.0
    %5319 = vmatprep.subr.mxu0 0.0
    %5320 = vmatpush2.msra.mxu0 0.0
    %5321 = vmatprep.subr.mxu0 0.0
    %5322 = vmatpush2.msra.mxu0 0.0
    %5323 = vmatprep.subr.mxu0 0.0
    %5324 = vmatpush2.msra.mxu0 0.0
    %5325 = vmatprep.mubr.f32.mxu0 0.0
    %5326 = vmatmul.mubr.f32.gmra.mxu0 %v5242
    %v5327 = vpop.f32.mrf.mxu0
    %v5328 = vadd.f32 0.0, %v5327
    %v5329 = vpop.f32.mrf.mxu0
    %5330 = vdwg.mxu0
    %v5331 = vadd.f32 %v5134, %v5328
    %v5332 = vmax.f32 %v5331, 0.0
    %5333 = vst [vmem:[#allocation12 + $0x7] sm:$0x1] %v5332
    // Predicated region
    $region42: #{tpu_custom_call.1} parent=1 // pred_check
      _
    $region43: #{tpu_custom_call.1} parent=1 // pred_check_branch
      %5335 = sbr.rel (0) target = $region45
    $region44: #{tpu_custom_call.1} parent=1 // pred_region
      %s5337 = ssub.s32 128, 128
      %5338 = vsyncadd [#allocation5], %s5337
      %s5340 = sshll.u32 [#allocation12], 4
      %s5341 = int_to_ptr.vmem [resolvable:$true] %s5340
      %5343 = dma.vmem_to_hbm [thread:$0]  %s5341, 128, %s5, [#allocation5]
    $region45: #{tpu_custom_call.1} parent=1 // pred_fallthru
      _
    // Predicated region
    $region46: #{tpu_custom_call.1} parent=1 // pred_check
      _
    $region47: #{tpu_custom_call.1} parent=1 // pred_check_branch
      %5345 = sbr.rel (0) target = $region49
    $region48: #{tpu_custom_call.1} parent=1 // pred_region
      %5346 = dma.done [#allocation5], 128
    $region49: #{tpu_custom_call.1} parent=1 // pred_fallthru
      _
    %5347 = vsyncpa [#allocation4], 1
    %5348 = vsyncpa [#allocation7], 1
    %5349 = vsyncpa [#allocation10], 1
    %5350 = vsyncpa [#allocation5], 1

</llo_original>
